<compile_context>
chip_gen: v7x
topology: tpu7x:2x2x1
jax: 0.10.0
libtpu: 0.0.40
codegen_flags: <defaults>
</compile_context>

<pallas_src>
import numpy as np
import jax
import jax.numpy as jnp
from jax.experimental import pallas as pl
from jax.experimental.pallas import tpu as pltpu

NUMBER_CHANNEL = 3
ND = 8                      # number_d_channel
_EPS = 1e-5
_VMEM_LIMIT = 12 * 1024 * 1024

# (Cin, Cout, H, W) per stride-2 conv layer; OH = H//2, OW = W//2.
_LAYERS = (
    (NUMBER_CHANNEL, ND,     64, 64),   # conv1 (no norm)
    (ND,             ND * 2, 32, 32),   # conv2 + InstanceNorm
    (ND * 2,         ND * 4, 16, 16),   # conv3 + InstanceNorm
    (ND * 4,         ND * 8,  8,  8),   # conv4 + InstanceNorm (bias cancelled)
)


# ----------------------- constant selection matrices ------------------------

def _row_sel(h):
    """(4, h//2, h) 0/1 bf16: RowSel[kh, oh, r] = [r == 2*oh + kh - 1]."""
    oh_n = h // 2
    rs = np.zeros((4, oh_n, h), np.float32)
    for kh in range(4):
        for oh in range(oh_n):
            r = 2 * oh + kh - 1
            if 0 <= r < h:
                rs[kh, oh, r] = 1.0
    return jnp.asarray(rs, jnp.bfloat16)


def _col_sel(w):
    """(4, w, w//2) 0/1: ColSel[kw, x, ow] = [x == 2*ow + kw - 1]."""
    ow_n = w // 2
    cs = np.zeros((4, w, ow_n), np.float32)
    for kw in range(4):
        for ow in range(ow_n):
            x = 2 * ow + kw - 1
            if 0 <= x < w:
                cs[kw, x, ow] = 1.0
    return cs


def _fold_weight(wgt, w):
    """(Cout, Cin, 4, 4) conv weight -> (4, Cin*w, Cout*(w//2)) bf16.

    M[kh, (cin, x), (cout, ow)] = wgt[cout, cin, kh, kw] with kw = x + 1 - 2*ow
    (zero when out of range): kw taps, stride-2 column selection and width
    zero-padding are all folded into the GEMM weight.
    """
    cout, cin, _, _ = wgt.shape
    ow_n = w // 2
    cs = jnp.asarray(_col_sel(w))                       # (4, w, ow)
    m = jnp.einsum('oihq,qxj->hixoj', wgt, cs)          # (4, cin, w, cout, ow)
    return m.reshape(4, cin * w, cout * ow_n).astype(jnp.bfloat16)


def _seg(cout, ow):
    """(cout*ow, cout) 0/1 f32 channel-segment-sum matrix and its transpose
    (per-channel broadcast matrix)."""
    s = np.kron(np.eye(cout, dtype=np.float32), np.ones((ow, 1), np.float32))
    return jnp.asarray(s), jnp.asarray(s.T)


# ------------------------------ fused kernel --------------------------------

def _disc_fused_kernel(x_ref,
                       rs1_ref, m1_ref,
                       rs2_ref, m2_ref, sg2_ref, sb2_ref,
                       rs3_ref, m3_ref, sg3_ref, sb3_ref,
                       rs4_ref, m4_ref, sg4_ref, sb4_ref,
                       w5_ref, o_ref):
    """Whole Discriminator forward for one batch element.
    Activations in layout (H, C*W); lane dim is 256 after layer 1."""

    def conv(x, rs_ref, m_ref):
        # y[oh, (cout, ow)] = sum_kh (RowSel_kh @ x) @ M_kh   (implicit im2col)
        acc = None
        for kh in range(4):
            rows = jnp.dot(rs_ref[kh], x,
                           preferred_element_type=jnp.float32).astype(jnp.bfloat16)
            part = jnp.dot(rows, m_ref[kh], preferred_element_type=jnp.float32)
            acc = part if acc is None else acc + part
        return acc                                           # f32 (OH, Cout*OW)

    def leaky(y):
        return jnp.where(y > 0, y, 0.2 * y)

    def inst_norm(y, sg_ref, sb_ref, n_spatial):
        # Per-channel (lane-segment) stats via tiny 0/1 matmuls; one-pass var.
        inv_n = 1.0 / n_spatial
        col_sum = jnp.sum(y, axis=0, keepdims=True)          # (1, Cout*OW)
        col_sq = jnp.sum(y * y, axis=0, keepdims=True)
        mean_c = jnp.dot(col_sum, sg_ref[...],
                         preferred_element_type=jnp.float32) * inv_n   # (1, Cout)
        msq_c = jnp.dot(col_sq, sg_ref[...],
                        preferred_element_type=jnp.float32) * inv_n
        var_c = msq_c - mean_c * mean_c
        inv_c = jax.lax.rsqrt(var_c + _EPS)
        mean_b = jnp.dot(mean_c, sb_ref[...], preferred_element_type=jnp.float32)
        inv_b = jnp.dot(inv_c, sb_ref[...], preferred_element_type=jnp.float32)
        return (y - mean_b) * inv_b

    x = x_ref[0]                                             # (64, 192) bf16

    # conv1 (3->8, bias=False) + LeakyReLU(0.2)
    y = leaky(conv(x, rs1_ref, m1_ref)).astype(jnp.bfloat16)              # (32, 256)
    # conv2 (8->16, bias=False) + InstanceNorm + LeakyReLU
    y = leaky(inst_norm(conv(y, rs2_ref, m2_ref), sg2_ref, sb2_ref,
                        16.0 * 16.0)).astype(jnp.bfloat16)                # (16, 256)
    # conv3 (16->32, bias=False) + InstanceNorm + LeakyReLU
    y = leaky(inst_norm(conv(y, rs3_ref, m3_ref), sg3_ref, sb3_ref,
                        8.0 * 8.0)).astype(jnp.bfloat16)                  # (8, 256)
    # conv4 (32->64, bias exactly cancelled by IN) + InstanceNorm + LeakyReLU
    y = leaky(inst_norm(conv(y, rs4_ref, m4_ref), sg4_ref, sb4_ref,
                        4.0 * 4.0))                                       # (4, 256) f32
    # head: 4x4 valid conv (64 -> 1) == full reduce against flattened weights
    s = jnp.sum(y * w5_ref[...], axis=1, keepdims=True)                   # (4, 1)
    o_ref[0] = jnp.sum(s, axis=0, keepdims=True)                          # (1, 1)


# ------------------------------ Discriminator -------------------------------

def init_params(key):
    ks = jax.random.split(key, 6)

    def w(k, cout, cin):
        return 0.02 * jax.random.normal(k, (cout, cin, 4, 4), jnp.float32)

    return {
        "w1": w(ks[0], ND, NUMBER_CHANNEL),       # Conv 3 -> 8   (bias=False)
        "w2": w(ks[1], ND * 2, ND),               # Conv 8 -> 16  (bias=False)
        "w3": w(ks[2], ND * 4, ND * 2),           # Conv 16 -> 32 (bias=False)
        "w4": w(ks[3], ND * 8, ND * 4),           # Conv 32 -> 64 (bias=True)
        "b4": 0.02 * jax.random.normal(ks[4], (ND * 8,), jnp.float32),
        "w5": w(ks[5], 1, ND * 8),                # Conv 64 -> 1  (bias=False)
    }


def discriminator_forward(params, x_nchw):
    B, C, H, W = x_nchw.shape
    assert (C, H, W) == (NUMBER_CHANNEL, 64, 64), "expects DCGAN-style 64x64 input"

    # Input to layout (B, H, C*W), bf16 — the only pre-kernel XLA op.
    xb = (jnp.transpose(x_nchw, (0, 2, 1, 3))
          .reshape(B, H, C * W).astype(jnp.bfloat16))

    weights = (params["w1"], params["w2"], params["w3"], params["w4"])
    # params["b4"] is intentionally unused: InstanceNorm2d(affine=False)
    # immediately after conv4 subtracts the per-channel mean, which cancels
    # the bias exactly.

    inputs = [xb]
    in_specs = [pl.BlockSpec((1, H, C * W), lambda b: (b, 0, 0))]

    def add_const(arr):
        inputs.append(arr)
        in_specs.append(
            pl.BlockSpec(arr.shape, lambda b, _n=arr.ndim: (0,) * _n))

    for li, (cin, cout, h, w_sp) in enumerate(_LAYERS):
        add_const(_row_sel(h))                        # (4, h/2, h)
        add_const(_fold_weight(weights[li], w_sp))    # (4, cin*w, cout*w/2)
        if li > 0:                                    # layers with InstanceNorm
            sg, sb = _seg(cout, w_sp // 2)
            add_const(sg)
            add_const(sb)

    # Head weights in the same layout: w5b[kh, cin*4 + kw] = w5[0, cin, kh, kw]
    w5b = (jnp.transpose(params["w5"][0], (1, 0, 2))
           .reshape(4, ND * 8 * 4).astype(jnp.float32))
    add_const(w5b)

    out = pl.pallas_call(
        _disc_fused_kernel,
        out_shape=jax.ShapeDtypeStruct((B, 1, 1), jnp.float32),
        grid=(B,),
        in_specs=in_specs,
        out_specs=pl.BlockSpec((1, 1, 1), lambda b: (b, 0, 0)),
        compiler_params=pltpu.CompilerParams(
            dimension_semantics=("parallel",),
            vmem_limit_bytes=_VMEM_LIMIT),
    )(*inputs)
    return out.reshape(B, 1, 1, 1)      # NCHW (B, 1, 1, 1), f32


if __name__ == "__main__":
    key = jax.random.PRNGKey(0)
    pkey, xkey = jax.random.split(key)
    params = init_params(pkey)
    # DCGAN-style 64x64 input so the final 4x4 valid conv yields 1x1.
    x = jax.random.normal(xkey, (2, NUMBER_CHANNEL, 64, 64), jnp.float32)

    fwd = jax.jit(discriminator_forward)
    out = fwd(params, x)
    jax.block_until_ready(out)
    assert out.shape == (2, 1, 1, 1), out.shape
    assert bool(jnp.all(jnp.isfinite(out))), "non-finite output"
    print("KERNEL_OK")
</pallas_src>

<mosaic_0001>
module attributes {stable_mosaic.version = 11 : i64} {
  func.func @_disc_fused_kernel(%arg0: i32, %arg1: memref<1x64x192xbf16, #tpu.memory_space<vmem>>, %arg2: memref<4x32x64xbf16, #tpu.memory_space<vmem>>, %arg3: memref<4x192x256xbf16, #tpu.memory_space<vmem>>, %arg4: memref<4x16x32xbf16, #tpu.memory_space<vmem>>, %arg5: memref<4x256x256xbf16, #tpu.memory_space<vmem>>, %arg6: memref<256x16xf32, #tpu.memory_space<vmem>>, %arg7: memref<16x256xf32, #tpu.memory_space<vmem>>, %arg8: memref<4x8x16xbf16, #tpu.memory_space<vmem>>, %arg9: memref<4x256x256xbf16, #tpu.memory_space<vmem>>, %arg10: memref<256x32xf32, #tpu.memory_space<vmem>>, %arg11: memref<32x256xf32, #tpu.memory_space<vmem>>, %arg12: memref<4x4x8xbf16, #tpu.memory_space<vmem>>, %arg13: memref<4x256x256xbf16, #tpu.memory_space<vmem>>, %arg14: memref<256x64xf32, #tpu.memory_space<vmem>>, %arg15: memref<64x256xf32, #tpu.memory_space<vmem>>, %arg16: memref<4x256xf32, #tpu.memory_space<vmem>>, %arg17: memref<1x1x1xf32, #tpu.memory_space<vmem>>) attributes {dimension_semantics = [#tpu.dimension_semantics<parallel>], iteration_bounds = array<i64: 2>, scalar_prefetch = 0 : i64, scratch_operands = 0 : i64, tpu.core_type = #tpu.core_type<tc>, window_params = [{transform_indices = @transform_0, window_bounds = array<i64: 1, 64, 192>}, {pipeline_mode = #tpu.pipeline_mode<synchronous>, transform_indices = @transform_1, window_bounds = array<i64: 4, 32, 64>}, {pipeline_mode = #tpu.pipeline_mode<synchronous>, transform_indices = @transform_2, window_bounds = array<i64: 4, 192, 256>}, {pipeline_mode = #tpu.pipeline_mode<synchronous>, transform_indices = @transform_3, window_bounds = array<i64: 4, 16, 32>}, {pipeline_mode = #tpu.pipeline_mode<synchronous>, transform_indices = @transform_4, window_bounds = array<i64: 4, 256, 256>}, {pipeline_mode = #tpu.pipeline_mode<synchronous>, transform_indices = @transform_5, window_bounds = array<i64: 256, 16>}, {pipeline_mode = #tpu.pipeline_mode<synchronous>, transform_indices = @transform_6, window_bounds = array<i64: 16, 256>}, {pipeline_mode = #tpu.pipeline_mode<synchronous>, transform_indices = @transform_7, window_bounds = array<i64: 4, 8, 16>}, {pipeline_mode = #tpu.pipeline_mode<synchronous>, transform_indices = @transform_8, window_bounds = array<i64: 4, 256, 256>}, {pipeline_mode = #tpu.pipeline_mode<synchronous>, transform_indices = @transform_9, window_bounds = array<i64: 256, 32>}, {pipeline_mode = #tpu.pipeline_mode<synchronous>, transform_indices = @transform_10, window_bounds = array<i64: 32, 256>}, {pipeline_mode = #tpu.pipeline_mode<synchronous>, transform_indices = @transform_11, window_bounds = array<i64: 4, 4, 8>}, {pipeline_mode = #tpu.pipeline_mode<synchronous>, transform_indices = @transform_12, window_bounds = array<i64: 4, 256, 256>}, {pipeline_mode = #tpu.pipeline_mode<synchronous>, transform_indices = @transform_13, window_bounds = array<i64: 256, 64>}, {pipeline_mode = #tpu.pipeline_mode<synchronous>, transform_indices = @transform_14, window_bounds = array<i64: 64, 256>}, {pipeline_mode = #tpu.pipeline_mode<synchronous>, transform_indices = @transform_15, window_bounds = array<i64: 4, 256>}, {transform_indices = @transform_16, window_bounds = array<i64: 1, 1, 1>}]} {
    %c0 = arith.constant 0 : index
    %c0_0 = arith.constant 0 : index
    %c0_1 = arith.constant 0 : index
    %0 = vector.load %arg1[%c0, %c0_0, %c0_1] : memref<1x64x192xbf16, #tpu.memory_space<vmem>>, vector<1x64x192xbf16>
    %1 = vector.shape_cast %0 : vector<1x64x192xbf16> to vector<64x192xbf16>
    %c0_2 = arith.constant 0 : index
    %c0_3 = arith.constant 0 : index
    %c0_4 = arith.constant 0 : index
    %2 = vector.load %arg2[%c0_2, %c0_3, %c0_4] : memref<4x32x64xbf16, #tpu.memory_space<vmem>>, vector<1x32x64xbf16>
    %3 = vector.shape_cast %2 : vector<1x32x64xbf16> to vector<32x64xbf16>
    %cst = arith.constant dense<0.000000e+00> : vector<32x192xf32>
    %4 = tpu.matmul %3, %1, %cst {dimension_numbers = #tpu.dot_dimension_numbers<[1], [0], [0], [1], [0, 0, 1, 1], [], []>} : vector<32x64xbf16>, vector<64x192xbf16>, vector<32x192xf32> -> vector<32x192xf32>
    %5 = arith.truncf %4 : vector<32x192xf32> to vector<32x192xbf16>
    %c0_5 = arith.constant 0 : index
    %c0_6 = arith.constant 0 : index
    %c0_7 = arith.constant 0 : index
    %6 = vector.load %arg3[%c0_5, %c0_6, %c0_7] : memref<4x192x256xbf16, #tpu.memory_space<vmem>>, vector<1x192x256xbf16>
    %7 = vector.shape_cast %6 : vector<1x192x256xbf16> to vector<192x256xbf16>
    %cst_8 = arith.constant dense<0.000000e+00> : vector<32x256xf32>
    %8 = tpu.matmul %5, %7, %cst_8 {dimension_numbers = #tpu.dot_dimension_numbers<[1], [0], [0], [1], [0, 0, 1, 1], [], []>} : vector<32x192xbf16>, vector<192x256xbf16>, vector<32x256xf32> -> vector<32x256xf32>
    %c1 = arith.constant 1 : index
    %c0_9 = arith.constant 0 : index
    %c0_10 = arith.constant 0 : index
    %9 = vector.load %arg2[%c1, %c0_9, %c0_10] : memref<4x32x64xbf16, #tpu.memory_space<vmem>>, vector<1x32x64xbf16>
    %10 = vector.shape_cast %9 : vector<1x32x64xbf16> to vector<32x64xbf16>
    %cst_11 = arith.constant dense<0.000000e+00> : vector<32x192xf32>
    %11 = tpu.matmul %10, %1, %cst_11 {dimension_numbers = #tpu.dot_dimension_numbers<[1], [0], [0], [1], [0, 0, 1, 1], [], []>} : vector<32x64xbf16>, vector<64x192xbf16>, vector<32x192xf32> -> vector<32x192xf32>
    %12 = arith.truncf %11 : vector<32x192xf32> to vector<32x192xbf16>
    %c1_12 = arith.constant 1 : index
    %c0_13 = arith.constant 0 : index
    %c0_14 = arith.constant 0 : index
    %13 = vector.load %arg3[%c1_12, %c0_13, %c0_14] : memref<4x192x256xbf16, #tpu.memory_space<vmem>>, vector<1x192x256xbf16>
    %14 = vector.shape_cast %13 : vector<1x192x256xbf16> to vector<192x256xbf16>
    %cst_15 = arith.constant dense<0.000000e+00> : vector<32x256xf32>
    %15 = tpu.matmul %12, %14, %cst_15 {dimension_numbers = #tpu.dot_dimension_numbers<[1], [0], [0], [1], [0, 0, 1, 1], [], []>} : vector<32x192xbf16>, vector<192x256xbf16>, vector<32x256xf32> -> vector<32x256xf32>
    %16 = arith.addf %8, %15 : vector<32x256xf32>
    %c2 = arith.constant 2 : index
    %c0_16 = arith.constant 0 : index
    %c0_17 = arith.constant 0 : index
    %17 = vector.load %arg2[%c2, %c0_16, %c0_17] : memref<4x32x64xbf16, #tpu.memory_space<vmem>>, vector<1x32x64xbf16>
    %18 = vector.shape_cast %17 : vector<1x32x64xbf16> to vector<32x64xbf16>
    %cst_18 = arith.constant dense<0.000000e+00> : vector<32x192xf32>
    %19 = tpu.matmul %18, %1, %cst_18 {dimension_numbers = #tpu.dot_dimension_numbers<[1], [0], [0], [1], [0, 0, 1, 1], [], []>} : vector<32x64xbf16>, vector<64x192xbf16>, vector<32x192xf32> -> vector<32x192xf32>
    %20 = arith.truncf %19 : vector<32x192xf32> to vector<32x192xbf16>
    %c2_19 = arith.constant 2 : index
    %c0_20 = arith.constant 0 : index
    %c0_21 = arith.constant 0 : index
    %21 = vector.load %arg3[%c2_19, %c0_20, %c0_21] : memref<4x192x256xbf16, #tpu.memory_space<vmem>>, vector<1x192x256xbf16>
    %22 = vector.shape_cast %21 : vector<1x192x256xbf16> to vector<192x256xbf16>
    %cst_22 = arith.constant dense<0.000000e+00> : vector<32x256xf32>
    %23 = tpu.matmul %20, %22, %cst_22 {dimension_numbers = #tpu.dot_dimension_numbers<[1], [0], [0], [1], [0, 0, 1, 1], [], []>} : vector<32x192xbf16>, vector<192x256xbf16>, vector<32x256xf32> -> vector<32x256xf32>
    %24 = arith.addf %16, %23 : vector<32x256xf32>
    %c3 = arith.constant 3 : index
    %c0_23 = arith.constant 0 : index
    %c0_24 = arith.constant 0 : index
    %25 = vector.load %arg2[%c3, %c0_23, %c0_24] : memref<4x32x64xbf16, #tpu.memory_space<vmem>>, vector<1x32x64xbf16>
    %26 = vector.shape_cast %25 : vector<1x32x64xbf16> to vector<32x64xbf16>
    %cst_25 = arith.constant dense<0.000000e+00> : vector<32x192xf32>
    %27 = tpu.matmul %26, %1, %cst_25 {dimension_numbers = #tpu.dot_dimension_numbers<[1], [0], [0], [1], [0, 0, 1, 1], [], []>} : vector<32x64xbf16>, vector<64x192xbf16>, vector<32x192xf32> -> vector<32x192xf32>
    %28 = arith.truncf %27 : vector<32x192xf32> to vector<32x192xbf16>
    %c3_26 = arith.constant 3 : index
    %c0_27 = arith.constant 0 : index
    %c0_28 = arith.constant 0 : index
    %29 = vector.load %arg3[%c3_26, %c0_27, %c0_28] : memref<4x192x256xbf16, #tpu.memory_space<vmem>>, vector<1x192x256xbf16>
    %30 = vector.shape_cast %29 : vector<1x192x256xbf16> to vector<192x256xbf16>
    %cst_29 = arith.constant dense<0.000000e+00> : vector<32x256xf32>
    %31 = tpu.matmul %28, %30, %cst_29 {dimension_numbers = #tpu.dot_dimension_numbers<[1], [0], [0], [1], [0, 0, 1, 1], [], []>} : vector<32x192xbf16>, vector<192x256xbf16>, vector<32x256xf32> -> vector<32x256xf32>
    %32 = arith.addf %24, %31 : vector<32x256xf32>
    %cst_30 = arith.constant 0.000000e+00 : f32
    %33 = vector.broadcast %cst_30 : f32 to vector<32x256xf32>
    %34 = arith.cmpf ogt, %32, %33 : vector<32x256xf32>
    %cst_31 = arith.constant 2.000000e-01 : f32
    %35 = vector.broadcast %cst_31 : f32 to vector<32x256xf32>
    %36 = arith.mulf %35, %32 : vector<32x256xf32>
    %37 = arith.select %34, %32, %36 : vector<32x256xi1>, vector<32x256xf32>
    %38 = arith.truncf %37 : vector<32x256xf32> to vector<32x256xbf16>
    %c0_32 = arith.constant 0 : index
    %c0_33 = arith.constant 0 : index
    %c0_34 = arith.constant 0 : index
    %39 = vector.load %arg4[%c0_32, %c0_33, %c0_34] : memref<4x16x32xbf16, #tpu.memory_space<vmem>>, vector<1x16x32xbf16>
    %40 = vector.shape_cast %39 : vector<1x16x32xbf16> to vector<16x32xbf16>
    %cst_35 = arith.constant dense<0.000000e+00> : vector<16x256xf32>
    %41 = tpu.matmul %40, %38, %cst_35 {dimension_numbers = #tpu.dot_dimension_numbers<[1], [0], [0], [1], [0, 0, 1, 1], [], []>} : vector<16x32xbf16>, vector<32x256xbf16>, vector<16x256xf32> -> vector<16x256xf32>
    %42 = arith.truncf %41 : vector<16x256xf32> to vector<16x256xbf16>
    %c0_36 = arith.constant 0 : index
    %c0_37 = arith.constant 0 : index
    %c0_38 = arith.constant 0 : index
    %43 = vector.load %arg5[%c0_36, %c0_37, %c0_38] : memref<4x256x256xbf16, #tpu.memory_space<vmem>>, vector<1x256x256xbf16>
    %44 = vector.shape_cast %43 : vector<1x256x256xbf16> to vector<256x256xbf16>
    %cst_39 = arith.constant dense<0.000000e+00> : vector<16x256xf32>
    %45 = tpu.matmul %42, %44, %cst_39 {dimension_numbers = #tpu.dot_dimension_numbers<[1], [0], [0], [1], [0, 0, 1, 1], [], []>} : vector<16x256xbf16>, vector<256x256xbf16>, vector<16x256xf32> -> vector<16x256xf32>
    %c1_40 = arith.constant 1 : index
    %c0_41 = arith.constant 0 : index
    %c0_42 = arith.constant 0 : index
    %46 = vector.load %arg4[%c1_40, %c0_41, %c0_42] : memref<4x16x32xbf16, #tpu.memory_space<vmem>>, vector<1x16x32xbf16>
    %47 = vector.shape_cast %46 : vector<1x16x32xbf16> to vector<16x32xbf16>
    %cst_43 = arith.constant dense<0.000000e+00> : vector<16x256xf32>
    %48 = tpu.matmul %47, %38, %cst_43 {dimension_numbers = #tpu.dot_dimension_numbers<[1], [0], [0], [1], [0, 0, 1, 1], [], []>} : vector<16x32xbf16>, vector<32x256xbf16>, vector<16x256xf32> -> vector<16x256xf32>
    %49 = arith.truncf %48 : vector<16x256xf32> to vector<16x256xbf16>
    %c1_44 = arith.constant 1 : index
    %c0_45 = arith.constant 0 : index
    %c0_46 = arith.constant 0 : index
    %50 = vector.load %arg5[%c1_44, %c0_45, %c0_46] : memref<4x256x256xbf16, #tpu.memory_space<vmem>>, vector<1x256x256xbf16>
    %51 = vector.shape_cast %50 : vector<1x256x256xbf16> to vector<256x256xbf16>
    %cst_47 = arith.constant dense<0.000000e+00> : vector<16x256xf32>
    %52 = tpu.matmul %49, %51, %cst_47 {dimension_numbers = #tpu.dot_dimension_numbers<[1], [0], [0], [1], [0, 0, 1, 1], [], []>} : vector<16x256xbf16>, vector<256x256xbf16>, vector<16x256xf32> -> vector<16x256xf32>
    %53 = arith.addf %45, %52 : vector<16x256xf32>
    %c2_48 = arith.constant 2 : index
    %c0_49 = arith.constant 0 : index
    %c0_50 = arith.constant 0 : index
    %54 = vector.load %arg4[%c2_48, %c0_49, %c0_50] : memref<4x16x32xbf16, #tpu.memory_space<vmem>>, vector<1x16x32xbf16>
    %55 = vector.shape_cast %54 : vector<1x16x32xbf16> to vector<16x32xbf16>
    %cst_51 = arith.constant dense<0.000000e+00> : vector<16x256xf32>
    %56 = tpu.matmul %55, %38, %cst_51 {dimension_numbers = #tpu.dot_dimension_numbers<[1], [0], [0], [1], [0, 0, 1, 1], [], []>} : vector<16x32xbf16>, vector<32x256xbf16>, vector<16x256xf32> -> vector<16x256xf32>
    %57 = arith.truncf %56 : vector<16x256xf32> to vector<16x256xbf16>
    %c2_52 = arith.constant 2 : index
    %c0_53 = arith.constant 0 : index
    %c0_54 = arith.constant 0 : index
    %58 = vector.load %arg5[%c2_52, %c0_53, %c0_54] : memref<4x256x256xbf16, #tpu.memory_space<vmem>>, vector<1x256x256xbf16>
    %59 = vector.shape_cast %58 : vector<1x256x256xbf16> to vector<256x256xbf16>
    %cst_55 = arith.constant dense<0.000000e+00> : vector<16x256xf32>
    %60 = tpu.matmul %57, %59, %cst_55 {dimension_numbers = #tpu.dot_dimension_numbers<[1], [0], [0], [1], [0, 0, 1, 1], [], []>} : vector<16x256xbf16>, vector<256x256xbf16>, vector<16x256xf32> -> vector<16x256xf32>
    %61 = arith.addf %53, %60 : vector<16x256xf32>
    %c3_56 = arith.constant 3 : index
    %c0_57 = arith.constant 0 : index
    %c0_58 = arith.constant 0 : index
    %62 = vector.load %arg4[%c3_56, %c0_57, %c0_58] : memref<4x16x32xbf16, #tpu.memory_space<vmem>>, vector<1x16x32xbf16>
    %63 = vector.shape_cast %62 : vector<1x16x32xbf16> to vector<16x32xbf16>
    %cst_59 = arith.constant dense<0.000000e+00> : vector<16x256xf32>
    %64 = tpu.matmul %63, %38, %cst_59 {dimension_numbers = #tpu.dot_dimension_numbers<[1], [0], [0], [1], [0, 0, 1, 1], [], []>} : vector<16x32xbf16>, vector<32x256xbf16>, vector<16x256xf32> -> vector<16x256xf32>
    %65 = arith.truncf %64 : vector<16x256xf32> to vector<16x256xbf16>
    %c3_60 = arith.constant 3 : index
    %c0_61 = arith.constant 0 : index
    %c0_62 = arith.constant 0 : index
    %66 = vector.load %arg5[%c3_60, %c0_61, %c0_62] : memref<4x256x256xbf16, #tpu.memory_space<vmem>>, vector<1x256x256xbf16>
    %67 = vector.shape_cast %66 : vector<1x256x256xbf16> to vector<256x256xbf16>
    %cst_63 = arith.constant dense<0.000000e+00> : vector<16x256xf32>
    %68 = tpu.matmul %65, %67, %cst_63 {dimension_numbers = #tpu.dot_dimension_numbers<[1], [0], [0], [1], [0, 0, 1, 1], [], []>} : vector<16x256xbf16>, vector<256x256xbf16>, vector<16x256xf32> -> vector<16x256xf32>
    %69 = arith.addf %61, %68 : vector<16x256xf32>
    %cst_64 = arith.constant dense<0.000000e+00> : vector<256xf32>
    %70 = vector.multi_reduction <add>, %69, %cst_64 [0] : vector<16x256xf32> to vector<256xf32>
    %71 = vector.shape_cast %70 : vector<256xf32> to vector<1x256xf32>
    %72 = arith.mulf %69, %69 : vector<16x256xf32>
    %cst_65 = arith.constant dense<0.000000e+00> : vector<256xf32>
    %73 = vector.multi_reduction <add>, %72, %cst_65 [0] : vector<16x256xf32> to vector<256xf32>
    %74 = vector.shape_cast %73 : vector<256xf32> to vector<1x256xf32>
    %c0_66 = arith.constant 0 : index
    %c0_67 = arith.constant 0 : index
    %75 = vector.load %arg6[%c0_66, %c0_67] : memref<256x16xf32, #tpu.memory_space<vmem>>, vector<256x16xf32>
    %cst_68 = arith.constant dense<0.000000e+00> : vector<1x16xf32>
    %76 = tpu.matmul %71, %75, %cst_68 {dimension_numbers = #tpu.dot_dimension_numbers<[1], [0], [0], [1], [0, 0, 1, 1], [], []>} : vector<1x256xf32>, vector<256x16xf32>, vector<1x16xf32> -> vector<1x16xf32>
    %cst_69 = arith.constant 3.906250e-03 : f32
    %77 = vector.broadcast %cst_69 : f32 to vector<1x16xf32>
    %78 = arith.mulf %76, %77 : vector<1x16xf32>
    %c0_70 = arith.constant 0 : index
    %c0_71 = arith.constant 0 : index
    %79 = vector.load %arg6[%c0_70, %c0_71] : memref<256x16xf32, #tpu.memory_space<vmem>>, vector<256x16xf32>
    %cst_72 = arith.constant dense<0.000000e+00> : vector<1x16xf32>
    %80 = tpu.matmul %74, %79, %cst_72 {dimension_numbers = #tpu.dot_dimension_numbers<[1], [0], [0], [1], [0, 0, 1, 1], [], []>} : vector<1x256xf32>, vector<256x16xf32>, vector<1x16xf32> -> vector<1x16xf32>
    %cst_73 = arith.constant 3.906250e-03 : f32
    %81 = vector.broadcast %cst_73 : f32 to vector<1x16xf32>
    %82 = arith.mulf %80, %81 : vector<1x16xf32>
    %83 = arith.mulf %78, %78 : vector<1x16xf32>
    %84 = arith.subf %82, %83 : vector<1x16xf32>
    %cst_74 = arith.constant 9.99999974E-6 : f32
    %85 = vector.broadcast %cst_74 : f32 to vector<1x16xf32>
    %86 = arith.addf %84, %85 : vector<1x16xf32>
    %87 = math.rsqrt %86 : vector<1x16xf32>
    %c0_75 = arith.constant 0 : index
    %c0_76 = arith.constant 0 : index
    %88 = vector.load %arg7[%c0_75, %c0_76] : memref<16x256xf32, #tpu.memory_space<vmem>>, vector<16x256xf32>
    %cst_77 = arith.constant dense<0.000000e+00> : vector<1x256xf32>
    %89 = tpu.matmul %78, %88, %cst_77 {dimension_numbers = #tpu.dot_dimension_numbers<[1], [0], [0], [1], [0, 0, 1, 1], [], []>} : vector<1x16xf32>, vector<16x256xf32>, vector<1x256xf32> -> vector<1x256xf32>
    %c0_78 = arith.constant 0 : index
    %c0_79 = arith.constant 0 : index
    %90 = vector.load %arg7[%c0_78, %c0_79] : memref<16x256xf32, #tpu.memory_space<vmem>>, vector<16x256xf32>
    %cst_80 = arith.constant dense<0.000000e+00> : vector<1x256xf32>
    %91 = tpu.matmul %87, %90, %cst_80 {dimension_numbers = #tpu.dot_dimension_numbers<[1], [0], [0], [1], [0, 0, 1, 1], [], []>} : vector<1x16xf32>, vector<16x256xf32>, vector<1x256xf32> -> vector<1x256xf32>
    %92 = vector.broadcast %89 : vector<1x256xf32> to vector<16x256xf32>
    %93 = arith.subf %69, %92 : vector<16x256xf32>
    %94 = vector.broadcast %91 : vector<1x256xf32> to vector<16x256xf32>
    %95 = arith.mulf %93, %94 : vector<16x256xf32>
    %cst_81 = arith.constant 0.000000e+00 : f32
    %96 = vector.broadcast %cst_81 : f32 to vector<16x256xf32>
    %97 = arith.cmpf ogt, %95, %96 : vector<16x256xf32>
    %cst_82 = arith.constant 2.000000e-01 : f32
    %98 = vector.broadcast %cst_82 : f32 to vector<16x256xf32>
    %99 = arith.mulf %98, %95 : vector<16x256xf32>
    %100 = arith.select %97, %95, %99 : vector<16x256xi1>, vector<16x256xf32>
    %101 = arith.truncf %100 : vector<16x256xf32> to vector<16x256xbf16>
    %c0_83 = arith.constant 0 : index
    %c0_84 = arith.constant 0 : index
    %c0_85 = arith.constant 0 : index
    %102 = vector.load %arg8[%c0_83, %c0_84, %c0_85] : memref<4x8x16xbf16, #tpu.memory_space<vmem>>, vector<1x8x16xbf16>
    %103 = vector.shape_cast %102 : vector<1x8x16xbf16> to vector<8x16xbf16>
    %cst_86 = arith.constant dense<0.000000e+00> : vector<8x256xf32>
    %104 = tpu.matmul %103, %101, %cst_86 {dimension_numbers = #tpu.dot_dimension_numbers<[1], [0], [0], [1], [0, 0, 1, 1], [], []>} : vector<8x16xbf16>, vector<16x256xbf16>, vector<8x256xf32> -> vector<8x256xf32>
    %105 = arith.truncf %104 : vector<8x256xf32> to vector<8x256xbf16>
    %c0_87 = arith.constant 0 : index
    %c0_88 = arith.constant 0 : index
    %c0_89 = arith.constant 0 : index
    %106 = vector.load %arg9[%c0_87, %c0_88, %c0_89] : memref<4x256x256xbf16, #tpu.memory_space<vmem>>, vector<1x256x256xbf16>
    %107 = vector.shape_cast %106 : vector<1x256x256xbf16> to vector<256x256xbf16>
    %cst_90 = arith.constant dense<0.000000e+00> : vector<8x256xf32>
    %108 = tpu.matmul %105, %107, %cst_90 {dimension_numbers = #tpu.dot_dimension_numbers<[1], [0], [0], [1], [0, 0, 1, 1], [], []>} : vector<8x256xbf16>, vector<256x256xbf16>, vector<8x256xf32> -> vector<8x256xf32>
    %c1_91 = arith.constant 1 : index
    %c0_92 = arith.constant 0 : index
    %c0_93 = arith.constant 0 : index
    %109 = vector.load %arg8[%c1_91, %c0_92, %c0_93] : memref<4x8x16xbf16, #tpu.memory_space<vmem>>, vector<1x8x16xbf16>
    %110 = vector.shape_cast %109 : vector<1x8x16xbf16> to vector<8x16xbf16>
    %cst_94 = arith.constant dense<0.000000e+00> : vector<8x256xf32>
    %111 = tpu.matmul %110, %101, %cst_94 {dimension_numbers = #tpu.dot_dimension_numbers<[1], [0], [0], [1], [0, 0, 1, 1], [], []>} : vector<8x16xbf16>, vector<16x256xbf16>, vector<8x256xf32> -> vector<8x256xf32>
    %112 = arith.truncf %111 : vector<8x256xf32> to vector<8x256xbf16>
    %c1_95 = arith.constant 1 : index
    %c0_96 = arith.constant 0 : index
    %c0_97 = arith.constant 0 : index
    %113 = vector.load %arg9[%c1_95, %c0_96, %c0_97] : memref<4x256x256xbf16, #tpu.memory_space<vmem>>, vector<1x256x256xbf16>
    %114 = vector.shape_cast %113 : vector<1x256x256xbf16> to vector<256x256xbf16>
    %cst_98 = arith.constant dense<0.000000e+00> : vector<8x256xf32>
    %115 = tpu.matmul %112, %114, %cst_98 {dimension_numbers = #tpu.dot_dimension_numbers<[1], [0], [0], [1], [0, 0, 1, 1], [], []>} : vector<8x256xbf16>, vector<256x256xbf16>, vector<8x256xf32> -> vector<8x256xf32>
    %116 = arith.addf %108, %115 : vector<8x256xf32>
    %c2_99 = arith.constant 2 : index
    %c0_100 = arith.constant 0 : index
    %c0_101 = arith.constant 0 : index
    %117 = vector.load %arg8[%c2_99, %c0_100, %c0_101] : memref<4x8x16xbf16, #tpu.memory_space<vmem>>, vector<1x8x16xbf16>
    %118 = vector.shape_cast %117 : vector<1x8x16xbf16> to vector<8x16xbf16>
    %cst_102 = arith.constant dense<0.000000e+00> : vector<8x256xf32>
    %119 = tpu.matmul %118, %101, %cst_102 {dimension_numbers = #tpu.dot_dimension_numbers<[1], [0], [0], [1], [0, 0, 1, 1], [], []>} : vector<8x16xbf16>, vector<16x256xbf16>, vector<8x256xf32> -> vector<8x256xf32>
    %120 = arith.truncf %119 : vector<8x256xf32> to vector<8x256xbf16>
    %c2_103 = arith.constant 2 : index
    %c0_104 = arith.constant 0 : index
    %c0_105 = arith.constant 0 : index
    %121 = vector.load %arg9[%c2_103, %c0_104, %c0_105] : memref<4x256x256xbf16, #tpu.memory_space<vmem>>, vector<1x256x256xbf16>
    %122 = vector.shape_cast %121 : vector<1x256x256xbf16> to vector<256x256xbf16>
    %cst_106 = arith.constant dense<0.000000e+00> : vector<8x256xf32>
    %123 = tpu.matmul %120, %122, %cst_106 {dimension_numbers = #tpu.dot_dimension_numbers<[1], [0], [0], [1], [0, 0, 1, 1], [], []>} : vector<8x256xbf16>, vector<256x256xbf16>, vector<8x256xf32> -> vector<8x256xf32>
    %124 = arith.addf %116, %123 : vector<8x256xf32>
    %c3_107 = arith.constant 3 : index
    %c0_108 = arith.constant 0 : index
    %c0_109 = arith.constant 0 : index
    %125 = vector.load %arg8[%c3_107, %c0_108, %c0_109] : memref<4x8x16xbf16, #tpu.memory_space<vmem>>, vector<1x8x16xbf16>
    %126 = vector.shape_cast %125 : vector<1x8x16xbf16> to vector<8x16xbf16>
    %cst_110 = arith.constant dense<0.000000e+00> : vector<8x256xf32>
    %127 = tpu.matmul %126, %101, %cst_110 {dimension_numbers = #tpu.dot_dimension_numbers<[1], [0], [0], [1], [0, 0, 1, 1], [], []>} : vector<8x16xbf16>, vector<16x256xbf16>, vector<8x256xf32> -> vector<8x256xf32>
    %128 = arith.truncf %127 : vector<8x256xf32> to vector<8x256xbf16>
    %c3_111 = arith.constant 3 : index
    %c0_112 = arith.constant 0 : index
    %c0_113 = arith.constant 0 : index
    %129 = vector.load %arg9[%c3_111, %c0_112, %c0_113] : memref<4x256x256xbf16, #tpu.memory_space<vmem>>, vector<1x256x256xbf16>
    %130 = vector.shape_cast %129 : vector<1x256x256xbf16> to vector<256x256xbf16>
    %cst_114 = arith.constant dense<0.000000e+00> : vector<8x256xf32>
    %131 = tpu.matmul %128, %130, %cst_114 {dimension_numbers = #tpu.dot_dimension_numbers<[1], [0], [0], [1], [0, 0, 1, 1], [], []>} : vector<8x256xbf16>, vector<256x256xbf16>, vector<8x256xf32> -> vector<8x256xf32>
    %132 = arith.addf %124, %131 : vector<8x256xf32>
    %cst_115 = arith.constant dense<0.000000e+00> : vector<256xf32>
    %133 = vector.multi_reduction <add>, %132, %cst_115 [0] : vector<8x256xf32> to vector<256xf32>
    %134 = vector.shape_cast %133 : vector<256xf32> to vector<1x256xf32>
    %135 = arith.mulf %132, %132 : vector<8x256xf32>
    %cst_116 = arith.constant dense<0.000000e+00> : vector<256xf32>
    %136 = vector.multi_reduction <add>, %135, %cst_116 [0] : vector<8x256xf32> to vector<256xf32>
    %137 = vector.shape_cast %136 : vector<256xf32> to vector<1x256xf32>
    %c0_117 = arith.constant 0 : index
    %c0_118 = arith.constant 0 : index
    %138 = vector.load %arg10[%c0_117, %c0_118] : memref<256x32xf32, #tpu.memory_space<vmem>>, vector<256x32xf32>
    %cst_119 = arith.constant dense<0.000000e+00> : vector<1x32xf32>
    %139 = tpu.matmul %134, %138, %cst_119 {dimension_numbers = #tpu.dot_dimension_numbers<[1], [0], [0], [1], [0, 0, 1, 1], [], []>} : vector<1x256xf32>, vector<256x32xf32>, vector<1x32xf32> -> vector<1x32xf32>
    %cst_120 = arith.constant 1.562500e-02 : f32
    %140 = vector.broadcast %cst_120 : f32 to vector<1x32xf32>
    %141 = arith.mulf %139, %140 : vector<1x32xf32>
    %c0_121 = arith.constant 0 : index
    %c0_122 = arith.constant 0 : index
    %142 = vector.load %arg10[%c0_121, %c0_122] : memref<256x32xf32, #tpu.memory_space<vmem>>, vector<256x32xf32>
    %cst_123 = arith.constant dense<0.000000e+00> : vector<1x32xf32>
    %143 = tpu.matmul %137, %142, %cst_123 {dimension_numbers = #tpu.dot_dimension_numbers<[1], [0], [0], [1], [0, 0, 1, 1], [], []>} : vector<1x256xf32>, vector<256x32xf32>, vector<1x32xf32> -> vector<1x32xf32>
    %cst_124 = arith.constant 1.562500e-02 : f32
    %144 = vector.broadcast %cst_124 : f32 to vector<1x32xf32>
    %145 = arith.mulf %143, %144 : vector<1x32xf32>
    %146 = arith.mulf %141, %141 : vector<1x32xf32>
    %147 = arith.subf %145, %146 : vector<1x32xf32>
    %cst_125 = arith.constant 9.99999974E-6 : f32
    %148 = vector.broadcast %cst_125 : f32 to vector<1x32xf32>
    %149 = arith.addf %147, %148 : vector<1x32xf32>
    %150 = math.rsqrt %149 : vector<1x32xf32>
    %c0_126 = arith.constant 0 : index
    %c0_127 = arith.constant 0 : index
    %151 = vector.load %arg11[%c0_126, %c0_127] : memref<32x256xf32, #tpu.memory_space<vmem>>, vector<32x256xf32>
    %cst_128 = arith.constant dense<0.000000e+00> : vector<1x256xf32>
    %152 = tpu.matmul %141, %151, %cst_128 {dimension_numbers = #tpu.dot_dimension_numbers<[1], [0], [0], [1], [0, 0, 1, 1], [], []>} : vector<1x32xf32>, vector<32x256xf32>, vector<1x256xf32> -> vector<1x256xf32>
    %c0_129 = arith.constant 0 : index
    %c0_130 = arith.constant 0 : index
    %153 = vector.load %arg11[%c0_129, %c0_130] : memref<32x256xf32, #tpu.memory_space<vmem>>, vector<32x256xf32>
    %cst_131 = arith.constant dense<0.000000e+00> : vector<1x256xf32>
    %154 = tpu.matmul %150, %153, %cst_131 {dimension_numbers = #tpu.dot_dimension_numbers<[1], [0], [0], [1], [0, 0, 1, 1], [], []>} : vector<1x32xf32>, vector<32x256xf32>, vector<1x256xf32> -> vector<1x256xf32>
    %155 = vector.broadcast %152 : vector<1x256xf32> to vector<8x256xf32>
    %156 = arith.subf %132, %155 : vector<8x256xf32>
    %157 = vector.broadcast %154 : vector<1x256xf32> to vector<8x256xf32>
    %158 = arith.mulf %156, %157 : vector<8x256xf32>
    %cst_132 = arith.constant 0.000000e+00 : f32
    %159 = vector.broadcast %cst_132 : f32 to vector<8x256xf32>
    %160 = arith.cmpf ogt, %158, %159 : vector<8x256xf32>
    %cst_133 = arith.constant 2.000000e-01 : f32
    %161 = vector.broadcast %cst_133 : f32 to vector<8x256xf32>
    %162 = arith.mulf %161, %158 : vector<8x256xf32>
    %163 = arith.select %160, %158, %162 : vector<8x256xi1>, vector<8x256xf32>
    %164 = arith.truncf %163 : vector<8x256xf32> to vector<8x256xbf16>
    %c0_134 = arith.constant 0 : index
    %c0_135 = arith.constant 0 : index
    %c0_136 = arith.constant 0 : index
    %165 = vector.load %arg12[%c0_134, %c0_135, %c0_136] : memref<4x4x8xbf16, #tpu.memory_space<vmem>>, vector<1x4x8xbf16>
    %166 = vector.shape_cast %165 : vector<1x4x8xbf16> to vector<4x8xbf16>
    %cst_137 = arith.constant dense<0.000000e+00> : vector<4x256xf32>
    %167 = tpu.matmul %166, %164, %cst_137 {dimension_numbers = #tpu.dot_dimension_numbers<[1], [0], [0], [1], [0, 0, 1, 1], [], []>} : vector<4x8xbf16>, vector<8x256xbf16>, vector<4x256xf32> -> vector<4x256xf32>
    %168 = arith.truncf %167 : vector<4x256xf32> to vector<4x256xbf16>
    %c0_138 = arith.constant 0 : index
    %c0_139 = arith.constant 0 : index
    %c0_140 = arith.constant 0 : index
    %169 = vector.load %arg13[%c0_138, %c0_139, %c0_140] : memref<4x256x256xbf16, #tpu.memory_space<vmem>>, vector<1x256x256xbf16>
    %170 = vector.shape_cast %169 : vector<1x256x256xbf16> to vector<256x256xbf16>
    %cst_141 = arith.constant dense<0.000000e+00> : vector<4x256xf32>
    %171 = tpu.matmul %168, %170, %cst_141 {dimension_numbers = #tpu.dot_dimension_numbers<[1], [0], [0], [1], [0, 0, 1, 1], [], []>} : vector<4x256xbf16>, vector<256x256xbf16>, vector<4x256xf32> -> vector<4x256xf32>
    %c1_142 = arith.constant 1 : index
    %c0_143 = arith.constant 0 : index
    %c0_144 = arith.constant 0 : index
    %172 = vector.load %arg12[%c1_142, %c0_143, %c0_144] : memref<4x4x8xbf16, #tpu.memory_space<vmem>>, vector<1x4x8xbf16>
    %173 = vector.shape_cast %172 : vector<1x4x8xbf16> to vector<4x8xbf16>
    %cst_145 = arith.constant dense<0.000000e+00> : vector<4x256xf32>
    %174 = tpu.matmul %173, %164, %cst_145 {dimension_numbers = #tpu.dot_dimension_numbers<[1], [0], [0], [1], [0, 0, 1, 1], [], []>} : vector<4x8xbf16>, vector<8x256xbf16>, vector<4x256xf32> -> vector<4x256xf32>
    %175 = arith.truncf %174 : vector<4x256xf32> to vector<4x256xbf16>
    %c1_146 = arith.constant 1 : index
    %c0_147 = arith.constant 0 : index
    %c0_148 = arith.constant 0 : index
    %176 = vector.load %arg13[%c1_146, %c0_147, %c0_148] : memref<4x256x256xbf16, #tpu.memory_space<vmem>>, vector<1x256x256xbf16>
    %177 = vector.shape_cast %176 : vector<1x256x256xbf16> to vector<256x256xbf16>
    %cst_149 = arith.constant dense<0.000000e+00> : vector<4x256xf32>
    %178 = tpu.matmul %175, %177, %cst_149 {dimension_numbers = #tpu.dot_dimension_numbers<[1], [0], [0], [1], [0, 0, 1, 1], [], []>} : vector<4x256xbf16>, vector<256x256xbf16>, vector<4x256xf32> -> vector<4x256xf32>
    %179 = arith.addf %171, %178 : vector<4x256xf32>
    %c2_150 = arith.constant 2 : index
    %c0_151 = arith.constant 0 : index
    %c0_152 = arith.constant 0 : index
    %180 = vector.load %arg12[%c2_150, %c0_151, %c0_152] : memref<4x4x8xbf16, #tpu.memory_space<vmem>>, vector<1x4x8xbf16>
    %181 = vector.shape_cast %180 : vector<1x4x8xbf16> to vector<4x8xbf16>
    %cst_153 = arith.constant dense<0.000000e+00> : vector<4x256xf32>
    %182 = tpu.matmul %181, %164, %cst_153 {dimension_numbers = #tpu.dot_dimension_numbers<[1], [0], [0], [1], [0, 0, 1, 1], [], []>} : vector<4x8xbf16>, vector<8x256xbf16>, vector<4x256xf32> -> vector<4x256xf32>
    %183 = arith.truncf %182 : vector<4x256xf32> to vector<4x256xbf16>
    %c2_154 = arith.constant 2 : index
    %c0_155 = arith.constant 0 : index
    %c0_156 = arith.constant 0 : index
    %184 = vector.load %arg13[%c2_154, %c0_155, %c0_156] : memref<4x256x256xbf16, #tpu.memory_space<vmem>>, vector<1x256x256xbf16>
    %185 = vector.shape_cast %184 : vector<1x256x256xbf16> to vector<256x256xbf16>
    %cst_157 = arith.constant dense<0.000000e+00> : vector<4x256xf32>
    %186 = tpu.matmul %183, %185, %cst_157 {dimension_numbers = #tpu.dot_dimension_numbers<[1], [0], [0], [1], [0, 0, 1, 1], [], []>} : vector<4x256xbf16>, vector<256x256xbf16>, vector<4x256xf32> -> vector<4x256xf32>
    %187 = arith.addf %179, %186 : vector<4x256xf32>
    %c3_158 = arith.constant 3 : index
    %c0_159 = arith.constant 0 : index
    %c0_160 = arith.constant 0 : index
    %188 = vector.load %arg12[%c3_158, %c0_159, %c0_160] : memref<4x4x8xbf16, #tpu.memory_space<vmem>>, vector<1x4x8xbf16>
    %189 = vector.shape_cast %188 : vector<1x4x8xbf16> to vector<4x8xbf16>
    %cst_161 = arith.constant dense<0.000000e+00> : vector<4x256xf32>
    %190 = tpu.matmul %189, %164, %cst_161 {dimension_numbers = #tpu.dot_dimension_numbers<[1], [0], [0], [1], [0, 0, 1, 1], [], []>} : vector<4x8xbf16>, vector<8x256xbf16>, vector<4x256xf32> -> vector<4x256xf32>
    %191 = arith.truncf %190 : vector<4x256xf32> to vector<4x256xbf16>
    %c3_162 = arith.constant 3 : index
    %c0_163 = arith.constant 0 : index
    %c0_164 = arith.constant 0 : index
    %192 = vector.load %arg13[%c3_162, %c0_163, %c0_164] : memref<4x256x256xbf16, #tpu.memory_space<vmem>>, vector<1x256x256xbf16>
    %193 = vector.shape_cast %192 : vector<1x256x256xbf16> to vector<256x256xbf16>
    %cst_165 = arith.constant dense<0.000000e+00> : vector<4x256xf32>
    %194 = tpu.matmul %191, %193, %cst_165 {dimension_numbers = #tpu.dot_dimension_numbers<[1], [0], [0], [1], [0, 0, 1, 1], [], []>} : vector<4x256xbf16>, vector<256x256xbf16>, vector<4x256xf32> -> vector<4x256xf32>
    %195 = arith.addf %187, %194 : vector<4x256xf32>
    %cst_166 = arith.constant dense<0.000000e+00> : vector<256xf32>
    %196 = vector.multi_reduction <add>, %195, %cst_166 [0] : vector<4x256xf32> to vector<256xf32>
    %197 = vector.shape_cast %196 : vector<256xf32> to vector<1x256xf32>
    %198 = arith.mulf %195, %195 : vector<4x256xf32>
    %cst_167 = arith.constant dense<0.000000e+00> : vector<256xf32>
    %199 = vector.multi_reduction <add>, %198, %cst_167 [0] : vector<4x256xf32> to vector<256xf32>
    %200 = vector.shape_cast %199 : vector<256xf32> to vector<1x256xf32>
    %c0_168 = arith.constant 0 : index
    %c0_169 = arith.constant 0 : index
    %201 = vector.load %arg14[%c0_168, %c0_169] : memref<256x64xf32, #tpu.memory_space<vmem>>, vector<256x64xf32>
    %cst_170 = arith.constant dense<0.000000e+00> : vector<1x64xf32>
    %202 = tpu.matmul %197, %201, %cst_170 {dimension_numbers = #tpu.dot_dimension_numbers<[1], [0], [0], [1], [0, 0, 1, 1], [], []>} : vector<1x256xf32>, vector<256x64xf32>, vector<1x64xf32> -> vector<1x64xf32>
    %cst_171 = arith.constant 6.250000e-02 : f32
    %203 = vector.broadcast %cst_171 : f32 to vector<1x64xf32>
    %204 = arith.mulf %202, %203 : vector<1x64xf32>
    %c0_172 = arith.constant 0 : index
    %c0_173 = arith.constant 0 : index
    %205 = vector.load %arg14[%c0_172, %c0_173] : memref<256x64xf32, #tpu.memory_space<vmem>>, vector<256x64xf32>
    %cst_174 = arith.constant dense<0.000000e+00> : vector<1x64xf32>
    %206 = tpu.matmul %200, %205, %cst_174 {dimension_numbers = #tpu.dot_dimension_numbers<[1], [0], [0], [1], [0, 0, 1, 1], [], []>} : vector<1x256xf32>, vector<256x64xf32>, vector<1x64xf32> -> vector<1x64xf32>
    %cst_175 = arith.constant 6.250000e-02 : f32
    %207 = vector.broadcast %cst_175 : f32 to vector<1x64xf32>
    %208 = arith.mulf %206, %207 : vector<1x64xf32>
    %209 = arith.mulf %204, %204 : vector<1x64xf32>
    %210 = arith.subf %208, %209 : vector<1x64xf32>
    %cst_176 = arith.constant 9.99999974E-6 : f32
    %211 = vector.broadcast %cst_176 : f32 to vector<1x64xf32>
    %212 = arith.addf %210, %211 : vector<1x64xf32>
    %213 = math.rsqrt %212 : vector<1x64xf32>
    %c0_177 = arith.constant 0 : index
    %c0_178 = arith.constant 0 : index
    %214 = vector.load %arg15[%c0_177, %c0_178] : memref<64x256xf32, #tpu.memory_space<vmem>>, vector<64x256xf32>
    %cst_179 = arith.constant dense<0.000000e+00> : vector<1x256xf32>
    %215 = tpu.matmul %204, %214, %cst_179 {dimension_numbers = #tpu.dot_dimension_numbers<[1], [0], [0], [1], [0, 0, 1, 1], [], []>} : vector<1x64xf32>, vector<64x256xf32>, vector<1x256xf32> -> vector<1x256xf32>
    %c0_180 = arith.constant 0 : index
    %c0_181 = arith.constant 0 : index
    %216 = vector.load %arg15[%c0_180, %c0_181] : memref<64x256xf32, #tpu.memory_space<vmem>>, vector<64x256xf32>
    %cst_182 = arith.constant dense<0.000000e+00> : vector<1x256xf32>
    %217 = tpu.matmul %213, %216, %cst_182 {dimension_numbers = #tpu.dot_dimension_numbers<[1], [0], [0], [1], [0, 0, 1, 1], [], []>} : vector<1x64xf32>, vector<64x256xf32>, vector<1x256xf32> -> vector<1x256xf32>
    %218 = vector.broadcast %215 : vector<1x256xf32> to vector<4x256xf32>
    %219 = arith.subf %195, %218 : vector<4x256xf32>
    %220 = vector.broadcast %217 : vector<1x256xf32> to vector<4x256xf32>
    %221 = arith.mulf %219, %220 : vector<4x256xf32>
    %cst_183 = arith.constant 0.000000e+00 : f32
    %222 = vector.broadcast %cst_183 : f32 to vector<4x256xf32>
    %223 = arith.cmpf ogt, %221, %222 : vector<4x256xf32>
    %cst_184 = arith.constant 2.000000e-01 : f32
    %224 = vector.broadcast %cst_184 : f32 to vector<4x256xf32>
    %225 = arith.mulf %224, %221 : vector<4x256xf32>
    %226 = arith.select %223, %221, %225 : vector<4x256xi1>, vector<4x256xf32>
    %c0_185 = arith.constant 0 : index
    %c0_186 = arith.constant 0 : index
    %227 = vector.load %arg16[%c0_185, %c0_186] : memref<4x256xf32, #tpu.memory_space<vmem>>, vector<4x256xf32>
    %228 = arith.mulf %226, %227 : vector<4x256xf32>
    %cst_187 = arith.constant dense<0.000000e+00> : vector<4xf32>
    %229 = vector.multi_reduction <add>, %228, %cst_187 [1] : vector<4x256xf32> to vector<4xf32>
    %230 = vector.shape_cast %229 : vector<4xf32> to vector<4x1xf32>
    %cst_188 = arith.constant dense<0.000000e+00> : vector<1xf32>
    %231 = vector.multi_reduction <add>, %230, %cst_188 [0] : vector<4x1xf32> to vector<1xf32>
    %232 = vector.shape_cast %231 : vector<1xf32> to vector<1x1xf32>
    %c0_189 = arith.constant 0 : index
    %c0_190 = arith.constant 0 : index
    %c0_191 = arith.constant 0 : index
    %233 = vector.load %arg17[%c0_189, %c0_190, %c0_191] : memref<1x1x1xf32, #tpu.memory_space<vmem>>, vector<1x1x1xf32>
    %234 = vector.shape_cast %233 : vector<1x1x1xf32> to vector<1x1xf32>
    %235 = vector.shape_cast %232 : vector<1x1xf32> to vector<1x1x1xf32>
    tpu.vector_store %arg17[%c0_189, %c0_190, %c0_191], %235 {strides = array<i32>} : memref<1x1x1xf32, #tpu.memory_space<vmem>>, vector<1x1x1xf32>,
    return
  }
  func.func @transform_0(%arg0: i32) -> (i32, i32, i32) {
    %c0_i32 = arith.constant 0 : i32
    %c0_i32_0 = arith.constant 0 : i32
    %c0_i32_1 = arith.constant 0 : i32
    return %arg0, %c0_i32, %c0_i32_0 : i32, i32, i32
  }
  func.func @transform_1(%arg0: i32) -> (i32, i32, i32) {
    %c0_i32 = arith.constant 0 : i32
    %c0_i32_0 = arith.constant 0 : i32
    %c0_i32_1 = arith.constant 0 : i32
    %c0_i32_2 = arith.constant 0 : i32
    return %c0_i32, %c0_i32_0, %c0_i32_1 : i32, i32, i32
  }
  func.func @transform_2(%arg0: i32) -> (i32, i32, i32) {
    %c0_i32 = arith.constant 0 : i32
    %c0_i32_0 = arith.constant 0 : i32
    %c0_i32_1 = arith.constant 0 : i32
    %c0_i32_2 = arith.constant 0 : i32
    return %c0_i32, %c0_i32_0, %c0_i32_1 : i32, i32, i32
  }
  func.func @transform_3(%arg0: i32) -> (i32, i32, i32) {
    %c0_i32 = arith.constant 0 : i32
    %c0_i32_0 = arith.constant 0 : i32
    %c0_i32_1 = arith.constant 0 : i32
    %c0_i32_2 = arith.constant 0 : i32
    return %c0_i32, %c0_i32_0, %c0_i32_1 : i32, i32, i32
  }
  func.func @transform_4(%arg0: i32) -> (i32, i32, i32) {
    %c0_i32 = arith.constant 0 : i32
    %c0_i32_0 = arith.constant 0 : i32
    %c0_i32_1 = arith.constant 0 : i32
    %c0_i32_2 = arith.constant 0 : i32
    return %c0_i32, %c0_i32_0, %c0_i32_1 : i32, i32, i32
  }
  func.func @transform_5(%arg0: i32) -> (i32, i32) {
    %c0_i32 = arith.constant 0 : i32
    %c0_i32_0 = arith.constant 0 : i32
    %c0_i32_1 = arith.constant 0 : i32
    return %c0_i32, %c0_i32_0 : i32, i32
  }
  func.func @transform_6(%arg0: i32) -> (i32, i32) {
    %c0_i32 = arith.constant 0 : i32
    %c0_i32_0 = arith.constant 0 : i32
    %c0_i32_1 = arith.constant 0 : i32
    return %c0_i32, %c0_i32_0 : i32, i32
  }
  func.func @transform_7(%arg0: i32) -> (i32, i32, i32) {
    %c0_i32 = arith.constant 0 : i32
    %c0_i32_0 = arith.constant 0 : i32
    %c0_i32_1 = arith.constant 0 : i32
    %c0_i32_2 = arith.constant 0 : i32
    return %c0_i32, %c0_i32_0, %c0_i32_1 : i32, i32, i32
  }
  func.func @transform_8(%arg0: i32) -> (i32, i32, i32) {
    %c0_i32 = arith.constant 0 : i32
    %c0_i32_0 = arith.constant 0 : i32
    %c0_i32_1 = arith.constant 0 : i32
    %c0_i32_2 = arith.constant 0 : i32
    return %c0_i32, %c0_i32_0, %c0_i32_1 : i32, i32, i32
  }
  func.func @transform_9(%arg0: i32) -> (i32, i32) {
    %c0_i32 = arith.constant 0 : i32
    %c0_i32_0 = arith.constant 0 : i32
    %c0_i32_1 = arith.constant 0 : i32
    return %c0_i32, %c0_i32_0 : i32, i32
  }
  func.func @transform_10(%arg0: i32) -> (i32, i32) {
    %c0_i32 = arith.constant 0 : i32
    %c0_i32_0 = arith.constant 0 : i32
    %c0_i32_1 = arith.constant 0 : i32
    return %c0_i32, %c0_i32_0 : i32, i32
  }
  func.func @transform_11(%arg0: i32) -> (i32, i32, i32) {
    %c0_i32 = arith.constant 0 : i32
    %c0_i32_0 = arith.constant 0 : i32
    %c0_i32_1 = arith.constant 0 : i32
    %c0_i32_2 = arith.constant 0 : i32
    return %c0_i32, %c0_i32_0, %c0_i32_1 : i32, i32, i32
  }
  func.func @transform_12(%arg0: i32) -> (i32, i32, i32) {
    %c0_i32 = arith.constant 0 : i32
    %c0_i32_0 = arith.constant 0 : i32
    %c0_i32_1 = arith.constant 0 : i32
    %c0_i32_2 = arith.constant 0 : i32
    return %c0_i32, %c0_i32_0, %c0_i32_1 : i32, i32, i32
  }
  func.func @transform_13(%arg0: i32) -> (i32, i32) {
    %c0_i32 = arith.constant 0 : i32
    %c0_i32_0 = arith.constant 0 : i32
    %c0_i32_1 = arith.constant 0 : i32
    return %c0_i32, %c0_i32_0 : i32, i32
  }
  func.func @transform_14(%arg0: i32) -> (i32, i32) {
    %c0_i32 = arith.constant 0 : i32
    %c0_i32_0 = arith.constant 0 : i32
    %c0_i32_1 = arith.constant 0 : i32
    return %c0_i32, %c0_i32_0 : i32, i32
  }
  func.func @transform_15(%arg0: i32) -> (i32, i32) {
    %c0_i32 = arith.constant 0 : i32
    %c0_i32_0 = arith.constant 0 : i32
    %c0_i32_1 = arith.constant 0 : i32
    return %c0_i32, %c0_i32_0 : i32, i32
  }
  func.func @transform_16(%arg0: i32) -> (i32, i32, i32) {
    %c0_i32 = arith.constant 0 : i32
    %c0_i32_0 = arith.constant 0 : i32
    %c0_i32_1 = arith.constant 0 : i32
    return %arg0, %c0_i32, %c0_i32_0 : i32, i32, i32
  }
}

</mosaic_0001>

<llo_original>
// kernel: discriminator_forward.1
$region0: #{discriminator_forward.1}
  #allocation0 [shape = 'u32[]', space=smem, size = 0x4, offset = 0x4, fixed_abs, tag = 'smem constant byte address 0x4 - core index']
  #allocation1 [shape = 'u32[144,128]{1,0:T(1,128)}', space=vmem, size = 0x12000, scoped, tag = 'internal scratch']
  %s0 = inlined_call_operand.vmem [shape: bf16[2,64,192], index: 0, kind: input, shape index: {}]
  %s1 = inlined_call_operand.vmem [shape: bf16[4,32,64], index: 1, kind: input, shape index: {}]
  %s2 = inlined_call_operand.vmem [shape: bf16[4,192,256], index: 2, kind: input, shape index: {}]
  %s3 = inlined_call_operand.vmem [shape: bf16[4,16,32], index: 3, kind: input, shape index: {}]
  %s4 = inlined_call_operand.vmem [shape: bf16[4,256,256], index: 4, kind: input, shape index: {}]
  %s5 = inlined_call_operand.vmem [shape: f32[256,16], index: 5, kind: input, shape index: {}]
  %s6 = inlined_call_operand.vmem [shape: f32[16,256], index: 6, kind: input, shape index: {}]
  %s7 = inlined_call_operand.vmem [shape: bf16[4,8,16], index: 7, kind: input, shape index: {}]
  %s8 = inlined_call_operand.vmem [shape: bf16[4,256,256], index: 8, kind: input, shape index: {}]
  %s9 = inlined_call_operand.vmem [shape: f32[256,32], index: 9, kind: input, shape index: {}]
  %s10 = inlined_call_operand.vmem [shape: f32[32,256], index: 10, kind: input, shape index: {}]
  %s11 = inlined_call_operand.vmem [shape: bf16[4,4,8], index: 11, kind: input, shape index: {}]
  %s12 = inlined_call_operand.vmem [shape: bf16[4,256,256], index: 12, kind: input, shape index: {}]
  %s13 = inlined_call_operand.vmem [shape: f32[256,64], index: 13, kind: input, shape index: {}]
  %s14 = inlined_call_operand.vmem [shape: f32[64,256], index: 14, kind: input, shape index: {}]
  %s15 = inlined_call_operand.vmem [shape: f32[4,256], index: 15, kind: input, shape index: {}]
  %s16 = inlined_call_operand.vmem [shape: f32[2,1,1], index: 16, kind: output, shape index: {}]
  %s17 = sld [smem:[#allocation0]]
  $region97: #{discriminator_forward.1} parent=0
    _
  %s19 = ssub.s32 1, %s17
  %s20 = scalar_select 0, %s19, %s17
  loop: start=0, step=1, limit=4
  $region2: #{discriminator_forward.1} parent=0 // loop_pre_header
    _
  $region3: #{discriminator_forward.1} parent=0 // loop_header
    %s22 = sphi 0, %s26
    %p23 = scmp.ge.s32.totalorder %s22, 4
    %s32 = sphi 0, %s34
    %s35 = sphi 0, %s32
    %s36 = sphi 0, %s35
    %s52 = sphi 0, %s36
    %s56 = sphi 0, %s56
    %s58 = sphi 0, %s56
    %s59 = sphi 0, %s58
    %s73 = sphi 0, %s59
    %s77 = sphi 0, %s77
    %s79 = sphi 0, %s77
    %s80 = sphi 0, %s79
    %s94 = sphi 0, %s80
    %s98 = sphi 0, %s98
    %s100 = sphi 0, %s98
    %s101 = sphi 0, %s100
    %s115 = sphi 0, %s101
    %s119 = sphi 0, %s119
    %s121 = sphi 0, %s119
    %s122 = sphi 0, %s121
    %s136 = sphi 0, %s122
    %s140 = sphi 0, %s140
    %s142 = sphi 0, %s140
    %s143 = sphi 0, %s142
    %s157 = sphi 0, %s143
    %s161 = sphi 0, %s161
    %s163 = sphi 0, %s161
    %s164 = sphi 0, %s163
    %s178 = sphi 0, %s164
    %s182 = sphi 0, %s182
    %s184 = sphi 0, %s182
    %s185 = sphi 0, %s184
    %s199 = sphi 0, %s185
    %s203 = sphi 0, %s203
    %s205 = sphi 0, %s203
    %s206 = sphi 0, %s205
    %s220 = sphi 0, %s206
    %s224 = sphi 0, %s224
    %s226 = sphi 0, %s224
    %s227 = sphi 0, %s226
    %s241 = sphi 0, %s227
    %s245 = sphi 0, %s245
    %s247 = sphi 0, %s245
    %s248 = sphi 0, %s247
    %s262 = sphi 0, %s248
    %s266 = sphi 0, %s266
    %s268 = sphi 0, %s266
    %s269 = sphi 0, %s268
    %s283 = sphi 0, %s269
    %s287 = sphi 0, %s287
    %s289 = sphi 0, %s287
    %s290 = sphi 0, %s289
    %s304 = sphi 0, %s290
    %s308 = sphi 0, %s308
    %s310 = sphi 0, %s308
    %s311 = sphi 0, %s310
    %s325 = sphi 0, %s311
    %s329 = sphi 0, %s329
    %s331 = sphi 0, %s329
    %s332 = sphi 0, %s331
    %s346 = sphi 0, %s332
    %s350 = sphi 0, %s350
    %s352 = sphi 0, %s350
    %s353 = sphi 0, %s352
    %s367 = sphi 0, %s353
    %s373 = sphi 0, %s375
    %s376 = sphi 0, %s373
    %s377 = sphi 0, %s376
    %s393 = sphi 0, %s377
  $region4: #{discriminator_forward.1} parent=0 // loop_header_branch
    %25 = sbr.rel (%p23) target = $region8
  $region5: #{discriminator_forward.1} parent=0 // loop_body
    %s27 = ssub.s32 %s22, 1
    %s28 = ssub.s32 %s22, 2
    %s29 = sadd.s32 %s22, 1
    %s30 = ssub.s32 %s22, %s29
    %p31 = scmp.eq.s32.totalorder %s30, 0
    %s33 = sadd.s32 %s32, 1
    %s34 = scalar_select %p31, %s32, %s33
    %p37 = pneg %p31
    %p38 = scmp.eq.s32.totalorder %s22, 1
    %p39 = por %p37, %p38
    %p40 = scmp.ne.s32.totalorder %s32, %s35
    %p41 = scmp.eq.s32.totalorder %s22, 0
    %p42 = por %p40, %p41
    %p43 = scmp.ne.s32.totalorder %s32, %s35
    %p44 = scmp.eq.s32.totalorder %s27, 1
    %p45 = por %p43, %p44
    %p46 = scmp.ne.s32.totalorder %s35, %s36
    %p47 = scmp.eq.s32.totalorder %s27, 0
    %p48 = por %p46, %p47
    %p49 = scmp.ne.s32.totalorder %s35, %s36
    %p50 = scmp.eq.s32.totalorder %s28, 1
    %p51 = por %p49, %p50
    %p53 = scmp.ne.s32.totalorder %s36, %s52
    %p54 = scmp.eq.s32.totalorder %s28, 0
    %p55 = por %p53, %p54
    %s57 = sadd.s32 %s56, 1
    %p60 = scmp.eq.s32.totalorder %s22, 1
    %p61 = scmp.ne.s32.totalorder %s56, %s58
    %p62 = scmp.eq.s32.totalorder %s22, 0
    %p63 = por %p61, %p62
    %p64 = scmp.ne.s32.totalorder %s56, %s58
    %p65 = scmp.eq.s32.totalorder %s27, 1
    %p66 = por %p64, %p65
    %p67 = scmp.ne.s32.totalorder %s58, %s59
    %p68 = scmp.eq.s32.totalorder %s27, 0
    %p69 = por %p67, %p68
    %p70 = scmp.ne.s32.totalorder %s58, %s59
    %p71 = scmp.eq.s32.totalorder %s28, 1
    %p72 = por %p70, %p71
    %p74 = scmp.ne.s32.totalorder %s59, %s73
    %p75 = scmp.eq.s32.totalorder %s28, 0
    %p76 = por %p74, %p75
    %s78 = sadd.s32 %s77, 1
    %p81 = scmp.eq.s32.totalorder %s22, 1
    %p82 = scmp.ne.s32.totalorder %s77, %s79
    %p83 = scmp.eq.s32.totalorder %s22, 0
    %p84 = por %p82, %p83
    %p85 = scmp.ne.s32.totalorder %s77, %s79
    %p86 = scmp.eq.s32.totalorder %s27, 1
    %p87 = por %p85, %p86
    %p88 = scmp.ne.s32.totalorder %s79, %s80
    %p89 = scmp.eq.s32.totalorder %s27, 0
    %p90 = por %p88, %p89
    %p91 = scmp.ne.s32.totalorder %s79, %s80
    %p92 = scmp.eq.s32.totalorder %s28, 1
    %p93 = por %p91, %p92
    %p95 = scmp.ne.s32.totalorder %s80, %s94
    %p96 = scmp.eq.s32.totalorder %s28, 0
    %p97 = por %p95, %p96
    %s99 = sadd.s32 %s98, 1
    %p102 = scmp.eq.s32.totalorder %s22, 1
    %p103 = scmp.ne.s32.totalorder %s98, %s100
    %p104 = scmp.eq.s32.totalorder %s22, 0
    %p105 = por %p103, %p104
    %p106 = scmp.ne.s32.totalorder %s98, %s100
    %p107 = scmp.eq.s32.totalorder %s27, 1
    %p108 = por %p106, %p107
    %p109 = scmp.ne.s32.totalorder %s100, %s101
    %p110 = scmp.eq.s32.totalorder %s27, 0
    %p111 = por %p109, %p110
    %p112 = scmp.ne.s32.totalorder %s100, %s101
    %p113 = scmp.eq.s32.totalorder %s28, 1
    %p114 = por %p112, %p113
    %p116 = scmp.ne.s32.totalorder %s101, %s115
    %p117 = scmp.eq.s32.totalorder %s28, 0
    %p118 = por %p116, %p117
    %s120 = sadd.s32 %s119, 1
    %p123 = scmp.eq.s32.totalorder %s22, 1
    %p124 = scmp.ne.s32.totalorder %s119, %s121
    %p125 = scmp.eq.s32.totalorder %s22, 0
    %p126 = por %p124, %p125
    %p127 = scmp.ne.s32.totalorder %s119, %s121
    %p128 = scmp.eq.s32.totalorder %s27, 1
    %p129 = por %p127, %p128
    %p130 = scmp.ne.s32.totalorder %s121, %s122
    %p131 = scmp.eq.s32.totalorder %s27, 0
    %p132 = por %p130, %p131
    %p133 = scmp.ne.s32.totalorder %s121, %s122
    %p134 = scmp.eq.s32.totalorder %s28, 1
    %p135 = por %p133, %p134
    %p137 = scmp.ne.s32.totalorder %s122, %s136
    %p138 = scmp.eq.s32.totalorder %s28, 0
    %p139 = por %p137, %p138
    %s141 = sadd.s32 %s140, 1
    %p144 = scmp.eq.s32.totalorder %s22, 1
    %p145 = scmp.ne.s32.totalorder %s140, %s142
    %p146 = scmp.eq.s32.totalorder %s22, 0
    %p147 = por %p145, %p146
    %p148 = scmp.ne.s32.totalorder %s140, %s142
    %p149 = scmp.eq.s32.totalorder %s27, 1
    %p150 = por %p148, %p149
    %p151 = scmp.ne.s32.totalorder %s142, %s143
    %p152 = scmp.eq.s32.totalorder %s27, 0
    %p153 = por %p151, %p152
    %p154 = scmp.ne.s32.totalorder %s142, %s143
    %p155 = scmp.eq.s32.totalorder %s28, 1
    %p156 = por %p154, %p155
    %p158 = scmp.ne.s32.totalorder %s143, %s157
    %p159 = scmp.eq.s32.totalorder %s28, 0
    %p160 = por %p158, %p159
    %s162 = sadd.s32 %s161, 1
    %p165 = scmp.eq.s32.totalorder %s22, 1
    %p166 = scmp.ne.s32.totalorder %s161, %s163
    %p167 = scmp.eq.s32.totalorder %s22, 0
    %p168 = por %p166, %p167
    %p169 = scmp.ne.s32.totalorder %s161, %s163
    %p170 = scmp.eq.s32.totalorder %s27, 1
    %p171 = por %p169, %p170
    %p172 = scmp.ne.s32.totalorder %s163, %s164
    %p173 = scmp.eq.s32.totalorder %s27, 0
    %p174 = por %p172, %p173
    %p175 = scmp.ne.s32.totalorder %s163, %s164
    %p176 = scmp.eq.s32.totalorder %s28, 1
    %p177 = por %p175, %p176
    %p179 = scmp.ne.s32.totalorder %s164, %s178
    %p180 = scmp.eq.s32.totalorder %s28, 0
    %p181 = por %p179, %p180
    %s183 = sadd.s32 %s182, 1
    %p186 = scmp.eq.s32.totalorder %s22, 1
    %p187 = scmp.ne.s32.totalorder %s182, %s184
    %p188 = scmp.eq.s32.totalorder %s22, 0
    %p189 = por %p187, %p188
    %p190 = scmp.ne.s32.totalorder %s182, %s184
    %p191 = scmp.eq.s32.totalorder %s27, 1
    %p192 = por %p190, %p191
    %p193 = scmp.ne.s32.totalorder %s184, %s185
    %p194 = scmp.eq.s32.totalorder %s27, 0
    %p195 = por %p193, %p194
    %p196 = scmp.ne.s32.totalorder %s184, %s185
    %p197 = scmp.eq.s32.totalorder %s28, 1
    %p198 = por %p196, %p197
    %p200 = scmp.ne.s32.totalorder %s185, %s199
    %p201 = scmp.eq.s32.totalorder %s28, 0
    %p202 = por %p200, %p201
    %s204 = sadd.s32 %s203, 1
    %p207 = scmp.eq.s32.totalorder %s22, 1
    %p208 = scmp.ne.s32.totalorder %s203, %s205
    %p209 = scmp.eq.s32.totalorder %s22, 0
    %p210 = por %p208, %p209
    %p211 = scmp.ne.s32.totalorder %s203, %s205
    %p212 = scmp.eq.s32.totalorder %s27, 1
    %p213 = por %p211, %p212
    %p214 = scmp.ne.s32.totalorder %s205, %s206
    %p215 = scmp.eq.s32.totalorder %s27, 0
    %p216 = por %p214, %p215
    %p217 = scmp.ne.s32.totalorder %s205, %s206
    %p218 = scmp.eq.s32.totalorder %s28, 1
    %p219 = por %p217, %p218
    %p221 = scmp.ne.s32.totalorder %s206, %s220
    %p222 = scmp.eq.s32.totalorder %s28, 0
    %p223 = por %p221, %p222
    %s225 = sadd.s32 %s224, 1
    %p228 = scmp.eq.s32.totalorder %s22, 1
    %p229 = scmp.ne.s32.totalorder %s224, %s226
    %p230 = scmp.eq.s32.totalorder %s22, 0
    %p231 = por %p229, %p230
    %p232 = scmp.ne.s32.totalorder %s224, %s226
    %p233 = scmp.eq.s32.totalorder %s27, 1
    %p234 = por %p232, %p233
    %p235 = scmp.ne.s32.totalorder %s226, %s227
    %p236 = scmp.eq.s32.totalorder %s27, 0
    %p237 = por %p235, %p236
    %p238 = scmp.ne.s32.totalorder %s226, %s227
    %p239 = scmp.eq.s32.totalorder %s28, 1
    %p240 = por %p238, %p239
    %p242 = scmp.ne.s32.totalorder %s227, %s241
    %p243 = scmp.eq.s32.totalorder %s28, 0
    %p244 = por %p242, %p243
    %s246 = sadd.s32 %s245, 1
    %p249 = scmp.eq.s32.totalorder %s22, 1
    %p250 = scmp.ne.s32.totalorder %s245, %s247
    %p251 = scmp.eq.s32.totalorder %s22, 0
    %p252 = por %p250, %p251
    %p253 = scmp.ne.s32.totalorder %s245, %s247
    %p254 = scmp.eq.s32.totalorder %s27, 1
    %p255 = por %p253, %p254
    %p256 = scmp.ne.s32.totalorder %s247, %s248
    %p257 = scmp.eq.s32.totalorder %s27, 0
    %p258 = por %p256, %p257
    %p259 = scmp.ne.s32.totalorder %s247, %s248
    %p260 = scmp.eq.s32.totalorder %s28, 1
    %p261 = por %p259, %p260
    %p263 = scmp.ne.s32.totalorder %s248, %s262
    %p264 = scmp.eq.s32.totalorder %s28, 0
    %p265 = por %p263, %p264
    %s267 = sadd.s32 %s266, 1
    %p270 = scmp.eq.s32.totalorder %s22, 1
    %p271 = scmp.ne.s32.totalorder %s266, %s268
    %p272 = scmp.eq.s32.totalorder %s22, 0
    %p273 = por %p271, %p272
    %p274 = scmp.ne.s32.totalorder %s266, %s268
    %p275 = scmp.eq.s32.totalorder %s27, 1
    %p276 = por %p274, %p275
    %p277 = scmp.ne.s32.totalorder %s268, %s269
    %p278 = scmp.eq.s32.totalorder %s27, 0
    %p279 = por %p277, %p278
    %p280 = scmp.ne.s32.totalorder %s268, %s269
    %p281 = scmp.eq.s32.totalorder %s28, 1
    %p282 = por %p280, %p281
    %p284 = scmp.ne.s32.totalorder %s269, %s283
    %p285 = scmp.eq.s32.totalorder %s28, 0
    %p286 = por %p284, %p285
    %s288 = sadd.s32 %s287, 1
    %p291 = scmp.eq.s32.totalorder %s22, 1
    %p292 = scmp.ne.s32.totalorder %s287, %s289
    %p293 = scmp.eq.s32.totalorder %s22, 0
    %p294 = por %p292, %p293
    %p295 = scmp.ne.s32.totalorder %s287, %s289
    %p296 = scmp.eq.s32.totalorder %s27, 1
    %p297 = por %p295, %p296
    %p298 = scmp.ne.s32.totalorder %s289, %s290
    %p299 = scmp.eq.s32.totalorder %s27, 0
    %p300 = por %p298, %p299
    %p301 = scmp.ne.s32.totalorder %s289, %s290
    %p302 = scmp.eq.s32.totalorder %s28, 1
    %p303 = por %p301, %p302
    %p305 = scmp.ne.s32.totalorder %s290, %s304
    %p306 = scmp.eq.s32.totalorder %s28, 0
    %p307 = por %p305, %p306
    %s309 = sadd.s32 %s308, 1
    %p312 = scmp.eq.s32.totalorder %s22, 1
    %p313 = scmp.ne.s32.totalorder %s308, %s310
    %p314 = scmp.eq.s32.totalorder %s22, 0
    %p315 = por %p313, %p314
    %p316 = scmp.ne.s32.totalorder %s308, %s310
    %p317 = scmp.eq.s32.totalorder %s27, 1
    %p318 = por %p316, %p317
    %p319 = scmp.ne.s32.totalorder %s310, %s311
    %p320 = scmp.eq.s32.totalorder %s27, 0
    %p321 = por %p319, %p320
    %p322 = scmp.ne.s32.totalorder %s310, %s311
    %p323 = scmp.eq.s32.totalorder %s28, 1
    %p324 = por %p322, %p323
    %p326 = scmp.ne.s32.totalorder %s311, %s325
    %p327 = scmp.eq.s32.totalorder %s28, 0
    %p328 = por %p326, %p327
    %s330 = sadd.s32 %s329, 1
    %p333 = scmp.eq.s32.totalorder %s22, 1
    %p334 = scmp.ne.s32.totalorder %s329, %s331
    %p335 = scmp.eq.s32.totalorder %s22, 0
    %p336 = por %p334, %p335
    %p337 = scmp.ne.s32.totalorder %s329, %s331
    %p338 = scmp.eq.s32.totalorder %s27, 1
    %p339 = por %p337, %p338
    %p340 = scmp.ne.s32.totalorder %s331, %s332
    %p341 = scmp.eq.s32.totalorder %s27, 0
    %p342 = por %p340, %p341
    %p343 = scmp.ne.s32.totalorder %s331, %s332
    %p344 = scmp.eq.s32.totalorder %s28, 1
    %p345 = por %p343, %p344
    %p347 = scmp.ne.s32.totalorder %s332, %s346
    %p348 = scmp.eq.s32.totalorder %s28, 0
    %p349 = por %p347, %p348
    %s351 = sadd.s32 %s350, 1
    %p354 = scmp.eq.s32.totalorder %s22, 1
    %p355 = scmp.ne.s32.totalorder %s350, %s352
    %p356 = scmp.eq.s32.totalorder %s22, 0
    %p357 = por %p355, %p356
    %p358 = scmp.ne.s32.totalorder %s350, %s352
    %p359 = scmp.eq.s32.totalorder %s27, 1
    %p360 = por %p358, %p359
    %p361 = scmp.ne.s32.totalorder %s352, %s353
    %p362 = scmp.eq.s32.totalorder %s27, 0
    %p363 = por %p361, %p362
    %p364 = scmp.ne.s32.totalorder %s352, %s353
    %p365 = scmp.eq.s32.totalorder %s28, 1
    %p366 = por %p364, %p365
    %p368 = scmp.ne.s32.totalorder %s353, %s367
    %p369 = scmp.eq.s32.totalorder %s28, 0
    %p370 = por %p368, %p369
    %s371 = ssub.s32 %s22, %s29
    %p372 = scmp.eq.s32.totalorder %s371, 0
    %s374 = sadd.s32 %s373, 1
    %s375 = scalar_select %p372, %s373, %s374
    %p378 = pneg %p372
    %p379 = scmp.eq.s32.totalorder %s22, 1
    %p380 = por %p378, %p379
    %p381 = scmp.ne.s32.totalorder %s373, %s376
    %p382 = scmp.eq.s32.totalorder %s22, 0
    %p383 = por %p381, %p382
    %p384 = scmp.ne.s32.totalorder %s373, %s376
    %p385 = scmp.eq.s32.totalorder %s27, 1
    %p386 = por %p384, %p385
    %p387 = scmp.ne.s32.totalorder %s376, %s377
    %p388 = scmp.eq.s32.totalorder %s27, 0
    %p389 = por %p387, %p388
    %p390 = scmp.ne.s32.totalorder %s376, %s377
    %p391 = scmp.eq.s32.totalorder %s28, 1
    %p392 = por %p390, %p391
    %p394 = scmp.ne.s32.totalorder %s377, %s393
    %p395 = scmp.eq.s32.totalorder %s28, 0
    %p396 = por %p394, %p395
    %p397 = scmp.le.s32.totalorder 1, %s22
    %p398 = scmp.lt.s32.totalorder %s22, 3
    %p399 = pnand %p397, %p398
    %p400 = pneg %p399
    // Predicated region
    $region9: #{discriminator_forward.1} parent=5 // pred_check
      _
    $region10: #{discriminator_forward.1} parent=5 // pred_check_branch
      %402 = sbr.rel (%p399) target = $region12
    $region11: #{discriminator_forward.1} parent=5 // pred_region
      %s403 = ssub.s32 %s22, 1
      // Predicated region
      $region13: #{discriminator_forward.1} parent=11 // pred_check
        %p404 = pneg %p69
      $region14: #{discriminator_forward.1} parent=11 // pred_check_branch
        %406 = sbr.rel (%p404) target = $region16
      $region15: #{discriminator_forward.1} parent=11 // pred_region
        _
      $region16: #{discriminator_forward.1} parent=11 // pred_fallthru
        _
      // Predicated region
      $region17: #{discriminator_forward.1} parent=11 // pred_check
        %p407 = pneg %p90
      $region18: #{discriminator_forward.1} parent=11 // pred_check_branch
        %409 = sbr.rel (%p407) target = $region20
      $region19: #{discriminator_forward.1} parent=11 // pred_region
        _
      $region20: #{discriminator_forward.1} parent=11 // pred_fallthru
        _
      // Predicated region
      $region21: #{discriminator_forward.1} parent=11 // pred_check
        %p410 = pneg %p111
      $region22: #{discriminator_forward.1} parent=11 // pred_check_branch
        %412 = sbr.rel (%p410) target = $region24
      $region23: #{discriminator_forward.1} parent=11 // pred_region
        _
      $region24: #{discriminator_forward.1} parent=11 // pred_fallthru
        _
      // Predicated region
      $region25: #{discriminator_forward.1} parent=11 // pred_check
        %p413 = pneg %p132
      $region26: #{discriminator_forward.1} parent=11 // pred_check_branch
        %415 = sbr.rel (%p413) target = $region28
      $region27: #{discriminator_forward.1} parent=11 // pred_region
        _
      $region28: #{discriminator_forward.1} parent=11 // pred_fallthru
        _
      // Predicated region
      $region29: #{discriminator_forward.1} parent=11 // pred_check
        %p416 = pneg %p153
      $region30: #{discriminator_forward.1} parent=11 // pred_check_branch
        %418 = sbr.rel (%p416) target = $region32
      $region31: #{discriminator_forward.1} parent=11 // pred_region
        _
      $region32: #{discriminator_forward.1} parent=11 // pred_fallthru
        _
      // Predicated region
      $region33: #{discriminator_forward.1} parent=11 // pred_check
        %p419 = pneg %p174
      $region34: #{discriminator_forward.1} parent=11 // pred_check_branch
        %421 = sbr.rel (%p419) target = $region36
      $region35: #{discriminator_forward.1} parent=11 // pred_region
        _
      $region36: #{discriminator_forward.1} parent=11 // pred_fallthru
        _
      // Predicated region
      $region37: #{discriminator_forward.1} parent=11 // pred_check
        %p422 = pneg %p195
      $region38: #{discriminator_forward.1} parent=11 // pred_check_branch
        %424 = sbr.rel (%p422) target = $region40
      $region39: #{discriminator_forward.1} parent=11 // pred_region
        _
      $region40: #{discriminator_forward.1} parent=11 // pred_fallthru
        _
      // Predicated region
      $region41: #{discriminator_forward.1} parent=11 // pred_check
        %p425 = pneg %p216
      $region42: #{discriminator_forward.1} parent=11 // pred_check_branch
        %427 = sbr.rel (%p425) target = $region44
      $region43: #{discriminator_forward.1} parent=11 // pred_region
        _
      $region44: #{discriminator_forward.1} parent=11 // pred_fallthru
        _
      // Predicated region
      $region45: #{discriminator_forward.1} parent=11 // pred_check
        %p428 = pneg %p237
      $region46: #{discriminator_forward.1} parent=11 // pred_check_branch
        %430 = sbr.rel (%p428) target = $region48
      $region47: #{discriminator_forward.1} parent=11 // pred_region
        _
      $region48: #{discriminator_forward.1} parent=11 // pred_fallthru
        _
      // Predicated region
      $region49: #{discriminator_forward.1} parent=11 // pred_check
        %p431 = pneg %p258
      $region50: #{discriminator_forward.1} parent=11 // pred_check_branch
        %433 = sbr.rel (%p431) target = $region52
      $region51: #{discriminator_forward.1} parent=11 // pred_region
        _
      $region52: #{discriminator_forward.1} parent=11 // pred_fallthru
        _
      // Predicated region
      $region53: #{discriminator_forward.1} parent=11 // pred_check
        %p434 = pneg %p279
      $region54: #{discriminator_forward.1} parent=11 // pred_check_branch
        %436 = sbr.rel (%p434) target = $region56
      $region55: #{discriminator_forward.1} parent=11 // pred_region
        _
      $region56: #{discriminator_forward.1} parent=11 // pred_fallthru
        _
      // Predicated region
      $region57: #{discriminator_forward.1} parent=11 // pred_check
        %p437 = pneg %p300
      $region58: #{discriminator_forward.1} parent=11 // pred_check_branch
        %439 = sbr.rel (%p437) target = $region60
      $region59: #{discriminator_forward.1} parent=11 // pred_region
        _
      $region60: #{discriminator_forward.1} parent=11 // pred_fallthru
        _
      // Predicated region
      $region61: #{discriminator_forward.1} parent=11 // pred_check
        %p440 = pneg %p321
      $region62: #{discriminator_forward.1} parent=11 // pred_check_branch
        %442 = sbr.rel (%p440) target = $region64
      $region63: #{discriminator_forward.1} parent=11 // pred_region
        _
      $region64: #{discriminator_forward.1} parent=11 // pred_fallthru
        _
      // Predicated region
      $region65: #{discriminator_forward.1} parent=11 // pred_check
        %p443 = pneg %p342
      $region66: #{discriminator_forward.1} parent=11 // pred_check_branch
        %445 = sbr.rel (%p443) target = $region68
      $region67: #{discriminator_forward.1} parent=11 // pred_region
        _
      $region68: #{discriminator_forward.1} parent=11 // pred_fallthru
        _
      // Predicated region
      $region69: #{discriminator_forward.1} parent=11 // pred_check
        %p446 = pneg %p363
      $region70: #{discriminator_forward.1} parent=11 // pred_check_branch
        %448 = sbr.rel (%p446) target = $region72
      $region71: #{discriminator_forward.1} parent=11 // pred_region
        _
      $region72: #{discriminator_forward.1} parent=11 // pred_fallthru
        _
    $region12: #{discriminator_forward.1} parent=5 // pred_fallthru
      _
    %p449 = scmp.lt.s32.totalorder %s22, 2
    // Predicated region
    $region73: #{discriminator_forward.1} parent=5 // pred_check
      %p450 = pneg %p449
    $region74: #{discriminator_forward.1} parent=5 // pred_check_branch
      %452 = sbr.rel (%p450) target = $region76
    $region75: #{discriminator_forward.1} parent=5 // pred_region
      // Predicated region
      $region77: #{discriminator_forward.1} parent=75 // pred_check
        %p453 = pneg %p42
      $region78: #{discriminator_forward.1} parent=75 // pred_check_branch
        %455 = sbr.rel (%p453) target = $region80
      $region79: #{discriminator_forward.1} parent=75 // pred_region
        %p456 = scmp.lt.s32.totalorder %s22, 1
        %s457 = scalar_select %p456, %s22, 1
        %s458 = smul.addr %s457, 16
        %s459 = smul.addr %s458, 4
        %s460 = scalar_lea.vmem %s0, %s459
      $region80: #{discriminator_forward.1} parent=75 // pred_fallthru
        _
    $region76: #{discriminator_forward.1} parent=5 // pred_fallthru
      _
    %p461 = scmp.le.s32.totalorder 1, %s22
    %p462 = scmp.lt.s32.totalorder %s22, 3
    %p463 = pnand %p461, %p462
    %p464 = pneg %p463
    // Predicated region
    $region81: #{discriminator_forward.1} parent=5 // pred_check
      _
    $region82: #{discriminator_forward.1} parent=5 // pred_check_branch
      %466 = sbr.rel (%p463) target = $region84
    $region83: #{discriminator_forward.1} parent=5 // pred_region
      %s467 = ssub.s32 %s22, 1
      %p468 = scmp.lt.s32.totalorder %s27, 1
      %s469 = scalar_select %p468, %s27, 1
      %s470 = smul.addr %s469, 16
      %s471 = smul.addr %s470, 4
      %s472 = scalar_lea.vmem %s0, %s471
      %p473 = pneg %p48
      %p474 = pneg %p45
      %p475 = pneg %p69
      %p476 = pneg %p66
      %p477 = pneg %p90
      %p478 = pneg %p87
      %p479 = pneg %p111
      %p480 = pneg %p108
      %p481 = pneg %p132
      %p482 = pneg %p129
      %p483 = pneg %p153
      %p484 = pneg %p150
      %p485 = pneg %p174
      %p486 = pneg %p171
      %p487 = pneg %p195
      %p488 = pneg %p192
      %p489 = pneg %p216
      %p490 = pneg %p213
      %p491 = pneg %p237
      %p492 = pneg %p234
      %p493 = pneg %p258
      %p494 = pneg %p255
      %p495 = pneg %p279
      %p496 = pneg %p276
      %p497 = pneg %p300
      %p498 = pneg %p297
      %p499 = pneg %p321
      %p500 = pneg %p318
      %p501 = pneg %p342
      %p502 = pneg %p339
      %p503 = pneg %p363
      %p504 = pneg %p360
      %p505 = pneg %p389
      %p506 = pneg %p386
      %p507 = scmp.lt.s32.totalorder %s27, 1
      %s508 = scalar_select %p507, %s27, 1
      %s509 = scalar_lea.vmem %s16, %s508
      %p510 = scmp.lt.s32.totalorder %s27, 1
      %s511 = scalar_select %p510, %s27, 1
      %s512 = smul.addr %s511, 16
      %s513 = smul.addr %s512, 4
      %s514 = scalar_lea.vmem %s0, %s513
      %p515 = scmp.lt.s32.totalorder %s27, 1
      %s516 = scalar_select %p515, %s27, 1
      %s517 = scalar_lea.vmem %s16, %s516
      %v519 = vld [vmem:[%s514] sm:$0xff]
      %v520 = vld [vmem:[%s514 + $0x8] sm:$0xff]
      %v521 = vld [vmem:[%s514 + $0x10] sm:$0xff]
      %v522 = vld [vmem:[%s514 + $0x18] sm:$0xff]
      %v523 = vld [vmem:[%s514 + $0x20] sm:$0xff]
      %v524 = vld [vmem:[%s514 + $0x28] sm:$0xff]
      %v525 = vld [vmem:[%s514 + $0x30] sm:$0xff]
      %v526 = vld [vmem:[%s514 + $0x38] sm:$0xff]
      %v527 = vld [vmem:[%s1] sm:$0xf]
      %v528 = vld [vmem:[%s1 + $0x4] sm:$0xf]
      %v529 = vld [vmem:[%s1 + $0x8] sm:$0xf]
      %v530 = vld [vmem:[%s1 + $0xc] sm:$0xf]
      %v535 = vunpack.c.l.b16 %v527
      %v536 = vunpack.c.l.b16 %v528
      %v537 = vunpack.c.l.b16 %v529
      %v538 = vunpack.c.l.b16 %v530
      %v539 = vpack.c.b16 %v536, %v535
      %v540 = vpack.c.b16 %v538, %v537
      %v549 = vunpack.c.l.b16 %v519
      %v550 = vunpack.c.h.b16 %v519
      %v551 = vunpack.c.l.b16 %v520
      %v552 = vunpack.c.h.b16 %v520
      %v553 = vunpack.c.l.b16 %v521
      %v554 = vunpack.c.h.b16 %v521
      %v555 = vunpack.c.l.b16 %v522
      %v556 = vunpack.c.h.b16 %v522
      %v557 = vunpack.c.l.b16 %v523
      %v558 = vunpack.c.h.b16 %v523
      %v559 = vunpack.c.l.b16 %v524
      %v560 = vunpack.c.h.b16 %v524
      %v561 = vunpack.c.l.b16 %v525
      %v562 = vunpack.c.h.b16 %v525
      %v563 = vunpack.c.l.b16 %v526
      %v564 = vunpack.c.h.b16 %v526
      %v565 = vpack.c.b16 %v551, %v549
      %v566 = vpack.c.b16 %v552, %v550
      %v567 = vpack.c.b16 %v555, %v553
      %v568 = vpack.c.b16 %v556, %v554
      %v569 = vpack.c.b16 %v559, %v557
      %v570 = vpack.c.b16 %v560, %v558
      %v571 = vpack.c.b16 %v563, %v561
      %v572 = vpack.c.b16 %v564, %v562
      %vm581 = vcmask 523264
      %v583 = vsel %vm581, %v539, 0
      %v586 = vsel %vm581, %v540, 0
      %588 = vmatprep.subr.bf16.mxu0 %v566
      %589 = vmatpush1.bf16.msra.mxu0 %v565
      %590 = vmatprep.subr.bf16.mxu0 %v568
      %591 = vmatpush1.bf16.msra.mxu0 %v567
      %592 = vmatprep.subr.bf16.mxu0 %v570
      %593 = vmatpush1.bf16.msra.mxu0 %v569
      %594 = vmatprep.subr.bf16.mxu0 %v572
      %595 = vmatpush1.bf16.msra.mxu0 %v571
      %596 = vmatprep.subr.bf16.mxu0 0
      %597 = vmatpush1.bf16.msra.mxu0 0
      %598 = vmatprep.subr.bf16.mxu0 0
      %599 = vmatpush1.bf16.msra.mxu0 0
      %600 = vmatprep.subr.bf16.mxu0 0
      %601 = vmatpush1.bf16.msra.mxu0 0
      %602 = vmatprep.subr.bf16.mxu0 0
      %603 = vmatpush1.bf16.msra.mxu0 0
      %604 = vmatprep.subr.bf16.mxu0 0
      %605 = vmatpush1.bf16.msra.mxu0 0
      %606 = vmatprep.subr.bf16.mxu0 0
      %607 = vmatpush1.bf16.msra.mxu0 0
      %608 = vmatprep.subr.bf16.mxu0 0
      %609 = vmatpush1.bf16.msra.mxu0 0
      %610 = vmatprep.subr.bf16.mxu0 0
      %611 = vmatpush1.bf16.msra.mxu0 0
      %612 = vmatprep.subr.bf16.mxu0 0
      %613 = vmatpush1.bf16.msra.mxu0 0
      %614 = vmatprep.subr.bf16.mxu0 0
      %615 = vmatpush1.bf16.msra.mxu0 0
      %616 = vmatprep.subr.bf16.mxu0 0
      %617 = vmatpush1.bf16.msra.mxu0 0
      %618 = vmatprep.subr.bf16.mxu0 0
      %619 = vmatpush1.bf16.msra.mxu0 0
      %620 = vmatprep.mubr.bf16.mxu0 0
      %621 = vmatmul.mubr.bf16.gmra.mrb[0].mxu0 %v583
      %v622 = vpop.f32.mrb[0].mxu0
      %v623 = vadd.f32 0.0, %v622
      %v624 = vpop.f32.mrb[0].mxu0
      %v625 = vadd.f32 0.0, %v624
      %v626 = vpop.f32.mrb[0].mxu0
      %v627 = vadd.f32 0.0, %v626
      %v628 = vpop.f32.mrb[0].mxu0
      %v629 = vadd.f32 0.0, %v628
      %630 = vmatprep.mubr.bf16.mxu0 0
      %631 = vmatmul.mubr.bf16.gmra.mrb[0].mxu0 %v586
      %v632 = vpop.f32.mrb[0].mxu0
      %v633 = vadd.f32 0.0, %v632
      %v634 = vpop.f32.mrb[0].mxu0
      %v635 = vadd.f32 0.0, %v634
      %v636 = vpop.f32.mrb[0].mxu0
      %v637 = vadd.f32 0.0, %v636
      %v638 = vpop.f32.mrb[0].mxu0
      %v639 = vadd.f32 0.0, %v638
      %640 = vdwg.mxu0
      %v641 = vpack.c.bf16 %v627, %v623
      %v642 = vpack.c.bf16 %v629, %v625
      %v643 = vpack.c.bf16 %v637, %v633
      %v644 = vpack.c.bf16 %v639, %v635
      %v645 = vld [vmem:[%s2] sm:$0xff]
      %v646 = vld [vmem:[%s2 + $0x8] sm:$0xff]
      %v647 = vld [vmem:[%s2 + $0x10] sm:$0xff]
      %v648 = vld [vmem:[%s2 + $0x18] sm:$0xff]
      %v649 = vld [vmem:[%s2 + $0x20] sm:$0xff]
      %v650 = vld [vmem:[%s2 + $0x28] sm:$0xff]
      %v651 = vld [vmem:[%s2 + $0x30] sm:$0xff]
      %v652 = vld [vmem:[%s2 + $0x38] sm:$0xff]
      %v653 = vld [vmem:[%s2 + $0x40] sm:$0xff]
      %v654 = vld [vmem:[%s2 + $0x48] sm:$0xff]
      %v655 = vld [vmem:[%s2 + $0x50] sm:$0xff]
      %v656 = vld [vmem:[%s2 + $0x58] sm:$0xff]
      %v657 = vld [vmem:[%s2 + $0x60] sm:$0xff]
      %v658 = vld [vmem:[%s2 + $0x68] sm:$0xff]
      %v659 = vld [vmem:[%s2 + $0x70] sm:$0xff]
      %v660 = vld [vmem:[%s2 + $0x78] sm:$0xff]
      %v661 = vld [vmem:[%s2 + $0x80] sm:$0xff]
      %v662 = vld [vmem:[%s2 + $0x88] sm:$0xff]
      %v663 = vld [vmem:[%s2 + $0x90] sm:$0xff]
      %v664 = vld [vmem:[%s2 + $0x98] sm:$0xff]
      %v665 = vld [vmem:[%s2 + $0xa0] sm:$0xff]
      %v666 = vld [vmem:[%s2 + $0xa8] sm:$0xff]
      %v667 = vld [vmem:[%s2 + $0xb0] sm:$0xff]
      %v668 = vld [vmem:[%s2 + $0xb8] sm:$0xff]
      %s669 = scalar_lea.vmem %s1, 16
      %v670 = vld [vmem:[%s669] sm:$0xf]
      %v671 = vld [vmem:[%s669 + $0x4] sm:$0xf]
      %v672 = vld [vmem:[%s669 + $0x8] sm:$0xf]
      %v673 = vld [vmem:[%s669 + $0xc] sm:$0xf]
      %v678 = vunpack.c.l.b16 %v670
      %v679 = vunpack.c.l.b16 %v671
      %v680 = vunpack.c.l.b16 %v672
      %v681 = vunpack.c.l.b16 %v673
      %v682 = vpack.c.b16 %v679, %v678
      %v683 = vpack.c.b16 %v681, %v680
      %v685 = vsel %vm581, %v682, 0
      %v688 = vsel %vm581, %v683, 0
      %690 = vmatprep.subr.bf16.mxu0 %v566
      %691 = vmatpush1.bf16.msra.mxu0 %v565
      %692 = vmatprep.subr.bf16.mxu0 %v568
      %693 = vmatpush1.bf16.msra.mxu0 %v567
      %694 = vmatprep.subr.bf16.mxu0 %v570
      %695 = vmatpush1.bf16.msra.mxu0 %v569
      %696 = vmatprep.subr.bf16.mxu0 %v572
      %697 = vmatpush1.bf16.msra.mxu0 %v571
      %698 = vmatprep.subr.bf16.mxu0 0
      %699 = vmatpush1.bf16.msra.mxu0 0
      %700 = vmatprep.subr.bf16.mxu0 0
      %701 = vmatpush1.bf16.msra.mxu0 0
      %702 = vmatprep.subr.bf16.mxu0 0
      %703 = vmatpush1.bf16.msra.mxu0 0
      %704 = vmatprep.subr.bf16.mxu0 0
      %705 = vmatpush1.bf16.msra.mxu0 0
      %706 = vmatprep.subr.bf16.mxu0 0
      %707 = vmatpush1.bf16.msra.mxu0 0
      %708 = vmatprep.subr.bf16.mxu0 0
      %709 = vmatpush1.bf16.msra.mxu0 0
      %710 = vmatprep.subr.bf16.mxu0 0
      %711 = vmatpush1.bf16.msra.mxu0 0
      %712 = vmatprep.subr.bf16.mxu0 0
      %713 = vmatpush1.bf16.msra.mxu0 0
      %714 = vmatprep.subr.bf16.mxu0 0
      %715 = vmatpush1.bf16.msra.mxu0 0
      %716 = vmatprep.subr.bf16.mxu0 0
      %717 = vmatpush1.bf16.msra.mxu0 0
      %718 = vmatprep.subr.bf16.mxu0 0
      %719 = vmatpush1.bf16.msra.mxu0 0
      %720 = vmatprep.subr.bf16.mxu0 0
      %721 = vmatpush1.bf16.msra.mxu0 0
      %722 = vmatprep.mubr.bf16.mxu0 0
      %723 = vmatmul.mubr.bf16.gmra.mrb[0].mxu0 %v685
      %v724 = vpop.f32.mrb[0].mxu0
      %v725 = vadd.f32 0.0, %v724
      %v726 = vpop.f32.mrb[0].mxu0
      %v727 = vadd.f32 0.0, %v726
      %v728 = vpop.f32.mrb[0].mxu0
      %v729 = vadd.f32 0.0, %v728
      %v730 = vpop.f32.mrb[0].mxu0
      %v731 = vadd.f32 0.0, %v730
      %732 = vmatprep.mubr.bf16.mxu0 0
      %733 = vmatmul.mubr.bf16.gmra.mrb[0].mxu0 %v688
      %v734 = vpop.f32.mrb[0].mxu0
      %v735 = vadd.f32 0.0, %v734
      %v736 = vpop.f32.mrb[0].mxu0
      %v737 = vadd.f32 0.0, %v736
      %v738 = vpop.f32.mrb[0].mxu0
      %v739 = vadd.f32 0.0, %v738
      %v740 = vpop.f32.mrb[0].mxu0
      %v741 = vadd.f32 0.0, %v740
      %742 = vdwg.mxu0
      %v743 = vpack.c.bf16 %v729, %v725
      %v744 = vpack.c.bf16 %v731, %v727
      %v745 = vpack.c.bf16 %v739, %v735
      %v746 = vpack.c.bf16 %v741, %v737
      %s747 = scalar_lea.vmem %s2, 192
      %v748 = vld [vmem:[%s747] sm:$0xff]
      %v749 = vld [vmem:[%s747 + $0x8] sm:$0xff]
      %v750 = vld [vmem:[%s747 + $0x10] sm:$0xff]
      %v751 = vld [vmem:[%s747 + $0x18] sm:$0xff]
      %v752 = vld [vmem:[%s747 + $0x20] sm:$0xff]
      %v753 = vld [vmem:[%s747 + $0x28] sm:$0xff]
      %v754 = vld [vmem:[%s747 + $0x30] sm:$0xff]
      %v755 = vld [vmem:[%s747 + $0x38] sm:$0xff]
      %v756 = vld [vmem:[%s747 + $0x40] sm:$0xff]
      %v757 = vld [vmem:[%s747 + $0x48] sm:$0xff]
      %v758 = vld [vmem:[%s747 + $0x50] sm:$0xff]
      %v759 = vld [vmem:[%s747 + $0x58] sm:$0xff]
      %v760 = vld [vmem:[%s747 + $0x60] sm:$0xff]
      %v761 = vld [vmem:[%s747 + $0x68] sm:$0xff]
      %v762 = vld [vmem:[%s747 + $0x70] sm:$0xff]
      %v763 = vld [vmem:[%s747 + $0x78] sm:$0xff]
      %v764 = vld [vmem:[%s747 + $0x80] sm:$0xff]
      %v765 = vld [vmem:[%s747 + $0x88] sm:$0xff]
      %v766 = vld [vmem:[%s747 + $0x90] sm:$0xff]
      %v767 = vld [vmem:[%s747 + $0x98] sm:$0xff]
      %v768 = vld [vmem:[%s747 + $0xa0] sm:$0xff]
      %v769 = vld [vmem:[%s747 + $0xa8] sm:$0xff]
      %v770 = vld [vmem:[%s747 + $0xb0] sm:$0xff]
      %v771 = vld [vmem:[%s747 + $0xb8] sm:$0xff]
      %v796 = vunpack.c.l.b16 %v748
      %v797 = vunpack.c.h.b16 %v748
      %v798 = vunpack.c.l.b16 %v749
      %v799 = vunpack.c.h.b16 %v749
      %v800 = vunpack.c.l.b16 %v750
      %v801 = vunpack.c.h.b16 %v750
      %v802 = vunpack.c.l.b16 %v751
      %v803 = vunpack.c.h.b16 %v751
      %v804 = vunpack.c.l.b16 %v752
      %v805 = vunpack.c.h.b16 %v752
      %v806 = vunpack.c.l.b16 %v753
      %v807 = vunpack.c.h.b16 %v753
      %v808 = vunpack.c.l.b16 %v754
      %v809 = vunpack.c.h.b16 %v754
      %v810 = vunpack.c.l.b16 %v755
      %v811 = vunpack.c.h.b16 %v755
      %v812 = vunpack.c.l.b16 %v756
      %v813 = vunpack.c.h.b16 %v756
      %v814 = vunpack.c.l.b16 %v757
      %v815 = vunpack.c.h.b16 %v757
      %v816 = vunpack.c.l.b16 %v758
      %v817 = vunpack.c.h.b16 %v758
      %v818 = vunpack.c.l.b16 %v759
      %v819 = vunpack.c.h.b16 %v759
      %v820 = vunpack.c.l.b16 %v760
      %v821 = vunpack.c.h.b16 %v760
      %v822 = vunpack.c.l.b16 %v761
      %v823 = vunpack.c.h.b16 %v761
      %v824 = vunpack.c.l.b16 %v762
      %v825 = vunpack.c.h.b16 %v762
      %v826 = vunpack.c.l.b16 %v763
      %v827 = vunpack.c.h.b16 %v763
      %v828 = vunpack.c.l.b16 %v764
      %v829 = vunpack.c.h.b16 %v764
      %v830 = vunpack.c.l.b16 %v765
      %v831 = vunpack.c.h.b16 %v765
      %v832 = vunpack.c.l.b16 %v766
      %v833 = vunpack.c.h.b16 %v766
      %v834 = vunpack.c.l.b16 %v767
      %v835 = vunpack.c.h.b16 %v767
      %v836 = vunpack.c.l.b16 %v768
      %v837 = vunpack.c.h.b16 %v768
      %v838 = vunpack.c.l.b16 %v769
      %v839 = vunpack.c.h.b16 %v769
      %v840 = vunpack.c.l.b16 %v770
      %v841 = vunpack.c.h.b16 %v770
      %v842 = vunpack.c.l.b16 %v771
      %v843 = vunpack.c.h.b16 %v771
      %v844 = vpack.c.b16 %v798, %v796
      %v845 = vpack.c.b16 %v799, %v797
      %v846 = vpack.c.b16 %v802, %v800
      %v847 = vpack.c.b16 %v803, %v801
      %v848 = vpack.c.b16 %v806, %v804
      %v849 = vpack.c.b16 %v807, %v805
      %v850 = vpack.c.b16 %v810, %v808
      %v851 = vpack.c.b16 %v811, %v809
      %v852 = vpack.c.b16 %v814, %v812
      %v853 = vpack.c.b16 %v815, %v813
      %v854 = vpack.c.b16 %v818, %v816
      %v855 = vpack.c.b16 %v819, %v817
      %v856 = vpack.c.b16 %v822, %v820
      %v857 = vpack.c.b16 %v823, %v821
      %v858 = vpack.c.b16 %v826, %v824
      %v859 = vpack.c.b16 %v827, %v825
      %v860 = vpack.c.b16 %v830, %v828
      %v861 = vpack.c.b16 %v831, %v829
      %v862 = vpack.c.b16 %v834, %v832
      %v863 = vpack.c.b16 %v835, %v833
      %v864 = vpack.c.b16 %v838, %v836
      %v865 = vpack.c.b16 %v839, %v837
      %v866 = vpack.c.b16 %v842, %v840
      %v867 = vpack.c.b16 %v843, %v841
      %v893 = vsel %vm581, %v744, 0
      %v896 = vsel %vm581, %v746, 0
      %898 = vmatprep.subr.bf16.mxu0 %v845
      %899 = vmatpush1.bf16.msra.mxu0 %v844
      %900 = vmatprep.subr.bf16.mxu0 %v847
      %901 = vmatpush1.bf16.msra.mxu0 %v846
      %902 = vmatprep.subr.bf16.mxu0 %v849
      %903 = vmatpush1.bf16.msra.mxu0 %v848
      %904 = vmatprep.subr.bf16.mxu0 %v851
      %905 = vmatpush1.bf16.msra.mxu0 %v850
      %906 = vmatprep.subr.bf16.mxu0 %v853
      %907 = vmatpush1.bf16.msra.mxu0 %v852
      %908 = vmatprep.subr.bf16.mxu0 %v855
      %909 = vmatpush1.bf16.msra.mxu0 %v854
      %910 = vmatprep.subr.bf16.mxu0 %v857
      %911 = vmatpush1.bf16.msra.mxu0 %v856
      %912 = vmatprep.subr.bf16.mxu0 %v859
      %913 = vmatpush1.bf16.msra.mxu0 %v858
      %914 = vmatprep.subr.bf16.mxu0 %v861
      %915 = vmatpush1.bf16.msra.mxu0 %v860
      %916 = vmatprep.subr.bf16.mxu0 %v863
      %917 = vmatpush1.bf16.msra.mxu0 %v862
      %918 = vmatprep.subr.bf16.mxu0 %v865
      %919 = vmatpush1.bf16.msra.mxu0 %v864
      %920 = vmatprep.subr.bf16.mxu0 %v867
      %921 = vmatpush1.bf16.msra.mxu0 %v866
      %922 = vmatprep.subr.bf16.mxu0 0
      %923 = vmatpush1.bf16.msra.mxu0 0
      %924 = vmatprep.subr.bf16.mxu0 0
      %925 = vmatpush1.bf16.msra.mxu0 0
      %926 = vmatprep.subr.bf16.mxu0 0
      %927 = vmatpush1.bf16.msra.mxu0 0
      %928 = vmatprep.subr.bf16.mxu0 0
      %929 = vmatpush1.bf16.msra.mxu0 0
      %930 = vmatprep.mubr.bf16.mxu0 %v893
      %931 = vmatmul.mubr.bf16.gmra.mrb[0].mxu0 %v743
      %v932 = vpop.f32.mrb[0].mxu0
      %v933 = vadd.f32 0.0, %v932
      %v934 = vpop.f32.mrb[0].mxu0
      %v935 = vadd.f32 0.0, %v934
      %v936 = vpop.f32.mrb[0].mxu0
      %v937 = vadd.f32 0.0, %v936
      %v938 = vpop.f32.mrb[0].mxu0
      %v939 = vadd.f32 0.0, %v938
      %940 = vmatprep.mubr.bf16.mxu0 %v896
      %941 = vmatmul.mubr.bf16.gmra.mrb[0].mxu0 %v745
      %v942 = vpop.f32.mrb[0].mxu0
      %v943 = vadd.f32 0.0, %v942
      %v944 = vpop.f32.mrb[0].mxu0
      %v945 = vadd.f32 0.0, %v944
      %v946 = vpop.f32.mrb[0].mxu0
      %v947 = vadd.f32 0.0, %v946
      %v948 = vpop.f32.mrb[0].mxu0
      %v949 = vadd.f32 0.0, %v948
      %950 = vdwg.mxu0
      %v975 = vunpack.c.l.b16 %v645
      %v976 = vunpack.c.h.b16 %v645
      %v977 = vunpack.c.l.b16 %v646
      %v978 = vunpack.c.h.b16 %v646
      %v979 = vunpack.c.l.b16 %v647
      %v980 = vunpack.c.h.b16 %v647
      %v981 = vunpack.c.l.b16 %v648
      %v982 = vunpack.c.h.b16 %v648
      %v983 = vunpack.c.l.b16 %v649
      %v984 = vunpack.c.h.b16 %v649
      %v985 = vunpack.c.l.b16 %v650
      %v986 = vunpack.c.h.b16 %v650
      %v987 = vunpack.c.l.b16 %v651
      %v988 = vunpack.c.h.b16 %v651
      %v989 = vunpack.c.l.b16 %v652
      %v990 = vunpack.c.h.b16 %v652
      %v991 = vunpack.c.l.b16 %v653
      %v992 = vunpack.c.h.b16 %v653
      %v993 = vunpack.c.l.b16 %v654
      %v994 = vunpack.c.h.b16 %v654
      %v995 = vunpack.c.l.b16 %v655
      %v996 = vunpack.c.h.b16 %v655
      %v997 = vunpack.c.l.b16 %v656
      %v998 = vunpack.c.h.b16 %v656
      %v999 = vunpack.c.l.b16 %v657
      %v1000 = vunpack.c.h.b16 %v657
      %v1001 = vunpack.c.l.b16 %v658
      %v1002 = vunpack.c.h.b16 %v658
      %v1003 = vunpack.c.l.b16 %v659
      %v1004 = vunpack.c.h.b16 %v659
      %v1005 = vunpack.c.l.b16 %v660
      %v1006 = vunpack.c.h.b16 %v660
      %v1007 = vunpack.c.l.b16 %v661
      %v1008 = vunpack.c.h.b16 %v661
      %v1009 = vunpack.c.l.b16 %v662
      %v1010 = vunpack.c.h.b16 %v662
      %v1011 = vunpack.c.l.b16 %v663
      %v1012 = vunpack.c.h.b16 %v663
      %v1013 = vunpack.c.l.b16 %v664
      %v1014 = vunpack.c.h.b16 %v664
      %v1015 = vunpack.c.l.b16 %v665
      %v1016 = vunpack.c.h.b16 %v665
      %v1017 = vunpack.c.l.b16 %v666
      %v1018 = vunpack.c.h.b16 %v666
      %v1019 = vunpack.c.l.b16 %v667
      %v1020 = vunpack.c.h.b16 %v667
      %v1021 = vunpack.c.l.b16 %v668
      %v1022 = vunpack.c.h.b16 %v668
      %v1023 = vpack.c.b16 %v977, %v975
      %v1024 = vpack.c.b16 %v978, %v976
      %v1025 = vpack.c.b16 %v981, %v979
      %v1026 = vpack.c.b16 %v982, %v980
      %v1027 = vpack.c.b16 %v985, %v983
      %v1028 = vpack.c.b16 %v986, %v984
      %v1029 = vpack.c.b16 %v989, %v987
      %v1030 = vpack.c.b16 %v990, %v988
      %v1031 = vpack.c.b16 %v993, %v991
      %v1032 = vpack.c.b16 %v994, %v992
      %v1033 = vpack.c.b16 %v997, %v995
      %v1034 = vpack.c.b16 %v998, %v996
      %v1035 = vpack.c.b16 %v1001, %v999
      %v1036 = vpack.c.b16 %v1002, %v1000
      %v1037 = vpack.c.b16 %v1005, %v1003
      %v1038 = vpack.c.b16 %v1006, %v1004
      %v1039 = vpack.c.b16 %v1009, %v1007
      %v1040 = vpack.c.b16 %v1010, %v1008
      %v1041 = vpack.c.b16 %v1013, %v1011
      %v1042 = vpack.c.b16 %v1014, %v1012
      %v1043 = vpack.c.b16 %v1017, %v1015
      %v1044 = vpack.c.b16 %v1018, %v1016
      %v1045 = vpack.c.b16 %v1021, %v1019
      %v1046 = vpack.c.b16 %v1022, %v1020
      %v1072 = vsel %vm581, %v642, 0
      %v1075 = vsel %vm581, %v644, 0
      %1077 = vmatprep.subr.bf16.mxu0 %v1024
      %1078 = vmatpush1.bf16.msra.mxu0 %v1023
      %1079 = vmatprep.subr.bf16.mxu0 %v1026
      %1080 = vmatpush1.bf16.msra.mxu0 %v1025
      %1081 = vmatprep.subr.bf16.mxu0 %v1028
      %1082 = vmatpush1.bf16.msra.mxu0 %v1027
      %1083 = vmatprep.subr.bf16.mxu0 %v1030
      %1084 = vmatpush1.bf16.msra.mxu0 %v1029
      %1085 = vmatprep.subr.bf16.mxu0 %v1032
      %1086 = vmatpush1.bf16.msra.mxu0 %v1031
      %1087 = vmatprep.subr.bf16.mxu0 %v1034
      %1088 = vmatpush1.bf16.msra.mxu0 %v1033
      %1089 = vmatprep.subr.bf16.mxu0 %v1036
      %1090 = vmatpush1.bf16.msra.mxu0 %v1035
      %1091 = vmatprep.subr.bf16.mxu0 %v1038
      %1092 = vmatpush1.bf16.msra.mxu0 %v1037
      %1093 = vmatprep.subr.bf16.mxu0 %v1040
      %1094 = vmatpush1.bf16.msra.mxu0 %v1039
      %1095 = vmatprep.subr.bf16.mxu0 %v1042
      %1096 = vmatpush1.bf16.msra.mxu0 %v1041
      %1097 = vmatprep.subr.bf16.mxu0 %v1044
      %1098 = vmatpush1.bf16.msra.mxu0 %v1043
      %1099 = vmatprep.subr.bf16.mxu0 %v1046
      %1100 = vmatpush1.bf16.msra.mxu0 %v1045
      %1101 = vmatprep.subr.bf16.mxu0 0
      %1102 = vmatpush1.bf16.msra.mxu0 0
      %1103 = vmatprep.subr.bf16.mxu0 0
      %1104 = vmatpush1.bf16.msra.mxu0 0
      %1105 = vmatprep.subr.bf16.mxu0 0
      %1106 = vmatpush1.bf16.msra.mxu0 0
      %1107 = vmatprep.subr.bf16.mxu0 0
      %1108 = vmatpush1.bf16.msra.mxu0 0
      %1109 = vmatprep.mubr.bf16.mxu0 %v1072
      %1110 = vmatmul.mubr.bf16.gmra.mrb[0].mxu0 %v641
      %v1111 = vpop.f32.mrb[0].mxu0
      %v1112 = vadd.f32 %v933, %v1111
      %v1113 = vpop.f32.mrb[0].mxu0
      %v1114 = vadd.f32 %v935, %v1113
      %v1115 = vpop.f32.mrb[0].mxu0
      %v1116 = vadd.f32 %v937, %v1115
      %v1117 = vpop.f32.mrb[0].mxu0
      %v1118 = vadd.f32 %v939, %v1117
      %1119 = vmatprep.mubr.bf16.mxu0 %v1075
      %1120 = vmatmul.mubr.bf16.gmra.mrb[0].mxu0 %v643
      %v1121 = vpop.f32.mrb[0].mxu0
      %v1122 = vadd.f32 %v943, %v1121
      %v1123 = vpop.f32.mrb[0].mxu0
      %v1124 = vadd.f32 %v945, %v1123
      %v1125 = vpop.f32.mrb[0].mxu0
      %v1126 = vadd.f32 %v947, %v1125
      %v1127 = vpop.f32.mrb[0].mxu0
      %v1128 = vadd.f32 %v949, %v1127
      %1129 = vdwg.mxu0
      %s1130 = scalar_lea.vmem %s1, 32
      %v1131 = vld [vmem:[%s1130] sm:$0xf]
      %v1132 = vld [vmem:[%s1130 + $0x4] sm:$0xf]
      %v1133 = vld [vmem:[%s1130 + $0x8] sm:$0xf]
      %v1134 = vld [vmem:[%s1130 + $0xc] sm:$0xf]
      %v1139 = vunpack.c.l.b16 %v1131
      %v1140 = vunpack.c.l.b16 %v1132
      %v1141 = vunpack.c.l.b16 %v1133
      %v1142 = vunpack.c.l.b16 %v1134
      %v1143 = vpack.c.b16 %v1140, %v1139
      %v1144 = vpack.c.b16 %v1142, %v1141
      %v1146 = vsel %vm581, %v1143, 0
      %v1149 = vsel %vm581, %v1144, 0
      %1151 = vmatprep.subr.bf16.mxu0 %v566
      %1152 = vmatpush1.bf16.msra.mxu0 %v565
      %1153 = vmatprep.subr.bf16.mxu0 %v568
      %1154 = vmatpush1.bf16.msra.mxu0 %v567
      %1155 = vmatprep.subr.bf16.mxu0 %v570
      %1156 = vmatpush1.bf16.msra.mxu0 %v569
      %1157 = vmatprep.subr.bf16.mxu0 %v572
      %1158 = vmatpush1.bf16.msra.mxu0 %v571
      %1159 = vmatprep.subr.bf16.mxu0 0
      %1160 = vmatpush1.bf16.msra.mxu0 0
      %1161 = vmatprep.subr.bf16.mxu0 0
      %1162 = vmatpush1.bf16.msra.mxu0 0
      %1163 = vmatprep.subr.bf16.mxu0 0
      %1164 = vmatpush1.bf16.msra.mxu0 0
      %1165 = vmatprep.subr.bf16.mxu0 0
      %1166 = vmatpush1.bf16.msra.mxu0 0
      %1167 = vmatprep.subr.bf16.mxu0 0
      %1168 = vmatpush1.bf16.msra.mxu0 0
      %1169 = vmatprep.subr.bf16.mxu0 0
      %1170 = vmatpush1.bf16.msra.mxu0 0
      %1171 = vmatprep.subr.bf16.mxu0 0
      %1172 = vmatpush1.bf16.msra.mxu0 0
      %1173 = vmatprep.subr.bf16.mxu0 0
      %1174 = vmatpush1.bf16.msra.mxu0 0
      %1175 = vmatprep.subr.bf16.mxu0 0
      %1176 = vmatpush1.bf16.msra.mxu0 0
      %1177 = vmatprep.subr.bf16.mxu0 0
      %1178 = vmatpush1.bf16.msra.mxu0 0
      %1179 = vmatprep.subr.bf16.mxu0 0
      %1180 = vmatpush1.bf16.msra.mxu0 0
      %1181 = vmatprep.subr.bf16.mxu0 0
      %1182 = vmatpush1.bf16.msra.mxu0 0
      %1183 = vmatprep.mubr.bf16.mxu0 0
      %1184 = vmatmul.mubr.bf16.gmra.mrb[0].mxu0 %v1146
      %v1185 = vpop.f32.mrb[0].mxu0
      %v1186 = vadd.f32 0.0, %v1185
      %v1187 = vpop.f32.mrb[0].mxu0
      %v1188 = vadd.f32 0.0, %v1187
      %v1189 = vpop.f32.mrb[0].mxu0
      %v1190 = vadd.f32 0.0, %v1189
      %v1191 = vpop.f32.mrb[0].mxu0
      %v1192 = vadd.f32 0.0, %v1191
      %1193 = vmatprep.mubr.bf16.mxu0 0
      %1194 = vmatmul.mubr.bf16.gmra.mrb[0].mxu0 %v1149
      %v1195 = vpop.f32.mrb[0].mxu0
      %v1196 = vadd.f32 0.0, %v1195
      %v1197 = vpop.f32.mrb[0].mxu0
      %v1198 = vadd.f32 0.0, %v1197
      %v1199 = vpop.f32.mrb[0].mxu0
      %v1200 = vadd.f32 0.0, %v1199
      %v1201 = vpop.f32.mrb[0].mxu0
      %v1202 = vadd.f32 0.0, %v1201
      %1203 = vdwg.mxu0
      %v1204 = vpack.c.bf16 %v1190, %v1186
      %v1205 = vpack.c.bf16 %v1192, %v1188
      %v1206 = vpack.c.bf16 %v1200, %v1196
      %v1207 = vpack.c.bf16 %v1202, %v1198
      %s1208 = scalar_lea.vmem %s2, 384
      %v1209 = vld [vmem:[%s1208] sm:$0xff]
      %v1210 = vld [vmem:[%s1208 + $0x8] sm:$0xff]
      %v1211 = vld [vmem:[%s1208 + $0x10] sm:$0xff]
      %v1212 = vld [vmem:[%s1208 + $0x18] sm:$0xff]
      %v1213 = vld [vmem:[%s1208 + $0x20] sm:$0xff]
      %v1214 = vld [vmem:[%s1208 + $0x28] sm:$0xff]
      %v1215 = vld [vmem:[%s1208 + $0x30] sm:$0xff]
      %v1216 = vld [vmem:[%s1208 + $0x38] sm:$0xff]
      %v1217 = vld [vmem:[%s1208 + $0x40] sm:$0xff]
      %v1218 = vld [vmem:[%s1208 + $0x48] sm:$0xff]
      %v1219 = vld [vmem:[%s1208 + $0x50] sm:$0xff]
      %v1220 = vld [vmem:[%s1208 + $0x58] sm:$0xff]
      %v1221 = vld [vmem:[%s1208 + $0x60] sm:$0xff]
      %v1222 = vld [vmem:[%s1208 + $0x68] sm:$0xff]
      %v1223 = vld [vmem:[%s1208 + $0x70] sm:$0xff]
      %v1224 = vld [vmem:[%s1208 + $0x78] sm:$0xff]
      %v1225 = vld [vmem:[%s1208 + $0x80] sm:$0xff]
      %v1226 = vld [vmem:[%s1208 + $0x88] sm:$0xff]
      %v1227 = vld [vmem:[%s1208 + $0x90] sm:$0xff]
      %v1228 = vld [vmem:[%s1208 + $0x98] sm:$0xff]
      %v1229 = vld [vmem:[%s1208 + $0xa0] sm:$0xff]
      %v1230 = vld [vmem:[%s1208 + $0xa8] sm:$0xff]
      %v1231 = vld [vmem:[%s1208 + $0xb0] sm:$0xff]
      %v1232 = vld [vmem:[%s1208 + $0xb8] sm:$0xff]
      %v1257 = vunpack.c.l.b16 %v1209
      %v1258 = vunpack.c.h.b16 %v1209
      %v1259 = vunpack.c.l.b16 %v1210
      %v1260 = vunpack.c.h.b16 %v1210
      %v1261 = vunpack.c.l.b16 %v1211
      %v1262 = vunpack.c.h.b16 %v1211
      %v1263 = vunpack.c.l.b16 %v1212
      %v1264 = vunpack.c.h.b16 %v1212
      %v1265 = vunpack.c.l.b16 %v1213
      %v1266 = vunpack.c.h.b16 %v1213
      %v1267 = vunpack.c.l.b16 %v1214
      %v1268 = vunpack.c.h.b16 %v1214
      %v1269 = vunpack.c.l.b16 %v1215
      %v1270 = vunpack.c.h.b16 %v1215
      %v1271 = vunpack.c.l.b16 %v1216
      %v1272 = vunpack.c.h.b16 %v1216
      %v1273 = vunpack.c.l.b16 %v1217
      %v1274 = vunpack.c.h.b16 %v1217
      %v1275 = vunpack.c.l.b16 %v1218
      %v1276 = vunpack.c.h.b16 %v1218
      %v1277 = vunpack.c.l.b16 %v1219
      %v1278 = vunpack.c.h.b16 %v1219
      %v1279 = vunpack.c.l.b16 %v1220
      %v1280 = vunpack.c.h.b16 %v1220
      %v1281 = vunpack.c.l.b16 %v1221
      %v1282 = vunpack.c.h.b16 %v1221
      %v1283 = vunpack.c.l.b16 %v1222
      %v1284 = vunpack.c.h.b16 %v1222
      %v1285 = vunpack.c.l.b16 %v1223
      %v1286 = vunpack.c.h.b16 %v1223
      %v1287 = vunpack.c.l.b16 %v1224
      %v1288 = vunpack.c.h.b16 %v1224
      %v1289 = vunpack.c.l.b16 %v1225
      %v1290 = vunpack.c.h.b16 %v1225
      %v1291 = vunpack.c.l.b16 %v1226
      %v1292 = vunpack.c.h.b16 %v1226
      %v1293 = vunpack.c.l.b16 %v1227
      %v1294 = vunpack.c.h.b16 %v1227
      %v1295 = vunpack.c.l.b16 %v1228
      %v1296 = vunpack.c.h.b16 %v1228
      %v1297 = vunpack.c.l.b16 %v1229
      %v1298 = vunpack.c.h.b16 %v1229
      %v1299 = vunpack.c.l.b16 %v1230
      %v1300 = vunpack.c.h.b16 %v1230
      %v1301 = vunpack.c.l.b16 %v1231
      %v1302 = vunpack.c.h.b16 %v1231
      %v1303 = vunpack.c.l.b16 %v1232
      %v1304 = vunpack.c.h.b16 %v1232
      %v1305 = vpack.c.b16 %v1259, %v1257
      %v1306 = vpack.c.b16 %v1260, %v1258
      %v1307 = vpack.c.b16 %v1263, %v1261
      %v1308 = vpack.c.b16 %v1264, %v1262
      %v1309 = vpack.c.b16 %v1267, %v1265
      %v1310 = vpack.c.b16 %v1268, %v1266
      %v1311 = vpack.c.b16 %v1271, %v1269
      %v1312 = vpack.c.b16 %v1272, %v1270
      %v1313 = vpack.c.b16 %v1275, %v1273
      %v1314 = vpack.c.b16 %v1276, %v1274
      %v1315 = vpack.c.b16 %v1279, %v1277
      %v1316 = vpack.c.b16 %v1280, %v1278
      %v1317 = vpack.c.b16 %v1283, %v1281
      %v1318 = vpack.c.b16 %v1284, %v1282
      %v1319 = vpack.c.b16 %v1287, %v1285
      %v1320 = vpack.c.b16 %v1288, %v1286
      %v1321 = vpack.c.b16 %v1291, %v1289
      %v1322 = vpack.c.b16 %v1292, %v1290
      %v1323 = vpack.c.b16 %v1295, %v1293
      %v1324 = vpack.c.b16 %v1296, %v1294
      %v1325 = vpack.c.b16 %v1299, %v1297
      %v1326 = vpack.c.b16 %v1300, %v1298
      %v1327 = vpack.c.b16 %v1303, %v1301
      %v1328 = vpack.c.b16 %v1304, %v1302
      %v1354 = vsel %vm581, %v1205, 0
      %v1357 = vsel %vm581, %v1207, 0
      %1359 = vmatprep.subr.bf16.mxu0 %v1306
      %1360 = vmatpush1.bf16.msra.mxu0 %v1305
      %1361 = vmatprep.subr.bf16.mxu0 %v1308
      %1362 = vmatpush1.bf16.msra.mxu0 %v1307
      %1363 = vmatprep.subr.bf16.mxu0 %v1310
      %1364 = vmatpush1.bf16.msra.mxu0 %v1309
      %1365 = vmatprep.subr.bf16.mxu0 %v1312
      %1366 = vmatpush1.bf16.msra.mxu0 %v1311
      %1367 = vmatprep.subr.bf16.mxu0 %v1314
      %1368 = vmatpush1.bf16.msra.mxu0 %v1313
      %1369 = vmatprep.subr.bf16.mxu0 %v1316
      %1370 = vmatpush1.bf16.msra.mxu0 %v1315
      %1371 = vmatprep.subr.bf16.mxu0 %v1318
      %1372 = vmatpush1.bf16.msra.mxu0 %v1317
      %1373 = vmatprep.subr.bf16.mxu0 %v1320
      %1374 = vmatpush1.bf16.msra.mxu0 %v1319
      %1375 = vmatprep.subr.bf16.mxu0 %v1322
      %1376 = vmatpush1.bf16.msra.mxu0 %v1321
      %1377 = vmatprep.subr.bf16.mxu0 %v1324
      %1378 = vmatpush1.bf16.msra.mxu0 %v1323
      %1379 = vmatprep.subr.bf16.mxu0 %v1326
      %1380 = vmatpush1.bf16.msra.mxu0 %v1325
      %1381 = vmatprep.subr.bf16.mxu0 %v1328
      %1382 = vmatpush1.bf16.msra.mxu0 %v1327
      %1383 = vmatprep.subr.bf16.mxu0 0
      %1384 = vmatpush1.bf16.msra.mxu0 0
      %1385 = vmatprep.subr.bf16.mxu0 0
      %1386 = vmatpush1.bf16.msra.mxu0 0
      %1387 = vmatprep.subr.bf16.mxu0 0
      %1388 = vmatpush1.bf16.msra.mxu0 0
      %1389 = vmatprep.subr.bf16.mxu0 0
      %1390 = vmatpush1.bf16.msra.mxu0 0
      %1391 = vmatprep.mubr.bf16.mxu0 %v1354
      %1392 = vmatmul.mubr.bf16.gmra.mrb[0].mxu0 %v1204
      %v1393 = vpop.f32.mrb[0].mxu0
      %v1394 = vadd.f32 0.0, %v1393
      %v1395 = vpop.f32.mrb[0].mxu0
      %v1396 = vadd.f32 0.0, %v1395
      %v1397 = vpop.f32.mrb[0].mxu0
      %v1398 = vadd.f32 0.0, %v1397
      %v1399 = vpop.f32.mrb[0].mxu0
      %v1400 = vadd.f32 0.0, %v1399
      %1401 = vmatprep.mubr.bf16.mxu0 %v1357
      %1402 = vmatmul.mubr.bf16.gmra.mrb[0].mxu0 %v1206
      %v1403 = vpop.f32.mrb[0].mxu0
      %v1404 = vadd.f32 0.0, %v1403
      %v1405 = vpop.f32.mrb[0].mxu0
      %v1406 = vadd.f32 0.0, %v1405
      %v1407 = vpop.f32.mrb[0].mxu0
      %v1408 = vadd.f32 0.0, %v1407
      %v1409 = vpop.f32.mrb[0].mxu0
      %v1410 = vadd.f32 0.0, %v1409
      %1411 = vdwg.mxu0
      %v1412 = vadd.f32 %v1112, %v1394
      %v1413 = vadd.f32 %v1114, %v1396
      %v1414 = vadd.f32 %v1116, %v1398
      %v1415 = vadd.f32 %v1118, %v1400
      %v1416 = vadd.f32 %v1122, %v1404
      %v1417 = vadd.f32 %v1124, %v1406
      %v1418 = vadd.f32 %v1126, %v1408
      %v1419 = vadd.f32 %v1128, %v1410
      %s1420 = scalar_lea.vmem %s1, 48
      %v1421 = vld [vmem:[%s1420] sm:$0xf]
      %v1422 = vld [vmem:[%s1420 + $0x4] sm:$0xf]
      %v1423 = vld [vmem:[%s1420 + $0x8] sm:$0xf]
      %v1424 = vld [vmem:[%s1420 + $0xc] sm:$0xf]
      %v1429 = vunpack.c.l.b16 %v1421
      %v1430 = vunpack.c.l.b16 %v1422
      %v1431 = vunpack.c.l.b16 %v1423
      %v1432 = vunpack.c.l.b16 %v1424
      %v1433 = vpack.c.b16 %v1430, %v1429
      %v1434 = vpack.c.b16 %v1432, %v1431
      %v1436 = vsel %vm581, %v1433, 0
      %v1439 = vsel %vm581, %v1434, 0
      %1441 = vmatprep.subr.bf16.mxu0 %v566
      %1442 = vmatpush1.bf16.msra.mxu0 %v565
      %1443 = vmatprep.subr.bf16.mxu0 %v568
      %1444 = vmatpush1.bf16.msra.mxu0 %v567
      %1445 = vmatprep.subr.bf16.mxu0 %v570
      %1446 = vmatpush1.bf16.msra.mxu0 %v569
      %1447 = vmatprep.subr.bf16.mxu0 %v572
      %1448 = vmatpush1.bf16.msra.mxu0 %v571
      %1449 = vmatprep.subr.bf16.mxu0 0
      %1450 = vmatpush1.bf16.msra.mxu0 0
      %1451 = vmatprep.subr.bf16.mxu0 0
      %1452 = vmatpush1.bf16.msra.mxu0 0
      %1453 = vmatprep.subr.bf16.mxu0 0
      %1454 = vmatpush1.bf16.msra.mxu0 0
      %1455 = vmatprep.subr.bf16.mxu0 0
      %1456 = vmatpush1.bf16.msra.mxu0 0
      %1457 = vmatprep.subr.bf16.mxu0 0
      %1458 = vmatpush1.bf16.msra.mxu0 0
      %1459 = vmatprep.subr.bf16.mxu0 0
      %1460 = vmatpush1.bf16.msra.mxu0 0
      %1461 = vmatprep.subr.bf16.mxu0 0
      %1462 = vmatpush1.bf16.msra.mxu0 0
      %1463 = vmatprep.subr.bf16.mxu0 0
      %1464 = vmatpush1.bf16.msra.mxu0 0
      %1465 = vmatprep.subr.bf16.mxu0 0
      %1466 = vmatpush1.bf16.msra.mxu0 0
      %1467 = vmatprep.subr.bf16.mxu0 0
      %1468 = vmatpush1.bf16.msra.mxu0 0
      %1469 = vmatprep.subr.bf16.mxu0 0
      %1470 = vmatpush1.bf16.msra.mxu0 0
      %1471 = vmatprep.subr.bf16.mxu0 0
      %1472 = vmatpush1.bf16.msra.mxu0 0
      %1473 = vmatprep.mubr.bf16.mxu0 0
      %1474 = vmatmul.mubr.bf16.gmra.mrb[0].mxu0 %v1436
      %v1475 = vpop.f32.mrb[0].mxu0
      %v1476 = vadd.f32 0.0, %v1475
      %v1477 = vpop.f32.mrb[0].mxu0
      %v1478 = vadd.f32 0.0, %v1477
      %v1479 = vpop.f32.mrb[0].mxu0
      %v1480 = vadd.f32 0.0, %v1479
      %v1481 = vpop.f32.mrb[0].mxu0
      %v1482 = vadd.f32 0.0, %v1481
      %1483 = vmatprep.mubr.bf16.mxu0 0
      %1484 = vmatmul.mubr.bf16.gmra.mrb[0].mxu0 %v1439
      %v1485 = vpop.f32.mrb[0].mxu0
      %v1486 = vadd.f32 0.0, %v1485
      %v1487 = vpop.f32.mrb[0].mxu0
      %v1488 = vadd.f32 0.0, %v1487
      %v1489 = vpop.f32.mrb[0].mxu0
      %v1490 = vadd.f32 0.0, %v1489
      %v1491 = vpop.f32.mrb[0].mxu0
      %v1492 = vadd.f32 0.0, %v1491
      %1493 = vdwg.mxu0
      %v1494 = vpack.c.bf16 %v1480, %v1476
      %v1495 = vpack.c.bf16 %v1482, %v1478
      %v1496 = vpack.c.bf16 %v1490, %v1486
      %v1497 = vpack.c.bf16 %v1492, %v1488
      %s1498 = scalar_lea.vmem %s2, 576
      %v1499 = vld [vmem:[%s1498] sm:$0xff]
      %v1500 = vld [vmem:[%s1498 + $0x8] sm:$0xff]
      %v1501 = vld [vmem:[%s1498 + $0x10] sm:$0xff]
      %v1502 = vld [vmem:[%s1498 + $0x18] sm:$0xff]
      %v1503 = vld [vmem:[%s1498 + $0x20] sm:$0xff]
      %v1504 = vld [vmem:[%s1498 + $0x28] sm:$0xff]
      %v1505 = vld [vmem:[%s1498 + $0x30] sm:$0xff]
      %v1506 = vld [vmem:[%s1498 + $0x38] sm:$0xff]
      %v1507 = vld [vmem:[%s1498 + $0x40] sm:$0xff]
      %v1508 = vld [vmem:[%s1498 + $0x48] sm:$0xff]
      %v1509 = vld [vmem:[%s1498 + $0x50] sm:$0xff]
      %v1510 = vld [vmem:[%s1498 + $0x58] sm:$0xff]
      %v1511 = vld [vmem:[%s1498 + $0x60] sm:$0xff]
      %v1512 = vld [vmem:[%s1498 + $0x68] sm:$0xff]
      %v1513 = vld [vmem:[%s1498 + $0x70] sm:$0xff]
      %v1514 = vld [vmem:[%s1498 + $0x78] sm:$0xff]
      %v1515 = vld [vmem:[%s1498 + $0x80] sm:$0xff]
      %v1516 = vld [vmem:[%s1498 + $0x88] sm:$0xff]
      %v1517 = vld [vmem:[%s1498 + $0x90] sm:$0xff]
      %v1518 = vld [vmem:[%s1498 + $0x98] sm:$0xff]
      %v1519 = vld [vmem:[%s1498 + $0xa0] sm:$0xff]
      %v1520 = vld [vmem:[%s1498 + $0xa8] sm:$0xff]
      %v1521 = vld [vmem:[%s1498 + $0xb0] sm:$0xff]
      %v1522 = vld [vmem:[%s1498 + $0xb8] sm:$0xff]
      %v1547 = vunpack.c.l.b16 %v1499
      %v1548 = vunpack.c.h.b16 %v1499
      %v1549 = vunpack.c.l.b16 %v1500
      %v1550 = vunpack.c.h.b16 %v1500
      %v1551 = vunpack.c.l.b16 %v1501
      %v1552 = vunpack.c.h.b16 %v1501
      %v1553 = vunpack.c.l.b16 %v1502
      %v1554 = vunpack.c.h.b16 %v1502
      %v1555 = vunpack.c.l.b16 %v1503
      %v1556 = vunpack.c.h.b16 %v1503
      %v1557 = vunpack.c.l.b16 %v1504
      %v1558 = vunpack.c.h.b16 %v1504
      %v1559 = vunpack.c.l.b16 %v1505
      %v1560 = vunpack.c.h.b16 %v1505
      %v1561 = vunpack.c.l.b16 %v1506
      %v1562 = vunpack.c.h.b16 %v1506
      %v1563 = vunpack.c.l.b16 %v1507
      %v1564 = vunpack.c.h.b16 %v1507
      %v1565 = vunpack.c.l.b16 %v1508
      %v1566 = vunpack.c.h.b16 %v1508
      %v1567 = vunpack.c.l.b16 %v1509
      %v1568 = vunpack.c.h.b16 %v1509
      %v1569 = vunpack.c.l.b16 %v1510
      %v1570 = vunpack.c.h.b16 %v1510
      %v1571 = vunpack.c.l.b16 %v1511
      %v1572 = vunpack.c.h.b16 %v1511
      %v1573 = vunpack.c.l.b16 %v1512
      %v1574 = vunpack.c.h.b16 %v1512
      %v1575 = vunpack.c.l.b16 %v1513
      %v1576 = vunpack.c.h.b16 %v1513
      %v1577 = vunpack.c.l.b16 %v1514
      %v1578 = vunpack.c.h.b16 %v1514
      %v1579 = vunpack.c.l.b16 %v1515
      %v1580 = vunpack.c.h.b16 %v1515
      %v1581 = vunpack.c.l.b16 %v1516
      %v1582 = vunpack.c.h.b16 %v1516
      %v1583 = vunpack.c.l.b16 %v1517
      %v1584 = vunpack.c.h.b16 %v1517
      %v1585 = vunpack.c.l.b16 %v1518
      %v1586 = vunpack.c.h.b16 %v1518
      %v1587 = vunpack.c.l.b16 %v1519
      %v1588 = vunpack.c.h.b16 %v1519
      %v1589 = vunpack.c.l.b16 %v1520
      %v1590 = vunpack.c.h.b16 %v1520
      %v1591 = vunpack.c.l.b16 %v1521
      %v1592 = vunpack.c.h.b16 %v1521
      %v1593 = vunpack.c.l.b16 %v1522
      %v1594 = vunpack.c.h.b16 %v1522
      %v1595 = vpack.c.b16 %v1549, %v1547
      %v1596 = vpack.c.b16 %v1550, %v1548
      %v1597 = vpack.c.b16 %v1553, %v1551
      %v1598 = vpack.c.b16 %v1554, %v1552
      %v1599 = vpack.c.b16 %v1557, %v1555
      %v1600 = vpack.c.b16 %v1558, %v1556
      %v1601 = vpack.c.b16 %v1561, %v1559
      %v1602 = vpack.c.b16 %v1562, %v1560
      %v1603 = vpack.c.b16 %v1565, %v1563
      %v1604 = vpack.c.b16 %v1566, %v1564
      %v1605 = vpack.c.b16 %v1569, %v1567
      %v1606 = vpack.c.b16 %v1570, %v1568
      %v1607 = vpack.c.b16 %v1573, %v1571
      %v1608 = vpack.c.b16 %v1574, %v1572
      %v1609 = vpack.c.b16 %v1577, %v1575
      %v1610 = vpack.c.b16 %v1578, %v1576
      %v1611 = vpack.c.b16 %v1581, %v1579
      %v1612 = vpack.c.b16 %v1582, %v1580
      %v1613 = vpack.c.b16 %v1585, %v1583
      %v1614 = vpack.c.b16 %v1586, %v1584
      %v1615 = vpack.c.b16 %v1589, %v1587
      %v1616 = vpack.c.b16 %v1590, %v1588
      %v1617 = vpack.c.b16 %v1593, %v1591
      %v1618 = vpack.c.b16 %v1594, %v1592
      %v1644 = vsel %vm581, %v1495, 0
      %v1647 = vsel %vm581, %v1497, 0
      %1649 = vmatprep.subr.bf16.mxu0 %v1596
      %1650 = vmatpush1.bf16.msra.mxu0 %v1595
      %1651 = vmatprep.subr.bf16.mxu0 %v1598
      %1652 = vmatpush1.bf16.msra.mxu0 %v1597
      %1653 = vmatprep.subr.bf16.mxu0 %v1600
      %1654 = vmatpush1.bf16.msra.mxu0 %v1599
      %1655 = vmatprep.subr.bf16.mxu0 %v1602
      %1656 = vmatpush1.bf16.msra.mxu0 %v1601
      %1657 = vmatprep.subr.bf16.mxu0 %v1604
      %1658 = vmatpush1.bf16.msra.mxu0 %v1603
      %1659 = vmatprep.subr.bf16.mxu0 %v1606
      %1660 = vmatpush1.bf16.msra.mxu0 %v1605
      %1661 = vmatprep.subr.bf16.mxu0 %v1608
      %1662 = vmatpush1.bf16.msra.mxu0 %v1607
      %1663 = vmatprep.subr.bf16.mxu0 %v1610
      %1664 = vmatpush1.bf16.msra.mxu0 %v1609
      %1665 = vmatprep.subr.bf16.mxu0 %v1612
      %1666 = vmatpush1.bf16.msra.mxu0 %v1611
      %1667 = vmatprep.subr.bf16.mxu0 %v1614
      %1668 = vmatpush1.bf16.msra.mxu0 %v1613
      %1669 = vmatprep.subr.bf16.mxu0 %v1616
      %1670 = vmatpush1.bf16.msra.mxu0 %v1615
      %1671 = vmatprep.subr.bf16.mxu0 %v1618
      %1672 = vmatpush1.bf16.msra.mxu0 %v1617
      %1673 = vmatprep.subr.bf16.mxu0 0
      %1674 = vmatpush1.bf16.msra.mxu0 0
      %1675 = vmatprep.subr.bf16.mxu0 0
      %1676 = vmatpush1.bf16.msra.mxu0 0
      %1677 = vmatprep.subr.bf16.mxu0 0
      %1678 = vmatpush1.bf16.msra.mxu0 0
      %1679 = vmatprep.subr.bf16.mxu0 0
      %1680 = vmatpush1.bf16.msra.mxu0 0
      %1681 = vmatprep.mubr.bf16.mxu0 %v1644
      %1682 = vmatmul.mubr.bf16.gmra.mrb[0].mxu0 %v1494
      %v1683 = vpop.f32.mrb[0].mxu0
      %v1684 = vadd.f32 0.0, %v1683
      %v1685 = vpop.f32.mrb[0].mxu0
      %v1686 = vadd.f32 0.0, %v1685
      %v1687 = vpop.f32.mrb[0].mxu0
      %v1688 = vadd.f32 0.0, %v1687
      %v1689 = vpop.f32.mrb[0].mxu0
      %v1690 = vadd.f32 0.0, %v1689
      %1691 = vmatprep.mubr.bf16.mxu0 %v1647
      %1692 = vmatmul.mubr.bf16.gmra.mrb[0].mxu0 %v1496
      %v1693 = vpop.f32.mrb[0].mxu0
      %v1694 = vadd.f32 0.0, %v1693
      %v1695 = vpop.f32.mrb[0].mxu0
      %v1696 = vadd.f32 0.0, %v1695
      %v1697 = vpop.f32.mrb[0].mxu0
      %v1698 = vadd.f32 0.0, %v1697
      %v1699 = vpop.f32.mrb[0].mxu0
      %v1700 = vadd.f32 0.0, %v1699
      %1701 = vdwg.mxu0
      %v1702 = vadd.f32 %v1412, %v1684
      %v1703 = vadd.f32 %v1413, %v1686
      %v1704 = vadd.f32 %v1414, %v1688
      %v1705 = vadd.f32 %v1415, %v1690
      %v1706 = vadd.f32 %v1416, %v1694
      %v1707 = vadd.f32 %v1417, %v1696
      %v1708 = vadd.f32 %v1418, %v1698
      %v1709 = vadd.f32 %v1419, %v1700
      %vm1710 = vcmp.gt.f32.partialorder %v1702, 0.0
      %vm1711 = vcmp.gt.f32.partialorder %v1703, 0.0
      %vm1712 = vcmp.gt.f32.partialorder %v1704, 0.0
      %vm1713 = vcmp.gt.f32.partialorder %v1705, 0.0
      %vm1714 = vcmp.gt.f32.partialorder %v1706, 0.0
      %vm1715 = vcmp.gt.f32.partialorder %v1707, 0.0
      %vm1716 = vcmp.gt.f32.partialorder %v1708, 0.0
      %vm1717 = vcmp.gt.f32.partialorder %v1709, 0.0
      %v1718 = vmul.f32 %v1702, 0.2
      %v1719 = vmul.f32 %v1703, 0.2
      %v1720 = vmul.f32 %v1704, 0.2
      %v1721 = vmul.f32 %v1705, 0.2
      %v1722 = vmul.f32 %v1706, 0.2
      %v1723 = vmul.f32 %v1707, 0.2
      %v1724 = vmul.f32 %v1708, 0.2
      %v1725 = vmul.f32 %v1709, 0.2
      %v1726 = vsel %vm1710, %v1702, %v1718
      %v1727 = vsel %vm1711, %v1703, %v1719
      %v1728 = vsel %vm1712, %v1704, %v1720
      %v1729 = vsel %vm1713, %v1705, %v1721
      %v1730 = vsel %vm1714, %v1706, %v1722
      %v1731 = vsel %vm1715, %v1707, %v1723
      %v1732 = vsel %vm1716, %v1708, %v1724
      %v1733 = vsel %vm1717, %v1709, %v1725
      %v1734 = vpack.c.bf16 %v1728, %v1726
      %v1735 = vpack.c.bf16 %v1729, %v1727
      %v1736 = vpack.c.bf16 %v1732, %v1730
      %v1737 = vpack.c.bf16 %v1733, %v1731
      %v1738 = vld [vmem:[%s3] sm:$0xf]
      %v1739 = vld [vmem:[%s3 + $0x4] sm:$0xf]
      %v1742 = vunpack.c.l.b16 %v1738
      %v1743 = vunpack.c.l.b16 %v1739
      %v1744 = vpack.c.b16 %v1743, %v1742
      %vm1745 = vcmask 261120
      %v1747 = vsel %vm1745, %v1744, 0
      %1749 = vmatprep.subr.bf16.mxu0 %v1735
      %1750 = vmatpush1.bf16.msra.mxu0 %v1734
      %1751 = vmatprep.subr.bf16.mxu0 %v1737
      %1752 = vmatpush1.bf16.msra.mxu0 %v1736
      %1753 = vmatprep.subr.bf16.mxu0 0
      %1754 = vmatpush1.bf16.msra.mxu0 0
      %1755 = vmatprep.subr.bf16.mxu0 0
      %1756 = vmatpush1.bf16.msra.mxu0 0
      %1757 = vmatprep.subr.bf16.mxu0 0
      %1758 = vmatpush1.bf16.msra.mxu0 0
      %1759 = vmatprep.subr.bf16.mxu0 0
      %1760 = vmatpush1.bf16.msra.mxu0 0
      %1761 = vmatprep.subr.bf16.mxu0 0
      %1762 = vmatpush1.bf16.msra.mxu0 0
      %1763 = vmatprep.subr.bf16.mxu0 0
      %1764 = vmatpush1.bf16.msra.mxu0 0
      %1765 = vmatprep.subr.bf16.mxu0 0
      %1766 = vmatpush1.bf16.msra.mxu0 0
      %1767 = vmatprep.subr.bf16.mxu0 0
      %1768 = vmatpush1.bf16.msra.mxu0 0
      %1769 = vmatprep.subr.bf16.mxu0 0
      %1770 = vmatpush1.bf16.msra.mxu0 0
      %1771 = vmatprep.subr.bf16.mxu0 0
      %1772 = vmatpush1.bf16.msra.mxu0 0
      %1773 = vmatprep.subr.bf16.mxu0 0
      %1774 = vmatpush1.bf16.msra.mxu0 0
      %1775 = vmatprep.subr.bf16.mxu0 0
      %1776 = vmatpush1.bf16.msra.mxu0 0
      %1777 = vmatprep.subr.bf16.mxu0 0
      %1778 = vmatpush1.bf16.msra.mxu0 0
      %1779 = vmatprep.subr.bf16.mxu0 0
      %1780 = vmatpush1.bf16.msra.mxu0 0
      %1781 = vmatprep.mubr.bf16.mxu0 0
      %1782 = vmatmul.mubr.bf16.gmra.mrb[0].mxu0 %v1747
      %v1783 = vpop.f32.mrb[0].mxu0
      %v1784 = vadd.f32 0.0, %v1783
      %v1785 = vpop.f32.mrb[0].mxu0
      %v1786 = vadd.f32 0.0, %v1785
      %v1787 = vpop.f32.mrb[0].mxu0
      %v1788 = vadd.f32 0.0, %v1787
      %v1789 = vpop.f32.mrb[0].mxu0
      %v1790 = vadd.f32 0.0, %v1789
      %1791 = vdwg.mxu0
      %v1792 = vpack.c.bf16 %v1788, %v1784
      %v1793 = vpack.c.bf16 %v1790, %v1786
      %v1794 = vld [vmem:[%s4] sm:$0xff]
      %v1795 = vld [vmem:[%s4 + $0x8] sm:$0xff]
      %v1796 = vld [vmem:[%s4 + $0x10] sm:$0xff]
      %v1797 = vld [vmem:[%s4 + $0x18] sm:$0xff]
      %v1798 = vld [vmem:[%s4 + $0x20] sm:$0xff]
      %v1799 = vld [vmem:[%s4 + $0x28] sm:$0xff]
      %v1800 = vld [vmem:[%s4 + $0x30] sm:$0xff]
      %v1801 = vld [vmem:[%s4 + $0x38] sm:$0xff]
      %v1802 = vld [vmem:[%s4 + $0x40] sm:$0xff]
      %v1803 = vld [vmem:[%s4 + $0x48] sm:$0xff]
      %v1804 = vld [vmem:[%s4 + $0x50] sm:$0xff]
      %v1805 = vld [vmem:[%s4 + $0x58] sm:$0xff]
      %v1806 = vld [vmem:[%s4 + $0x60] sm:$0xff]
      %v1807 = vld [vmem:[%s4 + $0x68] sm:$0xff]
      %v1808 = vld [vmem:[%s4 + $0x70] sm:$0xff]
      %v1809 = vld [vmem:[%s4 + $0x78] sm:$0xff]
      %v1810 = vld [vmem:[%s4 + $0x80] sm:$0xff]
      %v1811 = vld [vmem:[%s4 + $0x88] sm:$0xff]
      %v1812 = vld [vmem:[%s4 + $0x90] sm:$0xff]
      %v1813 = vld [vmem:[%s4 + $0x98] sm:$0xff]
      %v1814 = vld [vmem:[%s4 + $0xa0] sm:$0xff]
      %v1815 = vld [vmem:[%s4 + $0xa8] sm:$0xff]
      %v1816 = vld [vmem:[%s4 + $0xb0] sm:$0xff]
      %v1817 = vld [vmem:[%s4 + $0xb8] sm:$0xff]
      %v1818 = vld [vmem:[%s4 + $0xc0] sm:$0xff]
      %v1819 = vld [vmem:[%s4 + $0xc8] sm:$0xff]
      %v1820 = vld [vmem:[%s4 + $0xd0] sm:$0xff]
      %v1821 = vld [vmem:[%s4 + $0xd8] sm:$0xff]
      %v1822 = vld [vmem:[%s4 + $0xe0] sm:$0xff]
      %v1823 = vld [vmem:[%s4 + $0xe8] sm:$0xff]
      %v1824 = vld [vmem:[%s4 + $0xf0] sm:$0xff]
      %v1825 = vld [vmem:[%s4 + $0xf8] sm:$0xff]
      %s1826 = scalar_lea.vmem %s3, 8
      %v1827 = vld [vmem:[%s1826] sm:$0xf]
      %v1828 = vld [vmem:[%s1826 + $0x4] sm:$0xf]
      %v1831 = vunpack.c.l.b16 %v1827
      %v1832 = vunpack.c.l.b16 %v1828
      %v1833 = vpack.c.b16 %v1832, %v1831
      %v1835 = vsel %vm1745, %v1833, 0
      %1837 = vmatprep.subr.bf16.mxu0 %v1735
      %1838 = vmatpush1.bf16.msra.mxu0 %v1734
      %1839 = vmatprep.subr.bf16.mxu0 %v1737
      %1840 = vmatpush1.bf16.msra.mxu0 %v1736
      %1841 = vmatprep.subr.bf16.mxu0 0
      %1842 = vmatpush1.bf16.msra.mxu0 0
      %1843 = vmatprep.subr.bf16.mxu0 0
      %1844 = vmatpush1.bf16.msra.mxu0 0
      %1845 = vmatprep.subr.bf16.mxu0 0
      %1846 = vmatpush1.bf16.msra.mxu0 0
      %1847 = vmatprep.subr.bf16.mxu0 0
      %1848 = vmatpush1.bf16.msra.mxu0 0
      %1849 = vmatprep.subr.bf16.mxu0 0
      %1850 = vmatpush1.bf16.msra.mxu0 0
      %1851 = vmatprep.subr.bf16.mxu0 0
      %1852 = vmatpush1.bf16.msra.mxu0 0
      %1853 = vmatprep.subr.bf16.mxu0 0
      %1854 = vmatpush1.bf16.msra.mxu0 0
      %1855 = vmatprep.subr.bf16.mxu0 0
      %1856 = vmatpush1.bf16.msra.mxu0 0
      %1857 = vmatprep.subr.bf16.mxu0 0
      %1858 = vmatpush1.bf16.msra.mxu0 0
      %1859 = vmatprep.subr.bf16.mxu0 0
      %1860 = vmatpush1.bf16.msra.mxu0 0
      %1861 = vmatprep.subr.bf16.mxu0 0
      %1862 = vmatpush1.bf16.msra.mxu0 0
      %1863 = vmatprep.subr.bf16.mxu0 0
      %1864 = vmatpush1.bf16.msra.mxu0 0
      %1865 = vmatprep.subr.bf16.mxu0 0
      %1866 = vmatpush1.bf16.msra.mxu0 0
      %1867 = vmatprep.subr.bf16.mxu0 0
      %1868 = vmatpush1.bf16.msra.mxu0 0
      %1869 = vmatprep.mubr.bf16.mxu0 0
      %1870 = vmatmul.mubr.bf16.gmra.mrb[0].mxu0 %v1835
      %v1871 = vpop.f32.mrb[0].mxu0
      %v1872 = vadd.f32 0.0, %v1871
      %v1873 = vpop.f32.mrb[0].mxu0
      %v1874 = vadd.f32 0.0, %v1873
      %v1875 = vpop.f32.mrb[0].mxu0
      %v1876 = vadd.f32 0.0, %v1875
      %v1877 = vpop.f32.mrb[0].mxu0
      %v1878 = vadd.f32 0.0, %v1877
      %1879 = vdwg.mxu0
      %v1880 = vpack.c.bf16 %v1876, %v1872
      %v1881 = vpack.c.bf16 %v1878, %v1874
      %s1882 = scalar_lea.vmem %s4, 256
      %v1883 = vld [vmem:[%s1882] sm:$0xff]
      %v1884 = vld [vmem:[%s1882 + $0x8] sm:$0xff]
      %v1885 = vld [vmem:[%s1882 + $0x10] sm:$0xff]
      %v1886 = vld [vmem:[%s1882 + $0x18] sm:$0xff]
      %v1887 = vld [vmem:[%s1882 + $0x20] sm:$0xff]
      %v1888 = vld [vmem:[%s1882 + $0x28] sm:$0xff]
      %v1889 = vld [vmem:[%s1882 + $0x30] sm:$0xff]
      %v1890 = vld [vmem:[%s1882 + $0x38] sm:$0xff]
      %v1891 = vld [vmem:[%s1882 + $0x40] sm:$0xff]
      %v1892 = vld [vmem:[%s1882 + $0x48] sm:$0xff]
      %v1893 = vld [vmem:[%s1882 + $0x50] sm:$0xff]
      %v1894 = vld [vmem:[%s1882 + $0x58] sm:$0xff]
      %v1895 = vld [vmem:[%s1882 + $0x60] sm:$0xff]
      %v1896 = vld [vmem:[%s1882 + $0x68] sm:$0xff]
      %v1897 = vld [vmem:[%s1882 + $0x70] sm:$0xff]
      %v1898 = vld [vmem:[%s1882 + $0x78] sm:$0xff]
      %v1899 = vld [vmem:[%s1882 + $0x80] sm:$0xff]
      %v1900 = vld [vmem:[%s1882 + $0x88] sm:$0xff]
      %v1901 = vld [vmem:[%s1882 + $0x90] sm:$0xff]
      %v1902 = vld [vmem:[%s1882 + $0x98] sm:$0xff]
      %v1903 = vld [vmem:[%s1882 + $0xa0] sm:$0xff]
      %v1904 = vld [vmem:[%s1882 + $0xa8] sm:$0xff]
      %v1905 = vld [vmem:[%s1882 + $0xb0] sm:$0xff]
      %v1906 = vld [vmem:[%s1882 + $0xb8] sm:$0xff]
      %v1907 = vld [vmem:[%s1882 + $0xc0] sm:$0xff]
      %v1908 = vld [vmem:[%s1882 + $0xc8] sm:$0xff]
      %v1909 = vld [vmem:[%s1882 + $0xd0] sm:$0xff]
      %v1910 = vld [vmem:[%s1882 + $0xd8] sm:$0xff]
      %v1911 = vld [vmem:[%s1882 + $0xe0] sm:$0xff]
      %v1912 = vld [vmem:[%s1882 + $0xe8] sm:$0xff]
      %v1913 = vld [vmem:[%s1882 + $0xf0] sm:$0xff]
      %v1914 = vld [vmem:[%s1882 + $0xf8] sm:$0xff]
      %v1947 = vunpack.c.l.b16 %v1883
      %v1948 = vunpack.c.h.b16 %v1883
      %v1949 = vunpack.c.l.b16 %v1884
      %v1950 = vunpack.c.h.b16 %v1884
      %v1951 = vunpack.c.l.b16 %v1885
      %v1952 = vunpack.c.h.b16 %v1885
      %v1953 = vunpack.c.l.b16 %v1886
      %v1954 = vunpack.c.h.b16 %v1886
      %v1955 = vunpack.c.l.b16 %v1887
      %v1956 = vunpack.c.h.b16 %v1887
      %v1957 = vunpack.c.l.b16 %v1888
      %v1958 = vunpack.c.h.b16 %v1888
      %v1959 = vunpack.c.l.b16 %v1889
      %v1960 = vunpack.c.h.b16 %v1889
      %v1961 = vunpack.c.l.b16 %v1890
      %v1962 = vunpack.c.h.b16 %v1890
      %v1963 = vunpack.c.l.b16 %v1891
      %v1964 = vunpack.c.h.b16 %v1891
      %v1965 = vunpack.c.l.b16 %v1892
      %v1966 = vunpack.c.h.b16 %v1892
      %v1967 = vunpack.c.l.b16 %v1893
      %v1968 = vunpack.c.h.b16 %v1893
      %v1969 = vunpack.c.l.b16 %v1894
      %v1970 = vunpack.c.h.b16 %v1894
      %v1971 = vunpack.c.l.b16 %v1895
      %v1972 = vunpack.c.h.b16 %v1895
      %v1973 = vunpack.c.l.b16 %v1896
      %v1974 = vunpack.c.h.b16 %v1896
      %v1975 = vunpack.c.l.b16 %v1897
      %v1976 = vunpack.c.h.b16 %v1897
      %v1977 = vunpack.c.l.b16 %v1898
      %v1978 = vunpack.c.h.b16 %v1898
      %v1979 = vunpack.c.l.b16 %v1899
      %v1980 = vunpack.c.h.b16 %v1899
      %v1981 = vunpack.c.l.b16 %v1900
      %v1982 = vunpack.c.h.b16 %v1900
      %v1983 = vunpack.c.l.b16 %v1901
      %v1984 = vunpack.c.h.b16 %v1901
      %v1985 = vunpack.c.l.b16 %v1902
      %v1986 = vunpack.c.h.b16 %v1902
      %v1987 = vunpack.c.l.b16 %v1903
      %v1988 = vunpack.c.h.b16 %v1903
      %v1989 = vunpack.c.l.b16 %v1904
      %v1990 = vunpack.c.h.b16 %v1904
      %v1991 = vunpack.c.l.b16 %v1905
      %v1992 = vunpack.c.h.b16 %v1905
      %v1993 = vunpack.c.l.b16 %v1906
      %v1994 = vunpack.c.h.b16 %v1906
      %v1995 = vunpack.c.l.b16 %v1907
      %v1996 = vunpack.c.h.b16 %v1907
      %v1997 = vunpack.c.l.b16 %v1908
      %v1998 = vunpack.c.h.b16 %v1908
      %v1999 = vunpack.c.l.b16 %v1909
      %v2000 = vunpack.c.h.b16 %v1909
      %v2001 = vunpack.c.l.b16 %v1910
      %v2002 = vunpack.c.h.b16 %v1910
      %v2003 = vunpack.c.l.b16 %v1911
      %v2004 = vunpack.c.h.b16 %v1911
      %v2005 = vunpack.c.l.b16 %v1912
      %v2006 = vunpack.c.h.b16 %v1912
      %v2007 = vunpack.c.l.b16 %v1913
      %v2008 = vunpack.c.h.b16 %v1913
      %v2009 = vunpack.c.l.b16 %v1914
      %v2010 = vunpack.c.h.b16 %v1914
      %v2011 = vpack.c.b16 %v1949, %v1947
      %v2012 = vpack.c.b16 %v1950, %v1948
      %v2013 = vpack.c.b16 %v1953, %v1951
      %v2014 = vpack.c.b16 %v1954, %v1952
      %v2015 = vpack.c.b16 %v1957, %v1955
      %v2016 = vpack.c.b16 %v1958, %v1956
      %v2017 = vpack.c.b16 %v1961, %v1959
      %v2018 = vpack.c.b16 %v1962, %v1960
      %v2019 = vpack.c.b16 %v1965, %v1963
      %v2020 = vpack.c.b16 %v1966, %v1964
      %v2021 = vpack.c.b16 %v1969, %v1967
      %v2022 = vpack.c.b16 %v1970, %v1968
      %v2023 = vpack.c.b16 %v1973, %v1971
      %v2024 = vpack.c.b16 %v1974, %v1972
      %v2025 = vpack.c.b16 %v1977, %v1975
      %v2026 = vpack.c.b16 %v1978, %v1976
      %v2027 = vpack.c.b16 %v1981, %v1979
      %v2028 = vpack.c.b16 %v1982, %v1980
      %v2029 = vpack.c.b16 %v1985, %v1983
      %v2030 = vpack.c.b16 %v1986, %v1984
      %v2031 = vpack.c.b16 %v1989, %v1987
      %v2032 = vpack.c.b16 %v1990, %v1988
      %v2033 = vpack.c.b16 %v1993, %v1991
      %v2034 = vpack.c.b16 %v1994, %v1992
      %v2035 = vpack.c.b16 %v1997, %v1995
      %v2036 = vpack.c.b16 %v1998, %v1996
      %v2037 = vpack.c.b16 %v2001, %v1999
      %v2038 = vpack.c.b16 %v2002, %v2000
      %v2039 = vpack.c.b16 %v2005, %v2003
      %v2040 = vpack.c.b16 %v2006, %v2004
      %v2041 = vpack.c.b16 %v2009, %v2007
      %v2042 = vpack.c.b16 %v2010, %v2008
      %2075 = vmatprep.subr.bf16.mxu0 %v2012
      %2076 = vmatpush1.bf16.msra.mxu0 %v2011
      %2077 = vmatprep.subr.bf16.mxu0 %v2014
      %2078 = vmatpush1.bf16.msra.mxu0 %v2013
      %2079 = vmatprep.subr.bf16.mxu0 %v2016
      %2080 = vmatpush1.bf16.msra.mxu0 %v2015
      %2081 = vmatprep.subr.bf16.mxu0 %v2018
      %2082 = vmatpush1.bf16.msra.mxu0 %v2017
      %2083 = vmatprep.subr.bf16.mxu0 %v2020
      %2084 = vmatpush1.bf16.msra.mxu0 %v2019
      %2085 = vmatprep.subr.bf16.mxu0 %v2022
      %2086 = vmatpush1.bf16.msra.mxu0 %v2021
      %2087 = vmatprep.subr.bf16.mxu0 %v2024
      %2088 = vmatpush1.bf16.msra.mxu0 %v2023
      %2089 = vmatprep.subr.bf16.mxu0 %v2026
      %2090 = vmatpush1.bf16.msra.mxu0 %v2025
      %2091 = vmatprep.subr.bf16.mxu0 %v2028
      %2092 = vmatpush1.bf16.msra.mxu0 %v2027
      %2093 = vmatprep.subr.bf16.mxu0 %v2030
      %2094 = vmatpush1.bf16.msra.mxu0 %v2029
      %2095 = vmatprep.subr.bf16.mxu0 %v2032
      %2096 = vmatpush1.bf16.msra.mxu0 %v2031
      %2097 = vmatprep.subr.bf16.mxu0 %v2034
      %2098 = vmatpush1.bf16.msra.mxu0 %v2033
      %2099 = vmatprep.subr.bf16.mxu0 %v2036
      %2100 = vmatpush1.bf16.msra.mxu0 %v2035
      %2101 = vmatprep.subr.bf16.mxu0 %v2038
      %2102 = vmatpush1.bf16.msra.mxu0 %v2037
      %2103 = vmatprep.subr.bf16.mxu0 %v2040
      %2104 = vmatpush1.bf16.msra.mxu0 %v2039
      %2105 = vmatprep.subr.bf16.mxu0 %v2042
      %2106 = vmatpush1.bf16.msra.mxu0 %v2041
      %2107 = vmatprep.mubr.bf16.mxu0 %v1881
      %2108 = vmatmul.mubr.bf16.gmra.mrb[0].mxu0 %v1880
      %v2109 = vpop.f32.mrb[0].mxu0
      %v2110 = vadd.f32 0.0, %v2109
      %v2111 = vpop.f32.mrb[0].mxu0
      %v2112 = vadd.f32 0.0, %v2111
      %v2113 = vpop.f32.mrb[0].mxu0
      %v2114 = vadd.f32 0.0, %v2113
      %v2115 = vpop.f32.mrb[0].mxu0
      %v2116 = vadd.f32 0.0, %v2115
      %2117 = vdwg.mxu0
      %v2150 = vunpack.c.l.b16 %v1794
      %v2151 = vunpack.c.h.b16 %v1794
      %v2152 = vunpack.c.l.b16 %v1795
      %v2153 = vunpack.c.h.b16 %v1795
      %v2154 = vunpack.c.l.b16 %v1796
      %v2155 = vunpack.c.h.b16 %v1796
      %v2156 = vunpack.c.l.b16 %v1797
      %v2157 = vunpack.c.h.b16 %v1797
      %v2158 = vunpack.c.l.b16 %v1798
      %v2159 = vunpack.c.h.b16 %v1798
      %v2160 = vunpack.c.l.b16 %v1799
      %v2161 = vunpack.c.h.b16 %v1799
      %v2162 = vunpack.c.l.b16 %v1800
      %v2163 = vunpack.c.h.b16 %v1800
      %v2164 = vunpack.c.l.b16 %v1801
      %v2165 = vunpack.c.h.b16 %v1801
      %v2166 = vunpack.c.l.b16 %v1802
      %v2167 = vunpack.c.h.b16 %v1802
      %v2168 = vunpack.c.l.b16 %v1803
      %v2169 = vunpack.c.h.b16 %v1803
      %v2170 = vunpack.c.l.b16 %v1804
      %v2171 = vunpack.c.h.b16 %v1804
      %v2172 = vunpack.c.l.b16 %v1805
      %v2173 = vunpack.c.h.b16 %v1805
      %v2174 = vunpack.c.l.b16 %v1806
      %v2175 = vunpack.c.h.b16 %v1806
      %v2176 = vunpack.c.l.b16 %v1807
      %v2177 = vunpack.c.h.b16 %v1807
      %v2178 = vunpack.c.l.b16 %v1808
      %v2179 = vunpack.c.h.b16 %v1808
      %v2180 = vunpack.c.l.b16 %v1809
      %v2181 = vunpack.c.h.b16 %v1809
      %v2182 = vunpack.c.l.b16 %v1810
      %v2183 = vunpack.c.h.b16 %v1810
      %v2184 = vunpack.c.l.b16 %v1811
      %v2185 = vunpack.c.h.b16 %v1811
      %v2186 = vunpack.c.l.b16 %v1812
      %v2187 = vunpack.c.h.b16 %v1812
      %v2188 = vunpack.c.l.b16 %v1813
      %v2189 = vunpack.c.h.b16 %v1813
      %v2190 = vunpack.c.l.b16 %v1814
      %v2191 = vunpack.c.h.b16 %v1814
      %v2192 = vunpack.c.l.b16 %v1815
      %v2193 = vunpack.c.h.b16 %v1815
      %v2194 = vunpack.c.l.b16 %v1816
      %v2195 = vunpack.c.h.b16 %v1816
      %v2196 = vunpack.c.l.b16 %v1817
      %v2197 = vunpack.c.h.b16 %v1817
      %v2198 = vunpack.c.l.b16 %v1818
      %v2199 = vunpack.c.h.b16 %v1818
      %v2200 = vunpack.c.l.b16 %v1819
      %v2201 = vunpack.c.h.b16 %v1819
      %v2202 = vunpack.c.l.b16 %v1820
      %v2203 = vunpack.c.h.b16 %v1820
      %v2204 = vunpack.c.l.b16 %v1821
      %v2205 = vunpack.c.h.b16 %v1821
      %v2206 = vunpack.c.l.b16 %v1822
      %v2207 = vunpack.c.h.b16 %v1822
      %v2208 = vunpack.c.l.b16 %v1823
      %v2209 = vunpack.c.h.b16 %v1823
      %v2210 = vunpack.c.l.b16 %v1824
      %v2211 = vunpack.c.h.b16 %v1824
      %v2212 = vunpack.c.l.b16 %v1825
      %v2213 = vunpack.c.h.b16 %v1825
      %v2214 = vpack.c.b16 %v2152, %v2150
      %v2215 = vpack.c.b16 %v2153, %v2151
      %v2216 = vpack.c.b16 %v2156, %v2154
      %v2217 = vpack.c.b16 %v2157, %v2155
      %v2218 = vpack.c.b16 %v2160, %v2158
      %v2219 = vpack.c.b16 %v2161, %v2159
      %v2220 = vpack.c.b16 %v2164, %v2162
      %v2221 = vpack.c.b16 %v2165, %v2163
      %v2222 = vpack.c.b16 %v2168, %v2166
      %v2223 = vpack.c.b16 %v2169, %v2167
      %v2224 = vpack.c.b16 %v2172, %v2170
      %v2225 = vpack.c.b16 %v2173, %v2171
      %v2226 = vpack.c.b16 %v2176, %v2174
      %v2227 = vpack.c.b16 %v2177, %v2175
      %v2228 = vpack.c.b16 %v2180, %v2178
      %v2229 = vpack.c.b16 %v2181, %v2179
      %v2230 = vpack.c.b16 %v2184, %v2182
      %v2231 = vpack.c.b16 %v2185, %v2183
      %v2232 = vpack.c.b16 %v2188, %v2186
      %v2233 = vpack.c.b16 %v2189, %v2187
      %v2234 = vpack.c.b16 %v2192, %v2190
      %v2235 = vpack.c.b16 %v2193, %v2191
      %v2236 = vpack.c.b16 %v2196, %v2194
      %v2237 = vpack.c.b16 %v2197, %v2195
      %v2238 = vpack.c.b16 %v2200, %v2198
      %v2239 = vpack.c.b16 %v2201, %v2199
      %v2240 = vpack.c.b16 %v2204, %v2202
      %v2241 = vpack.c.b16 %v2205, %v2203
      %v2242 = vpack.c.b16 %v2208, %v2206
      %v2243 = vpack.c.b16 %v2209, %v2207
      %v2244 = vpack.c.b16 %v2212, %v2210
      %v2245 = vpack.c.b16 %v2213, %v2211
      %2278 = vmatprep.subr.bf16.mxu0 %v2215
      %2279 = vmatpush1.bf16.msra.mxu0 %v2214
      %2280 = vmatprep.subr.bf16.mxu0 %v2217
      %2281 = vmatpush1.bf16.msra.mxu0 %v2216
      %2282 = vmatprep.subr.bf16.mxu0 %v2219
      %2283 = vmatpush1.bf16.msra.mxu0 %v2218
      %2284 = vmatprep.subr.bf16.mxu0 %v2221
      %2285 = vmatpush1.bf16.msra.mxu0 %v2220
      %2286 = vmatprep.subr.bf16.mxu0 %v2223
      %2287 = vmatpush1.bf16.msra.mxu0 %v2222
      %2288 = vmatprep.subr.bf16.mxu0 %v2225
      %2289 = vmatpush1.bf16.msra.mxu0 %v2224
      %2290 = vmatprep.subr.bf16.mxu0 %v2227
      %2291 = vmatpush1.bf16.msra.mxu0 %v2226
      %2292 = vmatprep.subr.bf16.mxu0 %v2229
      %2293 = vmatpush1.bf16.msra.mxu0 %v2228
      %2294 = vmatprep.subr.bf16.mxu0 %v2231
      %2295 = vmatpush1.bf16.msra.mxu0 %v2230
      %2296 = vmatprep.subr.bf16.mxu0 %v2233
      %2297 = vmatpush1.bf16.msra.mxu0 %v2232
      %2298 = vmatprep.subr.bf16.mxu0 %v2235
      %2299 = vmatpush1.bf16.msra.mxu0 %v2234
      %2300 = vmatprep.subr.bf16.mxu0 %v2237
      %2301 = vmatpush1.bf16.msra.mxu0 %v2236
      %2302 = vmatprep.subr.bf16.mxu0 %v2239
      %2303 = vmatpush1.bf16.msra.mxu0 %v2238
      %2304 = vmatprep.subr.bf16.mxu0 %v2241
      %2305 = vmatpush1.bf16.msra.mxu0 %v2240
      %2306 = vmatprep.subr.bf16.mxu0 %v2243
      %2307 = vmatpush1.bf16.msra.mxu0 %v2242
      %2308 = vmatprep.subr.bf16.mxu0 %v2245
      %2309 = vmatpush1.bf16.msra.mxu0 %v2244
      %2310 = vmatprep.mubr.bf16.mxu0 %v1793
      %2311 = vmatmul.mubr.bf16.gmra.mrb[0].mxu0 %v1792
      %v2312 = vpop.f32.mrb[0].mxu0
      %v2313 = vadd.f32 %v2110, %v2312
      %v2314 = vpop.f32.mrb[0].mxu0
      %v2315 = vadd.f32 %v2112, %v2314
      %v2316 = vpop.f32.mrb[0].mxu0
      %v2317 = vadd.f32 %v2114, %v2316
      %v2318 = vpop.f32.mrb[0].mxu0
      %v2319 = vadd.f32 %v2116, %v2318
      %2320 = vdwg.mxu0
      %s2321 = scalar_lea.vmem %s3, 16
      %v2322 = vld [vmem:[%s2321] sm:$0xf]
      %v2323 = vld [vmem:[%s2321 + $0x4] sm:$0xf]
      %v2326 = vunpack.c.l.b16 %v2322
      %v2327 = vunpack.c.l.b16 %v2323
      %v2328 = vpack.c.b16 %v2327, %v2326
      %v2330 = vsel %vm1745, %v2328, 0
      %2332 = vmatprep.subr.bf16.mxu0 %v1735
      %2333 = vmatpush1.bf16.msra.mxu0 %v1734
      %2334 = vmatprep.subr.bf16.mxu0 %v1737
      %2335 = vmatpush1.bf16.msra.mxu0 %v1736
      %2336 = vmatprep.subr.bf16.mxu0 0
      %2337 = vmatpush1.bf16.msra.mxu0 0
      %2338 = vmatprep.subr.bf16.mxu0 0
      %2339 = vmatpush1.bf16.msra.mxu0 0
      %2340 = vmatprep.subr.bf16.mxu0 0
      %2341 = vmatpush1.bf16.msra.mxu0 0
      %2342 = vmatprep.subr.bf16.mxu0 0
      %2343 = vmatpush1.bf16.msra.mxu0 0
      %2344 = vmatprep.subr.bf16.mxu0 0
      %2345 = vmatpush1.bf16.msra.mxu0 0
      %2346 = vmatprep.subr.bf16.mxu0 0
      %2347 = vmatpush1.bf16.msra.mxu0 0
      %2348 = vmatprep.subr.bf16.mxu0 0
      %2349 = vmatpush1.bf16.msra.mxu0 0
      %2350 = vmatprep.subr.bf16.mxu0 0
      %2351 = vmatpush1.bf16.msra.mxu0 0
      %2352 = vmatprep.subr.bf16.mxu0 0
      %2353 = vmatpush1.bf16.msra.mxu0 0
      %2354 = vmatprep.subr.bf16.mxu0 0
      %2355 = vmatpush1.bf16.msra.mxu0 0
      %2356 = vmatprep.subr.bf16.mxu0 0
      %2357 = vmatpush1.bf16.msra.mxu0 0
      %2358 = vmatprep.subr.bf16.mxu0 0
      %2359 = vmatpush1.bf16.msra.mxu0 0
      %2360 = vmatprep.subr.bf16.mxu0 0
      %2361 = vmatpush1.bf16.msra.mxu0 0
      %2362 = vmatprep.subr.bf16.mxu0 0
      %2363 = vmatpush1.bf16.msra.mxu0 0
      %2364 = vmatprep.mubr.bf16.mxu0 0
      %2365 = vmatmul.mubr.bf16.gmra.mrb[0].mxu0 %v2330
      %v2366 = vpop.f32.mrb[0].mxu0
      %v2367 = vadd.f32 0.0, %v2366
      %v2368 = vpop.f32.mrb[0].mxu0
      %v2369 = vadd.f32 0.0, %v2368
      %v2370 = vpop.f32.mrb[0].mxu0
      %v2371 = vadd.f32 0.0, %v2370
      %v2372 = vpop.f32.mrb[0].mxu0
      %v2373 = vadd.f32 0.0, %v2372
      %2374 = vdwg.mxu0
      %v2375 = vpack.c.bf16 %v2371, %v2367
      %v2376 = vpack.c.bf16 %v2373, %v2369
      %s2377 = scalar_lea.vmem %s4, 512
      %v2378 = vld [vmem:[%s2377] sm:$0xff]
      %v2379 = vld [vmem:[%s2377 + $0x8] sm:$0xff]
      %v2380 = vld [vmem:[%s2377 + $0x10] sm:$0xff]
      %v2381 = vld [vmem:[%s2377 + $0x18] sm:$0xff]
      %v2382 = vld [vmem:[%s2377 + $0x20] sm:$0xff]
      %v2383 = vld [vmem:[%s2377 + $0x28] sm:$0xff]
      %v2384 = vld [vmem:[%s2377 + $0x30] sm:$0xff]
      %v2385 = vld [vmem:[%s2377 + $0x38] sm:$0xff]
      %v2386 = vld [vmem:[%s2377 + $0x40] sm:$0xff]
      %v2387 = vld [vmem:[%s2377 + $0x48] sm:$0xff]
      %v2388 = vld [vmem:[%s2377 + $0x50] sm:$0xff]
      %v2389 = vld [vmem:[%s2377 + $0x58] sm:$0xff]
      %v2390 = vld [vmem:[%s2377 + $0x60] sm:$0xff]
      %v2391 = vld [vmem:[%s2377 + $0x68] sm:$0xff]
      %v2392 = vld [vmem:[%s2377 + $0x70] sm:$0xff]
      %v2393 = vld [vmem:[%s2377 + $0x78] sm:$0xff]
      %v2394 = vld [vmem:[%s2377 + $0x80] sm:$0xff]
      %v2395 = vld [vmem:[%s2377 + $0x88] sm:$0xff]
      %v2396 = vld [vmem:[%s2377 + $0x90] sm:$0xff]
      %v2397 = vld [vmem:[%s2377 + $0x98] sm:$0xff]
      %v2398 = vld [vmem:[%s2377 + $0xa0] sm:$0xff]
      %v2399 = vld [vmem:[%s2377 + $0xa8] sm:$0xff]
      %v2400 = vld [vmem:[%s2377 + $0xb0] sm:$0xff]
      %v2401 = vld [vmem:[%s2377 + $0xb8] sm:$0xff]
      %v2402 = vld [vmem:[%s2377 + $0xc0] sm:$0xff]
      %v2403 = vld [vmem:[%s2377 + $0xc8] sm:$0xff]
      %v2404 = vld [vmem:[%s2377 + $0xd0] sm:$0xff]
      %v2405 = vld [vmem:[%s2377 + $0xd8] sm:$0xff]
      %v2406 = vld [vmem:[%s2377 + $0xe0] sm:$0xff]
      %v2407 = vld [vmem:[%s2377 + $0xe8] sm:$0xff]
      %v2408 = vld [vmem:[%s2377 + $0xf0] sm:$0xff]
      %v2409 = vld [vmem:[%s2377 + $0xf8] sm:$0xff]
      %v2442 = vunpack.c.l.b16 %v2378
      %v2443 = vunpack.c.h.b16 %v2378
      %v2444 = vunpack.c.l.b16 %v2379
      %v2445 = vunpack.c.h.b16 %v2379
      %v2446 = vunpack.c.l.b16 %v2380
      %v2447 = vunpack.c.h.b16 %v2380
      %v2448 = vunpack.c.l.b16 %v2381
      %v2449 = vunpack.c.h.b16 %v2381
      %v2450 = vunpack.c.l.b16 %v2382
      %v2451 = vunpack.c.h.b16 %v2382
      %v2452 = vunpack.c.l.b16 %v2383
      %v2453 = vunpack.c.h.b16 %v2383
      %v2454 = vunpack.c.l.b16 %v2384
      %v2455 = vunpack.c.h.b16 %v2384
      %v2456 = vunpack.c.l.b16 %v2385
      %v2457 = vunpack.c.h.b16 %v2385
      %v2458 = vunpack.c.l.b16 %v2386
      %v2459 = vunpack.c.h.b16 %v2386
      %v2460 = vunpack.c.l.b16 %v2387
      %v2461 = vunpack.c.h.b16 %v2387
      %v2462 = vunpack.c.l.b16 %v2388
      %v2463 = vunpack.c.h.b16 %v2388
      %v2464 = vunpack.c.l.b16 %v2389
      %v2465 = vunpack.c.h.b16 %v2389
      %v2466 = vunpack.c.l.b16 %v2390
      %v2467 = vunpack.c.h.b16 %v2390
      %v2468 = vunpack.c.l.b16 %v2391
      %v2469 = vunpack.c.h.b16 %v2391
      %v2470 = vunpack.c.l.b16 %v2392
      %v2471 = vunpack.c.h.b16 %v2392
      %v2472 = vunpack.c.l.b16 %v2393
      %v2473 = vunpack.c.h.b16 %v2393
      %v2474 = vunpack.c.l.b16 %v2394
      %v2475 = vunpack.c.h.b16 %v2394
      %v2476 = vunpack.c.l.b16 %v2395
      %v2477 = vunpack.c.h.b16 %v2395
      %v2478 = vunpack.c.l.b16 %v2396
      %v2479 = vunpack.c.h.b16 %v2396
      %v2480 = vunpack.c.l.b16 %v2397
      %v2481 = vunpack.c.h.b16 %v2397
      %v2482 = vunpack.c.l.b16 %v2398
      %v2483 = vunpack.c.h.b16 %v2398
      %v2484 = vunpack.c.l.b16 %v2399
      %v2485 = vunpack.c.h.b16 %v2399
      %v2486 = vunpack.c.l.b16 %v2400
      %v2487 = vunpack.c.h.b16 %v2400
      %v2488 = vunpack.c.l.b16 %v2401
      %v2489 = vunpack.c.h.b16 %v2401
      %v2490 = vunpack.c.l.b16 %v2402
      %v2491 = vunpack.c.h.b16 %v2402
      %v2492 = vunpack.c.l.b16 %v2403
      %v2493 = vunpack.c.h.b16 %v2403
      %v2494 = vunpack.c.l.b16 %v2404
      %v2495 = vunpack.c.h.b16 %v2404
      %v2496 = vunpack.c.l.b16 %v2405
      %v2497 = vunpack.c.h.b16 %v2405
      %v2498 = vunpack.c.l.b16 %v2406
      %v2499 = vunpack.c.h.b16 %v2406
      %v2500 = vunpack.c.l.b16 %v2407
      %v2501 = vunpack.c.h.b16 %v2407
      %v2502 = vunpack.c.l.b16 %v2408
      %v2503 = vunpack.c.h.b16 %v2408
      %v2504 = vunpack.c.l.b16 %v2409
      %v2505 = vunpack.c.h.b16 %v2409
      %v2506 = vpack.c.b16 %v2444, %v2442
      %v2507 = vpack.c.b16 %v2445, %v2443
      %v2508 = vpack.c.b16 %v2448, %v2446
      %v2509 = vpack.c.b16 %v2449, %v2447
      %v2510 = vpack.c.b16 %v2452, %v2450
      %v2511 = vpack.c.b16 %v2453, %v2451
      %v2512 = vpack.c.b16 %v2456, %v2454
      %v2513 = vpack.c.b16 %v2457, %v2455
      %v2514 = vpack.c.b16 %v2460, %v2458
      %v2515 = vpack.c.b16 %v2461, %v2459
      %v2516 = vpack.c.b16 %v2464, %v2462
      %v2517 = vpack.c.b16 %v2465, %v2463
      %v2518 = vpack.c.b16 %v2468, %v2466
      %v2519 = vpack.c.b16 %v2469, %v2467
      %v2520 = vpack.c.b16 %v2472, %v2470
      %v2521 = vpack.c.b16 %v2473, %v2471
      %v2522 = vpack.c.b16 %v2476, %v2474
      %v2523 = vpack.c.b16 %v2477, %v2475
      %v2524 = vpack.c.b16 %v2480, %v2478
      %v2525 = vpack.c.b16 %v2481, %v2479
      %v2526 = vpack.c.b16 %v2484, %v2482
      %v2527 = vpack.c.b16 %v2485, %v2483
      %v2528 = vpack.c.b16 %v2488, %v2486
      %v2529 = vpack.c.b16 %v2489, %v2487
      %v2530 = vpack.c.b16 %v2492, %v2490
      %v2531 = vpack.c.b16 %v2493, %v2491
      %v2532 = vpack.c.b16 %v2496, %v2494
      %v2533 = vpack.c.b16 %v2497, %v2495
      %v2534 = vpack.c.b16 %v2500, %v2498
      %v2535 = vpack.c.b16 %v2501, %v2499
      %v2536 = vpack.c.b16 %v2504, %v2502
      %v2537 = vpack.c.b16 %v2505, %v2503
      %2570 = vmatprep.subr.bf16.mxu0 %v2507
      %2571 = vmatpush1.bf16.msra.mxu0 %v2506
      %2572 = vmatprep.subr.bf16.mxu0 %v2509
      %2573 = vmatpush1.bf16.msra.mxu0 %v2508
      %2574 = vmatprep.subr.bf16.mxu0 %v2511
      %2575 = vmatpush1.bf16.msra.mxu0 %v2510
      %2576 = vmatprep.subr.bf16.mxu0 %v2513
      %2577 = vmatpush1.bf16.msra.mxu0 %v2512
      %2578 = vmatprep.subr.bf16.mxu0 %v2515
      %2579 = vmatpush1.bf16.msra.mxu0 %v2514
      %2580 = vmatprep.subr.bf16.mxu0 %v2517
      %2581 = vmatpush1.bf16.msra.mxu0 %v2516
      %2582 = vmatprep.subr.bf16.mxu0 %v2519
      %2583 = vmatpush1.bf16.msra.mxu0 %v2518
      %2584 = vmatprep.subr.bf16.mxu0 %v2521
      %2585 = vmatpush1.bf16.msra.mxu0 %v2520
      %2586 = vmatprep.subr.bf16.mxu0 %v2523
      %2587 = vmatpush1.bf16.msra.mxu0 %v2522
      %2588 = vmatprep.subr.bf16.mxu0 %v2525
      %2589 = vmatpush1.bf16.msra.mxu0 %v2524
      %2590 = vmatprep.subr.bf16.mxu0 %v2527
      %2591 = vmatpush1.bf16.msra.mxu0 %v2526
      %2592 = vmatprep.subr.bf16.mxu0 %v2529
      %2593 = vmatpush1.bf16.msra.mxu0 %v2528
      %2594 = vmatprep.subr.bf16.mxu0 %v2531
      %2595 = vmatpush1.bf16.msra.mxu0 %v2530
      %2596 = vmatprep.subr.bf16.mxu0 %v2533
      %2597 = vmatpush1.bf16.msra.mxu0 %v2532
      %2598 = vmatprep.subr.bf16.mxu0 %v2535
      %2599 = vmatpush1.bf16.msra.mxu0 %v2534
      %2600 = vmatprep.subr.bf16.mxu0 %v2537
      %2601 = vmatpush1.bf16.msra.mxu0 %v2536
      %2602 = vmatprep.mubr.bf16.mxu0 %v2376
      %2603 = vmatmul.mubr.bf16.gmra.mrb[0].mxu0 %v2375
      %v2604 = vpop.f32.mrb[0].mxu0
      %v2605 = vadd.f32 0.0, %v2604
      %v2606 = vpop.f32.mrb[0].mxu0
      %v2607 = vadd.f32 0.0, %v2606
      %v2608 = vpop.f32.mrb[0].mxu0
      %v2609 = vadd.f32 0.0, %v2608
      %v2610 = vpop.f32.mrb[0].mxu0
      %v2611 = vadd.f32 0.0, %v2610
      %2612 = vdwg.mxu0
      %v2613 = vadd.f32 %v2313, %v2605
      %v2614 = vadd.f32 %v2315, %v2607
      %v2615 = vadd.f32 %v2317, %v2609
      %v2616 = vadd.f32 %v2319, %v2611
      %s2617 = scalar_lea.vmem %s3, 24
      %v2618 = vld [vmem:[%s2617] sm:$0xf]
      %v2619 = vld [vmem:[%s2617 + $0x4] sm:$0xf]
      %v2622 = vunpack.c.l.b16 %v2618
      %v2623 = vunpack.c.l.b16 %v2619
      %v2624 = vpack.c.b16 %v2623, %v2622
      %v2626 = vsel %vm1745, %v2624, 0
      %2628 = vmatprep.subr.bf16.mxu0 %v1735
      %2629 = vmatpush1.bf16.msra.mxu0 %v1734
      %2630 = vmatprep.subr.bf16.mxu0 %v1737
      %2631 = vmatpush1.bf16.msra.mxu0 %v1736
      %2632 = vmatprep.subr.bf16.mxu0 0
      %2633 = vmatpush1.bf16.msra.mxu0 0
      %2634 = vmatprep.subr.bf16.mxu0 0
      %2635 = vmatpush1.bf16.msra.mxu0 0
      %2636 = vmatprep.subr.bf16.mxu0 0
      %2637 = vmatpush1.bf16.msra.mxu0 0
      %2638 = vmatprep.subr.bf16.mxu0 0
      %2639 = vmatpush1.bf16.msra.mxu0 0
      %2640 = vmatprep.subr.bf16.mxu0 0
      %2641 = vmatpush1.bf16.msra.mxu0 0
      %2642 = vmatprep.subr.bf16.mxu0 0
      %2643 = vmatpush1.bf16.msra.mxu0 0
      %2644 = vmatprep.subr.bf16.mxu0 0
      %2645 = vmatpush1.bf16.msra.mxu0 0
      %2646 = vmatprep.subr.bf16.mxu0 0
      %2647 = vmatpush1.bf16.msra.mxu0 0
      %2648 = vmatprep.subr.bf16.mxu0 0
      %2649 = vmatpush1.bf16.msra.mxu0 0
      %2650 = vmatprep.subr.bf16.mxu0 0
      %2651 = vmatpush1.bf16.msra.mxu0 0
      %2652 = vmatprep.subr.bf16.mxu0 0
      %2653 = vmatpush1.bf16.msra.mxu0 0
      %2654 = vmatprep.subr.bf16.mxu0 0
      %2655 = vmatpush1.bf16.msra.mxu0 0
      %2656 = vmatprep.subr.bf16.mxu0 0
      %2657 = vmatpush1.bf16.msra.mxu0 0
      %2658 = vmatprep.subr.bf16.mxu0 0
      %2659 = vmatpush1.bf16.msra.mxu0 0
      %2660 = vmatprep.mubr.bf16.mxu0 0
      %2661 = vmatmul.mubr.bf16.gmra.mrb[0].mxu0 %v2626
      %v2662 = vpop.f32.mrb[0].mxu0
      %v2663 = vadd.f32 0.0, %v2662
      %v2664 = vpop.f32.mrb[0].mxu0
      %v2665 = vadd.f32 0.0, %v2664
      %v2666 = vpop.f32.mrb[0].mxu0
      %v2667 = vadd.f32 0.0, %v2666
      %v2668 = vpop.f32.mrb[0].mxu0
      %v2669 = vadd.f32 0.0, %v2668
      %2670 = vdwg.mxu0
      %v2671 = vpack.c.bf16 %v2667, %v2663
      %v2672 = vpack.c.bf16 %v2669, %v2665
      %s2673 = scalar_lea.vmem %s4, 768
      %v2674 = vld [vmem:[%s2673] sm:$0xff]
      %v2675 = vld [vmem:[%s2673 + $0x8] sm:$0xff]
      %v2676 = vld [vmem:[%s2673 + $0x10] sm:$0xff]
      %v2677 = vld [vmem:[%s2673 + $0x18] sm:$0xff]
      %v2678 = vld [vmem:[%s2673 + $0x20] sm:$0xff]
      %v2679 = vld [vmem:[%s2673 + $0x28] sm:$0xff]
      %v2680 = vld [vmem:[%s2673 + $0x30] sm:$0xff]
      %v2681 = vld [vmem:[%s2673 + $0x38] sm:$0xff]
      %v2682 = vld [vmem:[%s2673 + $0x40] sm:$0xff]
      %v2683 = vld [vmem:[%s2673 + $0x48] sm:$0xff]
      %v2684 = vld [vmem:[%s2673 + $0x50] sm:$0xff]
      %v2685 = vld [vmem:[%s2673 + $0x58] sm:$0xff]
      %v2686 = vld [vmem:[%s2673 + $0x60] sm:$0xff]
      %v2687 = vld [vmem:[%s2673 + $0x68] sm:$0xff]
      %v2688 = vld [vmem:[%s2673 + $0x70] sm:$0xff]
      %v2689 = vld [vmem:[%s2673 + $0x78] sm:$0xff]
      %v2690 = vld [vmem:[%s2673 + $0x80] sm:$0xff]
      %v2691 = vld [vmem:[%s2673 + $0x88] sm:$0xff]
      %v2692 = vld [vmem:[%s2673 + $0x90] sm:$0xff]
      %v2693 = vld [vmem:[%s2673 + $0x98] sm:$0xff]
      %v2694 = vld [vmem:[%s2673 + $0xa0] sm:$0xff]
      %v2695 = vld [vmem:[%s2673 + $0xa8] sm:$0xff]
      %v2696 = vld [vmem:[%s2673 + $0xb0] sm:$0xff]
      %v2697 = vld [vmem:[%s2673 + $0xb8] sm:$0xff]
      %v2698 = vld [vmem:[%s2673 + $0xc0] sm:$0xff]
      %v2699 = vld [vmem:[%s2673 + $0xc8] sm:$0xff]
      %v2700 = vld [vmem:[%s2673 + $0xd0] sm:$0xff]
      %v2701 = vld [vmem:[%s2673 + $0xd8] sm:$0xff]
      %v2702 = vld [vmem:[%s2673 + $0xe0] sm:$0xff]
      %v2703 = vld [vmem:[%s2673 + $0xe8] sm:$0xff]
      %v2704 = vld [vmem:[%s2673 + $0xf0] sm:$0xff]
      %v2705 = vld [vmem:[%s2673 + $0xf8] sm:$0xff]
      %v2738 = vunpack.c.l.b16 %v2674
      %v2739 = vunpack.c.h.b16 %v2674
      %v2740 = vunpack.c.l.b16 %v2675
      %v2741 = vunpack.c.h.b16 %v2675
      %v2742 = vunpack.c.l.b16 %v2676
      %v2743 = vunpack.c.h.b16 %v2676
      %v2744 = vunpack.c.l.b16 %v2677
      %v2745 = vunpack.c.h.b16 %v2677
      %v2746 = vunpack.c.l.b16 %v2678
      %v2747 = vunpack.c.h.b16 %v2678
      %v2748 = vunpack.c.l.b16 %v2679
      %v2749 = vunpack.c.h.b16 %v2679
      %v2750 = vunpack.c.l.b16 %v2680
      %v2751 = vunpack.c.h.b16 %v2680
      %v2752 = vunpack.c.l.b16 %v2681
      %v2753 = vunpack.c.h.b16 %v2681
      %v2754 = vunpack.c.l.b16 %v2682
      %v2755 = vunpack.c.h.b16 %v2682
      %v2756 = vunpack.c.l.b16 %v2683
      %v2757 = vunpack.c.h.b16 %v2683
      %v2758 = vunpack.c.l.b16 %v2684
      %v2759 = vunpack.c.h.b16 %v2684
      %v2760 = vunpack.c.l.b16 %v2685
      %v2761 = vunpack.c.h.b16 %v2685
      %v2762 = vunpack.c.l.b16 %v2686
      %v2763 = vunpack.c.h.b16 %v2686
      %v2764 = vunpack.c.l.b16 %v2687
      %v2765 = vunpack.c.h.b16 %v2687
      %v2766 = vunpack.c.l.b16 %v2688
      %v2767 = vunpack.c.h.b16 %v2688
      %v2768 = vunpack.c.l.b16 %v2689
      %v2769 = vunpack.c.h.b16 %v2689
      %v2770 = vunpack.c.l.b16 %v2690
      %v2771 = vunpack.c.h.b16 %v2690
      %v2772 = vunpack.c.l.b16 %v2691
      %v2773 = vunpack.c.h.b16 %v2691
      %v2774 = vunpack.c.l.b16 %v2692
      %v2775 = vunpack.c.h.b16 %v2692
      %v2776 = vunpack.c.l.b16 %v2693
      %v2777 = vunpack.c.h.b16 %v2693
      %v2778 = vunpack.c.l.b16 %v2694
      %v2779 = vunpack.c.h.b16 %v2694
      %v2780 = vunpack.c.l.b16 %v2695
      %v2781 = vunpack.c.h.b16 %v2695
      %v2782 = vunpack.c.l.b16 %v2696
      %v2783 = vunpack.c.h.b16 %v2696
      %v2784 = vunpack.c.l.b16 %v2697
      %v2785 = vunpack.c.h.b16 %v2697
      %v2786 = vunpack.c.l.b16 %v2698
      %v2787 = vunpack.c.h.b16 %v2698
      %v2788 = vunpack.c.l.b16 %v2699
      %v2789 = vunpack.c.h.b16 %v2699
      %v2790 = vunpack.c.l.b16 %v2700
      %v2791 = vunpack.c.h.b16 %v2700
      %v2792 = vunpack.c.l.b16 %v2701
      %v2793 = vunpack.c.h.b16 %v2701
      %v2794 = vunpack.c.l.b16 %v2702
      %v2795 = vunpack.c.h.b16 %v2702
      %v2796 = vunpack.c.l.b16 %v2703
      %v2797 = vunpack.c.h.b16 %v2703
      %v2798 = vunpack.c.l.b16 %v2704
      %v2799 = vunpack.c.h.b16 %v2704
      %v2800 = vunpack.c.l.b16 %v2705
      %v2801 = vunpack.c.h.b16 %v2705
      %v2802 = vpack.c.b16 %v2740, %v2738
      %v2803 = vpack.c.b16 %v2741, %v2739
      %v2804 = vpack.c.b16 %v2744, %v2742
      %v2805 = vpack.c.b16 %v2745, %v2743
      %v2806 = vpack.c.b16 %v2748, %v2746
      %v2807 = vpack.c.b16 %v2749, %v2747
      %v2808 = vpack.c.b16 %v2752, %v2750
      %v2809 = vpack.c.b16 %v2753, %v2751
      %v2810 = vpack.c.b16 %v2756, %v2754
      %v2811 = vpack.c.b16 %v2757, %v2755
      %v2812 = vpack.c.b16 %v2760, %v2758
      %v2813 = vpack.c.b16 %v2761, %v2759
      %v2814 = vpack.c.b16 %v2764, %v2762
      %v2815 = vpack.c.b16 %v2765, %v2763
      %v2816 = vpack.c.b16 %v2768, %v2766
      %v2817 = vpack.c.b16 %v2769, %v2767
      %v2818 = vpack.c.b16 %v2772, %v2770
      %v2819 = vpack.c.b16 %v2773, %v2771
      %v2820 = vpack.c.b16 %v2776, %v2774
      %v2821 = vpack.c.b16 %v2777, %v2775
      %v2822 = vpack.c.b16 %v2780, %v2778
      %v2823 = vpack.c.b16 %v2781, %v2779
      %v2824 = vpack.c.b16 %v2784, %v2782
      %v2825 = vpack.c.b16 %v2785, %v2783
      %v2826 = vpack.c.b16 %v2788, %v2786
      %v2827 = vpack.c.b16 %v2789, %v2787
      %v2828 = vpack.c.b16 %v2792, %v2790
      %v2829 = vpack.c.b16 %v2793, %v2791
      %v2830 = vpack.c.b16 %v2796, %v2794
      %v2831 = vpack.c.b16 %v2797, %v2795
      %v2832 = vpack.c.b16 %v2800, %v2798
      %v2833 = vpack.c.b16 %v2801, %v2799
      %2866 = vmatprep.subr.bf16.mxu0 %v2803
      %2867 = vmatpush1.bf16.msra.mxu0 %v2802
      %2868 = vmatprep.subr.bf16.mxu0 %v2805
      %2869 = vmatpush1.bf16.msra.mxu0 %v2804
      %2870 = vmatprep.subr.bf16.mxu0 %v2807
      %2871 = vmatpush1.bf16.msra.mxu0 %v2806
      %2872 = vmatprep.subr.bf16.mxu0 %v2809
      %2873 = vmatpush1.bf16.msra.mxu0 %v2808
      %2874 = vmatprep.subr.bf16.mxu0 %v2811
      %2875 = vmatpush1.bf16.msra.mxu0 %v2810
      %2876 = vmatprep.subr.bf16.mxu0 %v2813
      %2877 = vmatpush1.bf16.msra.mxu0 %v2812
      %2878 = vmatprep.subr.bf16.mxu0 %v2815
      %2879 = vmatpush1.bf16.msra.mxu0 %v2814
      %2880 = vmatprep.subr.bf16.mxu0 %v2817
      %2881 = vmatpush1.bf16.msra.mxu0 %v2816
      %2882 = vmatprep.subr.bf16.mxu0 %v2819
      %2883 = vmatpush1.bf16.msra.mxu0 %v2818
      %2884 = vmatprep.subr.bf16.mxu0 %v2821
      %2885 = vmatpush1.bf16.msra.mxu0 %v2820
      %2886 = vmatprep.subr.bf16.mxu0 %v2823
      %2887 = vmatpush1.bf16.msra.mxu0 %v2822
      %2888 = vmatprep.subr.bf16.mxu0 %v2825
      %2889 = vmatpush1.bf16.msra.mxu0 %v2824
      %2890 = vmatprep.subr.bf16.mxu0 %v2827
      %2891 = vmatpush1.bf16.msra.mxu0 %v2826
      %2892 = vmatprep.subr.bf16.mxu0 %v2829
      %2893 = vmatpush1.bf16.msra.mxu0 %v2828
      %2894 = vmatprep.subr.bf16.mxu0 %v2831
      %2895 = vmatpush1.bf16.msra.mxu0 %v2830
      %2896 = vmatprep.subr.bf16.mxu0 %v2833
      %2897 = vmatpush1.bf16.msra.mxu0 %v2832
      %2898 = vmatprep.mubr.bf16.mxu0 %v2672
      %2899 = vmatmul.mubr.bf16.gmra.mrb[0].mxu0 %v2671
      %v2900 = vpop.f32.mrb[0].mxu0
      %v2901 = vadd.f32 0.0, %v2900
      %v2902 = vpop.f32.mrb[0].mxu0
      %v2903 = vadd.f32 0.0, %v2902
      %v2904 = vpop.f32.mrb[0].mxu0
      %v2905 = vadd.f32 0.0, %v2904
      %v2906 = vpop.f32.mrb[0].mxu0
      %v2907 = vadd.f32 0.0, %v2906
      %2908 = vdwg.mxu0
      %v2909 = vadd.f32 %v2613, %v2901
      %v2910 = vadd.f32 %v2614, %v2903
      %v2911 = vadd.f32 %v2615, %v2905
      %v2912 = vadd.f32 %v2616, %v2907
      %v2913 = vadd.f32 %v2909, %v2911
      %v2914 = vrot.slane %v2913, 4
      %v2915 = vadd.f32 %v2913, %v2914
      %v2916 = vrot.slane %v2915, 2
      %v2917 = vadd.f32 %v2915, %v2916
      %v2918 = vrot.slane %v2917, 1
      %v2919 = vadd.f32 %v2917, %v2918
      %v2920 = vadd.f32 %v2910, %v2912
      %v2921 = vrot.slane %v2920, 4
      %v2922 = vadd.f32 %v2920, %v2921
      %v2923 = vrot.slane %v2922, 2
      %v2924 = vadd.f32 %v2922, %v2923
      %v2925 = vrot.slane %v2924, 1
      %v2926 = vadd.f32 %v2924, %v2925
      %v2927 = vmul.f32 %v2909, %v2909
      %v2928 = vmul.f32 %v2910, %v2910
      %v2929 = vmul.f32 %v2911, %v2911
      %v2930 = vmul.f32 %v2912, %v2912
      %v2931 = vadd.f32 %v2927, %v2929
      %v2932 = vrot.slane %v2931, 4
      %v2933 = vadd.f32 %v2931, %v2932
      %v2934 = vrot.slane %v2933, 2
      %v2935 = vadd.f32 %v2933, %v2934
      %v2936 = vrot.slane %v2935, 1
      %v2937 = vadd.f32 %v2935, %v2936
      %v2938 = vadd.f32 %v2928, %v2930
      %v2939 = vrot.slane %v2938, 4
      %v2940 = vadd.f32 %v2938, %v2939
      %v2941 = vrot.slane %v2940, 2
      %v2942 = vadd.f32 %v2940, %v2941
      %v2943 = vrot.slane %v2942, 1
      %v2944 = vadd.f32 %v2942, %v2943
      %v2945 = vld [vmem:[%s5] sm:$0xff]
      %v2946 = vld [vmem:[%s5 + $0x8] sm:$0xff]
      %v2947 = vld [vmem:[%s5 + $0x10] sm:$0xff]
      %v2948 = vld [vmem:[%s5 + $0x18] sm:$0xff]
      %v2949 = vld [vmem:[%s5 + $0x20] sm:$0xff]
      %v2950 = vld [vmem:[%s5 + $0x28] sm:$0xff]
      %v2951 = vld [vmem:[%s5 + $0x30] sm:$0xff]
      %v2952 = vld [vmem:[%s5 + $0x38] sm:$0xff]
      %v2953 = vld [vmem:[%s5 + $0x40] sm:$0xff]
      %v2954 = vld [vmem:[%s5 + $0x48] sm:$0xff]
      %v2955 = vld [vmem:[%s5 + $0x50] sm:$0xff]
      %v2956 = vld [vmem:[%s5 + $0x58] sm:$0xff]
      %v2957 = vld [vmem:[%s5 + $0x60] sm:$0xff]
      %v2958 = vld [vmem:[%s5 + $0x68] sm:$0xff]
      %v2959 = vld [vmem:[%s5 + $0x70] sm:$0xff]
      %v2960 = vld [vmem:[%s5 + $0x78] sm:$0xff]
      %v2961 = vld [vmem:[%s5 + $0x80] sm:$0xff]
      %v2962 = vld [vmem:[%s5 + $0x88] sm:$0xff]
      %v2963 = vld [vmem:[%s5 + $0x90] sm:$0xff]
      %v2964 = vld [vmem:[%s5 + $0x98] sm:$0xff]
      %v2965 = vld [vmem:[%s5 + $0xa0] sm:$0xff]
      %v2966 = vld [vmem:[%s5 + $0xa8] sm:$0xff]
      %v2967 = vld [vmem:[%s5 + $0xb0] sm:$0xff]
      %v2968 = vld [vmem:[%s5 + $0xb8] sm:$0xff]
      %v2969 = vld [vmem:[%s5 + $0xc0] sm:$0xff]
      %v2970 = vld [vmem:[%s5 + $0xc8] sm:$0xff]
      %v2971 = vld [vmem:[%s5 + $0xd0] sm:$0xff]
      %v2972 = vld [vmem:[%s5 + $0xd8] sm:$0xff]
      %v2973 = vld [vmem:[%s5 + $0xe0] sm:$0xff]
      %v2974 = vld [vmem:[%s5 + $0xe8] sm:$0xff]
      %v2975 = vld [vmem:[%s5 + $0xf0] sm:$0xff]
      %v2976 = vld [vmem:[%s5 + $0xf8] sm:$0xff]
      %2977 = vmatprep.subr.mxu0 0.0
      %2978 = vmatpush1.msra.mxu0 %v2945
      %2979 = vmatprep.subr.mxu0 0.0
      %2980 = vmatpush1.msra.mxu0 %v2946
      %2981 = vmatprep.subr.mxu0 0.0
      %2982 = vmatpush1.msra.mxu0 %v2947
      %2983 = vmatprep.subr.mxu0 0.0
      %2984 = vmatpush1.msra.mxu0 %v2948
      %2985 = vmatprep.subr.mxu0 0.0
      %2986 = vmatpush1.msra.mxu0 %v2949
      %2987 = vmatprep.subr.mxu0 0.0
      %2988 = vmatpush1.msra.mxu0 %v2950
      %2989 = vmatprep.subr.mxu0 0.0
      %2990 = vmatpush1.msra.mxu0 %v2951
      %2991 = vmatprep.subr.mxu0 0.0
      %2992 = vmatpush1.msra.mxu0 %v2952
      %2993 = vmatprep.subr.mxu0 0.0
      %2994 = vmatpush1.msra.mxu0 %v2953
      %2995 = vmatprep.subr.mxu0 0.0
      %2996 = vmatpush1.msra.mxu0 %v2954
      %2997 = vmatprep.subr.mxu0 0.0
      %2998 = vmatpush1.msra.mxu0 %v2955
      %2999 = vmatprep.subr.mxu0 0.0
      %3000 = vmatpush1.msra.mxu0 %v2956
      %3001 = vmatprep.subr.mxu0 0.0
      %3002 = vmatpush1.msra.mxu0 %v2957
      %3003 = vmatprep.subr.mxu0 0.0
      %3004 = vmatpush1.msra.mxu0 %v2958
      %3005 = vmatprep.subr.mxu0 0.0
      %3006 = vmatpush1.msra.mxu0 %v2959
      %3007 = vmatprep.subr.mxu0 0.0
      %3008 = vmatpush1.msra.mxu0 %v2960
      %3009 = vmatprep.subr.mxu0 0.0
      %3010 = vmatpush1.msra.mxu0 %v2961
      %3011 = vmatprep.subr.mxu0 0.0
      %3012 = vmatpush1.msra.mxu0 %v2962
      %3013 = vmatprep.subr.mxu0 0.0
      %3014 = vmatpush1.msra.mxu0 %v2963
      %3015 = vmatprep.subr.mxu0 0.0
      %3016 = vmatpush1.msra.mxu0 %v2964
      %3017 = vmatprep.subr.mxu0 0.0
      %3018 = vmatpush1.msra.mxu0 %v2965
      %3019 = vmatprep.subr.mxu0 0.0
      %3020 = vmatpush1.msra.mxu0 %v2966
      %3021 = vmatprep.subr.mxu0 0.0
      %3022 = vmatpush1.msra.mxu0 %v2967
      %3023 = vmatprep.subr.mxu0 0.0
      %3024 = vmatpush1.msra.mxu0 %v2968
      %3025 = vmatprep.subr.mxu0 0.0
      %3026 = vmatpush1.msra.mxu0 %v2969
      %3027 = vmatprep.subr.mxu0 0.0
      %3028 = vmatpush1.msra.mxu0 %v2970
      %3029 = vmatprep.subr.mxu0 0.0
      %3030 = vmatpush1.msra.mxu0 %v2971
      %3031 = vmatprep.subr.mxu0 0.0
      %3032 = vmatpush1.msra.mxu0 %v2972
      %3033 = vmatprep.subr.mxu0 0.0
      %3034 = vmatpush1.msra.mxu0 %v2973
      %3035 = vmatprep.subr.mxu0 0.0
      %3036 = vmatpush1.msra.mxu0 %v2974
      %3037 = vmatprep.subr.mxu0 0.0
      %3038 = vmatpush1.msra.mxu0 %v2975
      %3039 = vmatprep.subr.mxu0 0.0
      %3040 = vmatpush1.msra.mxu0 %v2976
      %3041 = vmatprep.mubr.f32.mxu0 %v2926
      %3042 = vmatmul.mubr.f32.gmra.mrb[0].mxu0 %v2919
      %v3043 = vpop.f32.mrb[0].mxu0
      %v3044 = vadd.f32 0.0, %v3043
      %v3045 = vpop.f32.mrb[0].mxu0
      %3046 = vdwg.mxu0
      %v3047 = vmul.f32 %v3044, 0.00390625
      %3048 = vmatprep.subr.mxu0 0.0
      %3049 = vmatpush1.msra.mxu0 %v2945
      %3050 = vmatprep.subr.mxu0 0.0
      %3051 = vmatpush1.msra.mxu0 %v2946
      %3052 = vmatprep.subr.mxu0 0.0
      %3053 = vmatpush1.msra.mxu0 %v2947
      %3054 = vmatprep.subr.mxu0 0.0
      %3055 = vmatpush1.msra.mxu0 %v2948
      %3056 = vmatprep.subr.mxu0 0.0
      %3057 = vmatpush1.msra.mxu0 %v2949
      %3058 = vmatprep.subr.mxu0 0.0
      %3059 = vmatpush1.msra.mxu0 %v2950
      %3060 = vmatprep.subr.mxu0 0.0
      %3061 = vmatpush1.msra.mxu0 %v2951
      %3062 = vmatprep.subr.mxu0 0.0
      %3063 = vmatpush1.msra.mxu0 %v2952
      %3064 = vmatprep.subr.mxu0 0.0
      %3065 = vmatpush1.msra.mxu0 %v2953
      %3066 = vmatprep.subr.mxu0 0.0
      %3067 = vmatpush1.msra.mxu0 %v2954
      %3068 = vmatprep.subr.mxu0 0.0
      %3069 = vmatpush1.msra.mxu0 %v2955
      %3070 = vmatprep.subr.mxu0 0.0
      %3071 = vmatpush1.msra.mxu0 %v2956
      %3072 = vmatprep.subr.mxu0 0.0
      %3073 = vmatpush1.msra.mxu0 %v2957
      %3074 = vmatprep.subr.mxu0 0.0
      %3075 = vmatpush1.msra.mxu0 %v2958
      %3076 = vmatprep.subr.mxu0 0.0
      %3077 = vmatpush1.msra.mxu0 %v2959
      %3078 = vmatprep.subr.mxu0 0.0
      %3079 = vmatpush1.msra.mxu0 %v2960
      %3080 = vmatprep.subr.mxu0 0.0
      %3081 = vmatpush1.msra.mxu0 %v2961
      %3082 = vmatprep.subr.mxu0 0.0
      %3083 = vmatpush1.msra.mxu0 %v2962
      %3084 = vmatprep.subr.mxu0 0.0
      %3085 = vmatpush1.msra.mxu0 %v2963
      %3086 = vmatprep.subr.mxu0 0.0
      %3087 = vmatpush1.msra.mxu0 %v2964
      %3088 = vmatprep.subr.mxu0 0.0
      %3089 = vmatpush1.msra.mxu0 %v2965
      %3090 = vmatprep.subr.mxu0 0.0
      %3091 = vmatpush1.msra.mxu0 %v2966
      %3092 = vmatprep.subr.mxu0 0.0
      %3093 = vmatpush1.msra.mxu0 %v2967
      %3094 = vmatprep.subr.mxu0 0.0
      %3095 = vmatpush1.msra.mxu0 %v2968
      %3096 = vmatprep.subr.mxu0 0.0
      %3097 = vmatpush1.msra.mxu0 %v2969
      %3098 = vmatprep.subr.mxu0 0.0
      %3099 = vmatpush1.msra.mxu0 %v2970
      %3100 = vmatprep.subr.mxu0 0.0
      %3101 = vmatpush1.msra.mxu0 %v2971
      %3102 = vmatprep.subr.mxu0 0.0
      %3103 = vmatpush1.msra.mxu0 %v2972
      %3104 = vmatprep.subr.mxu0 0.0
      %3105 = vmatpush1.msra.mxu0 %v2973
      %3106 = vmatprep.subr.mxu0 0.0
      %3107 = vmatpush1.msra.mxu0 %v2974
      %3108 = vmatprep.subr.mxu0 0.0
      %3109 = vmatpush1.msra.mxu0 %v2975
      %3110 = vmatprep.subr.mxu0 0.0
      %3111 = vmatpush1.msra.mxu0 %v2976
      %3112 = vmatprep.mubr.f32.mxu0 %v2944
      %3113 = vmatmul.mubr.f32.gmra.mrb[0].mxu0 %v2937
      %v3114 = vpop.f32.mrb[0].mxu0
      %v3115 = vadd.f32 0.0, %v3114
      %v3116 = vpop.f32.mrb[0].mxu0
      %3117 = vdwg.mxu0
      %v3118 = vmul.f32 %v3115, 0.00390625
      %v3119 = vmul.f32 %v3047, %v3047
      %v3120 = vsub.f32 %v3118, %v3119
      %v3121 = vadd.f32 %v3120, 1e-05
      %v3122 = vrsqrt.pop %v3121
      %v3123 = vld [vmem:[%s6] sm:$0xff]
      %v3124 = vld [vmem:[%s6 + $0x8] sm:$0xff]
      %v3125 = vld [vmem:[%s6 + $0x10] sm:$0xff]
      %v3126 = vld [vmem:[%s6 + $0x18] sm:$0xff]
      %vm3127 = vcmask 130048
      %v3129 = vsel %vm3127, %v3047, 0
      %3131 = vmatprep.subr.mxu0 %v3124
      %3132 = vmatpush1.msra.mxu0 %v3123
      %3133 = vmatprep.subr.mxu0 %v3126
      %3134 = vmatpush1.msra.mxu0 %v3125
      %3135 = vmatprep.subr.mxu0 0.0
      %3136 = vmatpush1.msra.mxu0 0.0
      %3137 = vmatprep.subr.mxu0 0.0
      %3138 = vmatpush1.msra.mxu0 0.0
      %3139 = vmatprep.subr.mxu0 0.0
      %3140 = vmatpush1.msra.mxu0 0.0
      %3141 = vmatprep.subr.mxu0 0.0
      %3142 = vmatpush1.msra.mxu0 0.0
      %3143 = vmatprep.subr.mxu0 0.0
      %3144 = vmatpush1.msra.mxu0 0.0
      %3145 = vmatprep.subr.mxu0 0.0
      %3146 = vmatpush1.msra.mxu0 0.0
      %3147 = vmatprep.subr.mxu0 0.0
      %3148 = vmatpush1.msra.mxu0 0.0
      %3149 = vmatprep.subr.mxu0 0.0
      %3150 = vmatpush1.msra.mxu0 0.0
      %3151 = vmatprep.subr.mxu0 0.0
      %3152 = vmatpush1.msra.mxu0 0.0
      %3153 = vmatprep.subr.mxu0 0.0
      %3154 = vmatpush1.msra.mxu0 0.0
      %3155 = vmatprep.subr.mxu0 0.0
      %3156 = vmatpush1.msra.mxu0 0.0
      %3157 = vmatprep.subr.mxu0 0.0
      %3158 = vmatpush1.msra.mxu0 0.0
      %3159 = vmatprep.subr.mxu0 0.0
      %3160 = vmatpush1.msra.mxu0 0.0
      %3161 = vmatprep.subr.mxu0 0.0
      %3162 = vmatpush1.msra.mxu0 0.0
      %3163 = vmatprep.subr.mxu0 0.0
      %3164 = vmatpush1.msra.mxu0 0.0
      %3165 = vmatprep.subr.mxu0 0.0
      %3166 = vmatpush1.msra.mxu0 0.0
      %3167 = vmatprep.subr.mxu0 0.0
      %3168 = vmatpush1.msra.mxu0 0.0
      %3169 = vmatprep.subr.mxu0 0.0
      %3170 = vmatpush1.msra.mxu0 0.0
      %3171 = vmatprep.subr.mxu0 0.0
      %3172 = vmatpush1.msra.mxu0 0.0
      %3173 = vmatprep.subr.mxu0 0.0
      %3174 = vmatpush1.msra.mxu0 0.0
      %3175 = vmatprep.subr.mxu0 0.0
      %3176 = vmatpush1.msra.mxu0 0.0
      %3177 = vmatprep.subr.mxu0 0.0
      %3178 = vmatpush1.msra.mxu0 0.0
      %3179 = vmatprep.subr.mxu0 0.0
      %3180 = vmatpush1.msra.mxu0 0.0
      %3181 = vmatprep.subr.mxu0 0.0
      %3182 = vmatpush1.msra.mxu0 0.0
      %3183 = vmatprep.subr.mxu0 0.0
      %3184 = vmatpush1.msra.mxu0 0.0
      %3185 = vmatprep.subr.mxu0 0.0
      %3186 = vmatpush1.msra.mxu0 0.0
      %3187 = vmatprep.subr.mxu0 0.0
      %3188 = vmatpush1.msra.mxu0 0.0
      %3189 = vmatprep.subr.mxu0 0.0
      %3190 = vmatpush1.msra.mxu0 0.0
      %3191 = vmatprep.subr.mxu0 0.0
      %3192 = vmatpush1.msra.mxu0 0.0
      %3193 = vmatprep.subr.mxu0 0.0
      %3194 = vmatpush1.msra.mxu0 0.0
      %3195 = vmatprep.mubr.f32.mxu0 0.0
      %3196 = vmatmul.mubr.f32.gmra.mrb[0].mxu0 %v3129
      %v3197 = vpop.f32.mrb[0].mxu0
      %v3198 = vadd.f32 0.0, %v3197
      %v3199 = vpop.f32.mrb[0].mxu0
      %v3200 = vadd.f32 0.0, %v3199
      %3201 = vdwg.mxu0
      %v3203 = vsel %vm3127, %v3122, 0
      %3205 = vmatprep.subr.mxu0 %v3124
      %3206 = vmatpush1.msra.mxu0 %v3123
      %3207 = vmatprep.subr.mxu0 %v3126
      %3208 = vmatpush1.msra.mxu0 %v3125
      %3209 = vmatprep.subr.mxu0 0.0
      %3210 = vmatpush1.msra.mxu0 0.0
      %3211 = vmatprep.subr.mxu0 0.0
      %3212 = vmatpush1.msra.mxu0 0.0
      %3213 = vmatprep.subr.mxu0 0.0
      %3214 = vmatpush1.msra.mxu0 0.0
      %3215 = vmatprep.subr.mxu0 0.0
      %3216 = vmatpush1.msra.mxu0 0.0
      %3217 = vmatprep.subr.mxu0 0.0
      %3218 = vmatpush1.msra.mxu0 0.0
      %3219 = vmatprep.subr.mxu0 0.0
      %3220 = vmatpush1.msra.mxu0 0.0
      %3221 = vmatprep.subr.mxu0 0.0
      %3222 = vmatpush1.msra.mxu0 0.0
      %3223 = vmatprep.subr.mxu0 0.0
      %3224 = vmatpush1.msra.mxu0 0.0
      %3225 = vmatprep.subr.mxu0 0.0
      %3226 = vmatpush1.msra.mxu0 0.0
      %3227 = vmatprep.subr.mxu0 0.0
      %3228 = vmatpush1.msra.mxu0 0.0
      %3229 = vmatprep.subr.mxu0 0.0
      %3230 = vmatpush1.msra.mxu0 0.0
      %3231 = vmatprep.subr.mxu0 0.0
      %3232 = vmatpush1.msra.mxu0 0.0
      %3233 = vmatprep.subr.mxu0 0.0
      %3234 = vmatpush1.msra.mxu0 0.0
      %3235 = vmatprep.subr.mxu0 0.0
      %3236 = vmatpush1.msra.mxu0 0.0
      %3237 = vmatprep.subr.mxu0 0.0
      %3238 = vmatpush1.msra.mxu0 0.0
      %3239 = vmatprep.subr.mxu0 0.0
      %3240 = vmatpush1.msra.mxu0 0.0
      %3241 = vmatprep.subr.mxu0 0.0
      %3242 = vmatpush1.msra.mxu0 0.0
      %3243 = vmatprep.subr.mxu0 0.0
      %3244 = vmatpush1.msra.mxu0 0.0
      %3245 = vmatprep.subr.mxu0 0.0
      %3246 = vmatpush1.msra.mxu0 0.0
      %3247 = vmatprep.subr.mxu0 0.0
      %3248 = vmatpush1.msra.mxu0 0.0
      %3249 = vmatprep.subr.mxu0 0.0
      %3250 = vmatpush1.msra.mxu0 0.0
      %3251 = vmatprep.subr.mxu0 0.0
      %3252 = vmatpush1.msra.mxu0 0.0
      %3253 = vmatprep.subr.mxu0 0.0
      %3254 = vmatpush1.msra.mxu0 0.0
      %3255 = vmatprep.subr.mxu0 0.0
      %3256 = vmatpush1.msra.mxu0 0.0
      %3257 = vmatprep.subr.mxu0 0.0
      %3258 = vmatpush1.msra.mxu0 0.0
      %3259 = vmatprep.subr.mxu0 0.0
      %3260 = vmatpush1.msra.mxu0 0.0
      %3261 = vmatprep.subr.mxu0 0.0
      %3262 = vmatpush1.msra.mxu0 0.0
      %3263 = vmatprep.subr.mxu0 0.0
      %3264 = vmatpush1.msra.mxu0 0.0
      %3265 = vmatprep.subr.mxu0 0.0
      %3266 = vmatpush1.msra.mxu0 0.0
      %3267 = vmatprep.subr.mxu0 0.0
      %3268 = vmatpush1.msra.mxu0 0.0
      %3269 = vmatprep.mubr.f32.mxu0 0.0
      %3270 = vmatmul.mubr.f32.gmra.mrb[0].mxu0 %v3203
      %v3271 = vpop.f32.mrb[0].mxu0
      %v3272 = vadd.f32 0.0, %v3271
      %v3273 = vpop.f32.mrb[0].mxu0
      %v3274 = vadd.f32 0.0, %v3273
      %3275 = vdwg.mxu0
      %v3276 = vlaneseq
      %v3277 = vshrl.u32 %v3276, 7
      %v3278 = vsub.s32 0, %v3277
      %v3279 = vrot.slane %v3198, %v3278
      %v3280 = vlaneseq
      %v3281 = vshrl.u32 %v3280, 7
      %v3282 = vsub.s32 0, %v3281
      %v3283 = vrot.slane %v3200, %v3282
      %v3284 = vsub.f32 %v2909, %v3279
      %v3285 = vsub.f32 %v2910, %v3283
      %v3286 = vsub.f32 %v2911, %v3279
      %v3287 = vsub.f32 %v2912, %v3283
      %v3288 = vlaneseq
      %v3289 = vshrl.u32 %v3288, 7
      %v3290 = vsub.s32 0, %v3289
      %v3291 = vrot.slane %v3272, %v3290
      %v3292 = vlaneseq
      %v3293 = vshrl.u32 %v3292, 7
      %v3294 = vsub.s32 0, %v3293
      %v3295 = vrot.slane %v3274, %v3294
      %v3296 = vmul.f32 %v3284, %v3291
      %v3297 = vmul.f32 %v3285, %v3295
      %v3298 = vmul.f32 %v3286, %v3291
      %v3299 = vmul.f32 %v3287, %v3295
      %vm3300 = vcmp.gt.f32.partialorder %v3296, 0.0
      %vm3301 = vcmp.gt.f32.partialorder %v3297, 0.0
      %vm3302 = vcmp.gt.f32.partialorder %v3298, 0.0
      %vm3303 = vcmp.gt.f32.partialorder %v3299, 0.0
      %v3304 = vmul.f32 %v3296, 0.2
      %v3305 = vmul.f32 %v3297, 0.2
      %v3306 = vmul.f32 %v3298, 0.2
      %v3307 = vmul.f32 %v3299, 0.2
      %v3308 = vsel %vm3300, %v3296, %v3304
      %v3309 = vsel %vm3301, %v3297, %v3305
      %v3310 = vsel %vm3302, %v3298, %v3306
      %v3311 = vsel %vm3303, %v3299, %v3307
      %v3312 = vpack.c.bf16 %v3310, %v3308
      %v3313 = vpack.c.bf16 %v3311, %v3309
      %v3314 = vld [vmem:[%s7] sm:$0xf]
      %v3316 = vsel %vm3127, %v3314, 0
      %3318 = vmatprep.subr.bf16.mxu0 %v3313
      %3319 = vmatpush1.bf16.msra.mxu0 %v3312
      %3320 = vmatprep.subr.bf16.mxu0 0
      %3321 = vmatpush1.bf16.msra.mxu0 0
      %3322 = vmatprep.subr.bf16.mxu0 0
      %3323 = vmatpush1.bf16.msra.mxu0 0
      %3324 = vmatprep.subr.bf16.mxu0 0
      %3325 = vmatpush1.bf16.msra.mxu0 0
      %3326 = vmatprep.subr.bf16.mxu0 0
      %3327 = vmatpush1.bf16.msra.mxu0 0
      %3328 = vmatprep.subr.bf16.mxu0 0
      %3329 = vmatpush1.bf16.msra.mxu0 0
      %3330 = vmatprep.subr.bf16.mxu0 0
      %3331 = vmatpush1.bf16.msra.mxu0 0
      %3332 = vmatprep.subr.bf16.mxu0 0
      %3333 = vmatpush1.bf16.msra.mxu0 0
      %3334 = vmatprep.subr.bf16.mxu0 0
      %3335 = vmatpush1.bf16.msra.mxu0 0
      %3336 = vmatprep.subr.bf16.mxu0 0
      %3337 = vmatpush1.bf16.msra.mxu0 0
      %3338 = vmatprep.subr.bf16.mxu0 0
      %3339 = vmatpush1.bf16.msra.mxu0 0
      %3340 = vmatprep.subr.bf16.mxu0 0
      %3341 = vmatpush1.bf16.msra.mxu0 0
      %3342 = vmatprep.subr.bf16.mxu0 0
      %3343 = vmatpush1.bf16.msra.mxu0 0
      %3344 = vmatprep.subr.bf16.mxu0 0
      %3345 = vmatpush1.bf16.msra.mxu0 0
      %3346 = vmatprep.subr.bf16.mxu0 0
      %3347 = vmatpush1.bf16.msra.mxu0 0
      %3348 = vmatprep.subr.bf16.mxu0 0
      %3349 = vmatpush1.bf16.msra.mxu0 0
      %3350 = vmatprep.mubr.bf16.mxu0 0
      %3351 = vmatmul.mubr.bf16.gmra.mrb[0].mxu0 %v3316
      %v3352 = vpop.f32.mrb[0].mxu0
      %v3353 = vadd.f32 0.0, %v3352
      %v3354 = vpop.f32.mrb[0].mxu0
      %v3355 = vadd.f32 0.0, %v3354
      %v3356 = vpop.f32.mrb[0].mxu0
      %v3357 = vpop.f32.mrb[0].mxu0
      %3358 = vdwg.mxu0
      %v3359 = vpack.c.bf16 %v3353, %v3353
      %v3360 = vpack.c.bf16 %v3355, %v3355
      %v3361 = vld [vmem:[%s8] sm:$0xff]
      %v3362 = vld [vmem:[%s8 + $0x8] sm:$0xff]
      %v3363 = vld [vmem:[%s8 + $0x10] sm:$0xff]
      %v3364 = vld [vmem:[%s8 + $0x18] sm:$0xff]
      %v3365 = vld [vmem:[%s8 + $0x20] sm:$0xff]
      %v3366 = vld [vmem:[%s8 + $0x28] sm:$0xff]
      %v3367 = vld [vmem:[%s8 + $0x30] sm:$0xff]
      %v3368 = vld [vmem:[%s8 + $0x38] sm:$0xff]
      %v3369 = vld [vmem:[%s8 + $0x40] sm:$0xff]
      %v3370 = vld [vmem:[%s8 + $0x48] sm:$0xff]
      %v3371 = vld [vmem:[%s8 + $0x50] sm:$0xff]
      %v3372 = vld [vmem:[%s8 + $0x58] sm:$0xff]
      %v3373 = vld [vmem:[%s8 + $0x60] sm:$0xff]
      %v3374 = vld [vmem:[%s8 + $0x68] sm:$0xff]
      %v3375 = vld [vmem:[%s8 + $0x70] sm:$0xff]
      %v3376 = vld [vmem:[%s8 + $0x78] sm:$0xff]
      %v3377 = vld [vmem:[%s8 + $0x80] sm:$0xff]
      %v3378 = vld [vmem:[%s8 + $0x88] sm:$0xff]
      %v3379 = vld [vmem:[%s8 + $0x90] sm:$0xff]
      %v3380 = vld [vmem:[%s8 + $0x98] sm:$0xff]
      %v3381 = vld [vmem:[%s8 + $0xa0] sm:$0xff]
      %v3382 = vld [vmem:[%s8 + $0xa8] sm:$0xff]
      %v3383 = vld [vmem:[%s8 + $0xb0] sm:$0xff]
      %v3384 = vld [vmem:[%s8 + $0xb8] sm:$0xff]
      %v3385 = vld [vmem:[%s8 + $0xc0] sm:$0xff]
      %v3386 = vld [vmem:[%s8 + $0xc8] sm:$0xff]
      %v3387 = vld [vmem:[%s8 + $0xd0] sm:$0xff]
      %v3388 = vld [vmem:[%s8 + $0xd8] sm:$0xff]
      %v3389 = vld [vmem:[%s8 + $0xe0] sm:$0xff]
      %v3390 = vld [vmem:[%s8 + $0xe8] sm:$0xff]
      %v3391 = vld [vmem:[%s8 + $0xf0] sm:$0xff]
      %v3392 = vld [vmem:[%s8 + $0xf8] sm:$0xff]
      %s3393 = scalar_lea.vmem %s7, 4
      %v3394 = vld [vmem:[%s3393] sm:$0xf]
      %v3396 = vsel %vm3127, %v3394, 0
      %3398 = vmatprep.subr.bf16.mxu0 %v3313
      %3399 = vmatpush1.bf16.msra.mxu0 %v3312
      %3400 = vmatprep.subr.bf16.mxu0 0
      %3401 = vmatpush1.bf16.msra.mxu0 0
      %3402 = vmatprep.subr.bf16.mxu0 0
      %3403 = vmatpush1.bf16.msra.mxu0 0
      %3404 = vmatprep.subr.bf16.mxu0 0
      %3405 = vmatpush1.bf16.msra.mxu0 0
      %3406 = vmatprep.subr.bf16.mxu0 0
      %3407 = vmatpush1.bf16.msra.mxu0 0
      %3408 = vmatprep.subr.bf16.mxu0 0
      %3409 = vmatpush1.bf16.msra.mxu0 0
      %3410 = vmatprep.subr.bf16.mxu0 0
      %3411 = vmatpush1.bf16.msra.mxu0 0
      %3412 = vmatprep.subr.bf16.mxu0 0
      %3413 = vmatpush1.bf16.msra.mxu0 0
      %3414 = vmatprep.subr.bf16.mxu0 0
      %3415 = vmatpush1.bf16.msra.mxu0 0
      %3416 = vmatprep.subr.bf16.mxu0 0
      %3417 = vmatpush1.bf16.msra.mxu0 0
      %3418 = vmatprep.subr.bf16.mxu0 0
      %3419 = vmatpush1.bf16.msra.mxu0 0
      %3420 = vmatprep.subr.bf16.mxu0 0
      %3421 = vmatpush1.bf16.msra.mxu0 0
      %3422 = vmatprep.subr.bf16.mxu0 0
      %3423 = vmatpush1.bf16.msra.mxu0 0
      %3424 = vmatprep.subr.bf16.mxu0 0
      %3425 = vmatpush1.bf16.msra.mxu0 0
      %3426 = vmatprep.subr.bf16.mxu0 0
      %3427 = vmatpush1.bf16.msra.mxu0 0
      %3428 = vmatprep.subr.bf16.mxu0 0
      %3429 = vmatpush1.bf16.msra.mxu0 0
      %3430 = vmatprep.mubr.bf16.mxu0 0
      %3431 = vmatmul.mubr.bf16.gmra.mrb[0].mxu0 %v3396
      %v3432 = vpop.f32.mrb[0].mxu0
      %v3433 = vadd.f32 0.0, %v3432
      %v3434 = vpop.f32.mrb[0].mxu0
      %v3435 = vadd.f32 0.0, %v3434
      %v3436 = vpop.f32.mrb[0].mxu0
      %v3437 = vpop.f32.mrb[0].mxu0
      %3438 = vdwg.mxu0
      %v3439 = vpack.c.bf16 %v3433, %v3433
      %v3440 = vpack.c.bf16 %v3435, %v3435
      %s3441 = scalar_lea.vmem %s8, 256
      %v3442 = vld [vmem:[%s3441] sm:$0xff]
      %v3443 = vld [vmem:[%s3441 + $0x8] sm:$0xff]
      %v3444 = vld [vmem:[%s3441 + $0x10] sm:$0xff]
      %v3445 = vld [vmem:[%s3441 + $0x18] sm:$0xff]
      %v3446 = vld [vmem:[%s3441 + $0x20] sm:$0xff]
      %v3447 = vld [vmem:[%s3441 + $0x28] sm:$0xff]
      %v3448 = vld [vmem:[%s3441 + $0x30] sm:$0xff]
      %v3449 = vld [vmem:[%s3441 + $0x38] sm:$0xff]
      %v3450 = vld [vmem:[%s3441 + $0x40] sm:$0xff]
      %v3451 = vld [vmem:[%s3441 + $0x48] sm:$0xff]
      %v3452 = vld [vmem:[%s3441 + $0x50] sm:$0xff]
      %v3453 = vld [vmem:[%s3441 + $0x58] sm:$0xff]
      %v3454 = vld [vmem:[%s3441 + $0x60] sm:$0xff]
      %v3455 = vld [vmem:[%s3441 + $0x68] sm:$0xff]
      %v3456 = vld [vmem:[%s3441 + $0x70] sm:$0xff]
      %v3457 = vld [vmem:[%s3441 + $0x78] sm:$0xff]
      %v3458 = vld [vmem:[%s3441 + $0x80] sm:$0xff]
      %v3459 = vld [vmem:[%s3441 + $0x88] sm:$0xff]
      %v3460 = vld [vmem:[%s3441 + $0x90] sm:$0xff]
      %v3461 = vld [vmem:[%s3441 + $0x98] sm:$0xff]
      %v3462 = vld [vmem:[%s3441 + $0xa0] sm:$0xff]
      %v3463 = vld [vmem:[%s3441 + $0xa8] sm:$0xff]
      %v3464 = vld [vmem:[%s3441 + $0xb0] sm:$0xff]
      %v3465 = vld [vmem:[%s3441 + $0xb8] sm:$0xff]
      %v3466 = vld [vmem:[%s3441 + $0xc0] sm:$0xff]
      %v3467 = vld [vmem:[%s3441 + $0xc8] sm:$0xff]
      %v3468 = vld [vmem:[%s3441 + $0xd0] sm:$0xff]
      %v3469 = vld [vmem:[%s3441 + $0xd8] sm:$0xff]
      %v3470 = vld [vmem:[%s3441 + $0xe0] sm:$0xff]
      %v3471 = vld [vmem:[%s3441 + $0xe8] sm:$0xff]
      %v3472 = vld [vmem:[%s3441 + $0xf0] sm:$0xff]
      %v3473 = vld [vmem:[%s3441 + $0xf8] sm:$0xff]
      %v3506 = vunpack.c.l.b16 %v3442
      %v3507 = vunpack.c.h.b16 %v3442
      %v3508 = vunpack.c.l.b16 %v3443
      %v3509 = vunpack.c.h.b16 %v3443
      %v3510 = vunpack.c.l.b16 %v3444
      %v3511 = vunpack.c.h.b16 %v3444
      %v3512 = vunpack.c.l.b16 %v3445
      %v3513 = vunpack.c.h.b16 %v3445
      %v3514 = vunpack.c.l.b16 %v3446
      %v3515 = vunpack.c.h.b16 %v3446
      %v3516 = vunpack.c.l.b16 %v3447
      %v3517 = vunpack.c.h.b16 %v3447
      %v3518 = vunpack.c.l.b16 %v3448
      %v3519 = vunpack.c.h.b16 %v3448
      %v3520 = vunpack.c.l.b16 %v3449
      %v3521 = vunpack.c.h.b16 %v3449
      %v3522 = vunpack.c.l.b16 %v3450
      %v3523 = vunpack.c.h.b16 %v3450
      %v3524 = vunpack.c.l.b16 %v3451
      %v3525 = vunpack.c.h.b16 %v3451
      %v3526 = vunpack.c.l.b16 %v3452
      %v3527 = vunpack.c.h.b16 %v3452
      %v3528 = vunpack.c.l.b16 %v3453
      %v3529 = vunpack.c.h.b16 %v3453
      %v3530 = vunpack.c.l.b16 %v3454
      %v3531 = vunpack.c.h.b16 %v3454
      %v3532 = vunpack.c.l.b16 %v3455
      %v3533 = vunpack.c.h.b16 %v3455
      %v3534 = vunpack.c.l.b16 %v3456
      %v3535 = vunpack.c.h.b16 %v3456
      %v3536 = vunpack.c.l.b16 %v3457
      %v3537 = vunpack.c.h.b16 %v3457
      %v3538 = vunpack.c.l.b16 %v3458
      %v3539 = vunpack.c.h.b16 %v3458
      %v3540 = vunpack.c.l.b16 %v3459
      %v3541 = vunpack.c.h.b16 %v3459
      %v3542 = vunpack.c.l.b16 %v3460
      %v3543 = vunpack.c.h.b16 %v3460
      %v3544 = vunpack.c.l.b16 %v3461
      %v3545 = vunpack.c.h.b16 %v3461
      %v3546 = vunpack.c.l.b16 %v3462
      %v3547 = vunpack.c.h.b16 %v3462
      %v3548 = vunpack.c.l.b16 %v3463
      %v3549 = vunpack.c.h.b16 %v3463
      %v3550 = vunpack.c.l.b16 %v3464
      %v3551 = vunpack.c.h.b16 %v3464
      %v3552 = vunpack.c.l.b16 %v3465
      %v3553 = vunpack.c.h.b16 %v3465
      %v3554 = vunpack.c.l.b16 %v3466
      %v3555 = vunpack.c.h.b16 %v3466
      %v3556 = vunpack.c.l.b16 %v3467
      %v3557 = vunpack.c.h.b16 %v3467
      %v3558 = vunpack.c.l.b16 %v3468
      %v3559 = vunpack.c.h.b16 %v3468
      %v3560 = vunpack.c.l.b16 %v3469
      %v3561 = vunpack.c.h.b16 %v3469
      %v3562 = vunpack.c.l.b16 %v3470
      %v3563 = vunpack.c.h.b16 %v3470
      %v3564 = vunpack.c.l.b16 %v3471
      %v3565 = vunpack.c.h.b16 %v3471
      %v3566 = vunpack.c.l.b16 %v3472
      %v3567 = vunpack.c.h.b16 %v3472
      %v3568 = vunpack.c.l.b16 %v3473
      %v3569 = vunpack.c.h.b16 %v3473
      %v3570 = vpack.c.b16 %v3508, %v3506
      %v3571 = vpack.c.b16 %v3509, %v3507
      %v3572 = vpack.c.b16 %v3512, %v3510
      %v3573 = vpack.c.b16 %v3513, %v3511
      %v3574 = vpack.c.b16 %v3516, %v3514
      %v3575 = vpack.c.b16 %v3517, %v3515
      %v3576 = vpack.c.b16 %v3520, %v3518
      %v3577 = vpack.c.b16 %v3521, %v3519
      %v3578 = vpack.c.b16 %v3524, %v3522
      %v3579 = vpack.c.b16 %v3525, %v3523
      %v3580 = vpack.c.b16 %v3528, %v3526
      %v3581 = vpack.c.b16 %v3529, %v3527
      %v3582 = vpack.c.b16 %v3532, %v3530
      %v3583 = vpack.c.b16 %v3533, %v3531
      %v3584 = vpack.c.b16 %v3536, %v3534
      %v3585 = vpack.c.b16 %v3537, %v3535
      %v3586 = vpack.c.b16 %v3540, %v3538
      %v3587 = vpack.c.b16 %v3541, %v3539
      %v3588 = vpack.c.b16 %v3544, %v3542
      %v3589 = vpack.c.b16 %v3545, %v3543
      %v3590 = vpack.c.b16 %v3548, %v3546
      %v3591 = vpack.c.b16 %v3549, %v3547
      %v3592 = vpack.c.b16 %v3552, %v3550
      %v3593 = vpack.c.b16 %v3553, %v3551
      %v3594 = vpack.c.b16 %v3556, %v3554
      %v3595 = vpack.c.b16 %v3557, %v3555
      %v3596 = vpack.c.b16 %v3560, %v3558
      %v3597 = vpack.c.b16 %v3561, %v3559
      %v3598 = vpack.c.b16 %v3564, %v3562
      %v3599 = vpack.c.b16 %v3565, %v3563
      %v3600 = vpack.c.b16 %v3568, %v3566
      %v3601 = vpack.c.b16 %v3569, %v3567
      %3634 = vmatprep.subr.bf16.mxu0 %v3571
      %3635 = vmatpush1.bf16.msra.mxu0 %v3570
      %3636 = vmatprep.subr.bf16.mxu0 %v3573
      %3637 = vmatpush1.bf16.msra.mxu0 %v3572
      %3638 = vmatprep.subr.bf16.mxu0 %v3575
      %3639 = vmatpush1.bf16.msra.mxu0 %v3574
      %3640 = vmatprep.subr.bf16.mxu0 %v3577
      %3641 = vmatpush1.bf16.msra.mxu0 %v3576
      %3642 = vmatprep.subr.bf16.mxu0 %v3579
      %3643 = vmatpush1.bf16.msra.mxu0 %v3578
      %3644 = vmatprep.subr.bf16.mxu0 %v3581
      %3645 = vmatpush1.bf16.msra.mxu0 %v3580
      %3646 = vmatprep.subr.bf16.mxu0 %v3583
      %3647 = vmatpush1.bf16.msra.mxu0 %v3582
      %3648 = vmatprep.subr.bf16.mxu0 %v3585
      %3649 = vmatpush1.bf16.msra.mxu0 %v3584
      %3650 = vmatprep.subr.bf16.mxu0 %v3587
      %3651 = vmatpush1.bf16.msra.mxu0 %v3586
      %3652 = vmatprep.subr.bf16.mxu0 %v3589
      %3653 = vmatpush1.bf16.msra.mxu0 %v3588
      %3654 = vmatprep.subr.bf16.mxu0 %v3591
      %3655 = vmatpush1.bf16.msra.mxu0 %v3590
      %3656 = vmatprep.subr.bf16.mxu0 %v3593
      %3657 = vmatpush1.bf16.msra.mxu0 %v3592
      %3658 = vmatprep.subr.bf16.mxu0 %v3595
      %3659 = vmatpush1.bf16.msra.mxu0 %v3594
      %3660 = vmatprep.subr.bf16.mxu0 %v3597
      %3661 = vmatpush1.bf16.msra.mxu0 %v3596
      %3662 = vmatprep.subr.bf16.mxu0 %v3599
      %3663 = vmatpush1.bf16.msra.mxu0 %v3598
      %3664 = vmatprep.subr.bf16.mxu0 %v3601
      %3665 = vmatpush1.bf16.msra.mxu0 %v3600
      %3666 = vmatprep.mubr.bf16.mxu0 %v3440
      %3667 = vmatmul.mubr.bf16.gmra.mrb[0].mxu0 %v3439
      %v3668 = vpop.f32.mrb[0].mxu0
      %v3669 = vadd.f32 0.0, %v3668
      %v3670 = vpop.f32.mrb[0].mxu0
      %v3671 = vadd.f32 0.0, %v3670
      %v3672 = vpop.f32.mrb[0].mxu0
      %v3673 = vpop.f32.mrb[0].mxu0
      %3674 = vdwg.mxu0
      %v3707 = vunpack.c.l.b16 %v3361
      %v3708 = vunpack.c.h.b16 %v3361
      %v3709 = vunpack.c.l.b16 %v3362
      %v3710 = vunpack.c.h.b16 %v3362
      %v3711 = vunpack.c.l.b16 %v3363
      %v3712 = vunpack.c.h.b16 %v3363
      %v3713 = vunpack.c.l.b16 %v3364
      %v3714 = vunpack.c.h.b16 %v3364
      %v3715 = vunpack.c.l.b16 %v3365
      %v3716 = vunpack.c.h.b16 %v3365
      %v3717 = vunpack.c.l.b16 %v3366
      %v3718 = vunpack.c.h.b16 %v3366
      %v3719 = vunpack.c.l.b16 %v3367
      %v3720 = vunpack.c.h.b16 %v3367
      %v3721 = vunpack.c.l.b16 %v3368
      %v3722 = vunpack.c.h.b16 %v3368
      %v3723 = vunpack.c.l.b16 %v3369
      %v3724 = vunpack.c.h.b16 %v3369
      %v3725 = vunpack.c.l.b16 %v3370
      %v3726 = vunpack.c.h.b16 %v3370
      %v3727 = vunpack.c.l.b16 %v3371
      %v3728 = vunpack.c.h.b16 %v3371
      %v3729 = vunpack.c.l.b16 %v3372
      %v3730 = vunpack.c.h.b16 %v3372
      %v3731 = vunpack.c.l.b16 %v3373
      %v3732 = vunpack.c.h.b16 %v3373
      %v3733 = vunpack.c.l.b16 %v3374
      %v3734 = vunpack.c.h.b16 %v3374
      %v3735 = vunpack.c.l.b16 %v3375
      %v3736 = vunpack.c.h.b16 %v3375
      %v3737 = vunpack.c.l.b16 %v3376
      %v3738 = vunpack.c.h.b16 %v3376
      %v3739 = vunpack.c.l.b16 %v3377
      %v3740 = vunpack.c.h.b16 %v3377
      %v3741 = vunpack.c.l.b16 %v3378
      %v3742 = vunpack.c.h.b16 %v3378
      %v3743 = vunpack.c.l.b16 %v3379
      %v3744 = vunpack.c.h.b16 %v3379
      %v3745 = vunpack.c.l.b16 %v3380
      %v3746 = vunpack.c.h.b16 %v3380
      %v3747 = vunpack.c.l.b16 %v3381
      %v3748 = vunpack.c.h.b16 %v3381
      %v3749 = vunpack.c.l.b16 %v3382
      %v3750 = vunpack.c.h.b16 %v3382
      %v3751 = vunpack.c.l.b16 %v3383
      %v3752 = vunpack.c.h.b16 %v3383
      %v3753 = vunpack.c.l.b16 %v3384
      %v3754 = vunpack.c.h.b16 %v3384
      %v3755 = vunpack.c.l.b16 %v3385
      %v3756 = vunpack.c.h.b16 %v3385
      %v3757 = vunpack.c.l.b16 %v3386
      %v3758 = vunpack.c.h.b16 %v3386
      %v3759 = vunpack.c.l.b16 %v3387
      %v3760 = vunpack.c.h.b16 %v3387
      %v3761 = vunpack.c.l.b16 %v3388
      %v3762 = vunpack.c.h.b16 %v3388
      %v3763 = vunpack.c.l.b16 %v3389
      %v3764 = vunpack.c.h.b16 %v3389
      %v3765 = vunpack.c.l.b16 %v3390
      %v3766 = vunpack.c.h.b16 %v3390
      %v3767 = vunpack.c.l.b16 %v3391
      %v3768 = vunpack.c.h.b16 %v3391
      %v3769 = vunpack.c.l.b16 %v3392
      %v3770 = vunpack.c.h.b16 %v3392
      %v3771 = vpack.c.b16 %v3709, %v3707
      %v3772 = vpack.c.b16 %v3710, %v3708
      %v3773 = vpack.c.b16 %v3713, %v3711
      %v3774 = vpack.c.b16 %v3714, %v3712
      %v3775 = vpack.c.b16 %v3717, %v3715
      %v3776 = vpack.c.b16 %v3718, %v3716
      %v3777 = vpack.c.b16 %v3721, %v3719
      %v3778 = vpack.c.b16 %v3722, %v3720
      %v3779 = vpack.c.b16 %v3725, %v3723
      %v3780 = vpack.c.b16 %v3726, %v3724
      %v3781 = vpack.c.b16 %v3729, %v3727
      %v3782 = vpack.c.b16 %v3730, %v3728
      %v3783 = vpack.c.b16 %v3733, %v3731
      %v3784 = vpack.c.b16 %v3734, %v3732
      %v3785 = vpack.c.b16 %v3737, %v3735
      %v3786 = vpack.c.b16 %v3738, %v3736
      %v3787 = vpack.c.b16 %v3741, %v3739
      %v3788 = vpack.c.b16 %v3742, %v3740
      %v3789 = vpack.c.b16 %v3745, %v3743
      %v3790 = vpack.c.b16 %v3746, %v3744
      %v3791 = vpack.c.b16 %v3749, %v3747
      %v3792 = vpack.c.b16 %v3750, %v3748
      %v3793 = vpack.c.b16 %v3753, %v3751
      %v3794 = vpack.c.b16 %v3754, %v3752
      %v3795 = vpack.c.b16 %v3757, %v3755
      %v3796 = vpack.c.b16 %v3758, %v3756
      %v3797 = vpack.c.b16 %v3761, %v3759
      %v3798 = vpack.c.b16 %v3762, %v3760
      %v3799 = vpack.c.b16 %v3765, %v3763
      %v3800 = vpack.c.b16 %v3766, %v3764
      %v3801 = vpack.c.b16 %v3769, %v3767
      %v3802 = vpack.c.b16 %v3770, %v3768
      %3835 = vmatprep.subr.bf16.mxu0 %v3772
      %3836 = vmatpush1.bf16.msra.mxu0 %v3771
      %3837 = vmatprep.subr.bf16.mxu0 %v3774
      %3838 = vmatpush1.bf16.msra.mxu0 %v3773
      %3839 = vmatprep.subr.bf16.mxu0 %v3776
      %3840 = vmatpush1.bf16.msra.mxu0 %v3775
      %3841 = vmatprep.subr.bf16.mxu0 %v3778
      %3842 = vmatpush1.bf16.msra.mxu0 %v3777
      %3843 = vmatprep.subr.bf16.mxu0 %v3780
      %3844 = vmatpush1.bf16.msra.mxu0 %v3779
      %3845 = vmatprep.subr.bf16.mxu0 %v3782
      %3846 = vmatpush1.bf16.msra.mxu0 %v3781
      %3847 = vmatprep.subr.bf16.mxu0 %v3784
      %3848 = vmatpush1.bf16.msra.mxu0 %v3783
      %3849 = vmatprep.subr.bf16.mxu0 %v3786
      %3850 = vmatpush1.bf16.msra.mxu0 %v3785
      %3851 = vmatprep.subr.bf16.mxu0 %v3788
      %3852 = vmatpush1.bf16.msra.mxu0 %v3787
      %3853 = vmatprep.subr.bf16.mxu0 %v3790
      %3854 = vmatpush1.bf16.msra.mxu0 %v3789
      %3855 = vmatprep.subr.bf16.mxu0 %v3792
      %3856 = vmatpush1.bf16.msra.mxu0 %v3791
      %3857 = vmatprep.subr.bf16.mxu0 %v3794
      %3858 = vmatpush1.bf16.msra.mxu0 %v3793
      %3859 = vmatprep.subr.bf16.mxu0 %v3796
      %3860 = vmatpush1.bf16.msra.mxu0 %v3795
      %3861 = vmatprep.subr.bf16.mxu0 %v3798
      %3862 = vmatpush1.bf16.msra.mxu0 %v3797
      %3863 = vmatprep.subr.bf16.mxu0 %v3800
      %3864 = vmatpush1.bf16.msra.mxu0 %v3799
      %3865 = vmatprep.subr.bf16.mxu0 %v3802
      %3866 = vmatpush1.bf16.msra.mxu0 %v3801
      %3867 = vmatprep.mubr.bf16.mxu0 %v3360
      %3868 = vmatmul.mubr.bf16.gmra.mrb[0].mxu0 %v3359
      %v3869 = vpop.f32.mrb[0].mxu0
      %v3870 = vadd.f32 %v3669, %v3869
      %v3871 = vpop.f32.mrb[0].mxu0
      %v3872 = vadd.f32 %v3671, %v3871
      %v3873 = vpop.f32.mrb[0].mxu0
      %v3874 = vpop.f32.mrb[0].mxu0
      %3875 = vdwg.mxu0
      %s3876 = scalar_lea.vmem %s7, 8
      %v3877 = vld [vmem:[%s3876] sm:$0xf]
      %v3879 = vsel %vm3127, %v3877, 0
      %3881 = vmatprep.subr.bf16.mxu0 %v3313
      %3882 = vmatpush1.bf16.msra.mxu0 %v3312
      %3883 = vmatprep.subr.bf16.mxu0 0
      %3884 = vmatpush1.bf16.msra.mxu0 0
      %3885 = vmatprep.subr.bf16.mxu0 0
      %3886 = vmatpush1.bf16.msra.mxu0 0
      %3887 = vmatprep.subr.bf16.mxu0 0
      %3888 = vmatpush1.bf16.msra.mxu0 0
      %3889 = vmatprep.subr.bf16.mxu0 0
      %3890 = vmatpush1.bf16.msra.mxu0 0
      %3891 = vmatprep.subr.bf16.mxu0 0
      %3892 = vmatpush1.bf16.msra.mxu0 0
      %3893 = vmatprep.subr.bf16.mxu0 0
      %3894 = vmatpush1.bf16.msra.mxu0 0
      %3895 = vmatprep.subr.bf16.mxu0 0
      %3896 = vmatpush1.bf16.msra.mxu0 0
      %3897 = vmatprep.subr.bf16.mxu0 0
      %3898 = vmatpush1.bf16.msra.mxu0 0
      %3899 = vmatprep.subr.bf16.mxu0 0
      %3900 = vmatpush1.bf16.msra.mxu0 0
      %3901 = vmatprep.subr.bf16.mxu0 0
      %3902 = vmatpush1.bf16.msra.mxu0 0
      %3903 = vmatprep.subr.bf16.mxu0 0
      %3904 = vmatpush1.bf16.msra.mxu0 0
      %3905 = vmatprep.subr.bf16.mxu0 0
      %3906 = vmatpush1.bf16.msra.mxu0 0
      %3907 = vmatprep.subr.bf16.mxu0 0
      %3908 = vmatpush1.bf16.msra.mxu0 0
      %3909 = vmatprep.subr.bf16.mxu0 0
      %3910 = vmatpush1.bf16.msra.mxu0 0
      %3911 = vmatprep.subr.bf16.mxu0 0
      %3912 = vmatpush1.bf16.msra.mxu0 0
      %3913 = vmatprep.mubr.bf16.mxu0 0
      %3914 = vmatmul.mubr.bf16.gmra.mrb[0].mxu0 %v3879
      %v3915 = vpop.f32.mrb[0].mxu0
      %v3916 = vadd.f32 0.0, %v3915
      %v3917 = vpop.f32.mrb[0].mxu0
      %v3918 = vadd.f32 0.0, %v3917
      %v3919 = vpop.f32.mrb[0].mxu0
      %v3920 = vpop.f32.mrb[0].mxu0
      %3921 = vdwg.mxu0
      %v3922 = vpack.c.bf16 %v3916, %v3916
      %v3923 = vpack.c.bf16 %v3918, %v3918
      %s3924 = scalar_lea.vmem %s8, 512
      %v3925 = vld [vmem:[%s3924] sm:$0xff]
      %v3926 = vld [vmem:[%s3924 + $0x8] sm:$0xff]
      %v3927 = vld [vmem:[%s3924 + $0x10] sm:$0xff]
      %v3928 = vld [vmem:[%s3924 + $0x18] sm:$0xff]
      %v3929 = vld [vmem:[%s3924 + $0x20] sm:$0xff]
      %v3930 = vld [vmem:[%s3924 + $0x28] sm:$0xff]
      %v3931 = vld [vmem:[%s3924 + $0x30] sm:$0xff]
      %v3932 = vld [vmem:[%s3924 + $0x38] sm:$0xff]
      %v3933 = vld [vmem:[%s3924 + $0x40] sm:$0xff]
      %v3934 = vld [vmem:[%s3924 + $0x48] sm:$0xff]
      %v3935 = vld [vmem:[%s3924 + $0x50] sm:$0xff]
      %v3936 = vld [vmem:[%s3924 + $0x58] sm:$0xff]
      %v3937 = vld [vmem:[%s3924 + $0x60] sm:$0xff]
      %v3938 = vld [vmem:[%s3924 + $0x68] sm:$0xff]
      %v3939 = vld [vmem:[%s3924 + $0x70] sm:$0xff]
      %v3940 = vld [vmem:[%s3924 + $0x78] sm:$0xff]
      %v3941 = vld [vmem:[%s3924 + $0x80] sm:$0xff]
      %v3942 = vld [vmem:[%s3924 + $0x88] sm:$0xff]
      %v3943 = vld [vmem:[%s3924 + $0x90] sm:$0xff]
      %v3944 = vld [vmem:[%s3924 + $0x98] sm:$0xff]
      %v3945 = vld [vmem:[%s3924 + $0xa0] sm:$0xff]
      %v3946 = vld [vmem:[%s3924 + $0xa8] sm:$0xff]
      %v3947 = vld [vmem:[%s3924 + $0xb0] sm:$0xff]
      %v3948 = vld [vmem:[%s3924 + $0xb8] sm:$0xff]
      %v3949 = vld [vmem:[%s3924 + $0xc0] sm:$0xff]
      %v3950 = vld [vmem:[%s3924 + $0xc8] sm:$0xff]
      %v3951 = vld [vmem:[%s3924 + $0xd0] sm:$0xff]
      %v3952 = vld [vmem:[%s3924 + $0xd8] sm:$0xff]
      %v3953 = vld [vmem:[%s3924 + $0xe0] sm:$0xff]
      %v3954 = vld [vmem:[%s3924 + $0xe8] sm:$0xff]
      %v3955 = vld [vmem:[%s3924 + $0xf0] sm:$0xff]
      %v3956 = vld [vmem:[%s3924 + $0xf8] sm:$0xff]
      %v3989 = vunpack.c.l.b16 %v3925
      %v3990 = vunpack.c.h.b16 %v3925
      %v3991 = vunpack.c.l.b16 %v3926
      %v3992 = vunpack.c.h.b16 %v3926
      %v3993 = vunpack.c.l.b16 %v3927
      %v3994 = vunpack.c.h.b16 %v3927
      %v3995 = vunpack.c.l.b16 %v3928
      %v3996 = vunpack.c.h.b16 %v3928
      %v3997 = vunpack.c.l.b16 %v3929
      %v3998 = vunpack.c.h.b16 %v3929
      %v3999 = vunpack.c.l.b16 %v3930
      %v4000 = vunpack.c.h.b16 %v3930
      %v4001 = vunpack.c.l.b16 %v3931
      %v4002 = vunpack.c.h.b16 %v3931
      %v4003 = vunpack.c.l.b16 %v3932
      %v4004 = vunpack.c.h.b16 %v3932
      %v4005 = vunpack.c.l.b16 %v3933
      %v4006 = vunpack.c.h.b16 %v3933
      %v4007 = vunpack.c.l.b16 %v3934
      %v4008 = vunpack.c.h.b16 %v3934
      %v4009 = vunpack.c.l.b16 %v3935
      %v4010 = vunpack.c.h.b16 %v3935
      %v4011 = vunpack.c.l.b16 %v3936
      %v4012 = vunpack.c.h.b16 %v3936
      %v4013 = vunpack.c.l.b16 %v3937
      %v4014 = vunpack.c.h.b16 %v3937
      %v4015 = vunpack.c.l.b16 %v3938
      %v4016 = vunpack.c.h.b16 %v3938
      %v4017 = vunpack.c.l.b16 %v3939
      %v4018 = vunpack.c.h.b16 %v3939
      %v4019 = vunpack.c.l.b16 %v3940
      %v4020 = vunpack.c.h.b16 %v3940
      %v4021 = vunpack.c.l.b16 %v3941
      %v4022 = vunpack.c.h.b16 %v3941
      %v4023 = vunpack.c.l.b16 %v3942
      %v4024 = vunpack.c.h.b16 %v3942
      %v4025 = vunpack.c.l.b16 %v3943
      %v4026 = vunpack.c.h.b16 %v3943
      %v4027 = vunpack.c.l.b16 %v3944
      %v4028 = vunpack.c.h.b16 %v3944
      %v4029 = vunpack.c.l.b16 %v3945
      %v4030 = vunpack.c.h.b16 %v3945
      %v4031 = vunpack.c.l.b16 %v3946
      %v4032 = vunpack.c.h.b16 %v3946
      %v4033 = vunpack.c.l.b16 %v3947
      %v4034 = vunpack.c.h.b16 %v3947
      %v4035 = vunpack.c.l.b16 %v3948
      %v4036 = vunpack.c.h.b16 %v3948
      %v4037 = vunpack.c.l.b16 %v3949
      %v4038 = vunpack.c.h.b16 %v3949
      %v4039 = vunpack.c.l.b16 %v3950
      %v4040 = vunpack.c.h.b16 %v3950
      %v4041 = vunpack.c.l.b16 %v3951
      %v4042 = vunpack.c.h.b16 %v3951
      %v4043 = vunpack.c.l.b16 %v3952
      %v4044 = vunpack.c.h.b16 %v3952
      %v4045 = vunpack.c.l.b16 %v3953
      %v4046 = vunpack.c.h.b16 %v3953
      %v4047 = vunpack.c.l.b16 %v3954
      %v4048 = vunpack.c.h.b16 %v3954
      %v4049 = vunpack.c.l.b16 %v3955
      %v4050 = vunpack.c.h.b16 %v3955
      %v4051 = vunpack.c.l.b16 %v3956
      %v4052 = vunpack.c.h.b16 %v3956
      %v4053 = vpack.c.b16 %v3991, %v3989
      %v4054 = vpack.c.b16 %v3992, %v3990
      %v4055 = vpack.c.b16 %v3995, %v3993
      %v4056 = vpack.c.b16 %v3996, %v3994
      %v4057 = vpack.c.b16 %v3999, %v3997
      %v4058 = vpack.c.b16 %v4000, %v3998
      %v4059 = vpack.c.b16 %v4003, %v4001
      %v4060 = vpack.c.b16 %v4004, %v4002
      %v4061 = vpack.c.b16 %v4007, %v4005
      %v4062 = vpack.c.b16 %v4008, %v4006
      %v4063 = vpack.c.b16 %v4011, %v4009
      %v4064 = vpack.c.b16 %v4012, %v4010
      %v4065 = vpack.c.b16 %v4015, %v4013
      %v4066 = vpack.c.b16 %v4016, %v4014
      %v4067 = vpack.c.b16 %v4019, %v4017
      %v4068 = vpack.c.b16 %v4020, %v4018
      %v4069 = vpack.c.b16 %v4023, %v4021
      %v4070 = vpack.c.b16 %v4024, %v4022
      %v4071 = vpack.c.b16 %v4027, %v4025
      %v4072 = vpack.c.b16 %v4028, %v4026
      %v4073 = vpack.c.b16 %v4031, %v4029
      %v4074 = vpack.c.b16 %v4032, %v4030
      %v4075 = vpack.c.b16 %v4035, %v4033
      %v4076 = vpack.c.b16 %v4036, %v4034
      %v4077 = vpack.c.b16 %v4039, %v4037
      %v4078 = vpack.c.b16 %v4040, %v4038
      %v4079 = vpack.c.b16 %v4043, %v4041
      %v4080 = vpack.c.b16 %v4044, %v4042
      %v4081 = vpack.c.b16 %v4047, %v4045
      %v4082 = vpack.c.b16 %v4048, %v4046
      %v4083 = vpack.c.b16 %v4051, %v4049
      %v4084 = vpack.c.b16 %v4052, %v4050
      %4117 = vmatprep.subr.bf16.mxu0 %v4054
      %4118 = vmatpush1.bf16.msra.mxu0 %v4053
      %4119 = vmatprep.subr.bf16.mxu0 %v4056
      %4120 = vmatpush1.bf16.msra.mxu0 %v4055
      %4121 = vmatprep.subr.bf16.mxu0 %v4058
      %4122 = vmatpush1.bf16.msra.mxu0 %v4057
      %4123 = vmatprep.subr.bf16.mxu0 %v4060
      %4124 = vmatpush1.bf16.msra.mxu0 %v4059
      %4125 = vmatprep.subr.bf16.mxu0 %v4062
      %4126 = vmatpush1.bf16.msra.mxu0 %v4061
      %4127 = vmatprep.subr.bf16.mxu0 %v4064
      %4128 = vmatpush1.bf16.msra.mxu0 %v4063
      %4129 = vmatprep.subr.bf16.mxu0 %v4066
      %4130 = vmatpush1.bf16.msra.mxu0 %v4065
      %4131 = vmatprep.subr.bf16.mxu0 %v4068
      %4132 = vmatpush1.bf16.msra.mxu0 %v4067
      %4133 = vmatprep.subr.bf16.mxu0 %v4070
      %4134 = vmatpush1.bf16.msra.mxu0 %v4069
      %4135 = vmatprep.subr.bf16.mxu0 %v4072
      %4136 = vmatpush1.bf16.msra.mxu0 %v4071
      %4137 = vmatprep.subr.bf16.mxu0 %v4074
      %4138 = vmatpush1.bf16.msra.mxu0 %v4073
      %4139 = vmatprep.subr.bf16.mxu0 %v4076
      %4140 = vmatpush1.bf16.msra.mxu0 %v4075
      %4141 = vmatprep.subr.bf16.mxu0 %v4078
      %4142 = vmatpush1.bf16.msra.mxu0 %v4077
      %4143 = vmatprep.subr.bf16.mxu0 %v4080
      %4144 = vmatpush1.bf16.msra.mxu0 %v4079
      %4145 = vmatprep.subr.bf16.mxu0 %v4082
      %4146 = vmatpush1.bf16.msra.mxu0 %v4081
      %4147 = vmatprep.subr.bf16.mxu0 %v4084
      %4148 = vmatpush1.bf16.msra.mxu0 %v4083
      %4149 = vmatprep.mubr.bf16.mxu0 %v3923
      %4150 = vmatmul.mubr.bf16.gmra.mrb[0].mxu0 %v3922
      %v4151 = vpop.f32.mrb[0].mxu0
      %v4152 = vadd.f32 0.0, %v4151
      %v4153 = vpop.f32.mrb[0].mxu0
      %v4154 = vadd.f32 0.0, %v4153
      %v4155 = vpop.f32.mrb[0].mxu0
      %v4156 = vpop.f32.mrb[0].mxu0
      %4157 = vdwg.mxu0
      %v4158 = vadd.f32 %v3870, %v4152
      %v4159 = vadd.f32 %v3872, %v4154
      %s4160 = scalar_lea.vmem %s7, 12
      %v4161 = vld [vmem:[%s4160] sm:$0xf]
      %v4163 = vsel %vm3127, %v4161, 0
      %4165 = vmatprep.subr.bf16.mxu0 %v3313
      %4166 = vmatpush1.bf16.msra.mxu0 %v3312
      %4167 = vmatprep.subr.bf16.mxu0 0
      %4168 = vmatpush1.bf16.msra.mxu0 0
      %4169 = vmatprep.subr.bf16.mxu0 0
      %4170 = vmatpush1.bf16.msra.mxu0 0
      %4171 = vmatprep.subr.bf16.mxu0 0
      %4172 = vmatpush1.bf16.msra.mxu0 0
      %4173 = vmatprep.subr.bf16.mxu0 0
      %4174 = vmatpush1.bf16.msra.mxu0 0
      %4175 = vmatprep.subr.bf16.mxu0 0
      %4176 = vmatpush1.bf16.msra.mxu0 0
      %4177 = vmatprep.subr.bf16.mxu0 0
      %4178 = vmatpush1.bf16.msra.mxu0 0
      %4179 = vmatprep.subr.bf16.mxu0 0
      %4180 = vmatpush1.bf16.msra.mxu0 0
      %4181 = vmatprep.subr.bf16.mxu0 0
      %4182 = vmatpush1.bf16.msra.mxu0 0
      %4183 = vmatprep.subr.bf16.mxu0 0
      %4184 = vmatpush1.bf16.msra.mxu0 0
      %4185 = vmatprep.subr.bf16.mxu0 0
      %4186 = vmatpush1.bf16.msra.mxu0 0
      %4187 = vmatprep.subr.bf16.mxu0 0
      %4188 = vmatpush1.bf16.msra.mxu0 0
      %4189 = vmatprep.subr.bf16.mxu0 0
      %4190 = vmatpush1.bf16.msra.mxu0 0
      %4191 = vmatprep.subr.bf16.mxu0 0
      %4192 = vmatpush1.bf16.msra.mxu0 0
      %4193 = vmatprep.subr.bf16.mxu0 0
      %4194 = vmatpush1.bf16.msra.mxu0 0
      %4195 = vmatprep.subr.bf16.mxu0 0
      %4196 = vmatpush1.bf16.msra.mxu0 0
      %4197 = vmatprep.mubr.bf16.mxu0 0
      %4198 = vmatmul.mubr.bf16.gmra.mrb[0].mxu0 %v4163
      %v4199 = vpop.f32.mrb[0].mxu0
      %v4200 = vadd.f32 0.0, %v4199
      %v4201 = vpop.f32.mrb[0].mxu0
      %v4202 = vadd.f32 0.0, %v4201
      %v4203 = vpop.f32.mrb[0].mxu0
      %v4204 = vpop.f32.mrb[0].mxu0
      %4205 = vdwg.mxu0
      %v4206 = vpack.c.bf16 %v4200, %v4200
      %v4207 = vpack.c.bf16 %v4202, %v4202
      %s4208 = scalar_lea.vmem %s8, 768
      %v4209 = vld [vmem:[%s4208] sm:$0xff]
      %v4210 = vld [vmem:[%s4208 + $0x8] sm:$0xff]
      %v4211 = vld [vmem:[%s4208 + $0x10] sm:$0xff]
      %v4212 = vld [vmem:[%s4208 + $0x18] sm:$0xff]
      %v4213 = vld [vmem:[%s4208 + $0x20] sm:$0xff]
      %v4214 = vld [vmem:[%s4208 + $0x28] sm:$0xff]
      %v4215 = vld [vmem:[%s4208 + $0x30] sm:$0xff]
      %v4216 = vld [vmem:[%s4208 + $0x38] sm:$0xff]
      %v4217 = vld [vmem:[%s4208 + $0x40] sm:$0xff]
      %v4218 = vld [vmem:[%s4208 + $0x48] sm:$0xff]
      %v4219 = vld [vmem:[%s4208 + $0x50] sm:$0xff]
      %v4220 = vld [vmem:[%s4208 + $0x58] sm:$0xff]
      %v4221 = vld [vmem:[%s4208 + $0x60] sm:$0xff]
      %v4222 = vld [vmem:[%s4208 + $0x68] sm:$0xff]
      %v4223 = vld [vmem:[%s4208 + $0x70] sm:$0xff]
      %v4224 = vld [vmem:[%s4208 + $0x78] sm:$0xff]
      %v4225 = vld [vmem:[%s4208 + $0x80] sm:$0xff]
      %v4226 = vld [vmem:[%s4208 + $0x88] sm:$0xff]
      %v4227 = vld [vmem:[%s4208 + $0x90] sm:$0xff]
      %v4228 = vld [vmem:[%s4208 + $0x98] sm:$0xff]
      %v4229 = vld [vmem:[%s4208 + $0xa0] sm:$0xff]
      %v4230 = vld [vmem:[%s4208 + $0xa8] sm:$0xff]
      %v4231 = vld [vmem:[%s4208 + $0xb0] sm:$0xff]
      %v4232 = vld [vmem:[%s4208 + $0xb8] sm:$0xff]
      %v4233 = vld [vmem:[%s4208 + $0xc0] sm:$0xff]
      %v4234 = vld [vmem:[%s4208 + $0xc8] sm:$0xff]
      %v4235 = vld [vmem:[%s4208 + $0xd0] sm:$0xff]
      %v4236 = vld [vmem:[%s4208 + $0xd8] sm:$0xff]
      %v4237 = vld [vmem:[%s4208 + $0xe0] sm:$0xff]
      %v4238 = vld [vmem:[%s4208 + $0xe8] sm:$0xff]
      %v4239 = vld [vmem:[%s4208 + $0xf0] sm:$0xff]
      %v4240 = vld [vmem:[%s4208 + $0xf8] sm:$0xff]
      %v4273 = vunpack.c.l.b16 %v4209
      %v4274 = vunpack.c.h.b16 %v4209
      %v4275 = vunpack.c.l.b16 %v4210
      %v4276 = vunpack.c.h.b16 %v4210
      %v4277 = vunpack.c.l.b16 %v4211
      %v4278 = vunpack.c.h.b16 %v4211
      %v4279 = vunpack.c.l.b16 %v4212
      %v4280 = vunpack.c.h.b16 %v4212
      %v4281 = vunpack.c.l.b16 %v4213
      %v4282 = vunpack.c.h.b16 %v4213
      %v4283 = vunpack.c.l.b16 %v4214
      %v4284 = vunpack.c.h.b16 %v4214
      %v4285 = vunpack.c.l.b16 %v4215
      %v4286 = vunpack.c.h.b16 %v4215
      %v4287 = vunpack.c.l.b16 %v4216
      %v4288 = vunpack.c.h.b16 %v4216
      %v4289 = vunpack.c.l.b16 %v4217
      %v4290 = vunpack.c.h.b16 %v4217
      %v4291 = vunpack.c.l.b16 %v4218
      %v4292 = vunpack.c.h.b16 %v4218
      %v4293 = vunpack.c.l.b16 %v4219
      %v4294 = vunpack.c.h.b16 %v4219
      %v4295 = vunpack.c.l.b16 %v4220
      %v4296 = vunpack.c.h.b16 %v4220
      %v4297 = vunpack.c.l.b16 %v4221
      %v4298 = vunpack.c.h.b16 %v4221
      %v4299 = vunpack.c.l.b16 %v4222
      %v4300 = vunpack.c.h.b16 %v4222
      %v4301 = vunpack.c.l.b16 %v4223
      %v4302 = vunpack.c.h.b16 %v4223
      %v4303 = vunpack.c.l.b16 %v4224
      %v4304 = vunpack.c.h.b16 %v4224
      %v4305 = vunpack.c.l.b16 %v4225
      %v4306 = vunpack.c.h.b16 %v4225
      %v4307 = vunpack.c.l.b16 %v4226
      %v4308 = vunpack.c.h.b16 %v4226
      %v4309 = vunpack.c.l.b16 %v4227
      %v4310 = vunpack.c.h.b16 %v4227
      %v4311 = vunpack.c.l.b16 %v4228
      %v4312 = vunpack.c.h.b16 %v4228
      %v4313 = vunpack.c.l.b16 %v4229
      %v4314 = vunpack.c.h.b16 %v4229
      %v4315 = vunpack.c.l.b16 %v4230
      %v4316 = vunpack.c.h.b16 %v4230
      %v4317 = vunpack.c.l.b16 %v4231
      %v4318 = vunpack.c.h.b16 %v4231
      %v4319 = vunpack.c.l.b16 %v4232
      %v4320 = vunpack.c.h.b16 %v4232
      %v4321 = vunpack.c.l.b16 %v4233
      %v4322 = vunpack.c.h.b16 %v4233
      %v4323 = vunpack.c.l.b16 %v4234
      %v4324 = vunpack.c.h.b16 %v4234
      %v4325 = vunpack.c.l.b16 %v4235
      %v4326 = vunpack.c.h.b16 %v4235
      %v4327 = vunpack.c.l.b16 %v4236
      %v4328 = vunpack.c.h.b16 %v4236
      %v4329 = vunpack.c.l.b16 %v4237
      %v4330 = vunpack.c.h.b16 %v4237
      %v4331 = vunpack.c.l.b16 %v4238
      %v4332 = vunpack.c.h.b16 %v4238
      %v4333 = vunpack.c.l.b16 %v4239
      %v4334 = vunpack.c.h.b16 %v4239
      %v4335 = vunpack.c.l.b16 %v4240
      %v4336 = vunpack.c.h.b16 %v4240
      %v4337 = vpack.c.b16 %v4275, %v4273
      %v4338 = vpack.c.b16 %v4276, %v4274
      %v4339 = vpack.c.b16 %v4279, %v4277
      %v4340 = vpack.c.b16 %v4280, %v4278
      %v4341 = vpack.c.b16 %v4283, %v4281
      %v4342 = vpack.c.b16 %v4284, %v4282
      %v4343 = vpack.c.b16 %v4287, %v4285
      %v4344 = vpack.c.b16 %v4288, %v4286
      %v4345 = vpack.c.b16 %v4291, %v4289
      %v4346 = vpack.c.b16 %v4292, %v4290
      %v4347 = vpack.c.b16 %v4295, %v4293
      %v4348 = vpack.c.b16 %v4296, %v4294
      %v4349 = vpack.c.b16 %v4299, %v4297
      %v4350 = vpack.c.b16 %v4300, %v4298
      %v4351 = vpack.c.b16 %v4303, %v4301
      %v4352 = vpack.c.b16 %v4304, %v4302
      %v4353 = vpack.c.b16 %v4307, %v4305
      %v4354 = vpack.c.b16 %v4308, %v4306
      %v4355 = vpack.c.b16 %v4311, %v4309
      %v4356 = vpack.c.b16 %v4312, %v4310
      %v4357 = vpack.c.b16 %v4315, %v4313
      %v4358 = vpack.c.b16 %v4316, %v4314
      %v4359 = vpack.c.b16 %v4319, %v4317
      %v4360 = vpack.c.b16 %v4320, %v4318
      %v4361 = vpack.c.b16 %v4323, %v4321
      %v4362 = vpack.c.b16 %v4324, %v4322
      %v4363 = vpack.c.b16 %v4327, %v4325
      %v4364 = vpack.c.b16 %v4328, %v4326
      %v4365 = vpack.c.b16 %v4331, %v4329
      %v4366 = vpack.c.b16 %v4332, %v4330
      %v4367 = vpack.c.b16 %v4335, %v4333
      %v4368 = vpack.c.b16 %v4336, %v4334
      %4401 = vmatprep.subr.bf16.mxu0 %v4338
      %4402 = vmatpush1.bf16.msra.mxu0 %v4337
      %4403 = vmatprep.subr.bf16.mxu0 %v4340
      %4404 = vmatpush1.bf16.msra.mxu0 %v4339
      %4405 = vmatprep.subr.bf16.mxu0 %v4342
      %4406 = vmatpush1.bf16.msra.mxu0 %v4341
      %4407 = vmatprep.subr.bf16.mxu0 %v4344
      %4408 = vmatpush1.bf16.msra.mxu0 %v4343
      %4409 = vmatprep.subr.bf16.mxu0 %v4346
      %4410 = vmatpush1.bf16.msra.mxu0 %v4345
      %4411 = vmatprep.subr.bf16.mxu0 %v4348
      %4412 = vmatpush1.bf16.msra.mxu0 %v4347
      %4413 = vmatprep.subr.bf16.mxu0 %v4350
      %4414 = vmatpush1.bf16.msra.mxu0 %v4349
      %4415 = vmatprep.subr.bf16.mxu0 %v4352
      %4416 = vmatpush1.bf16.msra.mxu0 %v4351
      %4417 = vmatprep.subr.bf16.mxu0 %v4354
      %4418 = vmatpush1.bf16.msra.mxu0 %v4353
      %4419 = vmatprep.subr.bf16.mxu0 %v4356
      %4420 = vmatpush1.bf16.msra.mxu0 %v4355
      %4421 = vmatprep.subr.bf16.mxu0 %v4358
      %4422 = vmatpush1.bf16.msra.mxu0 %v4357
      %4423 = vmatprep.subr.bf16.mxu0 %v4360
      %4424 = vmatpush1.bf16.msra.mxu0 %v4359
      %4425 = vmatprep.subr.bf16.mxu0 %v4362
      %4426 = vmatpush1.bf16.msra.mxu0 %v4361
      %4427 = vmatprep.subr.bf16.mxu0 %v4364
      %4428 = vmatpush1.bf16.msra.mxu0 %v4363
      %4429 = vmatprep.subr.bf16.mxu0 %v4366
      %4430 = vmatpush1.bf16.msra.mxu0 %v4365
      %4431 = vmatprep.subr.bf16.mxu0 %v4368
      %4432 = vmatpush1.bf16.msra.mxu0 %v4367
      %4433 = vmatprep.mubr.bf16.mxu0 %v4207
      %4434 = vmatmul.mubr.bf16.gmra.mrb[0].mxu0 %v4206
      %v4435 = vpop.f32.mrb[0].mxu0
      %v4436 = vadd.f32 0.0, %v4435
      %v4437 = vpop.f32.mrb[0].mxu0
      %v4438 = vadd.f32 0.0, %v4437
      %v4439 = vpop.f32.mrb[0].mxu0
      %v4440 = vpop.f32.mrb[0].mxu0
      %4441 = vdwg.mxu0
      %v4442 = vadd.f32 %v4158, %v4436
      %v4443 = vadd.f32 %v4159, %v4438
      %v4444 = vrot.slane %v4442, 4
      %v4445 = vadd.f32 %v4442, %v4444
      %v4446 = vrot.slane %v4445, 2
      %v4447 = vadd.f32 %v4445, %v4446
      %v4448 = vrot.slane %v4447, 1
      %v4449 = vadd.f32 %v4447, %v4448
      %v4450 = vrot.slane %v4443, 4
      %v4451 = vadd.f32 %v4443, %v4450
      %v4452 = vrot.slane %v4451, 2
      %v4453 = vadd.f32 %v4451, %v4452
      %v4454 = vrot.slane %v4453, 1
      %v4455 = vadd.f32 %v4453, %v4454
      %v4456 = vmul.f32 %v4442, %v4442
      %v4457 = vmul.f32 %v4443, %v4443
      %v4458 = vrot.slane %v4456, 4
      %v4459 = vadd.f32 %v4456, %v4458
      %v4460 = vrot.slane %v4459, 2
      %v4461 = vadd.f32 %v4459, %v4460
      %v4462 = vrot.slane %v4461, 1
      %v4463 = vadd.f32 %v4461, %v4462
      %v4464 = vrot.slane %v4457, 4
      %v4465 = vadd.f32 %v4457, %v4464
      %v4466 = vrot.slane %v4465, 2
      %v4467 = vadd.f32 %v4465, %v4466
      %v4468 = vrot.slane %v4467, 1
      %v4469 = vadd.f32 %v4467, %v4468
      %v4470 = vld [vmem:[%s9] sm:$0xff]
      %v4471 = vld [vmem:[%s9 + $0x8] sm:$0xff]
      %v4472 = vld [vmem:[%s9 + $0x10] sm:$0xff]
      %v4473 = vld [vmem:[%s9 + $0x18] sm:$0xff]
      %v4474 = vld [vmem:[%s9 + $0x20] sm:$0xff]
      %v4475 = vld [vmem:[%s9 + $0x28] sm:$0xff]
      %v4476 = vld [vmem:[%s9 + $0x30] sm:$0xff]
      %v4477 = vld [vmem:[%s9 + $0x38] sm:$0xff]
      %v4478 = vld [vmem:[%s9 + $0x40] sm:$0xff]
      %v4479 = vld [vmem:[%s9 + $0x48] sm:$0xff]
      %v4480 = vld [vmem:[%s9 + $0x50] sm:$0xff]
      %v4481 = vld [vmem:[%s9 + $0x58] sm:$0xff]
      %v4482 = vld [vmem:[%s9 + $0x60] sm:$0xff]
      %v4483 = vld [vmem:[%s9 + $0x68] sm:$0xff]
      %v4484 = vld [vmem:[%s9 + $0x70] sm:$0xff]
      %v4485 = vld [vmem:[%s9 + $0x78] sm:$0xff]
      %v4486 = vld [vmem:[%s9 + $0x80] sm:$0xff]
      %v4487 = vld [vmem:[%s9 + $0x88] sm:$0xff]
      %v4488 = vld [vmem:[%s9 + $0x90] sm:$0xff]
      %v4489 = vld [vmem:[%s9 + $0x98] sm:$0xff]
      %v4490 = vld [vmem:[%s9 + $0xa0] sm:$0xff]
      %v4491 = vld [vmem:[%s9 + $0xa8] sm:$0xff]
      %v4492 = vld [vmem:[%s9 + $0xb0] sm:$0xff]
      %v4493 = vld [vmem:[%s9 + $0xb8] sm:$0xff]
      %v4494 = vld [vmem:[%s9 + $0xc0] sm:$0xff]
      %v4495 = vld [vmem:[%s9 + $0xc8] sm:$0xff]
      %v4496 = vld [vmem:[%s9 + $0xd0] sm:$0xff]
      %v4497 = vld [vmem:[%s9 + $0xd8] sm:$0xff]
      %v4498 = vld [vmem:[%s9 + $0xe0] sm:$0xff]
      %v4499 = vld [vmem:[%s9 + $0xe8] sm:$0xff]
      %v4500 = vld [vmem:[%s9 + $0xf0] sm:$0xff]
      %v4501 = vld [vmem:[%s9 + $0xf8] sm:$0xff]
      %4502 = vmatprep.subr.mxu0 0.0
      %4503 = vmatpush1.msra.mxu0 %v4470
      %4504 = vmatprep.subr.mxu0 0.0
      %4505 = vmatpush1.msra.mxu0 %v4471
      %4506 = vmatprep.subr.mxu0 0.0
      %4507 = vmatpush1.msra.mxu0 %v4472
      %4508 = vmatprep.subr.mxu0 0.0
      %4509 = vmatpush1.msra.mxu0 %v4473
      %4510 = vmatprep.subr.mxu0 0.0
      %4511 = vmatpush1.msra.mxu0 %v4474
      %4512 = vmatprep.subr.mxu0 0.0
      %4513 = vmatpush1.msra.mxu0 %v4475
      %4514 = vmatprep.subr.mxu0 0.0
      %4515 = vmatpush1.msra.mxu0 %v4476
      %4516 = vmatprep.subr.mxu0 0.0
      %4517 = vmatpush1.msra.mxu0 %v4477
      %4518 = vmatprep.subr.mxu0 0.0
      %4519 = vmatpush1.msra.mxu0 %v4478
      %4520 = vmatprep.subr.mxu0 0.0
      %4521 = vmatpush1.msra.mxu0 %v4479
      %4522 = vmatprep.subr.mxu0 0.0
      %4523 = vmatpush1.msra.mxu0 %v4480
      %4524 = vmatprep.subr.mxu0 0.0
      %4525 = vmatpush1.msra.mxu0 %v4481
      %4526 = vmatprep.subr.mxu0 0.0
      %4527 = vmatpush1.msra.mxu0 %v4482
      %4528 = vmatprep.subr.mxu0 0.0
      %4529 = vmatpush1.msra.mxu0 %v4483
      %4530 = vmatprep.subr.mxu0 0.0
      %4531 = vmatpush1.msra.mxu0 %v4484
      %4532 = vmatprep.subr.mxu0 0.0
      %4533 = vmatpush1.msra.mxu0 %v4485
      %4534 = vmatprep.subr.mxu0 0.0
      %4535 = vmatpush1.msra.mxu0 %v4486
      %4536 = vmatprep.subr.mxu0 0.0
      %4537 = vmatpush1.msra.mxu0 %v4487
      %4538 = vmatprep.subr.mxu0 0.0
      %4539 = vmatpush1.msra.mxu0 %v4488
      %4540 = vmatprep.subr.mxu0 0.0
      %4541 = vmatpush1.msra.mxu0 %v4489
      %4542 = vmatprep.subr.mxu0 0.0
      %4543 = vmatpush1.msra.mxu0 %v4490
      %4544 = vmatprep.subr.mxu0 0.0
      %4545 = vmatpush1.msra.mxu0 %v4491
      %4546 = vmatprep.subr.mxu0 0.0
      %4547 = vmatpush1.msra.mxu0 %v4492
      %4548 = vmatprep.subr.mxu0 0.0
      %4549 = vmatpush1.msra.mxu0 %v4493
      %4550 = vmatprep.subr.mxu0 0.0
      %4551 = vmatpush1.msra.mxu0 %v4494
      %4552 = vmatprep.subr.mxu0 0.0
      %4553 = vmatpush1.msra.mxu0 %v4495
      %4554 = vmatprep.subr.mxu0 0.0
      %4555 = vmatpush1.msra.mxu0 %v4496
      %4556 = vmatprep.subr.mxu0 0.0
      %4557 = vmatpush1.msra.mxu0 %v4497
      %4558 = vmatprep.subr.mxu0 0.0
      %4559 = vmatpush1.msra.mxu0 %v4498
      %4560 = vmatprep.subr.mxu0 0.0
      %4561 = vmatpush1.msra.mxu0 %v4499
      %4562 = vmatprep.subr.mxu0 0.0
      %4563 = vmatpush1.msra.mxu0 %v4500
      %4564 = vmatprep.subr.mxu0 0.0
      %4565 = vmatpush1.msra.mxu0 %v4501
      %4566 = vmatprep.mubr.f32.mxu0 %v4455
      %4567 = vmatmul.mubr.f32.gmra.mrb[0].mxu0 %v4449
      %v4568 = vpop.f32.mrb[0].mxu0
      %v4569 = vadd.f32 0.0, %v4568
      %v4570 = vpop.f32.mrb[0].mxu0
      %4571 = vdwg.mxu0
      %v4572 = vmul.f32 %v4569, 0.015625
      %4573 = vmatprep.subr.mxu0 0.0
      %4574 = vmatpush1.msra.mxu0 %v4470
      %4575 = vmatprep.subr.mxu0 0.0
      %4576 = vmatpush1.msra.mxu0 %v4471
      %4577 = vmatprep.subr.mxu0 0.0
      %4578 = vmatpush1.msra.mxu0 %v4472
      %4579 = vmatprep.subr.mxu0 0.0
      %4580 = vmatpush1.msra.mxu0 %v4473
      %4581 = vmatprep.subr.mxu0 0.0
      %4582 = vmatpush1.msra.mxu0 %v4474
      %4583 = vmatprep.subr.mxu0 0.0
      %4584 = vmatpush1.msra.mxu0 %v4475
      %4585 = vmatprep.subr.mxu0 0.0
      %4586 = vmatpush1.msra.mxu0 %v4476
      %4587 = vmatprep.subr.mxu0 0.0
      %4588 = vmatpush1.msra.mxu0 %v4477
      %4589 = vmatprep.subr.mxu0 0.0
      %4590 = vmatpush1.msra.mxu0 %v4478
      %4591 = vmatprep.subr.mxu0 0.0
      %4592 = vmatpush1.msra.mxu0 %v4479
      %4593 = vmatprep.subr.mxu0 0.0
      %4594 = vmatpush1.msra.mxu0 %v4480
      %4595 = vmatprep.subr.mxu0 0.0
      %4596 = vmatpush1.msra.mxu0 %v4481
      %4597 = vmatprep.subr.mxu0 0.0
      %4598 = vmatpush1.msra.mxu0 %v4482
      %4599 = vmatprep.subr.mxu0 0.0
      %4600 = vmatpush1.msra.mxu0 %v4483
      %4601 = vmatprep.subr.mxu0 0.0
      %4602 = vmatpush1.msra.mxu0 %v4484
      %4603 = vmatprep.subr.mxu0 0.0
      %4604 = vmatpush1.msra.mxu0 %v4485
      %4605 = vmatprep.subr.mxu0 0.0
      %4606 = vmatpush1.msra.mxu0 %v4486
      %4607 = vmatprep.subr.mxu0 0.0
      %4608 = vmatpush1.msra.mxu0 %v4487
      %4609 = vmatprep.subr.mxu0 0.0
      %4610 = vmatpush1.msra.mxu0 %v4488
      %4611 = vmatprep.subr.mxu0 0.0
      %4612 = vmatpush1.msra.mxu0 %v4489
      %4613 = vmatprep.subr.mxu0 0.0
      %4614 = vmatpush1.msra.mxu0 %v4490
      %4615 = vmatprep.subr.mxu0 0.0
      %4616 = vmatpush1.msra.mxu0 %v4491
      %4617 = vmatprep.subr.mxu0 0.0
      %4618 = vmatpush1.msra.mxu0 %v4492
      %4619 = vmatprep.subr.mxu0 0.0
      %4620 = vmatpush1.msra.mxu0 %v4493
      %4621 = vmatprep.subr.mxu0 0.0
      %4622 = vmatpush1.msra.mxu0 %v4494
      %4623 = vmatprep.subr.mxu0 0.0
      %4624 = vmatpush1.msra.mxu0 %v4495
      %4625 = vmatprep.subr.mxu0 0.0
      %4626 = vmatpush1.msra.mxu0 %v4496
      %4627 = vmatprep.subr.mxu0 0.0
      %4628 = vmatpush1.msra.mxu0 %v4497
      %4629 = vmatprep.subr.mxu0 0.0
      %4630 = vmatpush1.msra.mxu0 %v4498
      %4631 = vmatprep.subr.mxu0 0.0
      %4632 = vmatpush1.msra.mxu0 %v4499
      %4633 = vmatprep.subr.mxu0 0.0
      %4634 = vmatpush1.msra.mxu0 %v4500
      %4635 = vmatprep.subr.mxu0 0.0
      %4636 = vmatpush1.msra.mxu0 %v4501
      %4637 = vmatprep.mubr.f32.mxu0 %v4469
      %4638 = vmatmul.mubr.f32.gmra.mrb[0].mxu0 %v4463
      %v4639 = vpop.f32.mrb[0].mxu0
      %v4640 = vadd.f32 0.0, %v4639
      %v4641 = vpop.f32.mrb[0].mxu0
      %4642 = vdwg.mxu0
      %v4643 = vmul.f32 %v4640, 0.015625
      %v4644 = vmul.f32 %v4572, %v4572
      %v4645 = vsub.f32 %v4643, %v4644
      %v4646 = vadd.f32 %v4645, 1e-05
      %v4647 = vrsqrt.pop %v4646
      %v4648 = vld [vmem:[%s10] sm:$0xff]
      %v4649 = vld [vmem:[%s10 + $0x8] sm:$0xff]
      %v4650 = vld [vmem:[%s10 + $0x10] sm:$0xff]
      %v4651 = vld [vmem:[%s10 + $0x18] sm:$0xff]
      %v4652 = vld [vmem:[%s10 + $0x20] sm:$0xff]
      %v4653 = vld [vmem:[%s10 + $0x28] sm:$0xff]
      %v4654 = vld [vmem:[%s10 + $0x30] sm:$0xff]
      %v4655 = vld [vmem:[%s10 + $0x38] sm:$0xff]
      %v4657 = vsel %vm1745, %v4572, 0
      %4659 = vmatprep.subr.mxu0 %v4649
      %4660 = vmatpush1.msra.mxu0 %v4648
      %4661 = vmatprep.subr.mxu0 %v4651
      %4662 = vmatpush1.msra.mxu0 %v4650
      %4663 = vmatprep.subr.mxu0 %v4653
      %4664 = vmatpush1.msra.mxu0 %v4652
      %4665 = vmatprep.subr.mxu0 %v4655
      %4666 = vmatpush1.msra.mxu0 %v4654
      %4667 = vmatprep.subr.mxu0 0.0
      %4668 = vmatpush1.msra.mxu0 0.0
      %4669 = vmatprep.subr.mxu0 0.0
      %4670 = vmatpush1.msra.mxu0 0.0
      %4671 = vmatprep.subr.mxu0 0.0
      %4672 = vmatpush1.msra.mxu0 0.0
      %4673 = vmatprep.subr.mxu0 0.0
      %4674 = vmatpush1.msra.mxu0 0.0
      %4675 = vmatprep.subr.mxu0 0.0
      %4676 = vmatpush1.msra.mxu0 0.0
      %4677 = vmatprep.subr.mxu0 0.0
      %4678 = vmatpush1.msra.mxu0 0.0
      %4679 = vmatprep.subr.mxu0 0.0
      %4680 = vmatpush1.msra.mxu0 0.0
      %4681 = vmatprep.subr.mxu0 0.0
      %4682 = vmatpush1.msra.mxu0 0.0
      %4683 = vmatprep.subr.mxu0 0.0
      %4684 = vmatpush1.msra.mxu0 0.0
      %4685 = vmatprep.subr.mxu0 0.0
      %4686 = vmatpush1.msra.mxu0 0.0
      %4687 = vmatprep.subr.mxu0 0.0
      %4688 = vmatpush1.msra.mxu0 0.0
      %4689 = vmatprep.subr.mxu0 0.0
      %4690 = vmatpush1.msra.mxu0 0.0
      %4691 = vmatprep.subr.mxu0 0.0
      %4692 = vmatpush1.msra.mxu0 0.0
      %4693 = vmatprep.subr.mxu0 0.0
      %4694 = vmatpush1.msra.mxu0 0.0
      %4695 = vmatprep.subr.mxu0 0.0
      %4696 = vmatpush1.msra.mxu0 0.0
      %4697 = vmatprep.subr.mxu0 0.0
      %4698 = vmatpush1.msra.mxu0 0.0
      %4699 = vmatprep.subr.mxu0 0.0
      %4700 = vmatpush1.msra.mxu0 0.0
      %4701 = vmatprep.subr.mxu0 0.0
      %4702 = vmatpush1.msra.mxu0 0.0
      %4703 = vmatprep.subr.mxu0 0.0
      %4704 = vmatpush1.msra.mxu0 0.0
      %4705 = vmatprep.subr.mxu0 0.0
      %4706 = vmatpush1.msra.mxu0 0.0
      %4707 = vmatprep.subr.mxu0 0.0
      %4708 = vmatpush1.msra.mxu0 0.0
      %4709 = vmatprep.subr.mxu0 0.0
      %4710 = vmatpush1.msra.mxu0 0.0
      %4711 = vmatprep.subr.mxu0 0.0
      %4712 = vmatpush1.msra.mxu0 0.0
      %4713 = vmatprep.subr.mxu0 0.0
      %4714 = vmatpush1.msra.mxu0 0.0
      %4715 = vmatprep.subr.mxu0 0.0
      %4716 = vmatpush1.msra.mxu0 0.0
      %4717 = vmatprep.subr.mxu0 0.0
      %4718 = vmatpush1.msra.mxu0 0.0
      %4719 = vmatprep.subr.mxu0 0.0
      %4720 = vmatpush1.msra.mxu0 0.0
      %4721 = vmatprep.subr.mxu0 0.0
      %4722 = vmatpush1.msra.mxu0 0.0
      %4723 = vmatprep.mubr.f32.mxu0 0.0
      %4724 = vmatmul.mubr.f32.gmra.mrb[0].mxu0 %v4657
      %v4725 = vpop.f32.mrb[0].mxu0
      %v4726 = vadd.f32 0.0, %v4725
      %v4727 = vpop.f32.mrb[0].mxu0
      %v4728 = vadd.f32 0.0, %v4727
      %4729 = vdwg.mxu0
      %v4731 = vsel %vm1745, %v4647, 0
      %4733 = vmatprep.subr.mxu0 %v4649
      %4734 = vmatpush1.msra.mxu0 %v4648
      %4735 = vmatprep.subr.mxu0 %v4651
      %4736 = vmatpush1.msra.mxu0 %v4650
      %4737 = vmatprep.subr.mxu0 %v4653
      %4738 = vmatpush1.msra.mxu0 %v4652
      %4739 = vmatprep.subr.mxu0 %v4655
      %4740 = vmatpush1.msra.mxu0 %v4654
      %4741 = vmatprep.subr.mxu0 0.0
      %4742 = vmatpush1.msra.mxu0 0.0
      %4743 = vmatprep.subr.mxu0 0.0
      %4744 = vmatpush1.msra.mxu0 0.0
      %4745 = vmatprep.subr.mxu0 0.0
      %4746 = vmatpush1.msra.mxu0 0.0
      %4747 = vmatprep.subr.mxu0 0.0
      %4748 = vmatpush1.msra.mxu0 0.0
      %4749 = vmatprep.subr.mxu0 0.0
      %4750 = vmatpush1.msra.mxu0 0.0
      %4751 = vmatprep.subr.mxu0 0.0
      %4752 = vmatpush1.msra.mxu0 0.0
      %4753 = vmatprep.subr.mxu0 0.0
      %4754 = vmatpush1.msra.mxu0 0.0
      %4755 = vmatprep.subr.mxu0 0.0
      %4756 = vmatpush1.msra.mxu0 0.0
      %4757 = vmatprep.subr.mxu0 0.0
      %4758 = vmatpush1.msra.mxu0 0.0
      %4759 = vmatprep.subr.mxu0 0.0
      %4760 = vmatpush1.msra.mxu0 0.0
      %4761 = vmatprep.subr.mxu0 0.0
      %4762 = vmatpush1.msra.mxu0 0.0
      %4763 = vmatprep.subr.mxu0 0.0
      %4764 = vmatpush1.msra.mxu0 0.0
      %4765 = vmatprep.subr.mxu0 0.0
      %4766 = vmatpush1.msra.mxu0 0.0
      %4767 = vmatprep.subr.mxu0 0.0
      %4768 = vmatpush1.msra.mxu0 0.0
      %4769 = vmatprep.subr.mxu0 0.0
      %4770 = vmatpush1.msra.mxu0 0.0
      %4771 = vmatprep.subr.mxu0 0.0
      %4772 = vmatpush1.msra.mxu0 0.0
      %4773 = vmatprep.subr.mxu0 0.0
      %4774 = vmatpush1.msra.mxu0 0.0
      %4775 = vmatprep.subr.mxu0 0.0
      %4776 = vmatpush1.msra.mxu0 0.0
      %4777 = vmatprep.subr.mxu0 0.0
      %4778 = vmatpush1.msra.mxu0 0.0
      %4779 = vmatprep.subr.mxu0 0.0
      %4780 = vmatpush1.msra.mxu0 0.0
      %4781 = vmatprep.subr.mxu0 0.0
      %4782 = vmatpush1.msra.mxu0 0.0
      %4783 = vmatprep.subr.mxu0 0.0
      %4784 = vmatpush1.msra.mxu0 0.0
      %4785 = vmatprep.subr.mxu0 0.0
      %4786 = vmatpush1.msra.mxu0 0.0
      %4787 = vmatprep.subr.mxu0 0.0
      %4788 = vmatpush1.msra.mxu0 0.0
      %4789 = vmatprep.subr.mxu0 0.0
      %4790 = vmatpush1.msra.mxu0 0.0
      %4791 = vmatprep.subr.mxu0 0.0
      %4792 = vmatpush1.msra.mxu0 0.0
      %4793 = vmatprep.subr.mxu0 0.0
      %4794 = vmatpush1.msra.mxu0 0.0
      %4795 = vmatprep.subr.mxu0 0.0
      %4796 = vmatpush1.msra.mxu0 0.0
      %4797 = vmatprep.mubr.f32.mxu0 0.0
      %4798 = vmatmul.mubr.f32.gmra.mrb[0].mxu0 %v4731
      %v4799 = vpop.f32.mrb[0].mxu0
      %v4800 = vadd.f32 0.0, %v4799
      %v4801 = vpop.f32.mrb[0].mxu0
      %v4802 = vadd.f32 0.0, %v4801
      %4803 = vdwg.mxu0
      %v4804 = vlaneseq
      %v4805 = vshrl.u32 %v4804, 7
      %v4806 = vsub.s32 0, %v4805
      %v4807 = vrot.slane %v4726, %v4806
      %v4808 = vlaneseq
      %v4809 = vshrl.u32 %v4808, 7
      %v4810 = vsub.s32 0, %v4809
      %v4811 = vrot.slane %v4728, %v4810
      %v4812 = vsub.f32 %v4442, %v4807
      %v4813 = vsub.f32 %v4443, %v4811
      %v4814 = vlaneseq
      %v4815 = vshrl.u32 %v4814, 7
      %v4816 = vsub.s32 0, %v4815
      %v4817 = vrot.slane %v4800, %v4816
      %v4818 = vlaneseq
      %v4819 = vshrl.u32 %v4818, 7
      %v4820 = vsub.s32 0, %v4819
      %v4821 = vrot.slane %v4802, %v4820
      %v4822 = vmul.f32 %v4812, %v4817
      %v4823 = vmul.f32 %v4813, %v4821
      %vm4824 = vcmp.gt.f32.partialorder %v4822, 0.0
      %vm4825 = vcmp.gt.f32.partialorder %v4823, 0.0
      %v4826 = vmul.f32 %v4822, 0.2
      %v4827 = vmul.f32 %v4823, 0.2
      %v4828 = vsel %vm4824, %v4822, %v4826
      %v4829 = vsel %vm4825, %v4823, %v4827
      %v4830 = vpack.c.bf16 %v4828, %v4828
      %v4831 = vpack.c.bf16 %v4829, %v4829
      %v4832 = vld [vmem:[%s11] sm:$0x3]
      %vm4833 = vcmask 64512
      %v4835 = vsel %vm4833, %v4832, 0
      %vm4837 = vcmask 1043456
      %v4839 = vsel %vm4837, %v4830, 0
      %v4842 = vsel %vm4837, %v4831, 0
      %4844 = vmatprep.subr.bf16.mxu0 %v4842
      %4845 = vmatpush1.bf16.msra.mxu0 %v4839
      %4846 = vmatprep.subr.bf16.mxu0 0
      %4847 = vmatpush1.bf16.msra.mxu0 0
      %4848 = vmatprep.subr.bf16.mxu0 0
      %4849 = vmatpush1.bf16.msra.mxu0 0
      %4850 = vmatprep.subr.bf16.mxu0 0
      %4851 = vmatpush1.bf16.msra.mxu0 0
      %4852 = vmatprep.subr.bf16.mxu0 0
      %4853 = vmatpush1.bf16.msra.mxu0 0
      %4854 = vmatprep.subr.bf16.mxu0 0
      %4855 = vmatpush1.bf16.msra.mxu0 0
      %4856 = vmatprep.subr.bf16.mxu0 0
      %4857 = vmatpush1.bf16.msra.mxu0 0
      %4858 = vmatprep.subr.bf16.mxu0 0
      %4859 = vmatpush1.bf16.msra.mxu0 0
      %4860 = vmatprep.subr.bf16.mxu0 0
      %4861 = vmatpush1.bf16.msra.mxu0 0
      %4862 = vmatprep.subr.bf16.mxu0 0
      %4863 = vmatpush1.bf16.msra.mxu0 0
      %4864 = vmatprep.subr.bf16.mxu0 0
      %4865 = vmatpush1.bf16.msra.mxu0 0
      %4866 = vmatprep.subr.bf16.mxu0 0
      %4867 = vmatpush1.bf16.msra.mxu0 0
      %4868 = vmatprep.subr.bf16.mxu0 0
      %4869 = vmatpush1.bf16.msra.mxu0 0
      %4870 = vmatprep.subr.bf16.mxu0 0
      %4871 = vmatpush1.bf16.msra.mxu0 0
      %4872 = vmatprep.subr.bf16.mxu0 0
      %4873 = vmatpush1.bf16.msra.mxu0 0
      %4874 = vmatprep.subr.bf16.mxu0 0
      %4875 = vmatpush1.bf16.msra.mxu0 0
      %4876 = vmatprep.mubr.bf16.mxu0 0
      %4877 = vmatmul.mubr.bf16.gmra.mrb[0].mxu0 %v4835
      %v4878 = vpop.f32.mrb[0].mxu0
      %v4879 = vadd.f32 0.0, %v4878
      %v4880 = vpop.f32.mrb[0].mxu0
      %v4881 = vadd.f32 0.0, %v4880
      %v4882 = vpop.f32.mrb[0].mxu0
      %v4883 = vpop.f32.mrb[0].mxu0
      %4884 = vdwg.mxu0
      %v4885 = vpack.c.bf16 %v4879, %v4879
      %v4886 = vpack.c.bf16 %v4881, %v4881
      %v4887 = vld [vmem:[%s12] sm:$0xff]
      %v4888 = vld [vmem:[%s12 + $0x8] sm:$0xff]
      %v4889 = vld [vmem:[%s12 + $0x10] sm:$0xff]
      %v4890 = vld [vmem:[%s12 + $0x18] sm:$0xff]
      %v4891 = vld [vmem:[%s12 + $0x20] sm:$0xff]
      %v4892 = vld [vmem:[%s12 + $0x28] sm:$0xff]
      %v4893 = vld [vmem:[%s12 + $0x30] sm:$0xff]
      %v4894 = vld [vmem:[%s12 + $0x38] sm:$0xff]
      %v4895 = vld [vmem:[%s12 + $0x40] sm:$0xff]
      %v4896 = vld [vmem:[%s12 + $0x48] sm:$0xff]
      %v4897 = vld [vmem:[%s12 + $0x50] sm:$0xff]
      %v4898 = vld [vmem:[%s12 + $0x58] sm:$0xff]
      %v4899 = vld [vmem:[%s12 + $0x60] sm:$0xff]
      %v4900 = vld [vmem:[%s12 + $0x68] sm:$0xff]
      %v4901 = vld [vmem:[%s12 + $0x70] sm:$0xff]
      %v4902 = vld [vmem:[%s12 + $0x78] sm:$0xff]
      %v4903 = vld [vmem:[%s12 + $0x80] sm:$0xff]
      %v4904 = vld [vmem:[%s12 + $0x88] sm:$0xff]
      %v4905 = vld [vmem:[%s12 + $0x90] sm:$0xff]
      %v4906 = vld [vmem:[%s12 + $0x98] sm:$0xff]
      %v4907 = vld [vmem:[%s12 + $0xa0] sm:$0xff]
      %v4908 = vld [vmem:[%s12 + $0xa8] sm:$0xff]
      %v4909 = vld [vmem:[%s12 + $0xb0] sm:$0xff]
      %v4910 = vld [vmem:[%s12 + $0xb8] sm:$0xff]
      %v4911 = vld [vmem:[%s12 + $0xc0] sm:$0xff]
      %v4912 = vld [vmem:[%s12 + $0xc8] sm:$0xff]
      %v4913 = vld [vmem:[%s12 + $0xd0] sm:$0xff]
      %v4914 = vld [vmem:[%s12 + $0xd8] sm:$0xff]
      %v4915 = vld [vmem:[%s12 + $0xe0] sm:$0xff]
      %v4916 = vld [vmem:[%s12 + $0xe8] sm:$0xff]
      %v4917 = vld [vmem:[%s12 + $0xf0] sm:$0xff]
      %v4918 = vld [vmem:[%s12 + $0xf8] sm:$0xff]
      %s4919 = scalar_lea.vmem %s11, 2
      %v4920 = vld [vmem:[%s4919] sm:$0x3]
      %v4922 = vsel %vm4833, %v4920, 0
      %4924 = vmatprep.subr.bf16.mxu0 %v4842
      %4925 = vmatpush1.bf16.msra.mxu0 %v4839
      %4926 = vmatprep.subr.bf16.mxu0 0
      %4927 = vmatpush1.bf16.msra.mxu0 0
      %4928 = vmatprep.subr.bf16.mxu0 0
      %4929 = vmatpush1.bf16.msra.mxu0 0
      %4930 = vmatprep.subr.bf16.mxu0 0
      %4931 = vmatpush1.bf16.msra.mxu0 0
      %4932 = vmatprep.subr.bf16.mxu0 0
      %4933 = vmatpush1.bf16.msra.mxu0 0
      %4934 = vmatprep.subr.bf16.mxu0 0
      %4935 = vmatpush1.bf16.msra.mxu0 0
      %4936 = vmatprep.subr.bf16.mxu0 0
      %4937 = vmatpush1.bf16.msra.mxu0 0
      %4938 = vmatprep.subr.bf16.mxu0 0
      %4939 = vmatpush1.bf16.msra.mxu0 0
      %4940 = vmatprep.subr.bf16.mxu0 0
      %4941 = vmatpush1.bf16.msra.mxu0 0
      %4942 = vmatprep.subr.bf16.mxu0 0
      %4943 = vmatpush1.bf16.msra.mxu0 0
      %4944 = vmatprep.subr.bf16.mxu0 0
      %4945 = vmatpush1.bf16.msra.mxu0 0
      %4946 = vmatprep.subr.bf16.mxu0 0
      %4947 = vmatpush1.bf16.msra.mxu0 0
      %4948 = vmatprep.subr.bf16.mxu0 0
      %4949 = vmatpush1.bf16.msra.mxu0 0
      %4950 = vmatprep.subr.bf16.mxu0 0
      %4951 = vmatpush1.bf16.msra.mxu0 0
      %4952 = vmatprep.subr.bf16.mxu0 0
      %4953 = vmatpush1.bf16.msra.mxu0 0
      %4954 = vmatprep.subr.bf16.mxu0 0
      %4955 = vmatpush1.bf16.msra.mxu0 0
      %4956 = vmatprep.mubr.bf16.mxu0 0
      %4957 = vmatmul.mubr.bf16.gmra.mrb[0].mxu0 %v4922
      %v4958 = vpop.f32.mrb[0].mxu0
      %v4959 = vadd.f32 0.0, %v4958
      %v4960 = vpop.f32.mrb[0].mxu0
      %v4961 = vadd.f32 0.0, %v4960
      %v4962 = vpop.f32.mrb[0].mxu0
      %v4963 = vpop.f32.mrb[0].mxu0
      %4964 = vdwg.mxu0
      %v4965 = vpack.c.bf16 %v4959, %v4959
      %v4966 = vpack.c.bf16 %v4961, %v4961
      %s4967 = scalar_lea.vmem %s12, 256
      %v4968 = vld [vmem:[%s4967] sm:$0xff]
      %v4969 = vld [vmem:[%s4967 + $0x8] sm:$0xff]
      %v4970 = vld [vmem:[%s4967 + $0x10] sm:$0xff]
      %v4971 = vld [vmem:[%s4967 + $0x18] sm:$0xff]
      %v4972 = vld [vmem:[%s4967 + $0x20] sm:$0xff]
      %v4973 = vld [vmem:[%s4967 + $0x28] sm:$0xff]
      %v4974 = vld [vmem:[%s4967 + $0x30] sm:$0xff]
      %v4975 = vld [vmem:[%s4967 + $0x38] sm:$0xff]
      %v4976 = vld [vmem:[%s4967 + $0x40] sm:$0xff]
      %v4977 = vld [vmem:[%s4967 + $0x48] sm:$0xff]
      %v4978 = vld [vmem:[%s4967 + $0x50] sm:$0xff]
      %v4979 = vld [vmem:[%s4967 + $0x58] sm:$0xff]
      %v4980 = vld [vmem:[%s4967 + $0x60] sm:$0xff]
      %v4981 = vld [vmem:[%s4967 + $0x68] sm:$0xff]
      %v4982 = vld [vmem:[%s4967 + $0x70] sm:$0xff]
      %v4983 = vld [vmem:[%s4967 + $0x78] sm:$0xff]
      %v4984 = vld [vmem:[%s4967 + $0x80] sm:$0xff]
      %v4985 = vld [vmem:[%s4967 + $0x88] sm:$0xff]
      %v4986 = vld [vmem:[%s4967 + $0x90] sm:$0xff]
      %v4987 = vld [vmem:[%s4967 + $0x98] sm:$0xff]
      %v4988 = vld [vmem:[%s4967 + $0xa0] sm:$0xff]
      %v4989 = vld [vmem:[%s4967 + $0xa8] sm:$0xff]
      %v4990 = vld [vmem:[%s4967 + $0xb0] sm:$0xff]
      %v4991 = vld [vmem:[%s4967 + $0xb8] sm:$0xff]
      %v4992 = vld [vmem:[%s4967 + $0xc0] sm:$0xff]
      %v4993 = vld [vmem:[%s4967 + $0xc8] sm:$0xff]
      %v4994 = vld [vmem:[%s4967 + $0xd0] sm:$0xff]
      %v4995 = vld [vmem:[%s4967 + $0xd8] sm:$0xff]
      %v4996 = vld [vmem:[%s4967 + $0xe0] sm:$0xff]
      %v4997 = vld [vmem:[%s4967 + $0xe8] sm:$0xff]
      %v4998 = vld [vmem:[%s4967 + $0xf0] sm:$0xff]
      %v4999 = vld [vmem:[%s4967 + $0xf8] sm:$0xff]
      %v5032 = vunpack.c.l.b16 %v4968
      %v5033 = vunpack.c.h.b16 %v4968
      %v5034 = vunpack.c.l.b16 %v4969
      %v5035 = vunpack.c.h.b16 %v4969
      %v5036 = vunpack.c.l.b16 %v4970
      %v5037 = vunpack.c.h.b16 %v4970
      %v5038 = vunpack.c.l.b16 %v4971
      %v5039 = vunpack.c.h.b16 %v4971
      %v5040 = vunpack.c.l.b16 %v4972
      %v5041 = vunpack.c.h.b16 %v4972
      %v5042 = vunpack.c.l.b16 %v4973
      %v5043 = vunpack.c.h.b16 %v4973
      %v5044 = vunpack.c.l.b16 %v4974
      %v5045 = vunpack.c.h.b16 %v4974
      %v5046 = vunpack.c.l.b16 %v4975
      %v5047 = vunpack.c.h.b16 %v4975
      %v5048 = vunpack.c.l.b16 %v4976
      %v5049 = vunpack.c.h.b16 %v4976
      %v5050 = vunpack.c.l.b16 %v4977
      %v5051 = vunpack.c.h.b16 %v4977
      %v5052 = vunpack.c.l.b16 %v4978
      %v5053 = vunpack.c.h.b16 %v4978
      %v5054 = vunpack.c.l.b16 %v4979
      %v5055 = vunpack.c.h.b16 %v4979
      %v5056 = vunpack.c.l.b16 %v4980
      %v5057 = vunpack.c.h.b16 %v4980
      %v5058 = vunpack.c.l.b16 %v4981
      %v5059 = vunpack.c.h.b16 %v4981
      %v5060 = vunpack.c.l.b16 %v4982
      %v5061 = vunpack.c.h.b16 %v4982
      %v5062 = vunpack.c.l.b16 %v4983
      %v5063 = vunpack.c.h.b16 %v4983
      %v5064 = vunpack.c.l.b16 %v4984
      %v5065 = vunpack.c.h.b16 %v4984
      %v5066 = vunpack.c.l.b16 %v4985
      %v5067 = vunpack.c.h.b16 %v4985
      %v5068 = vunpack.c.l.b16 %v4986
      %v5069 = vunpack.c.h.b16 %v4986
      %v5070 = vunpack.c.l.b16 %v4987
      %v5071 = vunpack.c.h.b16 %v4987
      %v5072 = vunpack.c.l.b16 %v4988
      %v5073 = vunpack.c.h.b16 %v4988
      %v5074 = vunpack.c.l.b16 %v4989
      %v5075 = vunpack.c.h.b16 %v4989
      %v5076 = vunpack.c.l.b16 %v4990
      %v5077 = vunpack.c.h.b16 %v4990
      %v5078 = vunpack.c.l.b16 %v4991
      %v5079 = vunpack.c.h.b16 %v4991
      %v5080 = vunpack.c.l.b16 %v4992
      %v5081 = vunpack.c.h.b16 %v4992
      %v5082 = vunpack.c.l.b16 %v4993
      %v5083 = vunpack.c.h.b16 %v4993
      %v5084 = vunpack.c.l.b16 %v4994
      %v5085 = vunpack.c.h.b16 %v4994
      %v5086 = vunpack.c.l.b16 %v4995
      %v5087 = vunpack.c.h.b16 %v4995
      %v5088 = vunpack.c.l.b16 %v4996
      %v5089 = vunpack.c.h.b16 %v4996
      %v5090 = vunpack.c.l.b16 %v4997
      %v5091 = vunpack.c.h.b16 %v4997
      %v5092 = vunpack.c.l.b16 %v4998
      %v5093 = vunpack.c.h.b16 %v4998
      %v5094 = vunpack.c.l.b16 %v4999
      %v5095 = vunpack.c.h.b16 %v4999
      %v5096 = vpack.c.b16 %v5034, %v5032
      %v5097 = vpack.c.b16 %v5035, %v5033
      %v5098 = vpack.c.b16 %v5038, %v5036
      %v5099 = vpack.c.b16 %v5039, %v5037
      %v5100 = vpack.c.b16 %v5042, %v5040
      %v5101 = vpack.c.b16 %v5043, %v5041
      %v5102 = vpack.c.b16 %v5046, %v5044
      %v5103 = vpack.c.b16 %v5047, %v5045
      %v5104 = vpack.c.b16 %v5050, %v5048
      %v5105 = vpack.c.b16 %v5051, %v5049
      %v5106 = vpack.c.b16 %v5054, %v5052
      %v5107 = vpack.c.b16 %v5055, %v5053
      %v5108 = vpack.c.b16 %v5058, %v5056
      %v5109 = vpack.c.b16 %v5059, %v5057
      %v5110 = vpack.c.b16 %v5062, %v5060
      %v5111 = vpack.c.b16 %v5063, %v5061
      %v5112 = vpack.c.b16 %v5066, %v5064
      %v5113 = vpack.c.b16 %v5067, %v5065
      %v5114 = vpack.c.b16 %v5070, %v5068
      %v5115 = vpack.c.b16 %v5071, %v5069
      %v5116 = vpack.c.b16 %v5074, %v5072
      %v5117 = vpack.c.b16 %v5075, %v5073
      %v5118 = vpack.c.b16 %v5078, %v5076
      %v5119 = vpack.c.b16 %v5079, %v5077
      %v5120 = vpack.c.b16 %v5082, %v5080
      %v5121 = vpack.c.b16 %v5083, %v5081
      %v5122 = vpack.c.b16 %v5086, %v5084
      %v5123 = vpack.c.b16 %v5087, %v5085
      %v5124 = vpack.c.b16 %v5090, %v5088
      %v5125 = vpack.c.b16 %v5091, %v5089
      %v5126 = vpack.c.b16 %v5094, %v5092
      %v5127 = vpack.c.b16 %v5095, %v5093
      %5160 = vmatprep.subr.bf16.mxu0 %v5097
      %5161 = vmatpush1.bf16.msra.mxu0 %v5096
      %5162 = vmatprep.subr.bf16.mxu0 %v5099
      %5163 = vmatpush1.bf16.msra.mxu0 %v5098
      %5164 = vmatprep.subr.bf16.mxu0 %v5101
      %5165 = vmatpush1.bf16.msra.mxu0 %v5100
      %5166 = vmatprep.subr.bf16.mxu0 %v5103
      %5167 = vmatpush1.bf16.msra.mxu0 %v5102
      %5168 = vmatprep.subr.bf16.mxu0 %v5105
      %5169 = vmatpush1.bf16.msra.mxu0 %v5104
      %5170 = vmatprep.subr.bf16.mxu0 %v5107
      %5171 = vmatpush1.bf16.msra.mxu0 %v5106
      %5172 = vmatprep.subr.bf16.mxu0 %v5109
      %5173 = vmatpush1.bf16.msra.mxu0 %v5108
      %5174 = vmatprep.subr.bf16.mxu0 %v5111
      %5175 = vmatpush1.bf16.msra.mxu0 %v5110
      %5176 = vmatprep.subr.bf16.mxu0 %v5113
      %5177 = vmatpush1.bf16.msra.mxu0 %v5112
      %5178 = vmatprep.subr.bf16.mxu0 %v5115
      %5179 = vmatpush1.bf16.msra.mxu0 %v5114
      %5180 = vmatprep.subr.bf16.mxu0 %v5117
      %5181 = vmatpush1.bf16.msra.mxu0 %v5116
      %5182 = vmatprep.subr.bf16.mxu0 %v5119
      %5183 = vmatpush1.bf16.msra.mxu0 %v5118
      %5184 = vmatprep.subr.bf16.mxu0 %v5121
      %5185 = vmatpush1.bf16.msra.mxu0 %v5120
      %5186 = vmatprep.subr.bf16.mxu0 %v5123
      %5187 = vmatpush1.bf16.msra.mxu0 %v5122
      %5188 = vmatprep.subr.bf16.mxu0 %v5125
      %5189 = vmatpush1.bf16.msra.mxu0 %v5124
      %5190 = vmatprep.subr.bf16.mxu0 %v5127
      %5191 = vmatpush1.bf16.msra.mxu0 %v5126
      %5192 = vmatprep.mubr.bf16.mxu0 %v4966
      %5193 = vmatmul.mubr.bf16.gmra.mrb[0].mxu0 %v4965
      %v5194 = vpop.f32.mrb[0].mxu0
      %v5195 = vadd.f32 0.0, %v5194
      %v5196 = vpop.f32.mrb[0].mxu0
      %v5197 = vadd.f32 0.0, %v5196
      %v5198 = vpop.f32.mrb[0].mxu0
      %v5199 = vpop.f32.mrb[0].mxu0
      %5200 = vdwg.mxu0
      %v5233 = vunpack.c.l.b16 %v4887
      %v5234 = vunpack.c.h.b16 %v4887
      %v5235 = vunpack.c.l.b16 %v4888
      %v5236 = vunpack.c.h.b16 %v4888
      %v5237 = vunpack.c.l.b16 %v4889
      %v5238 = vunpack.c.h.b16 %v4889
      %v5239 = vunpack.c.l.b16 %v4890
      %v5240 = vunpack.c.h.b16 %v4890
      %v5241 = vunpack.c.l.b16 %v4891
      %v5242 = vunpack.c.h.b16 %v4891
      %v5243 = vunpack.c.l.b16 %v4892
      %v5244 = vunpack.c.h.b16 %v4892
      %v5245 = vunpack.c.l.b16 %v4893
      %v5246 = vunpack.c.h.b16 %v4893
      %v5247 = vunpack.c.l.b16 %v4894
      %v5248 = vunpack.c.h.b16 %v4894
      %v5249 = vunpack.c.l.b16 %v4895
      %v5250 = vunpack.c.h.b16 %v4895
      %v5251 = vunpack.c.l.b16 %v4896
      %v5252 = vunpack.c.h.b16 %v4896
      %v5253 = vunpack.c.l.b16 %v4897
      %v5254 = vunpack.c.h.b16 %v4897
      %v5255 = vunpack.c.l.b16 %v4898
      %v5256 = vunpack.c.h.b16 %v4898
      %v5257 = vunpack.c.l.b16 %v4899
      %v5258 = vunpack.c.h.b16 %v4899
      %v5259 = vunpack.c.l.b16 %v4900
      %v5260 = vunpack.c.h.b16 %v4900
      %v5261 = vunpack.c.l.b16 %v4901
      %v5262 = vunpack.c.h.b16 %v4901
      %v5263 = vunpack.c.l.b16 %v4902
      %v5264 = vunpack.c.h.b16 %v4902
      %v5265 = vunpack.c.l.b16 %v4903
      %v5266 = vunpack.c.h.b16 %v4903
      %v5267 = vunpack.c.l.b16 %v4904
      %v5268 = vunpack.c.h.b16 %v4904
      %v5269 = vunpack.c.l.b16 %v4905
      %v5270 = vunpack.c.h.b16 %v4905
      %v5271 = vunpack.c.l.b16 %v4906
      %v5272 = vunpack.c.h.b16 %v4906
      %v5273 = vunpack.c.l.b16 %v4907
      %v5274 = vunpack.c.h.b16 %v4907
      %v5275 = vunpack.c.l.b16 %v4908
      %v5276 = vunpack.c.h.b16 %v4908
      %v5277 = vunpack.c.l.b16 %v4909
      %v5278 = vunpack.c.h.b16 %v4909
      %v5279 = vunpack.c.l.b16 %v4910
      %v5280 = vunpack.c.h.b16 %v4910
      %v5281 = vunpack.c.l.b16 %v4911
      %v5282 = vunpack.c.h.b16 %v4911
      %v5283 = vunpack.c.l.b16 %v4912
      %v5284 = vunpack.c.h.b16 %v4912
      %v5285 = vunpack.c.l.b16 %v4913
      %v5286 = vunpack.c.h.b16 %v4913
      %v5287 = vunpack.c.l.b16 %v4914
      %v5288 = vunpack.c.h.b16 %v4914
      %v5289 = vunpack.c.l.b16 %v4915
      %v5290 = vunpack.c.h.b16 %v4915
      %v5291 = vunpack.c.l.b16 %v4916
      %v5292 = vunpack.c.h.b16 %v4916
      %v5293 = vunpack.c.l.b16 %v4917
      %v5294 = vunpack.c.h.b16 %v4917
      %v5295 = vunpack.c.l.b16 %v4918
      %v5296 = vunpack.c.h.b16 %v4918
      %v5297 = vpack.c.b16 %v5235, %v5233
      %v5298 = vpack.c.b16 %v5236, %v5234
      %v5299 = vpack.c.b16 %v5239, %v5237
      %v5300 = vpack.c.b16 %v5240, %v5238
      %v5301 = vpack.c.b16 %v5243, %v5241
      %v5302 = vpack.c.b16 %v5244, %v5242
      %v5303 = vpack.c.b16 %v5247, %v5245
      %v5304 = vpack.c.b16 %v5248, %v5246
      %v5305 = vpack.c.b16 %v5251, %v5249
      %v5306 = vpack.c.b16 %v5252, %v5250
      %v5307 = vpack.c.b16 %v5255, %v5253
      %v5308 = vpack.c.b16 %v5256, %v5254
      %v5309 = vpack.c.b16 %v5259, %v5257
      %v5310 = vpack.c.b16 %v5260, %v5258
      %v5311 = vpack.c.b16 %v5263, %v5261
      %v5312 = vpack.c.b16 %v5264, %v5262
      %v5313 = vpack.c.b16 %v5267, %v5265
      %v5314 = vpack.c.b16 %v5268, %v5266
      %v5315 = vpack.c.b16 %v5271, %v5269
      %v5316 = vpack.c.b16 %v5272, %v5270
      %v5317 = vpack.c.b16 %v5275, %v5273
      %v5318 = vpack.c.b16 %v5276, %v5274
      %v5319 = vpack.c.b16 %v5279, %v5277
      %v5320 = vpack.c.b16 %v5280, %v5278
      %v5321 = vpack.c.b16 %v5283, %v5281
      %v5322 = vpack.c.b16 %v5284, %v5282
      %v5323 = vpack.c.b16 %v5287, %v5285
      %v5324 = vpack.c.b16 %v5288, %v5286
      %v5325 = vpack.c.b16 %v5291, %v5289
      %v5326 = vpack.c.b16 %v5292, %v5290
      %v5327 = vpack.c.b16 %v5295, %v5293
      %v5328 = vpack.c.b16 %v5296, %v5294
      %5361 = vmatprep.subr.bf16.mxu0 %v5298
      %5362 = vmatpush1.bf16.msra.mxu0 %v5297
      %5363 = vmatprep.subr.bf16.mxu0 %v5300
      %5364 = vmatpush1.bf16.msra.mxu0 %v5299
      %5365 = vmatprep.subr.bf16.mxu0 %v5302
      %5366 = vmatpush1.bf16.msra.mxu0 %v5301
      %5367 = vmatprep.subr.bf16.mxu0 %v5304
      %5368 = vmatpush1.bf16.msra.mxu0 %v5303
      %5369 = vmatprep.subr.bf16.mxu0 %v5306
      %5370 = vmatpush1.bf16.msra.mxu0 %v5305
      %5371 = vmatprep.subr.bf16.mxu0 %v5308
      %5372 = vmatpush1.bf16.msra.mxu0 %v5307
      %5373 = vmatprep.subr.bf16.mxu0 %v5310
      %5374 = vmatpush1.bf16.msra.mxu0 %v5309
      %5375 = vmatprep.subr.bf16.mxu0 %v5312
      %5376 = vmatpush1.bf16.msra.mxu0 %v5311
      %5377 = vmatprep.subr.bf16.mxu0 %v5314
      %5378 = vmatpush1.bf16.msra.mxu0 %v5313
      %5379 = vmatprep.subr.bf16.mxu0 %v5316
      %5380 = vmatpush1.bf16.msra.mxu0 %v5315
      %5381 = vmatprep.subr.bf16.mxu0 %v5318
      %5382 = vmatpush1.bf16.msra.mxu0 %v5317
      %5383 = vmatprep.subr.bf16.mxu0 %v5320
      %5384 = vmatpush1.bf16.msra.mxu0 %v5319
      %5385 = vmatprep.subr.bf16.mxu0 %v5322
      %5386 = vmatpush1.bf16.msra.mxu0 %v5321
      %5387 = vmatprep.subr.bf16.mxu0 %v5324
      %5388 = vmatpush1.bf16.msra.mxu0 %v5323
      %5389 = vmatprep.subr.bf16.mxu0 %v5326
      %5390 = vmatpush1.bf16.msra.mxu0 %v5325
      %5391 = vmatprep.subr.bf16.mxu0 %v5328
      %5392 = vmatpush1.bf16.msra.mxu0 %v5327
      %5393 = vmatprep.mubr.bf16.mxu0 %v4886
      %5394 = vmatmul.mubr.bf16.gmra.mrb[0].mxu0 %v4885
      %v5395 = vpop.f32.mrb[0].mxu0
      %v5396 = vadd.f32 %v5195, %v5395
      %v5397 = vpop.f32.mrb[0].mxu0
      %v5398 = vadd.f32 %v5197, %v5397
      %v5399 = vpop.f32.mrb[0].mxu0
      %v5400 = vpop.f32.mrb[0].mxu0
      %5401 = vdwg.mxu0
      %s5402 = scalar_lea.vmem %s11, 4
      %v5403 = vld [vmem:[%s5402] sm:$0x3]
      %v5405 = vsel %vm4833, %v5403, 0
      %5407 = vmatprep.subr.bf16.mxu0 %v4842
      %5408 = vmatpush1.bf16.msra.mxu0 %v4839
      %5409 = vmatprep.subr.bf16.mxu0 0
      %5410 = vmatpush1.bf16.msra.mxu0 0
      %5411 = vmatprep.subr.bf16.mxu0 0
      %5412 = vmatpush1.bf16.msra.mxu0 0
      %5413 = vmatprep.subr.bf16.mxu0 0
      %5414 = vmatpush1.bf16.msra.mxu0 0
      %5415 = vmatprep.subr.bf16.mxu0 0
      %5416 = vmatpush1.bf16.msra.mxu0 0
      %5417 = vmatprep.subr.bf16.mxu0 0
      %5418 = vmatpush1.bf16.msra.mxu0 0
      %5419 = vmatprep.subr.bf16.mxu0 0
      %5420 = vmatpush1.bf16.msra.mxu0 0
      %5421 = vmatprep.subr.bf16.mxu0 0
      %5422 = vmatpush1.bf16.msra.mxu0 0
      %5423 = vmatprep.subr.bf16.mxu0 0
      %5424 = vmatpush1.bf16.msra.mxu0 0
      %5425 = vmatprep.subr.bf16.mxu0 0
      %5426 = vmatpush1.bf16.msra.mxu0 0
      %5427 = vmatprep.subr.bf16.mxu0 0
      %5428 = vmatpush1.bf16.msra.mxu0 0
      %5429 = vmatprep.subr.bf16.mxu0 0
      %5430 = vmatpush1.bf16.msra.mxu0 0
      %5431 = vmatprep.subr.bf16.mxu0 0
      %5432 = vmatpush1.bf16.msra.mxu0 0
      %5433 = vmatprep.subr.bf16.mxu0 0
      %5434 = vmatpush1.bf16.msra.mxu0 0
      %5435 = vmatprep.subr.bf16.mxu0 0
      %5436 = vmatpush1.bf16.msra.mxu0 0
      %5437 = vmatprep.subr.bf16.mxu0 0
      %5438 = vmatpush1.bf16.msra.mxu0 0
      %5439 = vmatprep.mubr.bf16.mxu0 0
      %5440 = vmatmul.mubr.bf16.gmra.mrb[0].mxu0 %v5405
      %v5441 = vpop.f32.mrb[0].mxu0
      %v5442 = vadd.f32 0.0, %v5441
      %v5443 = vpop.f32.mrb[0].mxu0
      %v5444 = vadd.f32 0.0, %v5443
      %v5445 = vpop.f32.mrb[0].mxu0
      %v5446 = vpop.f32.mrb[0].mxu0
      %5447 = vdwg.mxu0
      %v5448 = vpack.c.bf16 %v5442, %v5442
      %v5449 = vpack.c.bf16 %v5444, %v5444
      %s5450 = scalar_lea.vmem %s12, 512
      %v5451 = vld [vmem:[%s5450] sm:$0xff]
      %v5452 = vld [vmem:[%s5450 + $0x8] sm:$0xff]
      %v5453 = vld [vmem:[%s5450 + $0x10] sm:$0xff]
      %v5454 = vld [vmem:[%s5450 + $0x18] sm:$0xff]
      %v5455 = vld [vmem:[%s5450 + $0x20] sm:$0xff]
      %v5456 = vld [vmem:[%s5450 + $0x28] sm:$0xff]
      %v5457 = vld [vmem:[%s5450 + $0x30] sm:$0xff]
      %v5458 = vld [vmem:[%s5450 + $0x38] sm:$0xff]
      %v5459 = vld [vmem:[%s5450 + $0x40] sm:$0xff]
      %v5460 = vld [vmem:[%s5450 + $0x48] sm:$0xff]
      %v5461 = vld [vmem:[%s5450 + $0x50] sm:$0xff]
      %v5462 = vld [vmem:[%s5450 + $0x58] sm:$0xff]
      %v5463 = vld [vmem:[%s5450 + $0x60] sm:$0xff]
      %v5464 = vld [vmem:[%s5450 + $0x68] sm:$0xff]
      %v5465 = vld [vmem:[%s5450 + $0x70] sm:$0xff]
      %v5466 = vld [vmem:[%s5450 + $0x78] sm:$0xff]
      %v5467 = vld [vmem:[%s5450 + $0x80] sm:$0xff]
      %v5468 = vld [vmem:[%s5450 + $0x88] sm:$0xff]
      %v5469 = vld [vmem:[%s5450 + $0x90] sm:$0xff]
      %v5470 = vld [vmem:[%s5450 + $0x98] sm:$0xff]
      %v5471 = vld [vmem:[%s5450 + $0xa0] sm:$0xff]
      %v5472 = vld [vmem:[%s5450 + $0xa8] sm:$0xff]
      %v5473 = vld [vmem:[%s5450 + $0xb0] sm:$0xff]
      %v5474 = vld [vmem:[%s5450 + $0xb8] sm:$0xff]
      %v5475 = vld [vmem:[%s5450 + $0xc0] sm:$0xff]
      %v5476 = vld [vmem:[%s5450 + $0xc8] sm:$0xff]
      %v5477 = vld [vmem:[%s5450 + $0xd0] sm:$0xff]
      %v5478 = vld [vmem:[%s5450 + $0xd8] sm:$0xff]
      %v5479 = vld [vmem:[%s5450 + $0xe0] sm:$0xff]
      %v5480 = vld [vmem:[%s5450 + $0xe8] sm:$0xff]
      %v5481 = vld [vmem:[%s5450 + $0xf0] sm:$0xff]
      %v5482 = vld [vmem:[%s5450 + $0xf8] sm:$0xff]
      %v5515 = vunpack.c.l.b16 %v5451
      %v5516 = vunpack.c.h.b16 %v5451
      %v5517 = vunpack.c.l.b16 %v5452
      %v5518 = vunpack.c.h.b16 %v5452
      %v5519 = vunpack.c.l.b16 %v5453
      %v5520 = vunpack.c.h.b16 %v5453
      %v5521 = vunpack.c.l.b16 %v5454
      %v5522 = vunpack.c.h.b16 %v5454
      %v5523 = vunpack.c.l.b16 %v5455
      %v5524 = vunpack.c.h.b16 %v5455
      %v5525 = vunpack.c.l.b16 %v5456
      %v5526 = vunpack.c.h.b16 %v5456
      %v5527 = vunpack.c.l.b16 %v5457
      %v5528 = vunpack.c.h.b16 %v5457
      %v5529 = vunpack.c.l.b16 %v5458
      %v5530 = vunpack.c.h.b16 %v5458
      %v5531 = vunpack.c.l.b16 %v5459
      %v5532 = vunpack.c.h.b16 %v5459
      %v5533 = vunpack.c.l.b16 %v5460
      %v5534 = vunpack.c.h.b16 %v5460
      %v5535 = vunpack.c.l.b16 %v5461
      %v5536 = vunpack.c.h.b16 %v5461
      %v5537 = vunpack.c.l.b16 %v5462
      %v5538 = vunpack.c.h.b16 %v5462
      %v5539 = vunpack.c.l.b16 %v5463
      %v5540 = vunpack.c.h.b16 %v5463
      %v5541 = vunpack.c.l.b16 %v5464
      %v5542 = vunpack.c.h.b16 %v5464
      %v5543 = vunpack.c.l.b16 %v5465
      %v5544 = vunpack.c.h.b16 %v5465
      %v5545 = vunpack.c.l.b16 %v5466
      %v5546 = vunpack.c.h.b16 %v5466
      %v5547 = vunpack.c.l.b16 %v5467
      %v5548 = vunpack.c.h.b16 %v5467
      %v5549 = vunpack.c.l.b16 %v5468
      %v5550 = vunpack.c.h.b16 %v5468
      %v5551 = vunpack.c.l.b16 %v5469
      %v5552 = vunpack.c.h.b16 %v5469
      %v5553 = vunpack.c.l.b16 %v5470
      %v5554 = vunpack.c.h.b16 %v5470
      %v5555 = vunpack.c.l.b16 %v5471
      %v5556 = vunpack.c.h.b16 %v5471
      %v5557 = vunpack.c.l.b16 %v5472
      %v5558 = vunpack.c.h.b16 %v5472
      %v5559 = vunpack.c.l.b16 %v5473
      %v5560 = vunpack.c.h.b16 %v5473
      %v5561 = vunpack.c.l.b16 %v5474
      %v5562 = vunpack.c.h.b16 %v5474
      %v5563 = vunpack.c.l.b16 %v5475
      %v5564 = vunpack.c.h.b16 %v5475
      %v5565 = vunpack.c.l.b16 %v5476
      %v5566 = vunpack.c.h.b16 %v5476
      %v5567 = vunpack.c.l.b16 %v5477
      %v5568 = vunpack.c.h.b16 %v5477
      %v5569 = vunpack.c.l.b16 %v5478
      %v5570 = vunpack.c.h.b16 %v5478
      %v5571 = vunpack.c.l.b16 %v5479
      %v5572 = vunpack.c.h.b16 %v5479
      %v5573 = vunpack.c.l.b16 %v5480
      %v5574 = vunpack.c.h.b16 %v5480
      %v5575 = vunpack.c.l.b16 %v5481
      %v5576 = vunpack.c.h.b16 %v5481
      %v5577 = vunpack.c.l.b16 %v5482
      %v5578 = vunpack.c.h.b16 %v5482
      %v5579 = vpack.c.b16 %v5517, %v5515
      %v5580 = vpack.c.b16 %v5518, %v5516
      %v5581 = vpack.c.b16 %v5521, %v5519
      %v5582 = vpack.c.b16 %v5522, %v5520
      %v5583 = vpack.c.b16 %v5525, %v5523
      %v5584 = vpack.c.b16 %v5526, %v5524
      %v5585 = vpack.c.b16 %v5529, %v5527
      %v5586 = vpack.c.b16 %v5530, %v5528
      %v5587 = vpack.c.b16 %v5533, %v5531
      %v5588 = vpack.c.b16 %v5534, %v5532
      %v5589 = vpack.c.b16 %v5537, %v5535
      %v5590 = vpack.c.b16 %v5538, %v5536
      %v5591 = vpack.c.b16 %v5541, %v5539
      %v5592 = vpack.c.b16 %v5542, %v5540
      %v5593 = vpack.c.b16 %v5545, %v5543
      %v5594 = vpack.c.b16 %v5546, %v5544
      %v5595 = vpack.c.b16 %v5549, %v5547
      %v5596 = vpack.c.b16 %v5550, %v5548
      %v5597 = vpack.c.b16 %v5553, %v5551
      %v5598 = vpack.c.b16 %v5554, %v5552
      %v5599 = vpack.c.b16 %v5557, %v5555
      %v5600 = vpack.c.b16 %v5558, %v5556
      %v5601 = vpack.c.b16 %v5561, %v5559
      %v5602 = vpack.c.b16 %v5562, %v5560
      %v5603 = vpack.c.b16 %v5565, %v5563
      %v5604 = vpack.c.b16 %v5566, %v5564
      %v5605 = vpack.c.b16 %v5569, %v5567
      %v5606 = vpack.c.b16 %v5570, %v5568
      %v5607 = vpack.c.b16 %v5573, %v5571
      %v5608 = vpack.c.b16 %v5574, %v5572
      %v5609 = vpack.c.b16 %v5577, %v5575
      %v5610 = vpack.c.b16 %v5578, %v5576
      %5643 = vmatprep.subr.bf16.mxu0 %v5580
      %5644 = vmatpush1.bf16.msra.mxu0 %v5579
      %5645 = vmatprep.subr.bf16.mxu0 %v5582
      %5646 = vmatpush1.bf16.msra.mxu0 %v5581
      %5647 = vmatprep.subr.bf16.mxu0 %v5584
      %5648 = vmatpush1.bf16.msra.mxu0 %v5583
      %5649 = vmatprep.subr.bf16.mxu0 %v5586
      %5650 = vmatpush1.bf16.msra.mxu0 %v5585
      %5651 = vmatprep.subr.bf16.mxu0 %v5588
      %5652 = vmatpush1.bf16.msra.mxu0 %v5587
      %5653 = vmatprep.subr.bf16.mxu0 %v5590
      %5654 = vmatpush1.bf16.msra.mxu0 %v5589
      %5655 = vmatprep.subr.bf16.mxu0 %v5592
      %5656 = vmatpush1.bf16.msra.mxu0 %v5591
      %5657 = vmatprep.subr.bf16.mxu0 %v5594
      %5658 = vmatpush1.bf16.msra.mxu0 %v5593
      %5659 = vmatprep.subr.bf16.mxu0 %v5596
      %5660 = vmatpush1.bf16.msra.mxu0 %v5595
      %5661 = vmatprep.subr.bf16.mxu0 %v5598
      %5662 = vmatpush1.bf16.msra.mxu0 %v5597
      %5663 = vmatprep.subr.bf16.mxu0 %v5600
      %5664 = vmatpush1.bf16.msra.mxu0 %v5599
      %5665 = vmatprep.subr.bf16.mxu0 %v5602
      %5666 = vmatpush1.bf16.msra.mxu0 %v5601
      %5667 = vmatprep.subr.bf16.mxu0 %v5604
      %5668 = vmatpush1.bf16.msra.mxu0 %v5603
      %5669 = vmatprep.subr.bf16.mxu0 %v5606
      %5670 = vmatpush1.bf16.msra.mxu0 %v5605
      %5671 = vmatprep.subr.bf16.mxu0 %v5608
      %5672 = vmatpush1.bf16.msra.mxu0 %v5607
      %5673 = vmatprep.subr.bf16.mxu0 %v5610
      %5674 = vmatpush1.bf16.msra.mxu0 %v5609
      %5675 = vmatprep.mubr.bf16.mxu0 %v5449
      %5676 = vmatmul.mubr.bf16.gmra.mrb[0].mxu0 %v5448
      %v5677 = vpop.f32.mrb[0].mxu0
      %v5678 = vadd.f32 0.0, %v5677
      %v5679 = vpop.f32.mrb[0].mxu0
      %v5680 = vadd.f32 0.0, %v5679
      %v5681 = vpop.f32.mrb[0].mxu0
      %v5682 = vpop.f32.mrb[0].mxu0
      %5683 = vdwg.mxu0
      %v5684 = vadd.f32 %v5396, %v5678
      %v5685 = vadd.f32 %v5398, %v5680
      %s5686 = scalar_lea.vmem %s11, 6
      %v5687 = vld [vmem:[%s5686] sm:$0x3]
      %v5689 = vsel %vm4833, %v5687, 0
      %5691 = vmatprep.subr.bf16.mxu0 %v4842
      %5692 = vmatpush1.bf16.msra.mxu0 %v4839
      %5693 = vmatprep.subr.bf16.mxu0 0
      %5694 = vmatpush1.bf16.msra.mxu0 0
      %5695 = vmatprep.subr.bf16.mxu0 0
      %5696 = vmatpush1.bf16.msra.mxu0 0
      %5697 = vmatprep.subr.bf16.mxu0 0
      %5698 = vmatpush1.bf16.msra.mxu0 0
      %5699 = vmatprep.subr.bf16.mxu0 0
      %5700 = vmatpush1.bf16.msra.mxu0 0
      %5701 = vmatprep.subr.bf16.mxu0 0
      %5702 = vmatpush1.bf16.msra.mxu0 0
      %5703 = vmatprep.subr.bf16.mxu0 0
      %5704 = vmatpush1.bf16.msra.mxu0 0
      %5705 = vmatprep.subr.bf16.mxu0 0
      %5706 = vmatpush1.bf16.msra.mxu0 0
      %5707 = vmatprep.subr.bf16.mxu0 0
      %5708 = vmatpush1.bf16.msra.mxu0 0
      %5709 = vmatprep.subr.bf16.mxu0 0
      %5710 = vmatpush1.bf16.msra.mxu0 0
      %5711 = vmatprep.subr.bf16.mxu0 0
      %5712 = vmatpush1.bf16.msra.mxu0 0
      %5713 = vmatprep.subr.bf16.mxu0 0
      %5714 = vmatpush1.bf16.msra.mxu0 0
      %5715 = vmatprep.subr.bf16.mxu0 0
      %5716 = vmatpush1.bf16.msra.mxu0 0
      %5717 = vmatprep.subr.bf16.mxu0 0
      %5718 = vmatpush1.bf16.msra.mxu0 0
      %5719 = vmatprep.subr.bf16.mxu0 0
      %5720 = vmatpush1.bf16.msra.mxu0 0
      %5721 = vmatprep.subr.bf16.mxu0 0
      %5722 = vmatpush1.bf16.msra.mxu0 0
      %5723 = vmatprep.mubr.bf16.mxu0 0
      %5724 = vmatmul.mubr.bf16.gmra.mrb[0].mxu0 %v5689
      %v5725 = vpop.f32.mrb[0].mxu0
      %v5726 = vadd.f32 0.0, %v5725
      %v5727 = vpop.f32.mrb[0].mxu0
      %v5728 = vadd.f32 0.0, %v5727
      %v5729 = vpop.f32.mrb[0].mxu0
      %v5730 = vpop.f32.mrb[0].mxu0
      %5731 = vdwg.mxu0
      %v5732 = vpack.c.bf16 %v5726, %v5726
      %v5733 = vpack.c.bf16 %v5728, %v5728
      %s5734 = scalar_lea.vmem %s12, 768
      %v5735 = vld [vmem:[%s5734] sm:$0xff]
      %v5736 = vld [vmem:[%s5734 + $0x8] sm:$0xff]
      %v5737 = vld [vmem:[%s5734 + $0x10] sm:$0xff]
      %v5738 = vld [vmem:[%s5734 + $0x18] sm:$0xff]
      %v5739 = vld [vmem:[%s5734 + $0x20] sm:$0xff]
      %v5740 = vld [vmem:[%s5734 + $0x28] sm:$0xff]
      %v5741 = vld [vmem:[%s5734 + $0x30] sm:$0xff]
      %v5742 = vld [vmem:[%s5734 + $0x38] sm:$0xff]
      %v5743 = vld [vmem:[%s5734 + $0x40] sm:$0xff]
      %v5744 = vld [vmem:[%s5734 + $0x48] sm:$0xff]
      %v5745 = vld [vmem:[%s5734 + $0x50] sm:$0xff]
      %v5746 = vld [vmem:[%s5734 + $0x58] sm:$0xff]
      %v5747 = vld [vmem:[%s5734 + $0x60] sm:$0xff]
      %v5748 = vld [vmem:[%s5734 + $0x68] sm:$0xff]
      %v5749 = vld [vmem:[%s5734 + $0x70] sm:$0xff]
      %v5750 = vld [vmem:[%s5734 + $0x78] sm:$0xff]
      %v5751 = vld [vmem:[%s5734 + $0x80] sm:$0xff]
      %v5752 = vld [vmem:[%s5734 + $0x88] sm:$0xff]
      %v5753 = vld [vmem:[%s5734 + $0x90] sm:$0xff]
      %v5754 = vld [vmem:[%s5734 + $0x98] sm:$0xff]
      %v5755 = vld [vmem:[%s5734 + $0xa0] sm:$0xff]
      %v5756 = vld [vmem:[%s5734 + $0xa8] sm:$0xff]
      %v5757 = vld [vmem:[%s5734 + $0xb0] sm:$0xff]
      %v5758 = vld [vmem:[%s5734 + $0xb8] sm:$0xff]
      %v5759 = vld [vmem:[%s5734 + $0xc0] sm:$0xff]
      %v5760 = vld [vmem:[%s5734 + $0xc8] sm:$0xff]
      %v5761 = vld [vmem:[%s5734 + $0xd0] sm:$0xff]
      %v5762 = vld [vmem:[%s5734 + $0xd8] sm:$0xff]
      %v5763 = vld [vmem:[%s5734 + $0xe0] sm:$0xff]
      %v5764 = vld [vmem:[%s5734 + $0xe8] sm:$0xff]
      %v5765 = vld [vmem:[%s5734 + $0xf0] sm:$0xff]
      %v5766 = vld [vmem:[%s5734 + $0xf8] sm:$0xff]
      %v5799 = vunpack.c.l.b16 %v5735
      %v5800 = vunpack.c.h.b16 %v5735
      %v5801 = vunpack.c.l.b16 %v5736
      %v5802 = vunpack.c.h.b16 %v5736
      %v5803 = vunpack.c.l.b16 %v5737
      %v5804 = vunpack.c.h.b16 %v5737
      %v5805 = vunpack.c.l.b16 %v5738
      %v5806 = vunpack.c.h.b16 %v5738
      %v5807 = vunpack.c.l.b16 %v5739
      %v5808 = vunpack.c.h.b16 %v5739
      %v5809 = vunpack.c.l.b16 %v5740
      %v5810 = vunpack.c.h.b16 %v5740
      %v5811 = vunpack.c.l.b16 %v5741
      %v5812 = vunpack.c.h.b16 %v5741
      %v5813 = vunpack.c.l.b16 %v5742
      %v5814 = vunpack.c.h.b16 %v5742
      %v5815 = vunpack.c.l.b16 %v5743
      %v5816 = vunpack.c.h.b16 %v5743
      %v5817 = vunpack.c.l.b16 %v5744
      %v5818 = vunpack.c.h.b16 %v5744
      %v5819 = vunpack.c.l.b16 %v5745
      %v5820 = vunpack.c.h.b16 %v5745
      %v5821 = vunpack.c.l.b16 %v5746
      %v5822 = vunpack.c.h.b16 %v5746
      %v5823 = vunpack.c.l.b16 %v5747
      %v5824 = vunpack.c.h.b16 %v5747
      %v5825 = vunpack.c.l.b16 %v5748
      %v5826 = vunpack.c.h.b16 %v5748
      %v5827 = vunpack.c.l.b16 %v5749
      %v5828 = vunpack.c.h.b16 %v5749
      %v5829 = vunpack.c.l.b16 %v5750
      %v5830 = vunpack.c.h.b16 %v5750
      %v5831 = vunpack.c.l.b16 %v5751
      %v5832 = vunpack.c.h.b16 %v5751
      %v5833 = vunpack.c.l.b16 %v5752
      %v5834 = vunpack.c.h.b16 %v5752
      %v5835 = vunpack.c.l.b16 %v5753
      %v5836 = vunpack.c.h.b16 %v5753
      %v5837 = vunpack.c.l.b16 %v5754
      %v5838 = vunpack.c.h.b16 %v5754
      %v5839 = vunpack.c.l.b16 %v5755
      %v5840 = vunpack.c.h.b16 %v5755
      %v5841 = vunpack.c.l.b16 %v5756
      %v5842 = vunpack.c.h.b16 %v5756
      %v5843 = vunpack.c.l.b16 %v5757
      %v5844 = vunpack.c.h.b16 %v5757
      %v5845 = vunpack.c.l.b16 %v5758
      %v5846 = vunpack.c.h.b16 %v5758
      %v5847 = vunpack.c.l.b16 %v5759
      %v5848 = vunpack.c.h.b16 %v5759
      %v5849 = vunpack.c.l.b16 %v5760
      %v5850 = vunpack.c.h.b16 %v5760
      %v5851 = vunpack.c.l.b16 %v5761
      %v5852 = vunpack.c.h.b16 %v5761
      %v5853 = vunpack.c.l.b16 %v5762
      %v5854 = vunpack.c.h.b16 %v5762
      %v5855 = vunpack.c.l.b16 %v5763
      %v5856 = vunpack.c.h.b16 %v5763
      %v5857 = vunpack.c.l.b16 %v5764
      %v5858 = vunpack.c.h.b16 %v5764
      %v5859 = vunpack.c.l.b16 %v5765
      %v5860 = vunpack.c.h.b16 %v5765
      %v5861 = vunpack.c.l.b16 %v5766
      %v5862 = vunpack.c.h.b16 %v5766
      %v5863 = vpack.c.b16 %v5801, %v5799
      %v5864 = vpack.c.b16 %v5802, %v5800
      %v5865 = vpack.c.b16 %v5805, %v5803
      %v5866 = vpack.c.b16 %v5806, %v5804
      %v5867 = vpack.c.b16 %v5809, %v5807
      %v5868 = vpack.c.b16 %v5810, %v5808
      %v5869 = vpack.c.b16 %v5813, %v5811
      %v5870 = vpack.c.b16 %v5814, %v5812
      %v5871 = vpack.c.b16 %v5817, %v5815
      %v5872 = vpack.c.b16 %v5818, %v5816
      %v5873 = vpack.c.b16 %v5821, %v5819
      %v5874 = vpack.c.b16 %v5822, %v5820
      %v5875 = vpack.c.b16 %v5825, %v5823
      %v5876 = vpack.c.b16 %v5826, %v5824
      %v5877 = vpack.c.b16 %v5829, %v5827
      %v5878 = vpack.c.b16 %v5830, %v5828
      %v5879 = vpack.c.b16 %v5833, %v5831
      %v5880 = vpack.c.b16 %v5834, %v5832
      %v5881 = vpack.c.b16 %v5837, %v5835
      %v5882 = vpack.c.b16 %v5838, %v5836
      %v5883 = vpack.c.b16 %v5841, %v5839
      %v5884 = vpack.c.b16 %v5842, %v5840
      %v5885 = vpack.c.b16 %v5845, %v5843
      %v5886 = vpack.c.b16 %v5846, %v5844
      %v5887 = vpack.c.b16 %v5849, %v5847
      %v5888 = vpack.c.b16 %v5850, %v5848
      %v5889 = vpack.c.b16 %v5853, %v5851
      %v5890 = vpack.c.b16 %v5854, %v5852
      %v5891 = vpack.c.b16 %v5857, %v5855
      %v5892 = vpack.c.b16 %v5858, %v5856
      %v5893 = vpack.c.b16 %v5861, %v5859
      %v5894 = vpack.c.b16 %v5862, %v5860
      %5927 = vmatprep.subr.bf16.mxu0 %v5864
      %5928 = vmatpush1.bf16.msra.mxu0 %v5863
      %5929 = vmatprep.subr.bf16.mxu0 %v5866
      %5930 = vmatpush1.bf16.msra.mxu0 %v5865
      %5931 = vmatprep.subr.bf16.mxu0 %v5868
      %5932 = vmatpush1.bf16.msra.mxu0 %v5867
      %5933 = vmatprep.subr.bf16.mxu0 %v5870
      %5934 = vmatpush1.bf16.msra.mxu0 %v5869
      %5935 = vmatprep.subr.bf16.mxu0 %v5872
      %5936 = vmatpush1.bf16.msra.mxu0 %v5871
      %5937 = vmatprep.subr.bf16.mxu0 %v5874
      %5938 = vmatpush1.bf16.msra.mxu0 %v5873
      %5939 = vmatprep.subr.bf16.mxu0 %v5876
      %5940 = vmatpush1.bf16.msra.mxu0 %v5875
      %5941 = vmatprep.subr.bf16.mxu0 %v5878
      %5942 = vmatpush1.bf16.msra.mxu0 %v5877
      %5943 = vmatprep.subr.bf16.mxu0 %v5880
      %5944 = vmatpush1.bf16.msra.mxu0 %v5879
      %5945 = vmatprep.subr.bf16.mxu0 %v5882
      %5946 = vmatpush1.bf16.msra.mxu0 %v5881
      %5947 = vmatprep.subr.bf16.mxu0 %v5884
      %5948 = vmatpush1.bf16.msra.mxu0 %v5883
      %5949 = vmatprep.subr.bf16.mxu0 %v5886
      %5950 = vmatpush1.bf16.msra.mxu0 %v5885
      %5951 = vmatprep.subr.bf16.mxu0 %v5888
      %5952 = vmatpush1.bf16.msra.mxu0 %v5887
      %5953 = vmatprep.subr.bf16.mxu0 %v5890
      %5954 = vmatpush1.bf16.msra.mxu0 %v5889
      %5955 = vmatprep.subr.bf16.mxu0 %v5892
      %5956 = vmatpush1.bf16.msra.mxu0 %v5891
      %5957 = vmatprep.subr.bf16.mxu0 %v5894
      %5958 = vmatpush1.bf16.msra.mxu0 %v5893
      %5959 = vmatprep.mubr.bf16.mxu0 %v5733
      %5960 = vmatmul.mubr.bf16.gmra.mrb[0].mxu0 %v5732
      %v5961 = vpop.f32.mrb[0].mxu0
      %v5962 = vadd.f32 0.0, %v5961
      %v5963 = vpop.f32.mrb[0].mxu0
      %v5964 = vadd.f32 0.0, %v5963
      %v5965 = vpop.f32.mrb[0].mxu0
      %v5966 = vpop.f32.mrb[0].mxu0
      %5967 = vdwg.mxu0
      %v5968 = vadd.f32 %v5684, %v5962
      %v5969 = vadd.f32 %v5685, %v5964
      %v5970 = vsel %vm4837, %v5968, 0.0
      %v5971 = vrot.slane %v5970, 4
      %v5972 = vadd.f32 %v5970, %v5971
      %v5973 = vrot.slane %v5972, 2
      %v5974 = vadd.f32 %v5972, %v5973
      %v5975 = vrot.slane %v5974, 1
      %v5976 = vadd.f32 %v5974, %v5975
      %v5977 = vsel %vm4837, %v5969, 0.0
      %v5978 = vrot.slane %v5977, 4
      %v5979 = vadd.f32 %v5977, %v5978
      %v5980 = vrot.slane %v5979, 2
      %v5981 = vadd.f32 %v5979, %v5980
      %v5982 = vrot.slane %v5981, 1
      %v5983 = vadd.f32 %v5981, %v5982
      %v5984 = vmul.f32 %v5968, %v5968
      %v5985 = vmul.f32 %v5969, %v5969
      %v5986 = vsel %vm4837, %v5984, 0.0
      %v5987 = vrot.slane %v5986, 4
      %v5988 = vadd.f32 %v5986, %v5987
      %v5989 = vrot.slane %v5988, 2
      %v5990 = vadd.f32 %v5988, %v5989
      %v5991 = vrot.slane %v5990, 1
      %v5992 = vadd.f32 %v5990, %v5991
      %v5993 = vsel %vm4837, %v5985, 0.0
      %v5994 = vrot.slane %v5993, 4
      %v5995 = vadd.f32 %v5993, %v5994
      %v5996 = vrot.slane %v5995, 2
      %v5997 = vadd.f32 %v5995, %v5996
      %v5998 = vrot.slane %v5997, 1
      %v5999 = vadd.f32 %v5997, %v5998
      %v6000 = vld [vmem:[%s13] sm:$0xff]
      %v6001 = vld [vmem:[%s13 + $0x8] sm:$0xff]
      %v6002 = vld [vmem:[%s13 + $0x10] sm:$0xff]
      %v6003 = vld [vmem:[%s13 + $0x18] sm:$0xff]
      %v6004 = vld [vmem:[%s13 + $0x20] sm:$0xff]
      %v6005 = vld [vmem:[%s13 + $0x28] sm:$0xff]
      %v6006 = vld [vmem:[%s13 + $0x30] sm:$0xff]
      %v6007 = vld [vmem:[%s13 + $0x38] sm:$0xff]
      %v6008 = vld [vmem:[%s13 + $0x40] sm:$0xff]
      %v6009 = vld [vmem:[%s13 + $0x48] sm:$0xff]
      %v6010 = vld [vmem:[%s13 + $0x50] sm:$0xff]
      %v6011 = vld [vmem:[%s13 + $0x58] sm:$0xff]
      %v6012 = vld [vmem:[%s13 + $0x60] sm:$0xff]
      %v6013 = vld [vmem:[%s13 + $0x68] sm:$0xff]
      %v6014 = vld [vmem:[%s13 + $0x70] sm:$0xff]
      %v6015 = vld [vmem:[%s13 + $0x78] sm:$0xff]
      %v6016 = vld [vmem:[%s13 + $0x80] sm:$0xff]
      %v6017 = vld [vmem:[%s13 + $0x88] sm:$0xff]
      %v6018 = vld [vmem:[%s13 + $0x90] sm:$0xff]
      %v6019 = vld [vmem:[%s13 + $0x98] sm:$0xff]
      %v6020 = vld [vmem:[%s13 + $0xa0] sm:$0xff]
      %v6021 = vld [vmem:[%s13 + $0xa8] sm:$0xff]
      %v6022 = vld [vmem:[%s13 + $0xb0] sm:$0xff]
      %v6023 = vld [vmem:[%s13 + $0xb8] sm:$0xff]
      %v6024 = vld [vmem:[%s13 + $0xc0] sm:$0xff]
      %v6025 = vld [vmem:[%s13 + $0xc8] sm:$0xff]
      %v6026 = vld [vmem:[%s13 + $0xd0] sm:$0xff]
      %v6027 = vld [vmem:[%s13 + $0xd8] sm:$0xff]
      %v6028 = vld [vmem:[%s13 + $0xe0] sm:$0xff]
      %v6029 = vld [vmem:[%s13 + $0xe8] sm:$0xff]
      %v6030 = vld [vmem:[%s13 + $0xf0] sm:$0xff]
      %v6031 = vld [vmem:[%s13 + $0xf8] sm:$0xff]
      %6032 = vmatprep.subr.mxu0 0.0
      %6033 = vmatpush1.msra.mxu0 %v6000
      %6034 = vmatprep.subr.mxu0 0.0
      %6035 = vmatpush1.msra.mxu0 %v6001
      %6036 = vmatprep.subr.mxu0 0.0
      %6037 = vmatpush1.msra.mxu0 %v6002
      %6038 = vmatprep.subr.mxu0 0.0
      %6039 = vmatpush1.msra.mxu0 %v6003
      %6040 = vmatprep.subr.mxu0 0.0
      %6041 = vmatpush1.msra.mxu0 %v6004
      %6042 = vmatprep.subr.mxu0 0.0
      %6043 = vmatpush1.msra.mxu0 %v6005
      %6044 = vmatprep.subr.mxu0 0.0
      %6045 = vmatpush1.msra.mxu0 %v6006
      %6046 = vmatprep.subr.mxu0 0.0
      %6047 = vmatpush1.msra.mxu0 %v6007
      %6048 = vmatprep.subr.mxu0 0.0
      %6049 = vmatpush1.msra.mxu0 %v6008
      %6050 = vmatprep.subr.mxu0 0.0
      %6051 = vmatpush1.msra.mxu0 %v6009
      %6052 = vmatprep.subr.mxu0 0.0
      %6053 = vmatpush1.msra.mxu0 %v6010
      %6054 = vmatprep.subr.mxu0 0.0
      %6055 = vmatpush1.msra.mxu0 %v6011
      %6056 = vmatprep.subr.mxu0 0.0
      %6057 = vmatpush1.msra.mxu0 %v6012
      %6058 = vmatprep.subr.mxu0 0.0
      %6059 = vmatpush1.msra.mxu0 %v6013
      %6060 = vmatprep.subr.mxu0 0.0
      %6061 = vmatpush1.msra.mxu0 %v6014
      %6062 = vmatprep.subr.mxu0 0.0
      %6063 = vmatpush1.msra.mxu0 %v6015
      %6064 = vmatprep.subr.mxu0 0.0
      %6065 = vmatpush1.msra.mxu0 %v6016
      %6066 = vmatprep.subr.mxu0 0.0
      %6067 = vmatpush1.msra.mxu0 %v6017
      %6068 = vmatprep.subr.mxu0 0.0
      %6069 = vmatpush1.msra.mxu0 %v6018
      %6070 = vmatprep.subr.mxu0 0.0
      %6071 = vmatpush1.msra.mxu0 %v6019
      %6072 = vmatprep.subr.mxu0 0.0
      %6073 = vmatpush1.msra.mxu0 %v6020
      %6074 = vmatprep.subr.mxu0 0.0
      %6075 = vmatpush1.msra.mxu0 %v6021
      %6076 = vmatprep.subr.mxu0 0.0
      %6077 = vmatpush1.msra.mxu0 %v6022
      %6078 = vmatprep.subr.mxu0 0.0
      %6079 = vmatpush1.msra.mxu0 %v6023
      %6080 = vmatprep.subr.mxu0 0.0
      %6081 = vmatpush1.msra.mxu0 %v6024
      %6082 = vmatprep.subr.mxu0 0.0
      %6083 = vmatpush1.msra.mxu0 %v6025
      %6084 = vmatprep.subr.mxu0 0.0
      %6085 = vmatpush1.msra.mxu0 %v6026
      %6086 = vmatprep.subr.mxu0 0.0
      %6087 = vmatpush1.msra.mxu0 %v6027
      %6088 = vmatprep.subr.mxu0 0.0
      %6089 = vmatpush1.msra.mxu0 %v6028
      %6090 = vmatprep.subr.mxu0 0.0
      %6091 = vmatpush1.msra.mxu0 %v6029
      %6092 = vmatprep.subr.mxu0 0.0
      %6093 = vmatpush1.msra.mxu0 %v6030
      %6094 = vmatprep.subr.mxu0 0.0
      %6095 = vmatpush1.msra.mxu0 %v6031
      %6096 = vmatprep.mubr.f32.mxu0 %v5983
      %6097 = vmatmul.mubr.f32.gmra.mrb[0].mxu0 %v5976
      %v6098 = vpop.f32.mrb[0].mxu0
      %v6099 = vadd.f32 0.0, %v6098
      %v6100 = vpop.f32.mrb[0].mxu0
      %6101 = vdwg.mxu0
      %v6102 = vmul.f32 %v6099, 0.0625
      %6103 = vmatprep.subr.mxu0 0.0
      %6104 = vmatpush1.msra.mxu0 %v6000
      %6105 = vmatprep.subr.mxu0 0.0
      %6106 = vmatpush1.msra.mxu0 %v6001
      %6107 = vmatprep.subr.mxu0 0.0
      %6108 = vmatpush1.msra.mxu0 %v6002
      %6109 = vmatprep.subr.mxu0 0.0
      %6110 = vmatpush1.msra.mxu0 %v6003
      %6111 = vmatprep.subr.mxu0 0.0
      %6112 = vmatpush1.msra.mxu0 %v6004
      %6113 = vmatprep.subr.mxu0 0.0
      %6114 = vmatpush1.msra.mxu0 %v6005
      %6115 = vmatprep.subr.mxu0 0.0
      %6116 = vmatpush1.msra.mxu0 %v6006
      %6117 = vmatprep.subr.mxu0 0.0
      %6118 = vmatpush1.msra.mxu0 %v6007
      %6119 = vmatprep.subr.mxu0 0.0
      %6120 = vmatpush1.msra.mxu0 %v6008
      %6121 = vmatprep.subr.mxu0 0.0
      %6122 = vmatpush1.msra.mxu0 %v6009
      %6123 = vmatprep.subr.mxu0 0.0
      %6124 = vmatpush1.msra.mxu0 %v6010
      %6125 = vmatprep.subr.mxu0 0.0
      %6126 = vmatpush1.msra.mxu0 %v6011
      %6127 = vmatprep.subr.mxu0 0.0
      %6128 = vmatpush1.msra.mxu0 %v6012
      %6129 = vmatprep.subr.mxu0 0.0
      %6130 = vmatpush1.msra.mxu0 %v6013
      %6131 = vmatprep.subr.mxu0 0.0
      %6132 = vmatpush1.msra.mxu0 %v6014
      %6133 = vmatprep.subr.mxu0 0.0
      %6134 = vmatpush1.msra.mxu0 %v6015
      %6135 = vmatprep.subr.mxu0 0.0
      %6136 = vmatpush1.msra.mxu0 %v6016
      %6137 = vmatprep.subr.mxu0 0.0
      %6138 = vmatpush1.msra.mxu0 %v6017
      %6139 = vmatprep.subr.mxu0 0.0
      %6140 = vmatpush1.msra.mxu0 %v6018
      %6141 = vmatprep.subr.mxu0 0.0
      %6142 = vmatpush1.msra.mxu0 %v6019
      %6143 = vmatprep.subr.mxu0 0.0
      %6144 = vmatpush1.msra.mxu0 %v6020
      %6145 = vmatprep.subr.mxu0 0.0
      %6146 = vmatpush1.msra.mxu0 %v6021
      %6147 = vmatprep.subr.mxu0 0.0
      %6148 = vmatpush1.msra.mxu0 %v6022
      %6149 = vmatprep.subr.mxu0 0.0
      %6150 = vmatpush1.msra.mxu0 %v6023
      %6151 = vmatprep.subr.mxu0 0.0
      %6152 = vmatpush1.msra.mxu0 %v6024
      %6153 = vmatprep.subr.mxu0 0.0
      %6154 = vmatpush1.msra.mxu0 %v6025
      %6155 = vmatprep.subr.mxu0 0.0
      %6156 = vmatpush1.msra.mxu0 %v6026
      %6157 = vmatprep.subr.mxu0 0.0
      %6158 = vmatpush1.msra.mxu0 %v6027
      %6159 = vmatprep.subr.mxu0 0.0
      %6160 = vmatpush1.msra.mxu0 %v6028
      %6161 = vmatprep.subr.mxu0 0.0
      %6162 = vmatpush1.msra.mxu0 %v6029
      %6163 = vmatprep.subr.mxu0 0.0
      %6164 = vmatpush1.msra.mxu0 %v6030
      %6165 = vmatprep.subr.mxu0 0.0
      %6166 = vmatpush1.msra.mxu0 %v6031
      %6167 = vmatprep.mubr.f32.mxu0 %v5999
      %6168 = vmatmul.mubr.f32.gmra.mrb[0].mxu0 %v5992
      %v6169 = vpop.f32.mrb[0].mxu0
      %v6170 = vadd.f32 0.0, %v6169
      %v6171 = vpop.f32.mrb[0].mxu0
      %6172 = vdwg.mxu0
      %v6173 = vmul.f32 %v6170, 0.0625
      %v6174 = vmul.f32 %v6102, %v6102
      %v6175 = vsub.f32 %v6173, %v6174
      %v6176 = vadd.f32 %v6175, 1e-05
      %v6177 = vrsqrt.pop %v6176
      %v6178 = vld [vmem:[%s14] sm:$0xff]
      %v6179 = vld [vmem:[%s14 + $0x8] sm:$0xff]
      %v6180 = vld [vmem:[%s14 + $0x10] sm:$0xff]
      %v6181 = vld [vmem:[%s14 + $0x18] sm:$0xff]
      %v6182 = vld [vmem:[%s14 + $0x20] sm:$0xff]
      %v6183 = vld [vmem:[%s14 + $0x28] sm:$0xff]
      %v6184 = vld [vmem:[%s14 + $0x30] sm:$0xff]
      %v6185 = vld [vmem:[%s14 + $0x38] sm:$0xff]
      %v6186 = vld [vmem:[%s14 + $0x40] sm:$0xff]
      %v6187 = vld [vmem:[%s14 + $0x48] sm:$0xff]
      %v6188 = vld [vmem:[%s14 + $0x50] sm:$0xff]
      %v6189 = vld [vmem:[%s14 + $0x58] sm:$0xff]
      %v6190 = vld [vmem:[%s14 + $0x60] sm:$0xff]
      %v6191 = vld [vmem:[%s14 + $0x68] sm:$0xff]
      %v6192 = vld [vmem:[%s14 + $0x70] sm:$0xff]
      %v6193 = vld [vmem:[%s14 + $0x78] sm:$0xff]
      %v6195 = vsel %vm581, %v6102, 0
      %6197 = vmatprep.subr.mxu0 %v6179
      %6198 = vmatpush1.msra.mxu0 %v6178
      %6199 = vmatprep.subr.mxu0 %v6181
      %6200 = vmatpush1.msra.mxu0 %v6180
      %6201 = vmatprep.subr.mxu0 %v6183
      %6202 = vmatpush1.msra.mxu0 %v6182
      %6203 = vmatprep.subr.mxu0 %v6185
      %6204 = vmatpush1.msra.mxu0 %v6184
      %6205 = vmatprep.subr.mxu0 %v6187
      %6206 = vmatpush1.msra.mxu0 %v6186
      %6207 = vmatprep.subr.mxu0 %v6189
      %6208 = vmatpush1.msra.mxu0 %v6188
      %6209 = vmatprep.subr.mxu0 %v6191
      %6210 = vmatpush1.msra.mxu0 %v6190
      %6211 = vmatprep.subr.mxu0 %v6193
      %6212 = vmatpush1.msra.mxu0 %v6192
      %6213 = vmatprep.subr.mxu0 0.0
      %6214 = vmatpush1.msra.mxu0 0.0
      %6215 = vmatprep.subr.mxu0 0.0
      %6216 = vmatpush1.msra.mxu0 0.0
      %6217 = vmatprep.subr.mxu0 0.0
      %6218 = vmatpush1.msra.mxu0 0.0
      %6219 = vmatprep.subr.mxu0 0.0
      %6220 = vmatpush1.msra.mxu0 0.0
      %6221 = vmatprep.subr.mxu0 0.0
      %6222 = vmatpush1.msra.mxu0 0.0
      %6223 = vmatprep.subr.mxu0 0.0
      %6224 = vmatpush1.msra.mxu0 0.0
      %6225 = vmatprep.subr.mxu0 0.0
      %6226 = vmatpush1.msra.mxu0 0.0
      %6227 = vmatprep.subr.mxu0 0.0
      %6228 = vmatpush1.msra.mxu0 0.0
      %6229 = vmatprep.subr.mxu0 0.0
      %6230 = vmatpush1.msra.mxu0 0.0
      %6231 = vmatprep.subr.mxu0 0.0
      %6232 = vmatpush1.msra.mxu0 0.0
      %6233 = vmatprep.subr.mxu0 0.0
      %6234 = vmatpush1.msra.mxu0 0.0
      %6235 = vmatprep.subr.mxu0 0.0
      %6236 = vmatpush1.msra.mxu0 0.0
      %6237 = vmatprep.subr.mxu0 0.0
      %6238 = vmatpush1.msra.mxu0 0.0
      %6239 = vmatprep.subr.mxu0 0.0
      %6240 = vmatpush1.msra.mxu0 0.0
      %6241 = vmatprep.subr.mxu0 0.0
      %6242 = vmatpush1.msra.mxu0 0.0
      %6243 = vmatprep.subr.mxu0 0.0
      %6244 = vmatpush1.msra.mxu0 0.0
      %6245 = vmatprep.subr.mxu0 0.0
      %6246 = vmatpush1.msra.mxu0 0.0
      %6247 = vmatprep.subr.mxu0 0.0
      %6248 = vmatpush1.msra.mxu0 0.0
      %6249 = vmatprep.subr.mxu0 0.0
      %6250 = vmatpush1.msra.mxu0 0.0
      %6251 = vmatprep.subr.mxu0 0.0
      %6252 = vmatpush1.msra.mxu0 0.0
      %6253 = vmatprep.subr.mxu0 0.0
      %6254 = vmatpush1.msra.mxu0 0.0
      %6255 = vmatprep.subr.mxu0 0.0
      %6256 = vmatpush1.msra.mxu0 0.0
      %6257 = vmatprep.subr.mxu0 0.0
      %6258 = vmatpush1.msra.mxu0 0.0
      %6259 = vmatprep.subr.mxu0 0.0
      %6260 = vmatpush1.msra.mxu0 0.0
      %6261 = vmatprep.mubr.f32.mxu0 0.0
      %6262 = vmatmul.mubr.f32.gmra.mrb[0].mxu0 %v6195
      %v6263 = vpop.f32.mrb[0].mxu0
      %v6264 = vadd.f32 0.0, %v6263
      %v6265 = vpop.f32.mrb[0].mxu0
      %v6266 = vadd.f32 0.0, %v6265
      %6267 = vdwg.mxu0
      %v6269 = vsel %vm581, %v6177, 0
      %6271 = vmatprep.subr.mxu0 %v6179
      %6272 = vmatpush1.msra.mxu0 %v6178
      %6273 = vmatprep.subr.mxu0 %v6181
      %6274 = vmatpush1.msra.mxu0 %v6180
      %6275 = vmatprep.subr.mxu0 %v6183
      %6276 = vmatpush1.msra.mxu0 %v6182
      %6277 = vmatprep.subr.mxu0 %v6185
      %6278 = vmatpush1.msra.mxu0 %v6184
      %6279 = vmatprep.subr.mxu0 %v6187
      %6280 = vmatpush1.msra.mxu0 %v6186
      %6281 = vmatprep.subr.mxu0 %v6189
      %6282 = vmatpush1.msra.mxu0 %v6188
      %6283 = vmatprep.subr.mxu0 %v6191
      %6284 = vmatpush1.msra.mxu0 %v6190
      %6285 = vmatprep.subr.mxu0 %v6193
      %6286 = vmatpush1.msra.mxu0 %v6192
      %6287 = vmatprep.subr.mxu0 0.0
      %6288 = vmatpush1.msra.mxu0 0.0
      %6289 = vmatprep.subr.mxu0 0.0
      %6290 = vmatpush1.msra.mxu0 0.0
      %6291 = vmatprep.subr.mxu0 0.0
      %6292 = vmatpush1.msra.mxu0 0.0
      %6293 = vmatprep.subr.mxu0 0.0
      %6294 = vmatpush1.msra.mxu0 0.0
      %6295 = vmatprep.subr.mxu0 0.0
      %6296 = vmatpush1.msra.mxu0 0.0
      %6297 = vmatprep.subr.mxu0 0.0
      %6298 = vmatpush1.msra.mxu0 0.0
      %6299 = vmatprep.subr.mxu0 0.0
      %6300 = vmatpush1.msra.mxu0 0.0
      %6301 = vmatprep.subr.mxu0 0.0
      %6302 = vmatpush1.msra.mxu0 0.0
      %6303 = vmatprep.subr.mxu0 0.0
      %6304 = vmatpush1.msra.mxu0 0.0
      %6305 = vmatprep.subr.mxu0 0.0
      %6306 = vmatpush1.msra.mxu0 0.0
      %6307 = vmatprep.subr.mxu0 0.0
      %6308 = vmatpush1.msra.mxu0 0.0
      %6309 = vmatprep.subr.mxu0 0.0
      %6310 = vmatpush1.msra.mxu0 0.0
      %6311 = vmatprep.subr.mxu0 0.0
      %6312 = vmatpush1.msra.mxu0 0.0
      %6313 = vmatprep.subr.mxu0 0.0
      %6314 = vmatpush1.msra.mxu0 0.0
      %6315 = vmatprep.subr.mxu0 0.0
      %6316 = vmatpush1.msra.mxu0 0.0
      %6317 = vmatprep.subr.mxu0 0.0
      %6318 = vmatpush1.msra.mxu0 0.0
      %6319 = vmatprep.subr.mxu0 0.0
      %6320 = vmatpush1.msra.mxu0 0.0
      %6321 = vmatprep.subr.mxu0 0.0
      %6322 = vmatpush1.msra.mxu0 0.0
      %6323 = vmatprep.subr.mxu0 0.0
      %6324 = vmatpush1.msra.mxu0 0.0
      %6325 = vmatprep.subr.mxu0 0.0
      %6326 = vmatpush1.msra.mxu0 0.0
      %6327 = vmatprep.subr.mxu0 0.0
      %6328 = vmatpush1.msra.mxu0 0.0
      %6329 = vmatprep.subr.mxu0 0.0
      %6330 = vmatpush1.msra.mxu0 0.0
      %6331 = vmatprep.subr.mxu0 0.0
      %6332 = vmatpush1.msra.mxu0 0.0
      %6333 = vmatprep.subr.mxu0 0.0
      %6334 = vmatpush1.msra.mxu0 0.0
      %6335 = vmatprep.mubr.f32.mxu0 0.0
      %6336 = vmatmul.mubr.f32.gmra.mrb[0].mxu0 %v6269
      %v6337 = vpop.f32.mrb[0].mxu0
      %v6338 = vadd.f32 0.0, %v6337
      %v6339 = vpop.f32.mrb[0].mxu0
      %v6340 = vadd.f32 0.0, %v6339
      %6341 = vdwg.mxu0
      %v6342 = vlaneseq
      %v6343 = vshrl.u32 %v6342, 7
      %v6344 = vsub.s32 0, %v6343
      %v6345 = vrot.slane %v6264, %v6344
      %v6346 = vlaneseq
      %v6347 = vshrl.u32 %v6346, 7
      %v6348 = vsub.s32 0, %v6347
      %v6349 = vrot.slane %v6266, %v6348
      %v6350 = vsub.f32 %v5968, %v6345
      %v6351 = vsub.f32 %v5969, %v6349
      %v6352 = vlaneseq
      %v6353 = vshrl.u32 %v6352, 7
      %v6354 = vsub.s32 0, %v6353
      %v6355 = vrot.slane %v6338, %v6354
      %v6356 = vlaneseq
      %v6357 = vshrl.u32 %v6356, 7
      %v6358 = vsub.s32 0, %v6357
      %v6359 = vrot.slane %v6340, %v6358
      %v6360 = vmul.f32 %v6350, %v6355
      %v6361 = vmul.f32 %v6351, %v6359
      %vm6362 = vcmp.gt.f32.partialorder %v6360, 0.0
      %vm6363 = vcmp.gt.f32.partialorder %v6361, 0.0
      %v6364 = vmul.f32 %v6360, 0.2
      %v6365 = vmul.f32 %v6361, 0.2
      %v6366 = vsel %vm6362, %v6360, %v6364
      %v6367 = vsel %vm6363, %v6361, %v6365
      %v6368 = vld [vmem:[%s15] sm:$0xff]
      %v6370 = vcombine.high %v6368, %v6368
      %v6372 = vmul.f32 %v6366, %v6368
      %v6373 = vmul.f32 %v6367, %v6370
      %v6374 = vsel %vm4837, %v6372, 0.0
      %v6375 = vsel %vm4837, %v6373, 0.0
      %v6376 = vadd.f32 %v6374, %v6375
      %6377 = vadd.xlane.f32.xlu0 %v6376
      %v6378 = vpop.xlane.xlu0 %6377
      %v6379 = vsel %vm4837, %v6378, 0.0
      %v6380 = vrot.slane %v6379, 4
      %v6381 = vadd.f32 %v6379, %v6380
      %v6382 = vrot.slane %v6381, 2
      %v6383 = vadd.f32 %v6381, %v6382
      %v6384 = vrot.slane %v6383, 1
      %v6385 = vadd.f32 %v6383, %v6384
      %vm6386 = vcmask 0
      %6387 = vst.msk [vmem:[%s517] sm:$0x1] %vm6386, %v6385
      %p6388 = scmp.lt.s32.totalorder %s27, 1
      %s6389 = scalar_select %p6388, %s27, 1
      %s6390 = scalar_lea.vmem %s16, %s6389
      // Predicated region
      $region85: #{discriminator_forward.1} parent=83 // pred_check
        %p6391 = pneg %p386
      $region86: #{discriminator_forward.1} parent=83 // pred_check_branch
        %6393 = sbr.rel (%p6391) target = $region88
      $region87: #{discriminator_forward.1} parent=83 // pred_region
        _
      $region88: #{discriminator_forward.1} parent=83 // pred_fallthru
        _
    $region84: #{discriminator_forward.1} parent=5 // pred_fallthru
      _
    %p6394 = scmp.le.s32.totalorder 2, %s22
    // Predicated region
    $region89: #{discriminator_forward.1} parent=5 // pred_check
      %p6395 = pneg %p6394
    $region90: #{discriminator_forward.1} parent=5 // pred_check_branch
      %6397 = sbr.rel (%p6395) target = $region92
    $region91: #{discriminator_forward.1} parent=5 // pred_region
      %s6398 = ssub.s32 %s22, 2
      // Predicated region
      $region93: #{discriminator_forward.1} parent=91 // pred_check
        %p6399 = pneg %p392
      $region94: #{discriminator_forward.1} parent=91 // pred_check_branch
        %6401 = sbr.rel (%p6399) target = $region96
      $region95: #{discriminator_forward.1} parent=91 // pred_region
        %p6402 = scmp.lt.s32.totalorder %s28, 1
        %s6403 = scalar_select %p6402, %s28, 1
        %s6404 = scalar_lea.vmem %s16, %s6403
      $region96: #{discriminator_forward.1} parent=91 // pred_fallthru
        _
    $region92: #{discriminator_forward.1} parent=5 // pred_fallthru
      _
  $region6: #{discriminator_forward.1} parent=0 // loop_footer
    %s26 = sadd.s32 1, %s22
  $region7: #{discriminator_forward.1} parent=0 // loop_footer_branch
    %21 = sbr.rel target = $region3
  $region8: #{discriminator_forward.1} parent=0 // loop_exit
    _

</llo_original>
